<compile_context>
chip_gen: v5e
topology: v5e:2x2
jax: 0.10.0
libtpu: 0.0.40
codegen_flags: <defaults>
</compile_context>

<pallas_src>
import functools

import numpy as np
import jax
import jax.numpy as jnp
from jax.experimental import pallas as pl
from jax.experimental.pallas import tpu as pltpu

F32 = jnp.float32
LANE = 128        # packed feature width: all heads live in one 128-lane block
EDGE_DIM = 3
EDGE_PAD = 8      # edge-attr channels padded to one sublane group
ATT_PAD = 8       # head dim padded to one sublane group
OUT_PAD = 128     # lane-dense output width
NEG_INF = -1e30


# ----------------------------------------------------------------------------
# Fused Pallas kernel.  grid = (layer, target-row tile), both sequential.
# ----------------------------------------------------------------------------
def _gnn_kernel(x_ref, adj_ref, ea_ref,
                wl_ref, bl_ref, wrt_ref, brt_ref, wet_ref, att_ref, hmask_ref,
                gbias_ref, gamma_ref, beta_ref, mean_ref, var_ref,
                pm_ref, lw_ref, lb_ref,
                out_ref,
                h_scr, gl_scr, glt_scr,
                *, heads):
    l = pl.program_id(0)
    t = pl.program_id(1)
    n_layers = pl.num_programs(0)
    n_tiles = pl.num_programs(1)
    tile, n_pad = adj_ref.shape          # [TILE, N_pad]
    feat = h_scr.shape[1]                # 128

    # ---- one-time init: carried node features <- (padded) input ------------
    @pl.when(jnp.logical_and(l == 0, t == 0))
    def _():
        h_scr[...] = x_ref[...]

    # ---- per-layer setup: source-side projection lin_l(h), cached ----------
    @pl.when(t == 0)
    def _():
        gl = jnp.dot(h_scr[...], wl_ref[0], preferred_element_type=F32) + bl_ref[0]
        gl_scr[...] = gl
        glt_scr[...] = jnp.transpose(gl)

    row0 = pl.multiple_of(t * tile, tile)
    h_tile = h_scr[pl.ds(row0, tile), :]                    # [T, 128] pre-layer feats
    adj_tile = adj_ref[...]                                 # [T, N]
    ea_tile = ea_ref[...]                                   # [T, 8, N]

    # ---- target-side projection lin_r, built directly in [T, 128, 1] -------
    # (multiply + lane reduce keeps every operand in its native lane layout)
    wrt = wrt_ref[0]                                        # [128, 128] = lin_r^T
    grx = jnp.sum(wrt[None, :, :] * h_tile[:, None, :], axis=2, keepdims=True)
    grx = grx + brt_ref[0][None, :, :]                      # [T, 128, 1]

    # ---- edge projection in transposed orientation (batched MXU matmul) ----
    wet = wet_ref[0]                                        # [128, 8] = lin_edge^T
    wet_b = jnp.broadcast_to(wet[None, :, :], (tile,) + wet.shape)
    get = jnp.einsum('tfd,tdn->tfn', wet_b, ea_tile,
                     preferred_element_type=F32)            # [T, 128, N]

    # ---- GATv2 pre-activation + leaky_relu(0.2): e[t, f, n] -----------------
    e = grx + glt_scr[...][None, :, :] + get
    e = jnp.where(e > 0, e, 0.2 * e)

    # ---- all-heads attention logits on the MXU ------------------------------
    att = att_ref[0]                                        # [8, 128]
    att_b = jnp.broadcast_to(att[None, :, :], (tile,) + att.shape)
    logits = jnp.einsum('thf,tfn->thn', att_b, e,
                        preferred_element_type=F32)         # [T, 8, N]

    # ---- masked softmax over sources (lane dim) -----------------------------
    mask = adj_tile[:, None, :] > 0.0                       # [T, 1, N]
    logits = jnp.where(mask, logits, NEG_INF)
    m = jnp.max(logits, axis=2, keepdims=True)
    p = jnp.exp(logits - m)                                 # masked entries underflow to 0
    denom = jnp.maximum(jnp.sum(p, axis=2, keepdims=True), 1e-20)
    alpha = p / denom                                       # [T, 8, N]

    # ---- aggregate messages: alpha_h @ lin_l(x) for all heads in one matmul -
    attp = alpha.shape[1]
    agg = jnp.dot(alpha.reshape(tile * attp, n_pad), gl_scr[...],
                  preferred_element_type=F32).reshape(tile, attp, feat)
    conv = jnp.zeros((tile, feat), F32)
    for hd in range(heads):                                 # static unroll (tiny)
        conv = conv + agg[:, hd, :] * hmask_ref[hd:hd + 1, :]
    conv = conv + gbias_ref[0]

    # ---- residual (layers >= 1) + BatchNorm (running stats) + ELU, fused ----
    res_gate = jnp.where(l > 0, 1.0, 0.0).astype(F32)
    z = conv + res_gate * h_tile
    inv = jax.lax.rsqrt(var_ref[0] + 1e-5)
    zn = (z - mean_ref[0]) * inv * gamma_ref[0] + beta_ref[0]
    h_new = jnp.where(zn > 0, zn, jnp.exp(jnp.minimum(zn, 0.0)) - 1.0)
    h_scr[pl.ds(row0, tile), :] = h_new

    # ---- final grid step: global_mean_pool + Linear head --------------------
    @pl.when(jnp.logical_and(l == n_layers - 1, t == n_tiles - 1))
    def _():
        pooled = jnp.dot(pm_ref[...], h_scr[...], preferred_element_type=F32)
        out_ref[...] = (jnp.dot(pooled, lw_ref[...], preferred_element_type=F32)
                        + lb_ref[...])


# ----------------------------------------------------------------------------
# Host-side graph prep (plain XLA; cacheable for a static topology)
# ----------------------------------------------------------------------------
def _round_up(v, m):
    return (v + m - 1) // m * m


def build_graph_tensors(x, edge_index, edge_attr_enc, n_pad, feat):
    """Dense adjacency (+self loops) and dense encoded edge attrs laid out as
    (target, edge_dim, source), plus lane-padded node features."""
    src, dst = edge_index[0], edge_index[1]
    d = edge_attr_enc.shape[1]
    adj = jnp.zeros((n_pad, n_pad), F32).at[dst, src].max(1.0)
    ea = jnp.zeros((n_pad, n_pad, d), F32).at[dst, src, :].set(edge_attr_enc)
    deg = jnp.zeros((n_pad,), F32).at[dst].add(1.0)
    ssum = jnp.zeros((n_pad, d), F32).at[dst].add(edge_attr_enc)
    loop_attr = jnp.where(deg[:, None] > 0,
                          ssum / jnp.maximum(deg, 1.0)[:, None], 0.0)
    diag = jnp.arange(n_pad)
    adj = adj.at[diag, diag].set(1.0)            # self loops (incl. padded rows)
    ea = ea.at[diag, diag, :].set(loop_attr)     # fill_value='mean'
    ea_t = jnp.transpose(ea, (0, 2, 1))          # [N_pad, d, N_pad]
    ea_t = jnp.pad(ea_t, ((0, 0), (0, EDGE_PAD - d), (0, 0)))
    x_pad = jnp.pad(x, ((0, n_pad - x.shape[0]), (0, feat - x.shape[1])))
    return x_pad, adj, ea_t


def build_pool_matrix(batch, num_graphs, n_pad, bp):
    onehot = (batch[:, None] == jnp.arange(num_graphs)[None, :]).astype(F32)
    counts = jnp.maximum(onehot.sum(axis=0), 1.0)
    pm = (onehot / counts[None, :]).T            # [B, N]
    return jnp.pad(pm, ((0, bp - num_graphs), (0, n_pad - batch.shape[0])))


def gnn_forward(params, x, edge_index, edge_attr, batch, *,
                num_graphs, output_dim, heads):
    n = x.shape[0]
    tile = min(64, _round_up(n, 8))              # bounded tile -> fits v7x VMEM
    n_pad = _round_up(n, tile)
    n_tiles = n_pad // tile
    n_layers = params["wl"].shape[0]
    bp = 8 if num_graphs <= 8 else _round_up(num_graphs, 8)

    ea_enc = edge_attr @ params["enc_w"] + params["enc_b"][None, :]
    x_pad, adj, ea_t = build_graph_tensors(x, edge_index, ea_enc, n_pad, LANE)
    pm = build_pool_matrix(batch, num_graphs, n_pad, bp)

    def full_spec(shape):
        nd = len(shape)
        return pl.BlockSpec(tuple(shape), lambda l, t: (0,) * nd)

    def layer_spec(shape):
        nd = len(shape)
        return pl.BlockSpec((1,) + tuple(shape[1:]),
                            lambda l, t: (l,) + (0,) * (nd - 1))

    in_specs = [
        full_spec((n_pad, LANE)),                                        # x
        pl.BlockSpec((tile, n_pad), lambda l, t: (t, 0)),                # adj tile
        pl.BlockSpec((tile, EDGE_PAD, n_pad), lambda l, t: (t, 0, 0)),   # ea tile
        layer_spec(params["wl"].shape),
        layer_spec(params["bl"].shape),
        layer_spec(params["wrt"].shape),
        layer_spec(params["brt"].shape),
        layer_spec(params["wet"].shape),
        layer_spec(params["att"].shape),
        full_spec(params["headmask"].shape),
        layer_spec(params["gbias"].shape),
        layer_spec(params["gamma"].shape),
        layer_spec(params["beta"].shape),
        layer_spec(params["mean"].shape),
        layer_spec(params["var"].shape),
        full_spec((bp, n_pad)),                                          # pool matrix
        full_spec(params["lin_w"].shape),
        full_spec(params["lin_b"].shape),
    ]

    out = pl.pallas_call(
        functools.partial(_gnn_kernel, heads=heads),
        out_shape=jax.ShapeDtypeStruct((bp, OUT_PAD), F32),
        grid=(n_layers, n_tiles),
        in_specs=in_specs,
        out_specs=pl.BlockSpec((bp, OUT_PAD), lambda l, t: (0, 0)),
        scratch_shapes=[
            pltpu.VMEM((n_pad, LANE), F32),      # carried node features h
            pltpu.VMEM((n_pad, LANE), F32),      # lin_l(h) per layer
            pltpu.VMEM((LANE, n_pad), F32),      # lin_l(h)^T per layer
        ],
        compiler_params=pltpu.CompilerParams(
            dimension_semantics=("arbitrary", "arbitrary"),
            vmem_limit_bytes=48 * 1024 * 1024),
    )(x_pad, adj, ea_t,
      params["wl"], params["bl"], params["wrt"], params["brt"], params["wet"],
      params["att"], params["headmask"], params["gbias"],
      params["gamma"], params["beta"], params["mean"], params["var"],
      pm, params["lin_w"], params["lin_b"])
    return out[:num_graphs, :output_dim]


# ----------------------------------------------------------------------------
# Parameters in the packed layout: head h's channels are columns
# [h*hidden : (h+1)*hidden] of the single 128-lane feature block.
# ----------------------------------------------------------------------------
def init_params(key, input_dim, hidden_dim, output_dim, heads,
                n_layers=3, edge_dim=EDGE_DIM):
    hc = hidden_dim * heads
    assert hc <= LANE and output_dim <= OUT_PAD and heads <= ATT_PAD
    keys = iter(jax.random.split(key, 64))

    def nrm(shape, scale=0.1):
        return np.asarray(scale * jax.random.normal(next(keys), shape), np.float32)

    wl = np.zeros((n_layers, LANE, LANE), np.float32)
    wr = np.zeros((n_layers, LANE, LANE), np.float32)
    we = np.zeros((n_layers, EDGE_PAD, LANE), np.float32)
    bl = np.zeros((n_layers, 1, LANE), np.float32)
    brt = np.zeros((n_layers, LANE, 1), np.float32)      # lin_r bias, column form
    att = np.zeros((n_layers, ATT_PAD, LANE), np.float32)
    gbias = np.zeros((n_layers, 1, LANE), np.float32)
    gamma = np.ones((n_layers, 1, LANE), np.float32)     # BN eval defaults
    beta = np.zeros((n_layers, 1, LANE), np.float32)
    mean = np.zeros((n_layers, 1, LANE), np.float32)
    var = np.ones((n_layers, 1, LANE), np.float32)
    headmask = np.zeros((ATT_PAD, LANE), np.float32)
    for h in range(heads):
        headmask[h, h * hidden_dim:(h + 1) * hidden_dim] = 1.0

    for l in range(n_layers):
        in_dim = input_dim if l == 0 else hc
        wl[l, :in_dim, :hc] = nrm((in_dim, hc))
        wr[l, :in_dim, :hc] = nrm((in_dim, hc))
        we[l, :edge_dim, :hc] = nrm((edge_dim, hc))      # lin_edge (no bias in PyG)
        bl[l, 0, :hc] = nrm((hc,))
        brt[l, :hc, 0] = nrm((hc,))
        gbias[l, 0, :hc] = nrm((hc,))
        for h in range(heads):
            att[l, h, h * hidden_dim:(h + 1) * hidden_dim] = nrm((hidden_dim,))

    lin_w = np.zeros((LANE, OUT_PAD), np.float32)
    lin_w[:hc, :output_dim] = nrm((hc, output_dim))
    lin_b = np.zeros((1, OUT_PAD), np.float32)
    lin_b[0, :output_dim] = nrm((output_dim,))

    wrt = np.transpose(wr, (0, 2, 1))        # lin_r^T
    wet = np.transpose(we, (0, 2, 1))        # lin_edge^T

    return dict(
        enc_w=jnp.asarray(nrm((edge_dim, edge_dim))),
        enc_b=jnp.asarray(nrm((edge_dim,))),
        wl=jnp.asarray(wl), bl=jnp.asarray(bl),
        wrt=jnp.asarray(wrt), brt=jnp.asarray(brt),
        wet=jnp.asarray(wet), att=jnp.asarray(att),
        headmask=jnp.asarray(headmask), gbias=jnp.asarray(gbias),
        gamma=jnp.asarray(gamma), beta=jnp.asarray(beta),
        mean=jnp.asarray(mean), var=jnp.asarray(var),
        lin_w=jnp.asarray(lin_w), lin_b=jnp.asarray(lin_b),
    )


# ----------------------------------------------------------------------------
if __name__ == "__main__":
    input_dim, hidden_dim, output_dim, heads = 8, 8, 4, 2
    N, E, num_graphs = 16, 40, 2

    key = jax.random.PRNGKey(0)
    kx, ke, ks, kp = jax.random.split(key, 4)

    x = jax.random.normal(kx, (N, input_dim), dtype=F32)
    # E distinct directed edges, no self loops
    off_diag = jnp.array([i * N + j for i in range(N) for j in range(N) if i != j],
                         dtype=jnp.int32)
    sel = jax.random.permutation(ks, off_diag)[:E]
    src = sel // N
    dst = sel % N
    edge_index = jnp.stack([src, dst]).astype(jnp.int32)   # row0=src, row1=tgt
    edge_attr = jax.random.normal(ke, (E, EDGE_DIM), dtype=F32)
    batch = jnp.concatenate([jnp.zeros(N // 2, jnp.int32),
                             jnp.ones(N - N // 2, jnp.int32)])

    params = init_params(kp, input_dim, hidden_dim, output_dim, heads)

    fwd = jax.jit(functools.partial(gnn_forward,
                                    num_graphs=num_graphs,
                                    output_dim=output_dim,
                                    heads=heads))
    out = fwd(params, x, edge_index, edge_attr, batch)
    jax.block_until_ready(out)
    assert out.shape == (num_graphs, output_dim)
    assert bool(jnp.all(jnp.isfinite(out)))
    print("KERNEL_OK")
</pallas_src>

<mosaic_0001>
module attributes {stable_mosaic.version = 11 : i64} {
  func.func @_gnn_kernel(%arg0: i32, %arg1: i32, %arg2: memref<16x128xf32, #tpu.memory_space<vmem>>, %arg3: memref<16x16xf32, #tpu.memory_space<vmem>>, %arg4: memref<16x8x16xf32, #tpu.memory_space<vmem>>, %arg5: memref<1x128x128xf32, #tpu.memory_space<vmem>>, %arg6: memref<1x1x128xf32, #tpu.memory_space<vmem>>, %arg7: memref<1x128x128xf32, #tpu.memory_space<vmem>>, %arg8: memref<1x128x1xf32, #tpu.memory_space<vmem>>, %arg9: memref<1x128x8xf32, #tpu.memory_space<vmem>>, %arg10: memref<1x8x128xf32, #tpu.memory_space<vmem>>, %arg11: memref<8x128xf32, #tpu.memory_space<vmem>>, %arg12: memref<1x1x128xf32, #tpu.memory_space<vmem>>, %arg13: memref<1x1x128xf32, #tpu.memory_space<vmem>>, %arg14: memref<1x1x128xf32, #tpu.memory_space<vmem>>, %arg15: memref<1x1x128xf32, #tpu.memory_space<vmem>>, %arg16: memref<1x1x128xf32, #tpu.memory_space<vmem>>, %arg17: memref<8x16xf32, #tpu.memory_space<vmem>>, %arg18: memref<128x128xf32, #tpu.memory_space<vmem>>, %arg19: memref<1x128xf32, #tpu.memory_space<vmem>>, %arg20: memref<8x128xf32, #tpu.memory_space<vmem>>, %arg21: memref<16x128xf32, #tpu.memory_space<vmem>>, %arg22: memref<16x128xf32, #tpu.memory_space<vmem>>, %arg23: memref<128x16xf32, #tpu.memory_space<vmem>>) attributes {dimension_semantics = [#tpu.dimension_semantics<arbitrary>, #tpu.dimension_semantics<arbitrary>], iteration_bounds = array<i64: 3, 1>, scalar_prefetch = 0 : i64, scratch_operands = 3 : i64, tpu.core_type = #tpu.core_type<tc>, window_params = [{pipeline_mode = #tpu.pipeline_mode<synchronous>, transform_indices = @transform_0, window_bounds = array<i64: 16, 128>}, {transform_indices = @transform_1, window_bounds = array<i64: 16, 16>}, {transform_indices = @transform_2, window_bounds = array<i64: 16, 8, 16>}, {transform_indices = @transform_3, window_bounds = array<i64: 1, 128, 128>}, {transform_indices = @transform_4, window_bounds = array<i64: 1, 1, 128>}, {transform_indices = @transform_5, window_bounds = array<i64: 1, 128, 128>}, {transform_indices = @transform_6, window_bounds = array<i64: 1, 128, 1>}, {transform_indices = @transform_7, window_bounds = array<i64: 1, 128, 8>}, {transform_indices = @transform_8, window_bounds = array<i64: 1, 8, 128>}, {pipeline_mode = #tpu.pipeline_mode<synchronous>, transform_indices = @transform_9, window_bounds = array<i64: 8, 128>}, {transform_indices = @transform_10, window_bounds = array<i64: 1, 1, 128>}, {transform_indices = @transform_11, window_bounds = array<i64: 1, 1, 128>}, {transform_indices = @transform_12, window_bounds = array<i64: 1, 1, 128>}, {transform_indices = @transform_13, window_bounds = array<i64: 1, 1, 128>}, {transform_indices = @transform_14, window_bounds = array<i64: 1, 1, 128>}, {pipeline_mode = #tpu.pipeline_mode<synchronous>, transform_indices = @transform_15, window_bounds = array<i64: 8, 16>}, {pipeline_mode = #tpu.pipeline_mode<synchronous>, transform_indices = @transform_16, window_bounds = array<i64: 128, 128>}, {pipeline_mode = #tpu.pipeline_mode<synchronous>, transform_indices = @transform_17, window_bounds = array<i64: 1, 128>}, {pipeline_mode = #tpu.pipeline_mode<synchronous>, transform_indices = @transform_18, window_bounds = array<i64: 8, 128>}]} {
    %c0_i32 = arith.constant 0 : i32
    %0 = arith.cmpi eq, %arg0, %c0_i32 : i32
    %c0_i32_0 = arith.constant 0 : i32
    %1 = arith.cmpi eq, %arg1, %c0_i32_0 : i32
    %2 = arith.andi %0, %1 : i1
    %3 = arith.extui %2 : i1 to i32
    %c0_i32_1 = arith.constant 0 : i32
    %4 = arith.cmpi ne, %3, %c0_i32_1 : i32
    scf.if %4 {
      %c0_64 = arith.constant 0 : index
      %c0_65 = arith.constant 0 : index
      %129 = vector.load %arg2[%c0_64, %c0_65] : memref<16x128xf32, #tpu.memory_space<vmem>>, vector<16x128xf32>
      %c0_66 = arith.constant 0 : index
      %c0_67 = arith.constant 0 : index
      %130 = vector.load %arg21[%c0_66, %c0_67] : memref<16x128xf32, #tpu.memory_space<vmem>>, vector<16x128xf32>
      tpu.vector_store %arg21[%c0_66, %c0_67], %129 {strides = array<i32>} : memref<16x128xf32, #tpu.memory_space<vmem>>, vector<16x128xf32>,
    } else {
    }
    %c0_i32_2 = arith.constant 0 : i32
    %5 = arith.cmpi eq, %arg1, %c0_i32_2 : i32
    %6 = arith.extui %5 : i1 to i32
    %c0_i32_3 = arith.constant 0 : i32
    %7 = arith.cmpi ne, %6, %c0_i32_3 : i32
    scf.if %7 {
      %c0_64 = arith.constant 0 : index
      %c0_65 = arith.constant 0 : index
      %129 = vector.load %arg21[%c0_64, %c0_65] : memref<16x128xf32, #tpu.memory_space<vmem>>, vector<16x128xf32>
      %c0_66 = arith.constant 0 : index
      %c0_67 = arith.constant 0 : index
      %c0_68 = arith.constant 0 : index
      %130 = vector.load %arg5[%c0_66, %c0_67, %c0_68] : memref<1x128x128xf32, #tpu.memory_space<vmem>>, vector<1x128x128xf32>
      %131 = vector.shape_cast %130 : vector<1x128x128xf32> to vector<128x128xf32>
      %cst_69 = arith.constant dense<0.000000e+00> : vector<16x128xf32>
      %132 = tpu.matmul %129, %131, %cst_69 {dimension_numbers = #tpu.dot_dimension_numbers<[1], [0], [0], [1], [0, 0, 1, 1], [], []>} : vector<16x128xf32>, vector<128x128xf32>, vector<16x128xf32> -> vector<16x128xf32>
      %c0_70 = arith.constant 0 : index
      %c0_71 = arith.constant 0 : index
      %c0_72 = arith.constant 0 : index
      %133 = vector.load %arg6[%c0_70, %c0_71, %c0_72] : memref<1x1x128xf32, #tpu.memory_space<vmem>>, vector<1x1x128xf32>
      %134 = vector.shape_cast %133 : vector<1x1x128xf32> to vector<1x128xf32>
      %135 = vector.broadcast %134 : vector<1x128xf32> to vector<16x128xf32>
      %136 = arith.addf %132, %135 : vector<16x128xf32>
      %c0_73 = arith.constant 0 : index
      %c0_74 = arith.constant 0 : index
      %137 = vector.load %arg22[%c0_73, %c0_74] : memref<16x128xf32, #tpu.memory_space<vmem>>, vector<16x128xf32>
      tpu.vector_store %arg22[%c0_73, %c0_74], %136 {strides = array<i32>} : memref<16x128xf32, #tpu.memory_space<vmem>>, vector<16x128xf32>,
      %138 = tpu.transpose %136, [1, 0] : vector<16x128xf32> -> vector<128x16xf32>
      %c0_75 = arith.constant 0 : index
      %c0_76 = arith.constant 0 : index
      %139 = vector.load %arg23[%c0_75, %c0_76] : memref<128x16xf32, #tpu.memory_space<vmem>>, vector<128x16xf32>
      tpu.vector_store %arg23[%c0_75, %c0_76], %138 {strides = array<i32>} : memref<128x16xf32, #tpu.memory_space<vmem>>, vector<128x16xf32>,
    } else {
    }
    %c16_i32 = arith.constant 16 : i32
    %8 = arith.muli %arg1, %c16_i32 : i32
    %9 = tpu.assume_multiple %8, 16 : i32
    %10 = arith.index_cast %9 : i32 to index
    %c0 = arith.constant 0 : index
    %11 = vector.load %arg21[%10, %c0] : memref<16x128xf32, #tpu.memory_space<vmem>>, vector<16x128xf32>
    %c0_4 = arith.constant 0 : index
    %c0_5 = arith.constant 0 : index
    %12 = vector.load %arg3[%c0_4, %c0_5] : memref<16x16xf32, #tpu.memory_space<vmem>>, vector<16x16xf32>
    %c0_6 = arith.constant 0 : index
    %c0_7 = arith.constant 0 : index
    %c0_8 = arith.constant 0 : index
    %13 = vector.load %arg4[%c0_6, %c0_7, %c0_8] : memref<16x8x16xf32, #tpu.memory_space<vmem>>, vector<16x8x16xf32>
    %c0_9 = arith.constant 0 : index
    %c0_10 = arith.constant 0 : index
    %c0_11 = arith.constant 0 : index
    %14 = vector.load %arg7[%c0_9, %c0_10, %c0_11] : memref<1x128x128xf32, #tpu.memory_space<vmem>>, vector<1x128x128xf32>
    %15 = vector.shape_cast %14 : vector<1x128x128xf32> to vector<128x128xf32>
    %16 = vector.shape_cast %15 : vector<128x128xf32> to vector<1x128x128xf32>
    %17 = vector.shape_cast %11 : vector<16x128xf32> to vector<16x1x128xf32>
    %18 = vector.broadcast %16 : vector<1x128x128xf32> to vector<16x128x128xf32>
    %19 = vector.broadcast %17 : vector<16x1x128xf32> to vector<16x128x128xf32>
    %20 = arith.mulf %18, %19 : vector<16x128x128xf32>
    %cst = arith.constant dense<0.000000e+00> : vector<16x128xf32>
    %21 = vector.multi_reduction <add>, %20, %cst [2] : vector<16x128x128xf32> to vector<16x128xf32>
    %22 = vector.shape_cast %21 : vector<16x128xf32> to vector<16x128x1xf32>
    %c0_12 = arith.constant 0 : index
    %c0_13 = arith.constant 0 : index
    %c0_14 = arith.constant 0 : index
    %23 = vector.load %arg8[%c0_12, %c0_13, %c0_14] : memref<1x128x1xf32, #tpu.memory_space<vmem>>, vector<1x128x1xf32>
    %24 = vector.shape_cast %23 : vector<1x128x1xf32> to vector<128x1xf32>
    %25 = vector.shape_cast %24 : vector<128x1xf32> to vector<1x128x1xf32>
    %26 = vector.broadcast %25 : vector<1x128x1xf32> to vector<16x128x1xf32>
    %27 = arith.addf %22, %26 : vector<16x128x1xf32>
    %c0_15 = arith.constant 0 : index
    %c0_16 = arith.constant 0 : index
    %c0_17 = arith.constant 0 : index
    %28 = vector.load %arg9[%c0_15, %c0_16, %c0_17] : memref<1x128x8xf32, #tpu.memory_space<vmem>>, vector<1x128x8xf32>
    %29 = vector.shape_cast %28 : vector<1x128x8xf32> to vector<128x8xf32>
    %30 = vector.shape_cast %29 : vector<128x8xf32> to vector<1x128x8xf32>
    %31 = vector.shape_cast %30 : vector<1x128x8xf32> to vector<1x128x8xf32>
    %32 = vector.broadcast %31 : vector<1x128x8xf32> to vector<16x128x8xf32>
    "tpu.trace_start"() <{level = 10 : i32, message = "tfd,tdn->tfn"}> : () -> ()
    %cst_18 = arith.constant dense<0.000000e+00> : vector<16x128x16xf32>
    %33 = tpu.matmul %32, %13, %cst_18 {dimension_numbers = #tpu.dot_dimension_numbers<[2], [1], [1], [2], [0, 0, 0, 1, 1, 2], [0], [0]>} : vector<16x128x8xf32>, vector<16x8x16xf32>, vector<16x128x16xf32> -> vector<16x128x16xf32>
    "tpu.trace_stop"() : () -> ()
    %c0_19 = arith.constant 0 : index
    %c0_20 = arith.constant 0 : index
    %34 = vector.load %arg23[%c0_19, %c0_20] : memref<128x16xf32, #tpu.memory_space<vmem>>, vector<128x16xf32>
    %35 = vector.shape_cast %34 : vector<128x16xf32> to vector<1x128x16xf32>
    %36 = vector.broadcast %27 : vector<16x128x1xf32> to vector<16x128x16xf32>
    %37 = vector.broadcast %35 : vector<1x128x16xf32> to vector<16x128x16xf32>
    %38 = arith.addf %36, %37 : vector<16x128x16xf32>
    %39 = arith.addf %38, %33 : vector<16x128x16xf32>
    %cst_21 = arith.constant 0.000000e+00 : f32
    %40 = vector.broadcast %cst_21 : f32 to vector<16x128x16xf32>
    %41 = arith.cmpf ogt, %39, %40 : vector<16x128x16xf32>
    %cst_22 = arith.constant 2.000000e-01 : f32
    %42 = vector.broadcast %cst_22 : f32 to vector<16x128x16xf32>
    %43 = arith.mulf %42, %39 : vector<16x128x16xf32>
    %44 = arith.select %41, %39, %43 : vector<16x128x16xi1>, vector<16x128x16xf32>
    %c0_23 = arith.constant 0 : index
    %c0_24 = arith.constant 0 : index
    %c0_25 = arith.constant 0 : index
    %45 = vector.load %arg10[%c0_23, %c0_24, %c0_25] : memref<1x8x128xf32, #tpu.memory_space<vmem>>, vector<1x8x128xf32>
    %46 = vector.shape_cast %45 : vector<1x8x128xf32> to vector<8x128xf32>
    %47 = vector.shape_cast %46 : vector<8x128xf32> to vector<1x8x128xf32>
    %48 = vector.shape_cast %47 : vector<1x8x128xf32> to vector<1x8x128xf32>
    %49 = vector.broadcast %48 : vector<1x8x128xf32> to vector<16x8x128xf32>
    "tpu.trace_start"() <{level = 10 : i32, message = "thf,tfn->thn"}> : () -> ()
    %cst_26 = arith.constant dense<0.000000e+00> : vector<16x8x16xf32>
    %50 = tpu.matmul %49, %44, %cst_26 {dimension_numbers = #tpu.dot_dimension_numbers<[2], [1], [1], [2], [0, 0, 0, 1, 1, 2], [0], [0]>} : vector<16x8x128xf32>, vector<16x128x16xf32>, vector<16x8x16xf32> -> vector<16x8x16xf32>
    "tpu.trace_stop"() : () -> ()
    %51 = vector.shape_cast %12 : vector<16x16xf32> to vector<16x1x16xf32>
    %cst_27 = arith.constant 0.000000e+00 : f32
    %52 = vector.broadcast %cst_27 : f32 to vector<16x1x16xf32>
    %53 = arith.cmpf ogt, %51, %52 : vector<16x1x16xf32>
    %cst_28 = arith.constant -1.000000e+30 : f32
    %54 = vector.shape_cast %53 : vector<16x1x16xi1> to vector<16x1x16xi1>
    %55 = vector.broadcast %54 : vector<16x1x16xi1> to vector<16x8x16xi1>
    %56 = vector.broadcast %cst_28 : f32 to vector<16x8x16xf32>
    %57 = arith.select %55, %50, %56 : vector<16x8x16xi1>, vector<16x8x16xf32>
    %cst_29 = arith.constant dense<0xFF800000> : vector<16x8xf32>
    %58 = vector.multi_reduction <maximumf>, %57, %cst_29 [2] : vector<16x8x16xf32> to vector<16x8xf32>
    %59 = vector.shape_cast %58 : vector<16x8xf32> to vector<16x8x1xf32>
    %60 = vector.broadcast %59 : vector<16x8x1xf32> to vector<16x8x16xf32>
    %61 = arith.subf %57, %60 : vector<16x8x16xf32>
    %62 = math.exp %61 : vector<16x8x16xf32>
    %cst_30 = arith.constant dense<0.000000e+00> : vector<16x8xf32>
    %63 = vector.multi_reduction <add>, %62, %cst_30 [2] : vector<16x8x16xf32> to vector<16x8xf32>
    %64 = vector.shape_cast %63 : vector<16x8xf32> to vector<16x8x1xf32>
    %cst_31 = arith.constant 9.99999968E-21 : f32
    %65 = vector.broadcast %cst_31 : f32 to vector<16x8x1xf32>
    %66 = arith.maximumf %64, %65 : vector<16x8x1xf32>
    %67 = vector.broadcast %66 : vector<16x8x1xf32> to vector<16x8x16xf32>
    %68 = arith.divf %62, %67 : vector<16x8x16xf32>
    %69 = vector.shape_cast %68 : vector<16x8x16xf32> to vector<128x16xf32>
    %c0_32 = arith.constant 0 : index
    %c0_33 = arith.constant 0 : index
    %70 = vector.load %arg22[%c0_32, %c0_33] : memref<16x128xf32, #tpu.memory_space<vmem>>, vector<16x128xf32>
    %cst_34 = arith.constant dense<0.000000e+00> : vector<128x128xf32>
    %71 = tpu.matmul %69, %70, %cst_34 {dimension_numbers = #tpu.dot_dimension_numbers<[1], [0], [0], [1], [0, 0, 1, 1], [], []>} : vector<128x16xf32>, vector<16x128xf32>, vector<128x128xf32> -> vector<128x128xf32>
    %72 = vector.shape_cast %71 : vector<128x128xf32> to vector<16x8x128xf32>
    %cst_35 = arith.constant 0.000000e+00 : f32
    %73 = vector.broadcast %cst_35 : f32 to vector<16x128xf32>
    %74 = vector.extract_strided_slice %72 {offsets = [0, 0, 0], sizes = [16, 1, 128], strides = [1, 1, 1]} : vector<16x8x128xf32> to vector<16x1x128xf32>
    %75 = vector.shape_cast %74 : vector<16x1x128xf32> to vector<16x128xf32>
    %c0_36 = arith.constant 0 : index
    %c0_37 = arith.constant 0 : index
    %76 = vector.load %arg11[%c0_36, %c0_37] : memref<8x128xf32, #tpu.memory_space<vmem>>, vector<1x128xf32>
    %77 = vector.broadcast %76 : vector<1x128xf32> to vector<16x128xf32>
    %78 = arith.mulf %75, %77 : vector<16x128xf32>
    %79 = arith.addf %73, %78 : vector<16x128xf32>
    %80 = vector.extract_strided_slice %72 {offsets = [0, 1, 0], sizes = [16, 1, 128], strides = [1, 1, 1]} : vector<16x8x128xf32> to vector<16x1x128xf32>
    %81 = vector.shape_cast %80 : vector<16x1x128xf32> to vector<16x128xf32>
    %c1 = arith.constant 1 : index
    %c0_38 = arith.constant 0 : index
    %82 = vector.load %arg11[%c1, %c0_38] : memref<8x128xf32, #tpu.memory_space<vmem>>, vector<1x128xf32>
    %83 = vector.broadcast %82 : vector<1x128xf32> to vector<16x128xf32>
    %84 = arith.mulf %81, %83 : vector<16x128xf32>
    %85 = arith.addf %79, %84 : vector<16x128xf32>
    %c0_39 = arith.constant 0 : index
    %c0_40 = arith.constant 0 : index
    %c0_41 = arith.constant 0 : index
    %86 = vector.load %arg12[%c0_39, %c0_40, %c0_41] : memref<1x1x128xf32, #tpu.memory_space<vmem>>, vector<1x1x128xf32>
    %87 = vector.shape_cast %86 : vector<1x1x128xf32> to vector<1x128xf32>
    %88 = vector.broadcast %87 : vector<1x128xf32> to vector<16x128xf32>
    %89 = arith.addf %85, %88 : vector<16x128xf32>
    %c0_i32_42 = arith.constant 0 : i32
    %90 = arith.cmpi sgt, %arg0, %c0_i32_42 : i32
    %cst_43 = arith.constant 1.000000e+00 : f32
    %cst_44 = arith.constant 0.000000e+00 : f32
    %91 = arith.select %90, %cst_43, %cst_44 : f32
    %92 = vector.broadcast %91 : f32 to vector<16x128xf32>
    %93 = arith.mulf %92, %11 : vector<16x128xf32>
    %94 = arith.addf %89, %93 : vector<16x128xf32>
    %c0_45 = arith.constant 0 : index
    %c0_46 = arith.constant 0 : index
    %c0_47 = arith.constant 0 : index
    %95 = vector.load %arg16[%c0_45, %c0_46, %c0_47] : memref<1x1x128xf32, #tpu.memory_space<vmem>>, vector<1x1x128xf32>
    %96 = vector.shape_cast %95 : vector<1x1x128xf32> to vector<1x128xf32>
    %cst_48 = arith.constant 9.99999974E-6 : f32
    %97 = vector.broadcast %cst_48 : f32 to vector<1x128xf32>
    %98 = arith.addf %96, %97 : vector<1x128xf32>
    %99 = math.rsqrt %98 : vector<1x128xf32>
    %c0_49 = arith.constant 0 : index
    %c0_50 = arith.constant 0 : index
    %c0_51 = arith.constant 0 : index
    %100 = vector.load %arg15[%c0_49, %c0_50, %c0_51] : memref<1x1x128xf32, #tpu.memory_space<vmem>>, vector<1x1x128xf32>
    %101 = vector.shape_cast %100 : vector<1x1x128xf32> to vector<1x128xf32>
    %102 = vector.broadcast %101 : vector<1x128xf32> to vector<16x128xf32>
    %103 = arith.subf %94, %102 : vector<16x128xf32>
    %104 = vector.broadcast %99 : vector<1x128xf32> to vector<16x128xf32>
    %105 = arith.mulf %103, %104 : vector<16x128xf32>
    %c0_52 = arith.constant 0 : index
    %c0_53 = arith.constant 0 : index
    %c0_54 = arith.constant 0 : index
    %106 = vector.load %arg13[%c0_52, %c0_53, %c0_54] : memref<1x1x128xf32, #tpu.memory_space<vmem>>, vector<1x1x128xf32>
    %107 = vector.shape_cast %106 : vector<1x1x128xf32> to vector<1x128xf32>
    %108 = vector.broadcast %107 : vector<1x128xf32> to vector<16x128xf32>
    %109 = arith.mulf %105, %108 : vector<16x128xf32>
    %c0_55 = arith.constant 0 : index
    %c0_56 = arith.constant 0 : index
    %c0_57 = arith.constant 0 : index
    %110 = vector.load %arg14[%c0_55, %c0_56, %c0_57] : memref<1x1x128xf32, #tpu.memory_space<vmem>>, vector<1x1x128xf32>
    %111 = vector.shape_cast %110 : vector<1x1x128xf32> to vector<1x128xf32>
    %112 = vector.broadcast %111 : vector<1x128xf32> to vector<16x128xf32>
    %113 = arith.addf %109, %112 : vector<16x128xf32>
    %cst_58 = arith.constant 0.000000e+00 : f32
    %114 = vector.broadcast %cst_58 : f32 to vector<16x128xf32>
    %115 = arith.cmpf ogt, %113, %114 : vector<16x128xf32>
    %cst_59 = arith.constant 0.000000e+00 : f32
    %116 = vector.broadcast %cst_59 : f32 to vector<16x128xf32>
    %117 = arith.minimumf %113, %116 : vector<16x128xf32>
    %118 = math.exp %117 : vector<16x128xf32>
    %cst_60 = arith.constant 1.000000e+00 : f32
    %119 = vector.broadcast %cst_60 : f32 to vector<16x128xf32>
    %120 = arith.subf %118, %119 : vector<16x128xf32>
    %121 = arith.select %115, %113, %120 : vector<16x128xi1>, vector<16x128xf32>
    %122 = arith.index_cast %9 : i32 to index
    %c0_61 = arith.constant 0 : index
    %123 = vector.load %arg21[%122, %c0_61] : memref<16x128xf32, #tpu.memory_space<vmem>>, vector<16x128xf32>
    tpu.vector_store %arg21[%122, %c0_61], %121 {strides = array<i32>} : memref<16x128xf32, #tpu.memory_space<vmem>>, vector<16x128xf32>,
    %c2_i32 = arith.constant 2 : i32
    %124 = arith.cmpi eq, %arg0, %c2_i32 : i32
    %c0_i32_62 = arith.constant 0 : i32
    %125 = arith.cmpi eq, %arg1, %c0_i32_62 : i32
    %126 = arith.andi %124, %125 : i1
    %127 = arith.extui %126 : i1 to i32
    %c0_i32_63 = arith.constant 0 : i32
    %128 = arith.cmpi ne, %127, %c0_i32_63 : i32
    scf.if %128 {
      %c0_64 = arith.constant 0 : index
      %c0_65 = arith.constant 0 : index
      %129 = vector.load %arg17[%c0_64, %c0_65] : memref<8x16xf32, #tpu.memory_space<vmem>>, vector<8x16xf32>
      %c0_66 = arith.constant 0 : index
      %c0_67 = arith.constant 0 : index
      %130 = vector.load %arg21[%c0_66, %c0_67] : memref<16x128xf32, #tpu.memory_space<vmem>>, vector<16x128xf32>
      %cst_68 = arith.constant dense<0.000000e+00> : vector<8x128xf32>
      %131 = tpu.matmul %129, %130, %cst_68 {dimension_numbers = #tpu.dot_dimension_numbers<[1], [0], [0], [1], [0, 0, 1, 1], [], []>} : vector<8x16xf32>, vector<16x128xf32>, vector<8x128xf32> -> vector<8x128xf32>
      %c0_69 = arith.constant 0 : index
      %c0_70 = arith.constant 0 : index
      %132 = vector.load %arg18[%c0_69, %c0_70] : memref<128x128xf32, #tpu.memory_space<vmem>>, vector<128x128xf32>
      %cst_71 = arith.constant dense<0.000000e+00> : vector<8x128xf32>
      %133 = tpu.matmul %131, %132, %cst_71 {dimension_numbers = #tpu.dot_dimension_numbers<[1], [0], [0], [1], [0, 0, 1, 1], [], []>} : vector<8x128xf32>, vector<128x128xf32>, vector<8x128xf32> -> vector<8x128xf32>
      %c0_72 = arith.constant 0 : index
      %c0_73 = arith.constant 0 : index
      %134 = vector.load %arg19[%c0_72, %c0_73] : memref<1x128xf32, #tpu.memory_space<vmem>>, vector<1x128xf32>
      %135 = vector.broadcast %134 : vector<1x128xf32> to vector<8x128xf32>
      %136 = arith.addf %133, %135 : vector<8x128xf32>
      %c0_74 = arith.constant 0 : index
      %c0_75 = arith.constant 0 : index
      %137 = vector.load %arg20[%c0_74, %c0_75] : memref<8x128xf32, #tpu.memory_space<vmem>>, vector<8x128xf32>
      tpu.vector_store %arg20[%c0_74, %c0_75], %136 {strides = array<i32>} : memref<8x128xf32, #tpu.memory_space<vmem>>, vector<8x128xf32>,
    } else {
    }
    return
  }
  func.func @transform_0(%arg0: i32, %arg1: i32) -> (i32, i32) {
    %c0_i32 = arith.constant 0 : i32
    %c0_i32_0 = arith.constant 0 : i32
    %c0_i32_1 = arith.constant 0 : i32
    return %c0_i32, %c0_i32_0 : i32, i32
  }
  func.func @transform_1(%arg0: i32, %arg1: i32) -> (i32, i32) {
    %c0_i32 = arith.constant 0 : i32
    %c0_i32_0 = arith.constant 0 : i32
    return %arg1, %c0_i32 : i32, i32
  }
  func.func @transform_2(%arg0: i32, %arg1: i32) -> (i32, i32, i32) {
    %c0_i32 = arith.constant 0 : i32
    %c0_i32_0 = arith.constant 0 : i32
    %c0_i32_1 = arith.constant 0 : i32
    return %arg1, %c0_i32, %c0_i32_0 : i32, i32, i32
  }
  func.func @transform_3(%arg0: i32, %arg1: i32) -> (i32, i32, i32) {
    %c0_i32 = arith.constant 0 : i32
    %c0_i32_0 = arith.constant 0 : i32
    %c0_i32_1 = arith.constant 0 : i32
    return %arg0, %c0_i32, %c0_i32_0 : i32, i32, i32
  }
  func.func @transform_4(%arg0: i32, %arg1: i32) -> (i32, i32, i32) {
    %c0_i32 = arith.constant 0 : i32
    %c0_i32_0 = arith.constant 0 : i32
    %c0_i32_1 = arith.constant 0 : i32
    return %arg0, %c0_i32, %c0_i32_0 : i32, i32, i32
  }
  func.func @transform_5(%arg0: i32, %arg1: i32) -> (i32, i32, i32) {
    %c0_i32 = arith.constant 0 : i32
    %c0_i32_0 = arith.constant 0 : i32
    %c0_i32_1 = arith.constant 0 : i32
    return %arg0, %c0_i32, %c0_i32_0 : i32, i32, i32
  }
  func.func @transform_6(%arg0: i32, %arg1: i32) -> (i32, i32, i32) {
    %c0_i32 = arith.constant 0 : i32
    %c0_i32_0 = arith.constant 0 : i32
    %c0_i32_1 = arith.constant 0 : i32
    return %arg0, %c0_i32, %c0_i32_0 : i32, i32, i32
  }
  func.func @transform_7(%arg0: i32, %arg1: i32) -> (i32, i32, i32) {
    %c0_i32 = arith.constant 0 : i32
    %c0_i32_0 = arith.constant 0 : i32
    %c0_i32_1 = arith.constant 0 : i32
    return %arg0, %c0_i32, %c0_i32_0 : i32, i32, i32
  }
  func.func @transform_8(%arg0: i32, %arg1: i32) -> (i32, i32, i32) {
    %c0_i32 = arith.constant 0 : i32
    %c0_i32_0 = arith.constant 0 : i32
    %c0_i32_1 = arith.constant 0 : i32
    return %arg0, %c0_i32, %c0_i32_0 : i32, i32, i32
  }
  func.func @transform_9(%arg0: i32, %arg1: i32) -> (i32, i32) {
    %c0_i32 = arith.constant 0 : i32
    %c0_i32_0 = arith.constant 0 : i32
    %c0_i32_1 = arith.constant 0 : i32
    return %c0_i32, %c0_i32_0 : i32, i32
  }
  func.func @transform_10(%arg0: i32, %arg1: i32) -> (i32, i32, i32) {
    %c0_i32 = arith.constant 0 : i32
    %c0_i32_0 = arith.constant 0 : i32
    %c0_i32_1 = arith.constant 0 : i32
    return %arg0, %c0_i32, %c0_i32_0 : i32, i32, i32
  }
  func.func @transform_11(%arg0: i32, %arg1: i32) -> (i32, i32, i32) {
    %c0_i32 = arith.constant 0 : i32
    %c0_i32_0 = arith.constant 0 : i32
    %c0_i32_1 = arith.constant 0 : i32
    return %arg0, %c0_i32, %c0_i32_0 : i32, i32, i32
  }
  func.func @transform_12(%arg0: i32, %arg1: i32) -> (i32, i32, i32) {
    %c0_i32 = arith.constant 0 : i32
    %c0_i32_0 = arith.constant 0 : i32
    %c0_i32_1 = arith.constant 0 : i32
    return %arg0, %c0_i32, %c0_i32_0 : i32, i32, i32
  }
  func.func @transform_13(%arg0: i32, %arg1: i32) -> (i32, i32, i32) {
    %c0_i32 = arith.constant 0 : i32
    %c0_i32_0 = arith.constant 0 : i32
    %c0_i32_1 = arith.constant 0 : i32
    return %arg0, %c0_i32, %c0_i32_0 : i32, i32, i32
  }
  func.func @transform_14(%arg0: i32, %arg1: i32) -> (i32, i32, i32) {
    %c0_i32 = arith.constant 0 : i32
    %c0_i32_0 = arith.constant 0 : i32
    %c0_i32_1 = arith.constant 0 : i32
    return %arg0, %c0_i32, %c0_i32_0 : i32, i32, i32
  }
  func.func @transform_15(%arg0: i32, %arg1: i32) -> (i32, i32) {
    %c0_i32 = arith.constant 0 : i32
    %c0_i32_0 = arith.constant 0 : i32
    %c0_i32_1 = arith.constant 0 : i32
    return %c0_i32, %c0_i32_0 : i32, i32
  }
  func.func @transform_16(%arg0: i32, %arg1: i32) -> (i32, i32) {
    %c0_i32 = arith.constant 0 : i32
    %c0_i32_0 = arith.constant 0 : i32
    %c0_i32_1 = arith.constant 0 : i32
    return %c0_i32, %c0_i32_0 : i32, i32
  }
  func.func @transform_17(%arg0: i32, %arg1: i32) -> (i32, i32) {
    %c0_i32 = arith.constant 0 : i32
    %c0_i32_0 = arith.constant 0 : i32
    %c0_i32_1 = arith.constant 0 : i32
    return %c0_i32, %c0_i32_0 : i32, i32
  }
  func.func @transform_18(%arg0: i32, %arg1: i32) -> (i32, i32) {
    %c0_i32 = arith.constant 0 : i32
    %c0_i32_0 = arith.constant 0 : i32
    %c0_i32_1 = arith.constant 0 : i32
    return %c0_i32, %c0_i32_0 : i32, i32
  }
}

</mosaic_0001>

<llo_original>
// kernel: gnn_forward.1
$region0: #{gnn_forward.1}
  #allocation0 [shape = 'u32[]', space=smem, size = 0x4, offset = 0x4, fixed_abs, tag = 'smem constant byte address 0x4 - core index']
  #allocation1 [shape = 'u32[72,128]{1,0:T(1,128)}', space=vmem, size = 0x9000, scoped, tag = 'internal scratch']
  #allocation2 [shape = 'f32[16,128]{1,0:T(8,128)}', space=vmem, size = 0x2000, scoped, tag = 'scratch operand']
  #allocation3 [shape = 'f32[16,128]{1,0:T(8,128)}', space=vmem, size = 0x2000, scoped, tag = 'scratch operand']
  #allocation4 [shape = 'f32[128,16]{1,0:T(8,128)}', space=vmem, size = 0x10000, scoped, tag = 'scratch operand']
  %s0 = inlined_call_operand.vmem [shape: f32[16,128], index: 0, kind: input, shape index: {}]
  %s1 = inlined_call_operand.vmem [shape: f32[16,16], index: 1, kind: input, shape index: {}]
  %s2 = inlined_call_operand.vmem [shape: f32[16,8,16], index: 2, kind: input, shape index: {}]
  %s3 = inlined_call_operand.vmem [shape: f32[3,128,128], index: 3, kind: input, shape index: {}]
  %s4 = inlined_call_operand.vmem [shape: f32[3,1,128], index: 4, kind: input, shape index: {}]
  %s5 = inlined_call_operand.vmem [shape: f32[3,128,128], index: 5, kind: input, shape index: {}]
  %s6 = inlined_call_operand.vmem [shape: f32[3,128,1], index: 6, kind: input, shape index: {}]
  %s7 = inlined_call_operand.vmem [shape: f32[3,128,8], index: 7, kind: input, shape index: {}]
  %s8 = inlined_call_operand.vmem [shape: f32[3,8,128], index: 8, kind: input, shape index: {}]
  %s9 = inlined_call_operand.vmem [shape: f32[8,128], index: 9, kind: input, shape index: {}]
  %s10 = inlined_call_operand.vmem [shape: f32[3,1,128], index: 10, kind: input, shape index: {}]
  %s11 = inlined_call_operand.vmem [shape: f32[3,1,128], index: 11, kind: input, shape index: {}]
  %s12 = inlined_call_operand.vmem [shape: f32[3,1,128], index: 12, kind: input, shape index: {}]
  %s13 = inlined_call_operand.vmem [shape: f32[3,1,128], index: 13, kind: input, shape index: {}]
  %s14 = inlined_call_operand.vmem [shape: f32[3,1,128], index: 14, kind: input, shape index: {}]
  %s15 = inlined_call_operand.vmem [shape: f32[8,16], index: 15, kind: input, shape index: {}]
  %s16 = inlined_call_operand.vmem [shape: f32[128,128], index: 16, kind: input, shape index: {}]
  %s17 = inlined_call_operand.vmem [shape: f32[1,128], index: 17, kind: input, shape index: {}]
  %s18 = inlined_call_operand.vmem [shape: f32[8,128], index: 18, kind: output, shape index: {}]
  %s19 = sld [smem:[#allocation0]]
  $region117: #{gnn_forward.1} parent=0
    _
  %s21 = ssub.s32 1, %s19
  %s22 = scalar_select 0, %s21, %s19
  loop: start=0, step=1, limit=5
  $region2: #{gnn_forward.1} parent=0 // loop_pre_header
    _
  $region3: #{gnn_forward.1} parent=0 // loop_header
    %s24 = sphi 0, %s28
    %p25 = scmp.ge.s32.totalorder %s24, 5
    %s31 = sphi 0, %s43
    %s32 = sphi 0, %s39
    %s33 = sphi 0, %s31
    %s34 = sphi 0, %s32
    %s35 = sphi 0, %s33
    %s36 = sphi 0, %s34
    %s44 = sphi 0, %s44
    %s46 = sphi 0, %s44
    %s47 = sphi 0, %s46
    %s61 = sphi 0, %s47
    %s67 = sphi 0, %s69
    %s70 = sphi 0, %s67
    %s71 = sphi 0, %s70
    %s87 = sphi 0, %s71
    %s93 = sphi 0, %s95
    %s96 = sphi 0, %s93
    %s97 = sphi 0, %s96
    %s113 = sphi 0, %s97
    %s119 = sphi 0, %s121
    %s122 = sphi 0, %s119
    %s123 = sphi 0, %s122
    %s139 = sphi 0, %s123
    %s145 = sphi 0, %s147
    %s148 = sphi 0, %s145
    %s149 = sphi 0, %s148
    %s165 = sphi 0, %s149
    %s171 = sphi 0, %s173
    %s174 = sphi 0, %s171
    %s175 = sphi 0, %s174
    %s191 = sphi 0, %s175
    %s197 = sphi 0, %s199
    %s200 = sphi 0, %s197
    %s201 = sphi 0, %s200
    %s217 = sphi 0, %s201
    %s223 = sphi 0, %s225
    %s226 = sphi 0, %s223
    %s227 = sphi 0, %s226
    %s243 = sphi 0, %s227
    %s249 = sphi 0, %s251
    %s252 = sphi 0, %s249
    %s253 = sphi 0, %s252
    %s269 = sphi 0, %s253
    %s273 = sphi 0, %s273
    %s275 = sphi 0, %s273
    %s276 = sphi 0, %s275
    %s290 = sphi 0, %s276
    %s296 = sphi 0, %s298
    %s299 = sphi 0, %s296
    %s300 = sphi 0, %s299
    %s316 = sphi 0, %s300
    %s322 = sphi 0, %s324
    %s325 = sphi 0, %s322
    %s326 = sphi 0, %s325
    %s342 = sphi 0, %s326
    %s348 = sphi 0, %s350
    %s351 = sphi 0, %s348
    %s352 = sphi 0, %s351
    %s368 = sphi 0, %s352
    %s374 = sphi 0, %s376
    %s377 = sphi 0, %s374
    %s378 = sphi 0, %s377
    %s394 = sphi 0, %s378
    %s400 = sphi 0, %s402
    %s403 = sphi 0, %s400
    %s404 = sphi 0, %s403
    %s420 = sphi 0, %s404
    %s424 = sphi 0, %s424
    %s426 = sphi 0, %s424
    %s427 = sphi 0, %s426
    %s441 = sphi 0, %s427
    %s445 = sphi 0, %s445
    %s447 = sphi 0, %s445
    %s448 = sphi 0, %s447
    %s462 = sphi 0, %s448
    %s466 = sphi 0, %s466
    %s468 = sphi 0, %s466
    %s469 = sphi 0, %s468
    %s483 = sphi 0, %s469
    %s487 = sphi 0, %s487
    %s489 = sphi 0, %s487
    %s490 = sphi 0, %s489
    %s504 = sphi 0, %s490
  $region4: #{gnn_forward.1} parent=0 // loop_header_branch
    %27 = sbr.rel (%p25) target = $region8
  $region5: #{gnn_forward.1} parent=0 // loop_body
    %s29 = ssub.s32 %s24, 1
    %s30 = ssub.s32 %s24, 2
    %s37 = sadd.s32 1, %s32
    %p38 = scmp.ge.s32.totalorder %s37, 1
    %s39 = scalar_select %p38, 0, %s37
    %s40 = sadd.s32 1, %s31
    %s41 = scalar_select %p38, %s40, %s31
    %p42 = scmp.ge.s32.totalorder %s41, 3
    %s43 = scalar_select %p42, 0, %s41
    %s45 = sadd.s32 %s44, 1
    %p48 = scmp.eq.s32.totalorder %s24, 2
    %p49 = scmp.ne.s32.totalorder %s44, %s46
    %p50 = scmp.eq.s32.totalorder %s24, 0
    %p51 = por %p49, %p50
    %p52 = scmp.ne.s32.totalorder %s44, %s46
    %p53 = scmp.eq.s32.totalorder %s29, 2
    %p54 = por %p52, %p53
    %p55 = scmp.ne.s32.totalorder %s46, %s47
    %p56 = scmp.eq.s32.totalorder %s29, 0
    %p57 = por %p55, %p56
    %p58 = scmp.ne.s32.totalorder %s46, %s47
    %p59 = scmp.eq.s32.totalorder %s30, 2
    %p60 = por %p58, %p59
    %p62 = scmp.ne.s32.totalorder %s47, %s61
    %p63 = scmp.eq.s32.totalorder %s30, 0
    %p64 = por %p62, %p63
    %s65 = ssub.s32 %s32, %s39
    %p66 = scmp.eq.s32.totalorder %s65, 0
    %s68 = sadd.s32 %s67, 1
    %s69 = scalar_select %p66, %s67, %s68
    %p72 = pneg %p66
    %p73 = scmp.eq.s32.totalorder %s24, 2
    %p74 = por %p72, %p73
    %p75 = scmp.ne.s32.totalorder %s67, %s70
    %p76 = scmp.eq.s32.totalorder %s24, 0
    %p77 = por %p75, %p76
    %p78 = scmp.ne.s32.totalorder %s67, %s70
    %p79 = scmp.eq.s32.totalorder %s29, 2
    %p80 = por %p78, %p79
    %p81 = scmp.ne.s32.totalorder %s70, %s71
    %p82 = scmp.eq.s32.totalorder %s29, 0
    %p83 = por %p81, %p82
    %p84 = scmp.ne.s32.totalorder %s70, %s71
    %p85 = scmp.eq.s32.totalorder %s30, 2
    %p86 = por %p84, %p85
    %p88 = scmp.ne.s32.totalorder %s71, %s87
    %p89 = scmp.eq.s32.totalorder %s30, 0
    %p90 = por %p88, %p89
    %s91 = ssub.s32 %s32, %s39
    %p92 = scmp.eq.s32.totalorder %s91, 0
    %s94 = sadd.s32 %s93, 1
    %s95 = scalar_select %p92, %s93, %s94
    %p98 = pneg %p92
    %p99 = scmp.eq.s32.totalorder %s24, 2
    %p100 = por %p98, %p99
    %p101 = scmp.ne.s32.totalorder %s93, %s96
    %p102 = scmp.eq.s32.totalorder %s24, 0
    %p103 = por %p101, %p102
    %p104 = scmp.ne.s32.totalorder %s93, %s96
    %p105 = scmp.eq.s32.totalorder %s29, 2
    %p106 = por %p104, %p105
    %p107 = scmp.ne.s32.totalorder %s96, %s97
    %p108 = scmp.eq.s32.totalorder %s29, 0
    %p109 = por %p107, %p108
    %p110 = scmp.ne.s32.totalorder %s96, %s97
    %p111 = scmp.eq.s32.totalorder %s30, 2
    %p112 = por %p110, %p111
    %p114 = scmp.ne.s32.totalorder %s97, %s113
    %p115 = scmp.eq.s32.totalorder %s30, 0
    %p116 = por %p114, %p115
    %s117 = ssub.s32 %s31, %s43
    %p118 = scmp.eq.s32.totalorder %s117, 0
    %s120 = sadd.s32 %s119, 1
    %s121 = scalar_select %p118, %s119, %s120
    %p124 = pneg %p118
    %p125 = scmp.eq.s32.totalorder %s24, 2
    %p126 = por %p124, %p125
    %p127 = scmp.ne.s32.totalorder %s119, %s122
    %p128 = scmp.eq.s32.totalorder %s24, 0
    %p129 = por %p127, %p128
    %p130 = scmp.ne.s32.totalorder %s119, %s122
    %p131 = scmp.eq.s32.totalorder %s29, 2
    %p132 = por %p130, %p131
    %p133 = scmp.ne.s32.totalorder %s122, %s123
    %p134 = scmp.eq.s32.totalorder %s29, 0
    %p135 = por %p133, %p134
    %p136 = scmp.ne.s32.totalorder %s122, %s123
    %p137 = scmp.eq.s32.totalorder %s30, 2
    %p138 = por %p136, %p137
    %p140 = scmp.ne.s32.totalorder %s123, %s139
    %p141 = scmp.eq.s32.totalorder %s30, 0
    %p142 = por %p140, %p141
    %s143 = ssub.s32 %s31, %s43
    %p144 = scmp.eq.s32.totalorder %s143, 0
    %s146 = sadd.s32 %s145, 1
    %s147 = scalar_select %p144, %s145, %s146
    %p150 = pneg %p144
    %p151 = scmp.eq.s32.totalorder %s24, 2
    %p152 = por %p150, %p151
    %p153 = scmp.ne.s32.totalorder %s145, %s148
    %p154 = scmp.eq.s32.totalorder %s24, 0
    %p155 = por %p153, %p154
    %p156 = scmp.ne.s32.totalorder %s145, %s148
    %p157 = scmp.eq.s32.totalorder %s29, 2
    %p158 = por %p156, %p157
    %p159 = scmp.ne.s32.totalorder %s148, %s149
    %p160 = scmp.eq.s32.totalorder %s29, 0
    %p161 = por %p159, %p160
    %p162 = scmp.ne.s32.totalorder %s148, %s149
    %p163 = scmp.eq.s32.totalorder %s30, 2
    %p164 = por %p162, %p163
    %p166 = scmp.ne.s32.totalorder %s149, %s165
    %p167 = scmp.eq.s32.totalorder %s30, 0
    %p168 = por %p166, %p167
    %s169 = ssub.s32 %s31, %s43
    %p170 = scmp.eq.s32.totalorder %s169, 0
    %s172 = sadd.s32 %s171, 1
    %s173 = scalar_select %p170, %s171, %s172
    %p176 = pneg %p170
    %p177 = scmp.eq.s32.totalorder %s24, 2
    %p178 = por %p176, %p177
    %p179 = scmp.ne.s32.totalorder %s171, %s174
    %p180 = scmp.eq.s32.totalorder %s24, 0
    %p181 = por %p179, %p180
    %p182 = scmp.ne.s32.totalorder %s171, %s174
    %p183 = scmp.eq.s32.totalorder %s29, 2
    %p184 = por %p182, %p183
    %p185 = scmp.ne.s32.totalorder %s174, %s175
    %p186 = scmp.eq.s32.totalorder %s29, 0
    %p187 = por %p185, %p186
    %p188 = scmp.ne.s32.totalorder %s174, %s175
    %p189 = scmp.eq.s32.totalorder %s30, 2
    %p190 = por %p188, %p189
    %p192 = scmp.ne.s32.totalorder %s175, %s191
    %p193 = scmp.eq.s32.totalorder %s30, 0
    %p194 = por %p192, %p193
    %s195 = ssub.s32 %s31, %s43
    %p196 = scmp.eq.s32.totalorder %s195, 0
    %s198 = sadd.s32 %s197, 1
    %s199 = scalar_select %p196, %s197, %s198
    %p202 = pneg %p196
    %p203 = scmp.eq.s32.totalorder %s24, 2
    %p204 = por %p202, %p203
    %p205 = scmp.ne.s32.totalorder %s197, %s200
    %p206 = scmp.eq.s32.totalorder %s24, 0
    %p207 = por %p205, %p206
    %p208 = scmp.ne.s32.totalorder %s197, %s200
    %p209 = scmp.eq.s32.totalorder %s29, 2
    %p210 = por %p208, %p209
    %p211 = scmp.ne.s32.totalorder %s200, %s201
    %p212 = scmp.eq.s32.totalorder %s29, 0
    %p213 = por %p211, %p212
    %p214 = scmp.ne.s32.totalorder %s200, %s201
    %p215 = scmp.eq.s32.totalorder %s30, 2
    %p216 = por %p214, %p215
    %p218 = scmp.ne.s32.totalorder %s201, %s217
    %p219 = scmp.eq.s32.totalorder %s30, 0
    %p220 = por %p218, %p219
    %s221 = ssub.s32 %s31, %s43
    %p222 = scmp.eq.s32.totalorder %s221, 0
    %s224 = sadd.s32 %s223, 1
    %s225 = scalar_select %p222, %s223, %s224
    %p228 = pneg %p222
    %p229 = scmp.eq.s32.totalorder %s24, 2
    %p230 = por %p228, %p229
    %p231 = scmp.ne.s32.totalorder %s223, %s226
    %p232 = scmp.eq.s32.totalorder %s24, 0
    %p233 = por %p231, %p232
    %p234 = scmp.ne.s32.totalorder %s223, %s226
    %p235 = scmp.eq.s32.totalorder %s29, 2
    %p236 = por %p234, %p235
    %p237 = scmp.ne.s32.totalorder %s226, %s227
    %p238 = scmp.eq.s32.totalorder %s29, 0
    %p239 = por %p237, %p238
    %p240 = scmp.ne.s32.totalorder %s226, %s227
    %p241 = scmp.eq.s32.totalorder %s30, 2
    %p242 = por %p240, %p241
    %p244 = scmp.ne.s32.totalorder %s227, %s243
    %p245 = scmp.eq.s32.totalorder %s30, 0
    %p246 = por %p244, %p245
    %s247 = ssub.s32 %s31, %s43
    %p248 = scmp.eq.s32.totalorder %s247, 0
    %s250 = sadd.s32 %s249, 1
    %s251 = scalar_select %p248, %s249, %s250
    %p254 = pneg %p248
    %p255 = scmp.eq.s32.totalorder %s24, 2
    %p256 = por %p254, %p255
    %p257 = scmp.ne.s32.totalorder %s249, %s252
    %p258 = scmp.eq.s32.totalorder %s24, 0
    %p259 = por %p257, %p258
    %p260 = scmp.ne.s32.totalorder %s249, %s252
    %p261 = scmp.eq.s32.totalorder %s29, 2
    %p262 = por %p260, %p261
    %p263 = scmp.ne.s32.totalorder %s252, %s253
    %p264 = scmp.eq.s32.totalorder %s29, 0
    %p265 = por %p263, %p264
    %p266 = scmp.ne.s32.totalorder %s252, %s253
    %p267 = scmp.eq.s32.totalorder %s30, 2
    %p268 = por %p266, %p267
    %p270 = scmp.ne.s32.totalorder %s253, %s269
    %p271 = scmp.eq.s32.totalorder %s30, 0
    %p272 = por %p270, %p271
    %s274 = sadd.s32 %s273, 1
    %p277 = scmp.eq.s32.totalorder %s24, 2
    %p278 = scmp.ne.s32.totalorder %s273, %s275
    %p279 = scmp.eq.s32.totalorder %s24, 0
    %p280 = por %p278, %p279
    %p281 = scmp.ne.s32.totalorder %s273, %s275
    %p282 = scmp.eq.s32.totalorder %s29, 2
    %p283 = por %p281, %p282
    %p284 = scmp.ne.s32.totalorder %s275, %s276
    %p285 = scmp.eq.s32.totalorder %s29, 0
    %p286 = por %p284, %p285
    %p287 = scmp.ne.s32.totalorder %s275, %s276
    %p288 = scmp.eq.s32.totalorder %s30, 2
    %p289 = por %p287, %p288
    %p291 = scmp.ne.s32.totalorder %s276, %s290
    %p292 = scmp.eq.s32.totalorder %s30, 0
    %p293 = por %p291, %p292
    %s294 = ssub.s32 %s31, %s43
    %p295 = scmp.eq.s32.totalorder %s294, 0
    %s297 = sadd.s32 %s296, 1
    %s298 = scalar_select %p295, %s296, %s297
    %p301 = pneg %p295
    %p302 = scmp.eq.s32.totalorder %s24, 2
    %p303 = por %p301, %p302
    %p304 = scmp.ne.s32.totalorder %s296, %s299
    %p305 = scmp.eq.s32.totalorder %s24, 0
    %p306 = por %p304, %p305
    %p307 = scmp.ne.s32.totalorder %s296, %s299
    %p308 = scmp.eq.s32.totalorder %s29, 2
    %p309 = por %p307, %p308
    %p310 = scmp.ne.s32.totalorder %s299, %s300
    %p311 = scmp.eq.s32.totalorder %s29, 0
    %p312 = por %p310, %p311
    %p313 = scmp.ne.s32.totalorder %s299, %s300
    %p314 = scmp.eq.s32.totalorder %s30, 2
    %p315 = por %p313, %p314
    %p317 = scmp.ne.s32.totalorder %s300, %s316
    %p318 = scmp.eq.s32.totalorder %s30, 0
    %p319 = por %p317, %p318
    %s320 = ssub.s32 %s31, %s43
    %p321 = scmp.eq.s32.totalorder %s320, 0
    %s323 = sadd.s32 %s322, 1
    %s324 = scalar_select %p321, %s322, %s323
    %p327 = pneg %p321
    %p328 = scmp.eq.s32.totalorder %s24, 2
    %p329 = por %p327, %p328
    %p330 = scmp.ne.s32.totalorder %s322, %s325
    %p331 = scmp.eq.s32.totalorder %s24, 0
    %p332 = por %p330, %p331
    %p333 = scmp.ne.s32.totalorder %s322, %s325
    %p334 = scmp.eq.s32.totalorder %s29, 2
    %p335 = por %p333, %p334
    %p336 = scmp.ne.s32.totalorder %s325, %s326
    %p337 = scmp.eq.s32.totalorder %s29, 0
    %p338 = por %p336, %p337
    %p339 = scmp.ne.s32.totalorder %s325, %s326
    %p340 = scmp.eq.s32.totalorder %s30, 2
    %p341 = por %p339, %p340
    %p343 = scmp.ne.s32.totalorder %s326, %s342
    %p344 = scmp.eq.s32.totalorder %s30, 0
    %p345 = por %p343, %p344
    %s346 = ssub.s32 %s31, %s43
    %p347 = scmp.eq.s32.totalorder %s346, 0
    %s349 = sadd.s32 %s348, 1
    %s350 = scalar_select %p347, %s348, %s349
    %p353 = pneg %p347
    %p354 = scmp.eq.s32.totalorder %s24, 2
    %p355 = por %p353, %p354
    %p356 = scmp.ne.s32.totalorder %s348, %s351
    %p357 = scmp.eq.s32.totalorder %s24, 0
    %p358 = por %p356, %p357
    %p359 = scmp.ne.s32.totalorder %s348, %s351
    %p360 = scmp.eq.s32.totalorder %s29, 2
    %p361 = por %p359, %p360
    %p362 = scmp.ne.s32.totalorder %s351, %s352
    %p363 = scmp.eq.s32.totalorder %s29, 0
    %p364 = por %p362, %p363
    %p365 = scmp.ne.s32.totalorder %s351, %s352
    %p366 = scmp.eq.s32.totalorder %s30, 2
    %p367 = por %p365, %p366
    %p369 = scmp.ne.s32.totalorder %s352, %s368
    %p370 = scmp.eq.s32.totalorder %s30, 0
    %p371 = por %p369, %p370
    %s372 = ssub.s32 %s31, %s43
    %p373 = scmp.eq.s32.totalorder %s372, 0
    %s375 = sadd.s32 %s374, 1
    %s376 = scalar_select %p373, %s374, %s375
    %p379 = pneg %p373
    %p380 = scmp.eq.s32.totalorder %s24, 2
    %p381 = por %p379, %p380
    %p382 = scmp.ne.s32.totalorder %s374, %s377
    %p383 = scmp.eq.s32.totalorder %s24, 0
    %p384 = por %p382, %p383
    %p385 = scmp.ne.s32.totalorder %s374, %s377
    %p386 = scmp.eq.s32.totalorder %s29, 2
    %p387 = por %p385, %p386
    %p388 = scmp.ne.s32.totalorder %s377, %s378
    %p389 = scmp.eq.s32.totalorder %s29, 0
    %p390 = por %p388, %p389
    %p391 = scmp.ne.s32.totalorder %s377, %s378
    %p392 = scmp.eq.s32.totalorder %s30, 2
    %p393 = por %p391, %p392
    %p395 = scmp.ne.s32.totalorder %s378, %s394
    %p396 = scmp.eq.s32.totalorder %s30, 0
    %p397 = por %p395, %p396
    %s398 = ssub.s32 %s31, %s43
    %p399 = scmp.eq.s32.totalorder %s398, 0
    %s401 = sadd.s32 %s400, 1
    %s402 = scalar_select %p399, %s400, %s401
    %p405 = pneg %p399
    %p406 = scmp.eq.s32.totalorder %s24, 2
    %p407 = por %p405, %p406
    %p408 = scmp.ne.s32.totalorder %s400, %s403
    %p409 = scmp.eq.s32.totalorder %s24, 0
    %p410 = por %p408, %p409
    %p411 = scmp.ne.s32.totalorder %s400, %s403
    %p412 = scmp.eq.s32.totalorder %s29, 2
    %p413 = por %p411, %p412
    %p414 = scmp.ne.s32.totalorder %s403, %s404
    %p415 = scmp.eq.s32.totalorder %s29, 0
    %p416 = por %p414, %p415
    %p417 = scmp.ne.s32.totalorder %s403, %s404
    %p418 = scmp.eq.s32.totalorder %s30, 2
    %p419 = por %p417, %p418
    %p421 = scmp.ne.s32.totalorder %s404, %s420
    %p422 = scmp.eq.s32.totalorder %s30, 0
    %p423 = por %p421, %p422
    %s425 = sadd.s32 %s424, 1
    %p428 = scmp.eq.s32.totalorder %s24, 2
    %p429 = scmp.ne.s32.totalorder %s424, %s426
    %p430 = scmp.eq.s32.totalorder %s24, 0
    %p431 = por %p429, %p430
    %p432 = scmp.ne.s32.totalorder %s424, %s426
    %p433 = scmp.eq.s32.totalorder %s29, 2
    %p434 = por %p432, %p433
    %p435 = scmp.ne.s32.totalorder %s426, %s427
    %p436 = scmp.eq.s32.totalorder %s29, 0
    %p437 = por %p435, %p436
    %p438 = scmp.ne.s32.totalorder %s426, %s427
    %p439 = scmp.eq.s32.totalorder %s30, 2
    %p440 = por %p438, %p439
    %p442 = scmp.ne.s32.totalorder %s427, %s441
    %p443 = scmp.eq.s32.totalorder %s30, 0
    %p444 = por %p442, %p443
    %s446 = sadd.s32 %s445, 1
    %p449 = scmp.eq.s32.totalorder %s24, 2
    %p450 = scmp.ne.s32.totalorder %s445, %s447
    %p451 = scmp.eq.s32.totalorder %s24, 0
    %p452 = por %p450, %p451
    %p453 = scmp.ne.s32.totalorder %s445, %s447
    %p454 = scmp.eq.s32.totalorder %s29, 2
    %p455 = por %p453, %p454
    %p456 = scmp.ne.s32.totalorder %s447, %s448
    %p457 = scmp.eq.s32.totalorder %s29, 0
    %p458 = por %p456, %p457
    %p459 = scmp.ne.s32.totalorder %s447, %s448
    %p460 = scmp.eq.s32.totalorder %s30, 2
    %p461 = por %p459, %p460
    %p463 = scmp.ne.s32.totalorder %s448, %s462
    %p464 = scmp.eq.s32.totalorder %s30, 0
    %p465 = por %p463, %p464
    %s467 = sadd.s32 %s466, 1
    %p470 = scmp.eq.s32.totalorder %s24, 2
    %p471 = scmp.ne.s32.totalorder %s466, %s468
    %p472 = scmp.eq.s32.totalorder %s24, 0
    %p473 = por %p471, %p472
    %p474 = scmp.ne.s32.totalorder %s466, %s468
    %p475 = scmp.eq.s32.totalorder %s29, 2
    %p476 = por %p474, %p475
    %p477 = scmp.ne.s32.totalorder %s468, %s469
    %p478 = scmp.eq.s32.totalorder %s29, 0
    %p479 = por %p477, %p478
    %p480 = scmp.ne.s32.totalorder %s468, %s469
    %p481 = scmp.eq.s32.totalorder %s30, 2
    %p482 = por %p480, %p481
    %p484 = scmp.ne.s32.totalorder %s469, %s483
    %p485 = scmp.eq.s32.totalorder %s30, 0
    %p486 = por %p484, %p485
    %s488 = sadd.s32 %s487, 1
    %p491 = scmp.eq.s32.totalorder %s24, 2
    %p492 = scmp.ne.s32.totalorder %s487, %s489
    %p493 = scmp.eq.s32.totalorder %s24, 0
    %p494 = por %p492, %p493
    %p495 = scmp.ne.s32.totalorder %s487, %s489
    %p496 = scmp.eq.s32.totalorder %s29, 2
    %p497 = por %p495, %p496
    %p498 = scmp.ne.s32.totalorder %s489, %s490
    %p499 = scmp.eq.s32.totalorder %s29, 0
    %p500 = por %p498, %p499
    %p501 = scmp.ne.s32.totalorder %s489, %s490
    %p502 = scmp.eq.s32.totalorder %s30, 2
    %p503 = por %p501, %p502
    %p505 = scmp.ne.s32.totalorder %s490, %s504
    %p506 = scmp.eq.s32.totalorder %s30, 0
    %p507 = por %p505, %p506
    %p508 = scmp.le.s32.totalorder 1, %s24
    %p509 = scmp.lt.s32.totalorder %s24, 4
    %p510 = pnand %p508, %p509
    %p511 = pneg %p510
    // Predicated region
    $region9: #{gnn_forward.1} parent=5 // pred_check
      _
    $region10: #{gnn_forward.1} parent=5 // pred_check_branch
      %513 = sbr.rel (%p510) target = $region12
    $region11: #{gnn_forward.1} parent=5 // pred_region
      %s514 = ssub.s32 %s24, 1
      // Predicated region
      $region13: #{gnn_forward.1} parent=11 // pred_check
        %p515 = pneg %p57
      $region14: #{gnn_forward.1} parent=11 // pred_check_branch
        %517 = sbr.rel (%p515) target = $region16
      $region15: #{gnn_forward.1} parent=11 // pred_region
        _
      $region16: #{gnn_forward.1} parent=11 // pred_fallthru
        _
      // Predicated region
      $region17: #{gnn_forward.1} parent=11 // pred_check
        %p518 = pneg %p83
      $region18: #{gnn_forward.1} parent=11 // pred_check_branch
        %520 = sbr.rel (%p518) target = $region20
      $region19: #{gnn_forward.1} parent=11 // pred_region
        %s521 = smul.u32 2, %s34
        %p522 = scmp.lt.s32.totalorder %s521, 1
        %s523 = scalar_select %p522, %s521, 1
        %s524 = smul.addr %s523, 8
        %s525 = scalar_lea.vmem %s1, %s524
        %s526 = smul.u32 2, %s34
      $region20: #{gnn_forward.1} parent=11 // pred_fallthru
        _
      // Predicated region
      $region21: #{gnn_forward.1} parent=11 // pred_check
        %p527 = pneg %p109
      $region22: #{gnn_forward.1} parent=11 // pred_check_branch
        %529 = sbr.rel (%p527) target = $region24
      $region23: #{gnn_forward.1} parent=11 // pred_region
        %s530 = smul.u32 16, %s34
        %p531 = scmp.lt.s32.totalorder %s530, 15
        %s532 = scalar_select %p531, %s530, 15
        %s533 = smul.addr %s532, 8
        %s534 = scalar_lea.vmem %s2, %s533
        %s535 = smul.u32 16, %s34
      $region24: #{gnn_forward.1} parent=11 // pred_fallthru
        _
      // Predicated region
      $region25: #{gnn_forward.1} parent=11 // pred_check
        %p536 = pneg %p286
      $region26: #{gnn_forward.1} parent=11 // pred_check_branch
        %538 = sbr.rel (%p536) target = $region28
      $region27: #{gnn_forward.1} parent=11 // pred_region
        _
      $region28: #{gnn_forward.1} parent=11 // pred_fallthru
        _
      // Predicated region
      $region29: #{gnn_forward.1} parent=11 // pred_check
        %p539 = pneg %p437
      $region30: #{gnn_forward.1} parent=11 // pred_check_branch
        %541 = sbr.rel (%p539) target = $region32
      $region31: #{gnn_forward.1} parent=11 // pred_region
        _
      $region32: #{gnn_forward.1} parent=11 // pred_fallthru
        _
      // Predicated region
      $region33: #{gnn_forward.1} parent=11 // pred_check
        %p542 = pneg %p458
      $region34: #{gnn_forward.1} parent=11 // pred_check_branch
        %544 = sbr.rel (%p542) target = $region36
      $region35: #{gnn_forward.1} parent=11 // pred_region
        _
      $region36: #{gnn_forward.1} parent=11 // pred_fallthru
        _
      // Predicated region
      $region37: #{gnn_forward.1} parent=11 // pred_check
        %p545 = pneg %p479
      $region38: #{gnn_forward.1} parent=11 // pred_check_branch
        %547 = sbr.rel (%p545) target = $region40
      $region39: #{gnn_forward.1} parent=11 // pred_region
        _
      $region40: #{gnn_forward.1} parent=11 // pred_fallthru
        _
    $region12: #{gnn_forward.1} parent=5 // pred_fallthru
      _
    %p548 = scmp.lt.s32.totalorder %s24, 3
    // Predicated region
    $region41: #{gnn_forward.1} parent=5 // pred_check
      %p549 = pneg %p548
    $region42: #{gnn_forward.1} parent=5 // pred_check_branch
      %551 = sbr.rel (%p549) target = $region44
    $region43: #{gnn_forward.1} parent=5 // pred_region
      // Predicated region
      $region45: #{gnn_forward.1} parent=43 // pred_check
        %p552 = pneg %p129
      $region46: #{gnn_forward.1} parent=43 // pred_check_branch
        %554 = sbr.rel (%p552) target = $region48
      $region47: #{gnn_forward.1} parent=43 // pred_region
        %p555 = scmp.lt.s32.totalorder %s31, 2
        %s556 = scalar_select %p555, %s31, 2
        %s557 = smul.addr %s556, 16
        %s558 = smul.addr %s557, 8
        %s559 = scalar_lea.vmem %s3, %s558
      $region48: #{gnn_forward.1} parent=43 // pred_fallthru
        _
      // Predicated region
      $region49: #{gnn_forward.1} parent=43 // pred_check
        %p560 = pneg %p155
      $region50: #{gnn_forward.1} parent=43 // pred_check_branch
        %562 = sbr.rel (%p560) target = $region52
      $region51: #{gnn_forward.1} parent=43 // pred_region
        %p563 = scmp.lt.s32.totalorder %s31, 2
        %s564 = scalar_select %p563, %s31, 2
        %s565 = scalar_lea.vmem %s4, %s564
      $region52: #{gnn_forward.1} parent=43 // pred_fallthru
        _
      // Predicated region
      $region53: #{gnn_forward.1} parent=43 // pred_check
        %p566 = pneg %p181
      $region54: #{gnn_forward.1} parent=43 // pred_check_branch
        %568 = sbr.rel (%p566) target = $region56
      $region55: #{gnn_forward.1} parent=43 // pred_region
        %p569 = scmp.lt.s32.totalorder %s31, 2
        %s570 = scalar_select %p569, %s31, 2
        %s571 = smul.addr %s570, 16
        %s572 = smul.addr %s571, 8
        %s573 = scalar_lea.vmem %s5, %s572
      $region56: #{gnn_forward.1} parent=43 // pred_fallthru
        _
      // Predicated region
      $region57: #{gnn_forward.1} parent=43 // pred_check
        %p574 = pneg %p207
      $region58: #{gnn_forward.1} parent=43 // pred_check_branch
        %576 = sbr.rel (%p574) target = $region60
      $region59: #{gnn_forward.1} parent=43 // pred_region
        %p577 = scmp.lt.s32.totalorder %s31, 2
        %s578 = scalar_select %p577, %s31, 2
        %s579 = smul.addr %s578, 16
        %s580 = smul.addr %s579, 8
        %s581 = scalar_lea.vmem %s6, %s580
      $region60: #{gnn_forward.1} parent=43 // pred_fallthru
        _
      // Predicated region
      $region61: #{gnn_forward.1} parent=43 // pred_check
        %p582 = pneg %p233
      $region62: #{gnn_forward.1} parent=43 // pred_check_branch
        %584 = sbr.rel (%p582) target = $region64
      $region63: #{gnn_forward.1} parent=43 // pred_region
        %p585 = scmp.lt.s32.totalorder %s31, 2
        %s586 = scalar_select %p585, %s31, 2
        %s587 = smul.addr %s586, 16
        %s588 = smul.addr %s587, 8
        %s589 = scalar_lea.vmem %s7, %s588
      $region64: #{gnn_forward.1} parent=43 // pred_fallthru
        _
      // Predicated region
      $region65: #{gnn_forward.1} parent=43 // pred_check
        %p590 = pneg %p259
      $region66: #{gnn_forward.1} parent=43 // pred_check_branch
        %592 = sbr.rel (%p590) target = $region68
      $region67: #{gnn_forward.1} parent=43 // pred_region
        %p593 = scmp.lt.s32.totalorder %s31, 2
        %s594 = scalar_select %p593, %s31, 2
        %s595 = smul.addr %s594, 8
        %s596 = scalar_lea.vmem %s8, %s595
      $region68: #{gnn_forward.1} parent=43 // pred_fallthru
        _
      // Predicated region
      $region69: #{gnn_forward.1} parent=43 // pred_check
        %p597 = pneg %p306
      $region70: #{gnn_forward.1} parent=43 // pred_check_branch
        %599 = sbr.rel (%p597) target = $region72
      $region71: #{gnn_forward.1} parent=43 // pred_region
        %p600 = scmp.lt.s32.totalorder %s31, 2
        %s601 = scalar_select %p600, %s31, 2
        %s602 = scalar_lea.vmem %s10, %s601
      $region72: #{gnn_forward.1} parent=43 // pred_fallthru
        _
      // Predicated region
      $region73: #{gnn_forward.1} parent=43 // pred_check
        %p603 = pneg %p332
      $region74: #{gnn_forward.1} parent=43 // pred_check_branch
        %605 = sbr.rel (%p603) target = $region76
      $region75: #{gnn_forward.1} parent=43 // pred_region
        %p606 = scmp.lt.s32.totalorder %s31, 2
        %s607 = scalar_select %p606, %s31, 2
        %s608 = scalar_lea.vmem %s11, %s607
      $region76: #{gnn_forward.1} parent=43 // pred_fallthru
        _
      // Predicated region
      $region77: #{gnn_forward.1} parent=43 // pred_check
        %p609 = pneg %p358
      $region78: #{gnn_forward.1} parent=43 // pred_check_branch
        %611 = sbr.rel (%p609) target = $region80
      $region79: #{gnn_forward.1} parent=43 // pred_region
        %p612 = scmp.lt.s32.totalorder %s31, 2
        %s613 = scalar_select %p612, %s31, 2
        %s614 = scalar_lea.vmem %s12, %s613
      $region80: #{gnn_forward.1} parent=43 // pred_fallthru
        _
      // Predicated region
      $region81: #{gnn_forward.1} parent=43 // pred_check
        %p615 = pneg %p384
      $region82: #{gnn_forward.1} parent=43 // pred_check_branch
        %617 = sbr.rel (%p615) target = $region84
      $region83: #{gnn_forward.1} parent=43 // pred_region
        %p618 = scmp.lt.s32.totalorder %s31, 2
        %s619 = scalar_select %p618, %s31, 2
        %s620 = scalar_lea.vmem %s13, %s619
      $region84: #{gnn_forward.1} parent=43 // pred_fallthru
        _
      // Predicated region
      $region85: #{gnn_forward.1} parent=43 // pred_check
        %p621 = pneg %p410
      $region86: #{gnn_forward.1} parent=43 // pred_check_branch
        %623 = sbr.rel (%p621) target = $region88
      $region87: #{gnn_forward.1} parent=43 // pred_region
        %p624 = scmp.lt.s32.totalorder %s31, 2
        %s625 = scalar_select %p624, %s31, 2
        %s626 = scalar_lea.vmem %s14, %s625
      $region88: #{gnn_forward.1} parent=43 // pred_fallthru
        _
    $region44: #{gnn_forward.1} parent=5 // pred_fallthru
      _
    %p627 = scmp.le.s32.totalorder 1, %s24
    %p628 = scmp.lt.s32.totalorder %s24, 4
    %p629 = pnand %p627, %p628
    %p630 = pneg %p629
    // Predicated region
    $region89: #{gnn_forward.1} parent=5 // pred_check
      _
    $region90: #{gnn_forward.1} parent=5 // pred_check_branch
      %632 = sbr.rel (%p629) target = $region92
    $region91: #{gnn_forward.1} parent=5 // pred_region
      %s633 = ssub.s32 %s24, 1
      %p634 = pneg %p57
      %p635 = pneg %p54
      %s636 = smul.u32 2, %s34
      %p637 = scmp.lt.s32.totalorder %s636, 1
      %s638 = scalar_select %p637, %s636, 1
      %s639 = smul.addr %s638, 8
      %s640 = scalar_lea.vmem %s1, %s639
      %p641 = pneg %p83
      %p642 = pneg %p80
      %s643 = smul.u32 16, %s34
      %p644 = scmp.lt.s32.totalorder %s643, 15
      %s645 = scalar_select %p644, %s643, 15
      %s646 = smul.addr %s645, 8
      %s647 = scalar_lea.vmem %s2, %s646
      %p648 = pneg %p109
      %p649 = pneg %p106
      %p650 = scmp.lt.s32.totalorder %s33, 2
      %s651 = scalar_select %p650, %s33, 2
      %s652 = smul.addr %s651, 16
      %s653 = smul.addr %s652, 8
      %s654 = scalar_lea.vmem %s3, %s653
      %p655 = pneg %p135
      %p656 = pneg %p132
      %p657 = scmp.lt.s32.totalorder %s33, 2
      %s658 = scalar_select %p657, %s33, 2
      %s659 = scalar_lea.vmem %s4, %s658
      %p660 = pneg %p161
      %p661 = pneg %p158
      %p662 = scmp.lt.s32.totalorder %s33, 2
      %s663 = scalar_select %p662, %s33, 2
      %s664 = smul.addr %s663, 16
      %s665 = smul.addr %s664, 8
      %s666 = scalar_lea.vmem %s5, %s665
      %p667 = pneg %p187
      %p668 = pneg %p184
      %p669 = scmp.lt.s32.totalorder %s33, 2
      %s670 = scalar_select %p669, %s33, 2
      %s671 = smul.addr %s670, 16
      %s672 = smul.addr %s671, 8
      %s673 = scalar_lea.vmem %s6, %s672
      %p674 = pneg %p213
      %p675 = pneg %p210
      %p676 = scmp.lt.s32.totalorder %s33, 2
      %s677 = scalar_select %p676, %s33, 2
      %s678 = smul.addr %s677, 16
      %s679 = smul.addr %s678, 8
      %s680 = scalar_lea.vmem %s7, %s679
      %p681 = pneg %p239
      %p682 = pneg %p236
      %p683 = scmp.lt.s32.totalorder %s33, 2
      %s684 = scalar_select %p683, %s33, 2
      %s685 = smul.addr %s684, 8
      %s686 = scalar_lea.vmem %s8, %s685
      %p687 = pneg %p265
      %p688 = pneg %p262
      %p689 = pneg %p286
      %p690 = pneg %p283
      %p691 = scmp.lt.s32.totalorder %s33, 2
      %s692 = scalar_select %p691, %s33, 2
      %s693 = scalar_lea.vmem %s10, %s692
      %p694 = pneg %p312
      %p695 = pneg %p309
      %p696 = scmp.lt.s32.totalorder %s33, 2
      %s697 = scalar_select %p696, %s33, 2
      %s698 = scalar_lea.vmem %s11, %s697
      %p699 = pneg %p338
      %p700 = pneg %p335
      %p701 = scmp.lt.s32.totalorder %s33, 2
      %s702 = scalar_select %p701, %s33, 2
      %s703 = scalar_lea.vmem %s12, %s702
      %p704 = pneg %p364
      %p705 = pneg %p361
      %p706 = scmp.lt.s32.totalorder %s33, 2
      %s707 = scalar_select %p706, %s33, 2
      %s708 = scalar_lea.vmem %s13, %s707
      %p709 = pneg %p390
      %p710 = pneg %p387
      %p711 = scmp.lt.s32.totalorder %s33, 2
      %s712 = scalar_select %p711, %s33, 2
      %s713 = scalar_lea.vmem %s14, %s712
      %p714 = pneg %p416
      %p715 = pneg %p413
      %p716 = pneg %p437
      %p717 = pneg %p434
      %p718 = pneg %p458
      %p719 = pneg %p455
      %p720 = pneg %p479
      %p721 = pneg %p476
      %p722 = pneg %p500
      %p723 = pneg %p497
      %s724 = smul.u32 2, %s34
      %p725 = scmp.lt.s32.totalorder %s724, 1
      %s726 = scalar_select %p725, %s724, 1
      %s727 = smul.addr %s726, 8
      %s728 = scalar_lea.vmem %s1, %s727
      %s729 = smul.u32 2, %s34
      %s730 = smul.u32 16, %s34
      %p731 = scmp.lt.s32.totalorder %s730, 15
      %s732 = scalar_select %p731, %s730, 15
      %s733 = smul.addr %s732, 8
      %s734 = scalar_lea.vmem %s2, %s733
      %s735 = smul.u32 16, %s34
      %p736 = scmp.lt.s32.totalorder %s33, 2
      %s737 = scalar_select %p736, %s33, 2
      %s738 = smul.addr %s737, 16
      %s739 = smul.addr %s738, 8
      %s740 = scalar_lea.vmem %s3, %s739
      %p741 = scmp.lt.s32.totalorder %s33, 2
      %s742 = scalar_select %p741, %s33, 2
      %s743 = scalar_lea.vmem %s4, %s742
      %p744 = scmp.lt.s32.totalorder %s33, 2
      %s745 = scalar_select %p744, %s33, 2
      %s746 = smul.addr %s745, 16
      %s747 = smul.addr %s746, 8
      %s748 = scalar_lea.vmem %s5, %s747
      %p749 = scmp.lt.s32.totalorder %s33, 2
      %s750 = scalar_select %p749, %s33, 2
      %s751 = smul.addr %s750, 16
      %s752 = smul.addr %s751, 8
      %s753 = scalar_lea.vmem %s6, %s752
      %p754 = scmp.lt.s32.totalorder %s33, 2
      %s755 = scalar_select %p754, %s33, 2
      %s756 = smul.addr %s755, 16
      %s757 = smul.addr %s756, 8
      %s758 = scalar_lea.vmem %s7, %s757
      %p759 = scmp.lt.s32.totalorder %s33, 2
      %s760 = scalar_select %p759, %s33, 2
      %s761 = smul.addr %s760, 8
      %s762 = scalar_lea.vmem %s8, %s761
      %p763 = scmp.lt.s32.totalorder %s33, 2
      %s764 = scalar_select %p763, %s33, 2
      %s765 = scalar_lea.vmem %s10, %s764
      %p766 = scmp.lt.s32.totalorder %s33, 2
      %s767 = scalar_select %p766, %s33, 2
      %s768 = scalar_lea.vmem %s11, %s767
      %p769 = scmp.lt.s32.totalorder %s33, 2
      %s770 = scalar_select %p769, %s33, 2
      %s771 = scalar_lea.vmem %s12, %s770
      %p772 = scmp.lt.s32.totalorder %s33, 2
      %s773 = scalar_select %p772, %s33, 2
      %s774 = scalar_lea.vmem %s13, %s773
      %p775 = scmp.lt.s32.totalorder %s33, 2
      %s776 = scalar_select %p775, %s33, 2
      %s777 = scalar_lea.vmem %s14, %s776
      %p778 = scmp.eq.s32.totalorder %s33, 0
      %p779 = scmp.eq.s32.totalorder %s34, 0
      %p780 = pnand %p778, %p779
      %p781 = pneg %p780
      // Predicated region
      $region93: #{gnn_forward.1} parent=91 // pred_check
        _
      $region94: #{gnn_forward.1} parent=91 // pred_check_branch
        %783 = sbr.rel (%p780) target = $region96
      $region95: #{gnn_forward.1} parent=91 // pred_region
        %v784 = vld [vmem:[%s0] sm:$0xff]
        %v785 = vld [vmem:[%s0 + $0x8] sm:$0xff]
        %786 = vst [vmem:[#allocation2] sm:$0xff] %v784
        %787 = vst [vmem:[#allocation2 + $0x8] sm:$0xff] %v785
      $region96: #{gnn_forward.1} parent=91 // pred_fallthru
        _
      // Predicated region
      $region97: #{gnn_forward.1} parent=91 // pred_check
        %p788 = pneg %p779
      $region98: #{gnn_forward.1} parent=91 // pred_check_branch
        %790 = sbr.rel (%p788) target = $region100
      $region99: #{gnn_forward.1} parent=91 // pred_region
        %v791 = vld [vmem:[#allocation2] sm:$0xff]
        %v792 = vld [vmem:[#allocation2 + $0x8] sm:$0xff]
        %v793 = vld [vmem:[%s740] sm:$0xff]
        %v794 = vld [vmem:[%s740 + $0x8] sm:$0xff]
        %v795 = vld [vmem:[%s740 + $0x10] sm:$0xff]
        %v796 = vld [vmem:[%s740 + $0x18] sm:$0xff]
        %v797 = vld [vmem:[%s740 + $0x20] sm:$0xff]
        %v798 = vld [vmem:[%s740 + $0x28] sm:$0xff]
        %v799 = vld [vmem:[%s740 + $0x30] sm:$0xff]
        %v800 = vld [vmem:[%s740 + $0x38] sm:$0xff]
        %v801 = vld [vmem:[%s740 + $0x40] sm:$0xff]
        %v802 = vld [vmem:[%s740 + $0x48] sm:$0xff]
        %v803 = vld [vmem:[%s740 + $0x50] sm:$0xff]
        %v804 = vld [vmem:[%s740 + $0x58] sm:$0xff]
        %v805 = vld [vmem:[%s740 + $0x60] sm:$0xff]
        %v806 = vld [vmem:[%s740 + $0x68] sm:$0xff]
        %v807 = vld [vmem:[%s740 + $0x70] sm:$0xff]
        %v808 = vld [vmem:[%s740 + $0x78] sm:$0xff]
        %v809 = vld [vmem:[%s743] sm:$0x1]
        %v811 = vperm.slane %v809, 0
        %813 = vmatpush.msra.mxu0 %v808
        %814 = vmatpush.msra.mxu0 %v807
        %815 = vmatpush.msra.mxu0 %v806
        %816 = vmatpush.msra.mxu0 %v805
        %817 = vmatpush.msra.mxu0 %v804
        %818 = vmatpush.msra.mxu0 %v803
        %819 = vmatpush.msra.mxu0 %v802
        %820 = vmatpush.msra.mxu0 %v801
        %821 = vmatpush.msra.mxu0 %v800
        %822 = vmatpush.msra.mxu0 %v799
        %823 = vmatpush.msra.mxu0 %v798
        %824 = vmatpush.msra.mxu0 %v797
        %825 = vmatpush.msra.mxu0 %v796
        %826 = vmatpush.msra.mxu0 %v795
        %827 = vmatpush.msra.mxu0 %v794
        %828 = vmatpush.msra.mxu0 %v793
        %829 = vmatmul.f32.gmra.mxu0 %v791
        %v830 = vpop.f32.mrf.mxu0
        %v831 = vadd.f32 %v811, %v830
        %832 = vmatmul.f32.gmra.mxu0 %v792
        %v833 = vpop.f32.mrf.mxu0
        %v834 = vadd.f32 %v811, %v833
        %835 = vdwg.mxu0
        %836 = vst [vmem:[#allocation3] sm:$0xff] %v831
        %837 = vst [vmem:[#allocation3 + $0x8] sm:$0xff] %v834
        %838 = vxpose.xlu0.b32.start [1/16] %v831, 128
        %839 = vxpose.xlu0.b32.cont [2/16] %v834, 128
        %840 = vxpose.xlu0.b32.cont [3/16] 0.0, 128
        %841 = vxpose.xlu0.b32.cont [4/16] 0.0, 128
        %842 = vxpose.xlu0.b32.cont [5/16] 0.0, 128
        %843 = vxpose.xlu0.b32.cont [6/16] 0.0, 128
        %844 = vxpose.xlu0.b32.cont [7/16] 0.0, 128
        %845 = vxpose.xlu0.b32.cont [8/16] 0.0, 128
        %846 = vxpose.xlu0.b32.cont [9/16] 0.0, 128
        %847 = vxpose.xlu0.b32.cont [10/16] 0.0, 128
        %848 = vxpose.xlu0.b32.cont [11/16] 0.0, 128
        %849 = vxpose.xlu0.b32.cont [12/16] 0.0, 128
        %850 = vxpose.xlu0.b32.cont [13/16] 0.0, 128
        %851 = vxpose.xlu0.b32.cont [14/16] 0.0, 128
        %852 = vxpose.xlu0.b32.cont [15/16] 0.0, 128
        %853 = vxpose.xlu0.b32.end [16/16] 0.0, 128
        %v854 = vpop.trf.xlu0
        %v855 = vpop.trf.xlu0
        %v856 = vpop.trf.xlu0
        %v857 = vpop.trf.xlu0
        %v858 = vpop.trf.xlu0
        %v859 = vpop.trf.xlu0
        %v860 = vpop.trf.xlu0
        %v861 = vpop.trf.xlu0
        %v862 = vpop.trf.xlu0
        %v863 = vpop.trf.xlu0
        %v864 = vpop.trf.xlu0
        %v865 = vpop.trf.xlu0
        %v866 = vpop.trf.xlu0
        %v867 = vpop.trf.xlu0
        %v868 = vpop.trf.xlu0
        %v869 = vpop.trf.xlu0
        %vm870 = vcmask 130048
        %871 = vst.msk [vmem:[#allocation4] sm:$0xff] %vm870, %v854
        %872 = vst.msk [vmem:[#allocation4 + $0x8] sm:$0xff] %vm870, %v855
        %873 = vst.msk [vmem:[#allocation4 + $0x10] sm:$0xff] %vm870, %v856
        %874 = vst.msk [vmem:[#allocation4 + $0x18] sm:$0xff] %vm870, %v857
        %875 = vst.msk [vmem:[#allocation4 + $0x20] sm:$0xff] %vm870, %v858
        %876 = vst.msk [vmem:[#allocation4 + $0x28] sm:$0xff] %vm870, %v859
        %877 = vst.msk [vmem:[#allocation4 + $0x30] sm:$0xff] %vm870, %v860
        %878 = vst.msk [vmem:[#allocation4 + $0x38] sm:$0xff] %vm870, %v861
        %879 = vst.msk [vmem:[#allocation4 + $0x40] sm:$0xff] %vm870, %v862
        %880 = vst.msk [vmem:[#allocation4 + $0x48] sm:$0xff] %vm870, %v863
        %881 = vst.msk [vmem:[#allocation4 + $0x50] sm:$0xff] %vm870, %v864
        %882 = vst.msk [vmem:[#allocation4 + $0x58] sm:$0xff] %vm870, %v865
        %883 = vst.msk [vmem:[#allocation4 + $0x60] sm:$0xff] %vm870, %v866
        %884 = vst.msk [vmem:[#allocation4 + $0x68] sm:$0xff] %vm870, %v867
        %885 = vst.msk [vmem:[#allocation4 + $0x70] sm:$0xff] %vm870, %v868
        %886 = vst.msk [vmem:[#allocation4 + $0x78] sm:$0xff] %vm870, %v869
      $region100: #{gnn_forward.1} parent=91 // pred_fallthru
        _
      %s887 = smul.u32 %s34, 16
      %s888 = scalar_lea.vmem [#allocation2], %s887
      %v889 = vld [vmem:[%s888] sm:$0xff]
      %v890 = vld [vmem:[%s888 + $0x8] sm:$0xff]
      %v891 = vld [vmem:[%s728] sm:$0xff]
      %v892 = vld [vmem:[%s728 + $0x8] sm:$0xff]
      %v893 = vld [vmem:[%s734] sm:$0xff]
      %v894 = vld [vmem:[%s734 + $0x8] sm:$0xff]
      %v895 = vld [vmem:[%s734 + $0x10] sm:$0xff]
      %v896 = vld [vmem:[%s734 + $0x18] sm:$0xff]
      %v897 = vld [vmem:[%s734 + $0x20] sm:$0xff]
      %v898 = vld [vmem:[%s734 + $0x28] sm:$0xff]
      %v899 = vld [vmem:[%s734 + $0x30] sm:$0xff]
      %v900 = vld [vmem:[%s734 + $0x38] sm:$0xff]
      %v901 = vld [vmem:[%s734 + $0x40] sm:$0xff]
      %v902 = vld [vmem:[%s734 + $0x48] sm:$0xff]
      %v903 = vld [vmem:[%s734 + $0x50] sm:$0xff]
      %v904 = vld [vmem:[%s734 + $0x58] sm:$0xff]
      %v905 = vld [vmem:[%s734 + $0x60] sm:$0xff]
      %v906 = vld [vmem:[%s734 + $0x68] sm:$0xff]
      %v907 = vld [vmem:[%s734 + $0x70] sm:$0xff]
      %v908 = vld [vmem:[%s734 + $0x78] sm:$0xff]
      %v909 = vld [vmem:[%s748] sm:$0xff]
      %v910 = vld [vmem:[%s748 + $0x8] sm:$0xff]
      %v911 = vld [vmem:[%s748 + $0x10] sm:$0xff]
      %v912 = vld [vmem:[%s748 + $0x18] sm:$0xff]
      %v913 = vld [vmem:[%s748 + $0x20] sm:$0xff]
      %v914 = vld [vmem:[%s748 + $0x28] sm:$0xff]
      %v915 = vld [vmem:[%s748 + $0x30] sm:$0xff]
      %v916 = vld [vmem:[%s748 + $0x38] sm:$0xff]
      %v917 = vld [vmem:[%s748 + $0x40] sm:$0xff]
      %v918 = vld [vmem:[%s748 + $0x48] sm:$0xff]
      %v919 = vld [vmem:[%s748 + $0x50] sm:$0xff]
      %v920 = vld [vmem:[%s748 + $0x58] sm:$0xff]
      %v921 = vld [vmem:[%s748 + $0x60] sm:$0xff]
      %v922 = vld [vmem:[%s748 + $0x68] sm:$0xff]
      %v923 = vld [vmem:[%s748 + $0x70] sm:$0xff]
      %v924 = vld [vmem:[%s748 + $0x78] sm:$0xff]
      %v927 = vrot.slane %v889, 1
      %v928 = vrot.slane %v889, 2
      %v929 = vrot.slane %v889, 3
      %v930 = vrot.slane %v889, 4
      %v931 = vrot.slane %v889, 5
      %v932 = vrot.slane %v889, 6
      %v933 = vrot.slane %v889, 7
      %v934 = vrot.slane %v890, 1
      %v935 = vrot.slane %v890, 2
      %v936 = vrot.slane %v890, 3
      %v937 = vrot.slane %v890, 4
      %v938 = vrot.slane %v890, 5
      %v939 = vrot.slane %v890, 6
      %v940 = vrot.slane %v890, 7
      %v941 = vperm.slane %v889, 0
      %v942 = vperm.slane %v927, 0
      %v943 = vperm.slane %v928, 0
      %v944 = vperm.slane %v929, 0
      %v945 = vperm.slane %v930, 0
      %v946 = vperm.slane %v931, 0
      %v947 = vperm.slane %v932, 0
      %v948 = vperm.slane %v933, 0
      %v949 = vperm.slane %v890, 0
      %v950 = vperm.slane %v934, 0
      %v951 = vperm.slane %v935, 0
      %v952 = vperm.slane %v936, 0
      %v953 = vperm.slane %v937, 0
      %v954 = vperm.slane %v938, 0
      %v955 = vperm.slane %v939, 0
      %v956 = vperm.slane %v940, 0
      %v973 = vmul.f32 %v909, %v941
      %v974 = vmul.f32 %v910, %v941
      %v975 = vmul.f32 %v911, %v941
      %v976 = vmul.f32 %v912, %v941
      %v977 = vmul.f32 %v913, %v941
      %v978 = vmul.f32 %v914, %v941
      %v979 = vmul.f32 %v915, %v941
      %v980 = vmul.f32 %v916, %v941
      %v981 = vmul.f32 %v917, %v941
      %v982 = vmul.f32 %v918, %v941
      %v983 = vmul.f32 %v919, %v941
      %v984 = vmul.f32 %v920, %v941
      %v985 = vmul.f32 %v921, %v941
      %v986 = vmul.f32 %v922, %v941
      %v987 = vmul.f32 %v923, %v941
      %v988 = vmul.f32 %v924, %v941
      %v989 = vmul.f32 %v909, %v942
      %v990 = vmul.f32 %v910, %v942
      %v991 = vmul.f32 %v911, %v942
      %v992 = vmul.f32 %v912, %v942
      %v993 = vmul.f32 %v913, %v942
      %v994 = vmul.f32 %v914, %v942
      %v995 = vmul.f32 %v915, %v942
      %v996 = vmul.f32 %v916, %v942
      %v997 = vmul.f32 %v917, %v942
      %v998 = vmul.f32 %v918, %v942
      %v999 = vmul.f32 %v919, %v942
      %v1000 = vmul.f32 %v920, %v942
      %v1001 = vmul.f32 %v921, %v942
      %v1002 = vmul.f32 %v922, %v942
      %v1003 = vmul.f32 %v923, %v942
      %v1004 = vmul.f32 %v924, %v942
      %v1005 = vmul.f32 %v909, %v943
      %v1006 = vmul.f32 %v910, %v943
      %v1007 = vmul.f32 %v911, %v943
      %v1008 = vmul.f32 %v912, %v943
      %v1009 = vmul.f32 %v913, %v943
      %v1010 = vmul.f32 %v914, %v943
      %v1011 = vmul.f32 %v915, %v943
      %v1012 = vmul.f32 %v916, %v943
      %v1013 = vmul.f32 %v917, %v943
      %v1014 = vmul.f32 %v918, %v943
      %v1015 = vmul.f32 %v919, %v943
      %v1016 = vmul.f32 %v920, %v943
      %v1017 = vmul.f32 %v921, %v943
      %v1018 = vmul.f32 %v922, %v943
      %v1019 = vmul.f32 %v923, %v943
      %v1020 = vmul.f32 %v924, %v943
      %v1021 = vmul.f32 %v909, %v944
      %v1022 = vmul.f32 %v910, %v944
      %v1023 = vmul.f32 %v911, %v944
      %v1024 = vmul.f32 %v912, %v944
      %v1025 = vmul.f32 %v913, %v944
      %v1026 = vmul.f32 %v914, %v944
      %v1027 = vmul.f32 %v915, %v944
      %v1028 = vmul.f32 %v916, %v944
      %v1029 = vmul.f32 %v917, %v944
      %v1030 = vmul.f32 %v918, %v944
      %v1031 = vmul.f32 %v919, %v944
      %v1032 = vmul.f32 %v920, %v944
      %v1033 = vmul.f32 %v921, %v944
      %v1034 = vmul.f32 %v922, %v944
      %v1035 = vmul.f32 %v923, %v944
      %v1036 = vmul.f32 %v924, %v944
      %v1037 = vmul.f32 %v909, %v945
      %v1038 = vmul.f32 %v910, %v945
      %v1039 = vmul.f32 %v911, %v945
      %v1040 = vmul.f32 %v912, %v945
      %v1041 = vmul.f32 %v913, %v945
      %v1042 = vmul.f32 %v914, %v945
      %v1043 = vmul.f32 %v915, %v945
      %v1044 = vmul.f32 %v916, %v945
      %v1045 = vmul.f32 %v917, %v945
      %v1046 = vmul.f32 %v918, %v945
      %v1047 = vmul.f32 %v919, %v945
      %v1048 = vmul.f32 %v920, %v945
      %v1049 = vmul.f32 %v921, %v945
      %v1050 = vmul.f32 %v922, %v945
      %v1051 = vmul.f32 %v923, %v945
      %v1052 = vmul.f32 %v924, %v945
      %v1053 = vmul.f32 %v909, %v946
      %v1054 = vmul.f32 %v910, %v946
      %v1055 = vmul.f32 %v911, %v946
      %v1056 = vmul.f32 %v912, %v946
      %v1057 = vmul.f32 %v913, %v946
      %v1058 = vmul.f32 %v914, %v946
      %v1059 = vmul.f32 %v915, %v946
      %v1060 = vmul.f32 %v916, %v946
      %v1061 = vmul.f32 %v917, %v946
      %v1062 = vmul.f32 %v918, %v946
      %v1063 = vmul.f32 %v919, %v946
      %v1064 = vmul.f32 %v920, %v946
      %v1065 = vmul.f32 %v921, %v946
      %v1066 = vmul.f32 %v922, %v946
      %v1067 = vmul.f32 %v923, %v946
      %v1068 = vmul.f32 %v924, %v946
      %v1069 = vmul.f32 %v909, %v947
      %v1070 = vmul.f32 %v910, %v947
      %v1071 = vmul.f32 %v911, %v947
      %v1072 = vmul.f32 %v912, %v947
      %v1073 = vmul.f32 %v913, %v947
      %v1074 = vmul.f32 %v914, %v947
      %v1075 = vmul.f32 %v915, %v947
      %v1076 = vmul.f32 %v916, %v947
      %v1077 = vmul.f32 %v917, %v947
      %v1078 = vmul.f32 %v918, %v947
      %v1079 = vmul.f32 %v919, %v947
      %v1080 = vmul.f32 %v920, %v947
      %v1081 = vmul.f32 %v921, %v947
      %v1082 = vmul.f32 %v922, %v947
      %v1083 = vmul.f32 %v923, %v947
      %v1084 = vmul.f32 %v924, %v947
      %v1085 = vmul.f32 %v909, %v948
      %v1086 = vmul.f32 %v910, %v948
      %v1087 = vmul.f32 %v911, %v948
      %v1088 = vmul.f32 %v912, %v948
      %v1089 = vmul.f32 %v913, %v948
      %v1090 = vmul.f32 %v914, %v948
      %v1091 = vmul.f32 %v915, %v948
      %v1092 = vmul.f32 %v916, %v948
      %v1093 = vmul.f32 %v917, %v948
      %v1094 = vmul.f32 %v918, %v948
      %v1095 = vmul.f32 %v919, %v948
      %v1096 = vmul.f32 %v920, %v948
      %v1097 = vmul.f32 %v921, %v948
      %v1098 = vmul.f32 %v922, %v948
      %v1099 = vmul.f32 %v923, %v948
      %v1100 = vmul.f32 %v924, %v948
      %v1101 = vmul.f32 %v909, %v949
      %v1102 = vmul.f32 %v910, %v949
      %v1103 = vmul.f32 %v911, %v949
      %v1104 = vmul.f32 %v912, %v949
      %v1105 = vmul.f32 %v913, %v949
      %v1106 = vmul.f32 %v914, %v949
      %v1107 = vmul.f32 %v915, %v949
      %v1108 = vmul.f32 %v916, %v949
      %v1109 = vmul.f32 %v917, %v949
      %v1110 = vmul.f32 %v918, %v949
      %v1111 = vmul.f32 %v919, %v949
      %v1112 = vmul.f32 %v920, %v949
      %v1113 = vmul.f32 %v921, %v949
      %v1114 = vmul.f32 %v922, %v949
      %v1115 = vmul.f32 %v923, %v949
      %v1116 = vmul.f32 %v924, %v949
      %v1117 = vmul.f32 %v909, %v950
      %v1118 = vmul.f32 %v910, %v950
      %v1119 = vmul.f32 %v911, %v950
      %v1120 = vmul.f32 %v912, %v950
      %v1121 = vmul.f32 %v913, %v950
      %v1122 = vmul.f32 %v914, %v950
      %v1123 = vmul.f32 %v915, %v950
      %v1124 = vmul.f32 %v916, %v950
      %v1125 = vmul.f32 %v917, %v950
      %v1126 = vmul.f32 %v918, %v950
      %v1127 = vmul.f32 %v919, %v950
      %v1128 = vmul.f32 %v920, %v950
      %v1129 = vmul.f32 %v921, %v950
      %v1130 = vmul.f32 %v922, %v950
      %v1131 = vmul.f32 %v923, %v950
      %v1132 = vmul.f32 %v924, %v950
      %v1133 = vmul.f32 %v909, %v951
      %v1134 = vmul.f32 %v910, %v951
      %v1135 = vmul.f32 %v911, %v951
      %v1136 = vmul.f32 %v912, %v951
      %v1137 = vmul.f32 %v913, %v951
      %v1138 = vmul.f32 %v914, %v951
      %v1139 = vmul.f32 %v915, %v951
      %v1140 = vmul.f32 %v916, %v951
      %v1141 = vmul.f32 %v917, %v951
      %v1142 = vmul.f32 %v918, %v951
      %v1143 = vmul.f32 %v919, %v951
      %v1144 = vmul.f32 %v920, %v951
      %v1145 = vmul.f32 %v921, %v951
      %v1146 = vmul.f32 %v922, %v951
      %v1147 = vmul.f32 %v923, %v951
      %v1148 = vmul.f32 %v924, %v951
      %v1149 = vmul.f32 %v909, %v952
      %v1150 = vmul.f32 %v910, %v952
      %v1151 = vmul.f32 %v911, %v952
      %v1152 = vmul.f32 %v912, %v952
      %v1153 = vmul.f32 %v913, %v952
      %v1154 = vmul.f32 %v914, %v952
      %v1155 = vmul.f32 %v915, %v952
      %v1156 = vmul.f32 %v916, %v952
      %v1157 = vmul.f32 %v917, %v952
      %v1158 = vmul.f32 %v918, %v952
      %v1159 = vmul.f32 %v919, %v952
      %v1160 = vmul.f32 %v920, %v952
      %v1161 = vmul.f32 %v921, %v952
      %v1162 = vmul.f32 %v922, %v952
      %v1163 = vmul.f32 %v923, %v952
      %v1164 = vmul.f32 %v924, %v952
      %v1165 = vmul.f32 %v909, %v953
      %v1166 = vmul.f32 %v910, %v953
      %v1167 = vmul.f32 %v911, %v953
      %v1168 = vmul.f32 %v912, %v953
      %v1169 = vmul.f32 %v913, %v953
      %v1170 = vmul.f32 %v914, %v953
      %v1171 = vmul.f32 %v915, %v953
      %v1172 = vmul.f32 %v916, %v953
      %v1173 = vmul.f32 %v917, %v953
      %v1174 = vmul.f32 %v918, %v953
      %v1175 = vmul.f32 %v919, %v953
      %v1176 = vmul.f32 %v920, %v953
      %v1177 = vmul.f32 %v921, %v953
      %v1178 = vmul.f32 %v922, %v953
      %v1179 = vmul.f32 %v923, %v953
      %v1180 = vmul.f32 %v924, %v953
      %v1181 = vmul.f32 %v909, %v954
      %v1182 = vmul.f32 %v910, %v954
      %v1183 = vmul.f32 %v911, %v954
      %v1184 = vmul.f32 %v912, %v954
      %v1185 = vmul.f32 %v913, %v954
      %v1186 = vmul.f32 %v914, %v954
      %v1187 = vmul.f32 %v915, %v954
      %v1188 = vmul.f32 %v916, %v954
      %v1189 = vmul.f32 %v917, %v954
      %v1190 = vmul.f32 %v918, %v954
      %v1191 = vmul.f32 %v919, %v954
      %v1192 = vmul.f32 %v920, %v954
      %v1193 = vmul.f32 %v921, %v954
      %v1194 = vmul.f32 %v922, %v954
      %v1195 = vmul.f32 %v923, %v954
      %v1196 = vmul.f32 %v924, %v954
      %v1197 = vmul.f32 %v909, %v955
      %v1198 = vmul.f32 %v910, %v955
      %v1199 = vmul.f32 %v911, %v955
      %v1200 = vmul.f32 %v912, %v955
      %v1201 = vmul.f32 %v913, %v955
      %v1202 = vmul.f32 %v914, %v955
      %v1203 = vmul.f32 %v915, %v955
      %v1204 = vmul.f32 %v916, %v955
      %v1205 = vmul.f32 %v917, %v955
      %v1206 = vmul.f32 %v918, %v955
      %v1207 = vmul.f32 %v919, %v955
      %v1208 = vmul.f32 %v920, %v955
      %v1209 = vmul.f32 %v921, %v955
      %v1210 = vmul.f32 %v922, %v955
      %v1211 = vmul.f32 %v923, %v955
      %v1212 = vmul.f32 %v924, %v955
      %v1213 = vmul.f32 %v909, %v956
      %v1214 = vmul.f32 %v910, %v956
      %v1215 = vmul.f32 %v911, %v956
      %v1216 = vmul.f32 %v912, %v956
      %v1217 = vmul.f32 %v913, %v956
      %v1218 = vmul.f32 %v914, %v956
      %v1219 = vmul.f32 %v915, %v956
      %v1220 = vmul.f32 %v916, %v956
      %v1221 = vmul.f32 %v917, %v956
      %v1222 = vmul.f32 %v918, %v956
      %v1223 = vmul.f32 %v919, %v956
      %v1224 = vmul.f32 %v920, %v956
      %v1225 = vmul.f32 %v921, %v956
      %v1226 = vmul.f32 %v922, %v956
      %v1227 = vmul.f32 %v923, %v956
      %v1228 = vmul.f32 %v924, %v956
      %1229 = vadd.xlane.f32.xlu0 %v973
      %v1230 = vpop.xlane.xlu0 %1229
      %1231 = vadd.xlane.f32.xlu0 %v974
      %v1232 = vpop.xlane.xlu0 %1231
      %1233 = vadd.xlane.f32.xlu0 %v975
      %v1234 = vpop.xlane.xlu0 %1233
      %1235 = vadd.xlane.f32.xlu0 %v976
      %v1236 = vpop.xlane.xlu0 %1235
      %1237 = vadd.xlane.f32.xlu0 %v977
      %v1238 = vpop.xlane.xlu0 %1237
      %1239 = vadd.xlane.f32.xlu0 %v978
      %v1240 = vpop.xlane.xlu0 %1239
      %1241 = vadd.xlane.f32.xlu0 %v979
      %v1242 = vpop.xlane.xlu0 %1241
      %1243 = vadd.xlane.f32.xlu0 %v980
      %v1244 = vpop.xlane.xlu0 %1243
      %1245 = vadd.xlane.f32.xlu0 %v981
      %v1246 = vpop.xlane.xlu0 %1245
      %1247 = vadd.xlane.f32.xlu0 %v982
      %v1248 = vpop.xlane.xlu0 %1247
      %1249 = vadd.xlane.f32.xlu0 %v983
      %v1250 = vpop.xlane.xlu0 %1249
      %1251 = vadd.xlane.f32.xlu0 %v984
      %v1252 = vpop.xlane.xlu0 %1251
      %1253 = vadd.xlane.f32.xlu0 %v985
      %v1254 = vpop.xlane.xlu0 %1253
      %1255 = vadd.xlane.f32.xlu0 %v986
      %v1256 = vpop.xlane.xlu0 %1255
      %1257 = vadd.xlane.f32.xlu0 %v987
      %v1258 = vpop.xlane.xlu0 %1257
      %1259 = vadd.xlane.f32.xlu0 %v988
      %v1260 = vpop.xlane.xlu0 %1259
      %1261 = vadd.xlane.f32.xlu0 %v989
      %v1262 = vpop.xlane.xlu0 %1261
      %1263 = vadd.xlane.f32.xlu0 %v990
      %v1264 = vpop.xlane.xlu0 %1263
      %1265 = vadd.xlane.f32.xlu0 %v991
      %v1266 = vpop.xlane.xlu0 %1265
      %1267 = vadd.xlane.f32.xlu0 %v992
      %v1268 = vpop.xlane.xlu0 %1267
      %1269 = vadd.xlane.f32.xlu0 %v993
      %v1270 = vpop.xlane.xlu0 %1269
      %1271 = vadd.xlane.f32.xlu0 %v994
      %v1272 = vpop.xlane.xlu0 %1271
      %1273 = vadd.xlane.f32.xlu0 %v995
      %v1274 = vpop.xlane.xlu0 %1273
      %1275 = vadd.xlane.f32.xlu0 %v996
      %v1276 = vpop.xlane.xlu0 %1275
      %1277 = vadd.xlane.f32.xlu0 %v997
      %v1278 = vpop.xlane.xlu0 %1277
      %1279 = vadd.xlane.f32.xlu0 %v998
      %v1280 = vpop.xlane.xlu0 %1279
      %1281 = vadd.xlane.f32.xlu0 %v999
      %v1282 = vpop.xlane.xlu0 %1281
      %1283 = vadd.xlane.f32.xlu0 %v1000
      %v1284 = vpop.xlane.xlu0 %1283
      %1285 = vadd.xlane.f32.xlu0 %v1001
      %v1286 = vpop.xlane.xlu0 %1285
      %1287 = vadd.xlane.f32.xlu0 %v1002
      %v1288 = vpop.xlane.xlu0 %1287
      %1289 = vadd.xlane.f32.xlu0 %v1003
      %v1290 = vpop.xlane.xlu0 %1289
      %1291 = vadd.xlane.f32.xlu0 %v1004
      %v1292 = vpop.xlane.xlu0 %1291
      %1293 = vadd.xlane.f32.xlu0 %v1005
      %v1294 = vpop.xlane.xlu0 %1293
      %1295 = vadd.xlane.f32.xlu0 %v1006
      %v1296 = vpop.xlane.xlu0 %1295
      %1297 = vadd.xlane.f32.xlu0 %v1007
      %v1298 = vpop.xlane.xlu0 %1297
      %1299 = vadd.xlane.f32.xlu0 %v1008
      %v1300 = vpop.xlane.xlu0 %1299
      %1301 = vadd.xlane.f32.xlu0 %v1009
      %v1302 = vpop.xlane.xlu0 %1301
      %1303 = vadd.xlane.f32.xlu0 %v1010
      %v1304 = vpop.xlane.xlu0 %1303
      %1305 = vadd.xlane.f32.xlu0 %v1011
      %v1306 = vpop.xlane.xlu0 %1305
      %1307 = vadd.xlane.f32.xlu0 %v1012
      %v1308 = vpop.xlane.xlu0 %1307
      %1309 = vadd.xlane.f32.xlu0 %v1013
      %v1310 = vpop.xlane.xlu0 %1309
      %1311 = vadd.xlane.f32.xlu0 %v1014
      %v1312 = vpop.xlane.xlu0 %1311
      %1313 = vadd.xlane.f32.xlu0 %v1015
      %v1314 = vpop.xlane.xlu0 %1313
      %1315 = vadd.xlane.f32.xlu0 %v1016
      %v1316 = vpop.xlane.xlu0 %1315
      %1317 = vadd.xlane.f32.xlu0 %v1017
      %v1318 = vpop.xlane.xlu0 %1317
      %1319 = vadd.xlane.f32.xlu0 %v1018
      %v1320 = vpop.xlane.xlu0 %1319
      %1321 = vadd.xlane.f32.xlu0 %v1019
      %v1322 = vpop.xlane.xlu0 %1321
      %1323 = vadd.xlane.f32.xlu0 %v1020
      %v1324 = vpop.xlane.xlu0 %1323
      %1325 = vadd.xlane.f32.xlu0 %v1021
      %v1326 = vpop.xlane.xlu0 %1325
      %1327 = vadd.xlane.f32.xlu0 %v1022
      %v1328 = vpop.xlane.xlu0 %1327
      %1329 = vadd.xlane.f32.xlu0 %v1023
      %v1330 = vpop.xlane.xlu0 %1329
      %1331 = vadd.xlane.f32.xlu0 %v1024
      %v1332 = vpop.xlane.xlu0 %1331
      %1333 = vadd.xlane.f32.xlu0 %v1025
      %v1334 = vpop.xlane.xlu0 %1333
      %1335 = vadd.xlane.f32.xlu0 %v1026
      %v1336 = vpop.xlane.xlu0 %1335
      %1337 = vadd.xlane.f32.xlu0 %v1027
      %v1338 = vpop.xlane.xlu0 %1337
      %1339 = vadd.xlane.f32.xlu0 %v1028
      %v1340 = vpop.xlane.xlu0 %1339
      %1341 = vadd.xlane.f32.xlu0 %v1029
      %v1342 = vpop.xlane.xlu0 %1341
      %1343 = vadd.xlane.f32.xlu0 %v1030
      %v1344 = vpop.xlane.xlu0 %1343
      %1345 = vadd.xlane.f32.xlu0 %v1031
      %v1346 = vpop.xlane.xlu0 %1345
      %1347 = vadd.xlane.f32.xlu0 %v1032
      %v1348 = vpop.xlane.xlu0 %1347
      %1349 = vadd.xlane.f32.xlu0 %v1033
      %v1350 = vpop.xlane.xlu0 %1349
      %1351 = vadd.xlane.f32.xlu0 %v1034
      %v1352 = vpop.xlane.xlu0 %1351
      %1353 = vadd.xlane.f32.xlu0 %v1035
      %v1354 = vpop.xlane.xlu0 %1353
      %1355 = vadd.xlane.f32.xlu0 %v1036
      %v1356 = vpop.xlane.xlu0 %1355
      %1357 = vadd.xlane.f32.xlu0 %v1037
      %v1358 = vpop.xlane.xlu0 %1357
      %1359 = vadd.xlane.f32.xlu0 %v1038
      %v1360 = vpop.xlane.xlu0 %1359
      %1361 = vadd.xlane.f32.xlu0 %v1039
      %v1362 = vpop.xlane.xlu0 %1361
      %1363 = vadd.xlane.f32.xlu0 %v1040
      %v1364 = vpop.xlane.xlu0 %1363
      %1365 = vadd.xlane.f32.xlu0 %v1041
      %v1366 = vpop.xlane.xlu0 %1365
      %1367 = vadd.xlane.f32.xlu0 %v1042
      %v1368 = vpop.xlane.xlu0 %1367
      %1369 = vadd.xlane.f32.xlu0 %v1043
      %v1370 = vpop.xlane.xlu0 %1369
      %1371 = vadd.xlane.f32.xlu0 %v1044
      %v1372 = vpop.xlane.xlu0 %1371
      %1373 = vadd.xlane.f32.xlu0 %v1045
      %v1374 = vpop.xlane.xlu0 %1373
      %1375 = vadd.xlane.f32.xlu0 %v1046
      %v1376 = vpop.xlane.xlu0 %1375
      %1377 = vadd.xlane.f32.xlu0 %v1047
      %v1378 = vpop.xlane.xlu0 %1377
      %1379 = vadd.xlane.f32.xlu0 %v1048
      %v1380 = vpop.xlane.xlu0 %1379
      %1381 = vadd.xlane.f32.xlu0 %v1049
      %v1382 = vpop.xlane.xlu0 %1381
      %1383 = vadd.xlane.f32.xlu0 %v1050
      %v1384 = vpop.xlane.xlu0 %1383
      %1385 = vadd.xlane.f32.xlu0 %v1051
      %v1386 = vpop.xlane.xlu0 %1385
      %1387 = vadd.xlane.f32.xlu0 %v1052
      %v1388 = vpop.xlane.xlu0 %1387
      %1389 = vadd.xlane.f32.xlu0 %v1053
      %v1390 = vpop.xlane.xlu0 %1389
      %1391 = vadd.xlane.f32.xlu0 %v1054
      %v1392 = vpop.xlane.xlu0 %1391
      %1393 = vadd.xlane.f32.xlu0 %v1055
      %v1394 = vpop.xlane.xlu0 %1393
      %1395 = vadd.xlane.f32.xlu0 %v1056
      %v1396 = vpop.xlane.xlu0 %1395
      %1397 = vadd.xlane.f32.xlu0 %v1057
      %v1398 = vpop.xlane.xlu0 %1397
      %1399 = vadd.xlane.f32.xlu0 %v1058
      %v1400 = vpop.xlane.xlu0 %1399
      %1401 = vadd.xlane.f32.xlu0 %v1059
      %v1402 = vpop.xlane.xlu0 %1401
      %1403 = vadd.xlane.f32.xlu0 %v1060
      %v1404 = vpop.xlane.xlu0 %1403
      %1405 = vadd.xlane.f32.xlu0 %v1061
      %v1406 = vpop.xlane.xlu0 %1405
      %1407 = vadd.xlane.f32.xlu0 %v1062
      %v1408 = vpop.xlane.xlu0 %1407
      %1409 = vadd.xlane.f32.xlu0 %v1063
      %v1410 = vpop.xlane.xlu0 %1409
      %1411 = vadd.xlane.f32.xlu0 %v1064
      %v1412 = vpop.xlane.xlu0 %1411
      %1413 = vadd.xlane.f32.xlu0 %v1065
      %v1414 = vpop.xlane.xlu0 %1413
      %1415 = vadd.xlane.f32.xlu0 %v1066
      %v1416 = vpop.xlane.xlu0 %1415
      %1417 = vadd.xlane.f32.xlu0 %v1067
      %v1418 = vpop.xlane.xlu0 %1417
      %1419 = vadd.xlane.f32.xlu0 %v1068
      %v1420 = vpop.xlane.xlu0 %1419
      %1421 = vadd.xlane.f32.xlu0 %v1069
      %v1422 = vpop.xlane.xlu0 %1421
      %1423 = vadd.xlane.f32.xlu0 %v1070
      %v1424 = vpop.xlane.xlu0 %1423
      %1425 = vadd.xlane.f32.xlu0 %v1071
      %v1426 = vpop.xlane.xlu0 %1425
      %1427 = vadd.xlane.f32.xlu0 %v1072
      %v1428 = vpop.xlane.xlu0 %1427
      %1429 = vadd.xlane.f32.xlu0 %v1073
      %v1430 = vpop.xlane.xlu0 %1429
      %1431 = vadd.xlane.f32.xlu0 %v1074
      %v1432 = vpop.xlane.xlu0 %1431
      %1433 = vadd.xlane.f32.xlu0 %v1075
      %v1434 = vpop.xlane.xlu0 %1433
      %1435 = vadd.xlane.f32.xlu0 %v1076
      %v1436 = vpop.xlane.xlu0 %1435
      %1437 = vadd.xlane.f32.xlu0 %v1077
      %v1438 = vpop.xlane.xlu0 %1437
      %1439 = vadd.xlane.f32.xlu0 %v1078
      %v1440 = vpop.xlane.xlu0 %1439
      %1441 = vadd.xlane.f32.xlu0 %v1079
      %v1442 = vpop.xlane.xlu0 %1441
      %1443 = vadd.xlane.f32.xlu0 %v1080
      %v1444 = vpop.xlane.xlu0 %1443
      %1445 = vadd.xlane.f32.xlu0 %v1081
      %v1446 = vpop.xlane.xlu0 %1445
      %1447 = vadd.xlane.f32.xlu0 %v1082
      %v1448 = vpop.xlane.xlu0 %1447
      %1449 = vadd.xlane.f32.xlu0 %v1083
      %v1450 = vpop.xlane.xlu0 %1449
      %1451 = vadd.xlane.f32.xlu0 %v1084
      %v1452 = vpop.xlane.xlu0 %1451
      %1453 = vadd.xlane.f32.xlu0 %v1085
      %v1454 = vpop.xlane.xlu0 %1453
      %1455 = vadd.xlane.f32.xlu0 %v1086
      %v1456 = vpop.xlane.xlu0 %1455
      %1457 = vadd.xlane.f32.xlu0 %v1087
      %v1458 = vpop.xlane.xlu0 %1457
      %1459 = vadd.xlane.f32.xlu0 %v1088
      %v1460 = vpop.xlane.xlu0 %1459
      %1461 = vadd.xlane.f32.xlu0 %v1089
      %v1462 = vpop.xlane.xlu0 %1461
      %1463 = vadd.xlane.f32.xlu0 %v1090
      %v1464 = vpop.xlane.xlu0 %1463
      %1465 = vadd.xlane.f32.xlu0 %v1091
      %v1466 = vpop.xlane.xlu0 %1465
      %1467 = vadd.xlane.f32.xlu0 %v1092
      %v1468 = vpop.xlane.xlu0 %1467
      %1469 = vadd.xlane.f32.xlu0 %v1093
      %v1470 = vpop.xlane.xlu0 %1469
      %1471 = vadd.xlane.f32.xlu0 %v1094
      %v1472 = vpop.xlane.xlu0 %1471
      %1473 = vadd.xlane.f32.xlu0 %v1095
      %v1474 = vpop.xlane.xlu0 %1473
      %1475 = vadd.xlane.f32.xlu0 %v1096
      %v1476 = vpop.xlane.xlu0 %1475
      %1477 = vadd.xlane.f32.xlu0 %v1097
      %v1478 = vpop.xlane.xlu0 %1477
      %1479 = vadd.xlane.f32.xlu0 %v1098
      %v1480 = vpop.xlane.xlu0 %1479
      %1481 = vadd.xlane.f32.xlu0 %v1099
      %v1482 = vpop.xlane.xlu0 %1481
      %1483 = vadd.xlane.f32.xlu0 %v1100
      %v1484 = vpop.xlane.xlu0 %1483
      %1485 = vadd.xlane.f32.xlu0 %v1101
      %v1486 = vpop.xlane.xlu0 %1485
      %1487 = vadd.xlane.f32.xlu0 %v1102
      %v1488 = vpop.xlane.xlu0 %1487
      %1489 = vadd.xlane.f32.xlu0 %v1103
      %v1490 = vpop.xlane.xlu0 %1489
      %1491 = vadd.xlane.f32.xlu0 %v1104
      %v1492 = vpop.xlane.xlu0 %1491
      %1493 = vadd.xlane.f32.xlu0 %v1105
      %v1494 = vpop.xlane.xlu0 %1493
      %1495 = vadd.xlane.f32.xlu0 %v1106
      %v1496 = vpop.xlane.xlu0 %1495
      %1497 = vadd.xlane.f32.xlu0 %v1107
      %v1498 = vpop.xlane.xlu0 %1497
      %1499 = vadd.xlane.f32.xlu0 %v1108
      %v1500 = vpop.xlane.xlu0 %1499
      %1501 = vadd.xlane.f32.xlu0 %v1109
      %v1502 = vpop.xlane.xlu0 %1501
      %1503 = vadd.xlane.f32.xlu0 %v1110
      %v1504 = vpop.xlane.xlu0 %1503
      %1505 = vadd.xlane.f32.xlu0 %v1111
      %v1506 = vpop.xlane.xlu0 %1505
      %1507 = vadd.xlane.f32.xlu0 %v1112
      %v1508 = vpop.xlane.xlu0 %1507
      %1509 = vadd.xlane.f32.xlu0 %v1113
      %v1510 = vpop.xlane.xlu0 %1509
      %1511 = vadd.xlane.f32.xlu0 %v1114
      %v1512 = vpop.xlane.xlu0 %1511
      %1513 = vadd.xlane.f32.xlu0 %v1115
      %v1514 = vpop.xlane.xlu0 %1513
      %1515 = vadd.xlane.f32.xlu0 %v1116
      %v1516 = vpop.xlane.xlu0 %1515
      %1517 = vadd.xlane.f32.xlu0 %v1117
      %v1518 = vpop.xlane.xlu0 %1517
      %1519 = vadd.xlane.f32.xlu0 %v1118
      %v1520 = vpop.xlane.xlu0 %1519
      %1521 = vadd.xlane.f32.xlu0 %v1119
      %v1522 = vpop.xlane.xlu0 %1521
      %1523 = vadd.xlane.f32.xlu0 %v1120
      %v1524 = vpop.xlane.xlu0 %1523
      %1525 = vadd.xlane.f32.xlu0 %v1121
      %v1526 = vpop.xlane.xlu0 %1525
      %1527 = vadd.xlane.f32.xlu0 %v1122
      %v1528 = vpop.xlane.xlu0 %1527
      %1529 = vadd.xlane.f32.xlu0 %v1123
      %v1530 = vpop.xlane.xlu0 %1529
      %1531 = vadd.xlane.f32.xlu0 %v1124
      %v1532 = vpop.xlane.xlu0 %1531
      %1533 = vadd.xlane.f32.xlu0 %v1125
      %v1534 = vpop.xlane.xlu0 %1533
      %1535 = vadd.xlane.f32.xlu0 %v1126
      %v1536 = vpop.xlane.xlu0 %1535
      %1537 = vadd.xlane.f32.xlu0 %v1127
      %v1538 = vpop.xlane.xlu0 %1537
      %1539 = vadd.xlane.f32.xlu0 %v1128
      %v1540 = vpop.xlane.xlu0 %1539
      %1541 = vadd.xlane.f32.xlu0 %v1129
      %v1542 = vpop.xlane.xlu0 %1541
      %1543 = vadd.xlane.f32.xlu0 %v1130
      %v1544 = vpop.xlane.xlu0 %1543
      %1545 = vadd.xlane.f32.xlu0 %v1131
      %v1546 = vpop.xlane.xlu0 %1545
      %1547 = vadd.xlane.f32.xlu0 %v1132
      %v1548 = vpop.xlane.xlu0 %1547
      %1549 = vadd.xlane.f32.xlu0 %v1133
      %v1550 = vpop.xlane.xlu0 %1549
      %1551 = vadd.xlane.f32.xlu0 %v1134
      %v1552 = vpop.xlane.xlu0 %1551
      %1553 = vadd.xlane.f32.xlu0 %v1135
      %v1554 = vpop.xlane.xlu0 %1553
      %1555 = vadd.xlane.f32.xlu0 %v1136
      %v1556 = vpop.xlane.xlu0 %1555
      %1557 = vadd.xlane.f32.xlu0 %v1137
      %v1558 = vpop.xlane.xlu0 %1557
      %1559 = vadd.xlane.f32.xlu0 %v1138
      %v1560 = vpop.xlane.xlu0 %1559
      %1561 = vadd.xlane.f32.xlu0 %v1139
      %v1562 = vpop.xlane.xlu0 %1561
      %1563 = vadd.xlane.f32.xlu0 %v1140
      %v1564 = vpop.xlane.xlu0 %1563
      %1565 = vadd.xlane.f32.xlu0 %v1141
      %v1566 = vpop.xlane.xlu0 %1565
      %1567 = vadd.xlane.f32.xlu0 %v1142
      %v1568 = vpop.xlane.xlu0 %1567
      %1569 = vadd.xlane.f32.xlu0 %v1143
      %v1570 = vpop.xlane.xlu0 %1569
      %1571 = vadd.xlane.f32.xlu0 %v1144
      %v1572 = vpop.xlane.xlu0 %1571
      %1573 = vadd.xlane.f32.xlu0 %v1145
      %v1574 = vpop.xlane.xlu0 %1573
      %1575 = vadd.xlane.f32.xlu0 %v1146
      %v1576 = vpop.xlane.xlu0 %1575
      %1577 = vadd.xlane.f32.xlu0 %v1147
      %v1578 = vpop.xlane.xlu0 %1577
      %1579 = vadd.xlane.f32.xlu0 %v1148
      %v1580 = vpop.xlane.xlu0 %1579
      %1581 = vadd.xlane.f32.xlu0 %v1149
      %v1582 = vpop.xlane.xlu0 %1581
      %1583 = vadd.xlane.f32.xlu0 %v1150
      %v1584 = vpop.xlane.xlu0 %1583
      %1585 = vadd.xlane.f32.xlu0 %v1151
      %v1586 = vpop.xlane.xlu0 %1585
      %1587 = vadd.xlane.f32.xlu0 %v1152
      %v1588 = vpop.xlane.xlu0 %1587
      %1589 = vadd.xlane.f32.xlu0 %v1153
      %v1590 = vpop.xlane.xlu0 %1589
      %1591 = vadd.xlane.f32.xlu0 %v1154
      %v1592 = vpop.xlane.xlu0 %1591
      %1593 = vadd.xlane.f32.xlu0 %v1155
      %v1594 = vpop.xlane.xlu0 %1593
      %1595 = vadd.xlane.f32.xlu0 %v1156
      %v1596 = vpop.xlane.xlu0 %1595
      %1597 = vadd.xlane.f32.xlu0 %v1157
      %v1598 = vpop.xlane.xlu0 %1597
      %1599 = vadd.xlane.f32.xlu0 %v1158
      %v1600 = vpop.xlane.xlu0 %1599
      %1601 = vadd.xlane.f32.xlu0 %v1159
      %v1602 = vpop.xlane.xlu0 %1601
      %1603 = vadd.xlane.f32.xlu0 %v1160
      %v1604 = vpop.xlane.xlu0 %1603
      %1605 = vadd.xlane.f32.xlu0 %v1161
      %v1606 = vpop.xlane.xlu0 %1605
      %1607 = vadd.xlane.f32.xlu0 %v1162
      %v1608 = vpop.xlane.xlu0 %1607
      %1609 = vadd.xlane.f32.xlu0 %v1163
      %v1610 = vpop.xlane.xlu0 %1609
      %1611 = vadd.xlane.f32.xlu0 %v1164
      %v1612 = vpop.xlane.xlu0 %1611
      %1613 = vadd.xlane.f32.xlu0 %v1165
      %v1614 = vpop.xlane.xlu0 %1613
      %1615 = vadd.xlane.f32.xlu0 %v1166
      %v1616 = vpop.xlane.xlu0 %1615
      %1617 = vadd.xlane.f32.xlu0 %v1167
      %v1618 = vpop.xlane.xlu0 %1617
      %1619 = vadd.xlane.f32.xlu0 %v1168
      %v1620 = vpop.xlane.xlu0 %1619
      %1621 = vadd.xlane.f32.xlu0 %v1169
      %v1622 = vpop.xlane.xlu0 %1621
      %1623 = vadd.xlane.f32.xlu0 %v1170
      %v1624 = vpop.xlane.xlu0 %1623
      %1625 = vadd.xlane.f32.xlu0 %v1171
      %v1626 = vpop.xlane.xlu0 %1625
      %1627 = vadd.xlane.f32.xlu0 %v1172
      %v1628 = vpop.xlane.xlu0 %1627
      %1629 = vadd.xlane.f32.xlu0 %v1173
      %v1630 = vpop.xlane.xlu0 %1629
      %1631 = vadd.xlane.f32.xlu0 %v1174
      %v1632 = vpop.xlane.xlu0 %1631
      %1633 = vadd.xlane.f32.xlu0 %v1175
      %v1634 = vpop.xlane.xlu0 %1633
      %1635 = vadd.xlane.f32.xlu0 %v1176
      %v1636 = vpop.xlane.xlu0 %1635
      %1637 = vadd.xlane.f32.xlu0 %v1177
      %v1638 = vpop.xlane.xlu0 %1637
      %1639 = vadd.xlane.f32.xlu0 %v1178
      %v1640 = vpop.xlane.xlu0 %1639
      %1641 = vadd.xlane.f32.xlu0 %v1179
      %v1642 = vpop.xlane.xlu0 %1641
      %1643 = vadd.xlane.f32.xlu0 %v1180
      %v1644 = vpop.xlane.xlu0 %1643
      %1645 = vadd.xlane.f32.xlu0 %v1181
      %v1646 = vpop.xlane.xlu0 %1645
      %1647 = vadd.xlane.f32.xlu0 %v1182
      %v1648 = vpop.xlane.xlu0 %1647
      %1649 = vadd.xlane.f32.xlu0 %v1183
      %v1650 = vpop.xlane.xlu0 %1649
      %1651 = vadd.xlane.f32.xlu0 %v1184
      %v1652 = vpop.xlane.xlu0 %1651
      %1653 = vadd.xlane.f32.xlu0 %v1185
      %v1654 = vpop.xlane.xlu0 %1653
      %1655 = vadd.xlane.f32.xlu0 %v1186
      %v1656 = vpop.xlane.xlu0 %1655
      %1657 = vadd.xlane.f32.xlu0 %v1187
      %v1658 = vpop.xlane.xlu0 %1657
      %1659 = vadd.xlane.f32.xlu0 %v1188
      %v1660 = vpop.xlane.xlu0 %1659
      %1661 = vadd.xlane.f32.xlu0 %v1189
      %v1662 = vpop.xlane.xlu0 %1661
      %1663 = vadd.xlane.f32.xlu0 %v1190
      %v1664 = vpop.xlane.xlu0 %1663
      %1665 = vadd.xlane.f32.xlu0 %v1191
      %v1666 = vpop.xlane.xlu0 %1665
      %1667 = vadd.xlane.f32.xlu0 %v1192
      %v1668 = vpop.xlane.xlu0 %1667
      %1669 = vadd.xlane.f32.xlu0 %v1193
      %v1670 = vpop.xlane.xlu0 %1669
      %1671 = vadd.xlane.f32.xlu0 %v1194
      %v1672 = vpop.xlane.xlu0 %1671
      %1673 = vadd.xlane.f32.xlu0 %v1195
      %v1674 = vpop.xlane.xlu0 %1673
      %1675 = vadd.xlane.f32.xlu0 %v1196
      %v1676 = vpop.xlane.xlu0 %1675
      %1677 = vadd.xlane.f32.xlu0 %v1197
      %v1678 = vpop.xlane.xlu0 %1677
      %1679 = vadd.xlane.f32.xlu0 %v1198
      %v1680 = vpop.xlane.xlu0 %1679
      %1681 = vadd.xlane.f32.xlu0 %v1199
      %v1682 = vpop.xlane.xlu0 %1681
      %1683 = vadd.xlane.f32.xlu0 %v1200
      %v1684 = vpop.xlane.xlu0 %1683
      %1685 = vadd.xlane.f32.xlu0 %v1201
      %v1686 = vpop.xlane.xlu0 %1685
      %1687 = vadd.xlane.f32.xlu0 %v1202
      %v1688 = vpop.xlane.xlu0 %1687
      %1689 = vadd.xlane.f32.xlu0 %v1203
      %v1690 = vpop.xlane.xlu0 %1689
      %1691 = vadd.xlane.f32.xlu0 %v1204
      %v1692 = vpop.xlane.xlu0 %1691
      %1693 = vadd.xlane.f32.xlu0 %v1205
      %v1694 = vpop.xlane.xlu0 %1693
      %1695 = vadd.xlane.f32.xlu0 %v1206
      %v1696 = vpop.xlane.xlu0 %1695
      %1697 = vadd.xlane.f32.xlu0 %v1207
      %v1698 = vpop.xlane.xlu0 %1697
      %1699 = vadd.xlane.f32.xlu0 %v1208
      %v1700 = vpop.xlane.xlu0 %1699
      %1701 = vadd.xlane.f32.xlu0 %v1209
      %v1702 = vpop.xlane.xlu0 %1701
      %1703 = vadd.xlane.f32.xlu0 %v1210
      %v1704 = vpop.xlane.xlu0 %1703
      %1705 = vadd.xlane.f32.xlu0 %v1211
      %v1706 = vpop.xlane.xlu0 %1705
      %1707 = vadd.xlane.f32.xlu0 %v1212
      %v1708 = vpop.xlane.xlu0 %1707
      %1709 = vadd.xlane.f32.xlu0 %v1213
      %v1710 = vpop.xlane.xlu0 %1709
      %1711 = vadd.xlane.f32.xlu0 %v1214
      %v1712 = vpop.xlane.xlu0 %1711
      %1713 = vadd.xlane.f32.xlu0 %v1215
      %v1714 = vpop.xlane.xlu0 %1713
      %1715 = vadd.xlane.f32.xlu0 %v1216
      %v1716 = vpop.xlane.xlu0 %1715
      %1717 = vadd.xlane.f32.xlu0 %v1217
      %v1718 = vpop.xlane.xlu0 %1717
      %1719 = vadd.xlane.f32.xlu0 %v1218
      %v1720 = vpop.xlane.xlu0 %1719
      %1721 = vadd.xlane.f32.xlu0 %v1219
      %v1722 = vpop.xlane.xlu0 %1721
      %1723 = vadd.xlane.f32.xlu0 %v1220
      %v1724 = vpop.xlane.xlu0 %1723
      %1725 = vadd.xlane.f32.xlu0 %v1221
      %v1726 = vpop.xlane.xlu0 %1725
      %1727 = vadd.xlane.f32.xlu0 %v1222
      %v1728 = vpop.xlane.xlu0 %1727
      %1729 = vadd.xlane.f32.xlu0 %v1223
      %v1730 = vpop.xlane.xlu0 %1729
      %1731 = vadd.xlane.f32.xlu0 %v1224
      %v1732 = vpop.xlane.xlu0 %1731
      %1733 = vadd.xlane.f32.xlu0 %v1225
      %v1734 = vpop.xlane.xlu0 %1733
      %1735 = vadd.xlane.f32.xlu0 %v1226
      %v1736 = vpop.xlane.xlu0 %1735
      %1737 = vadd.xlane.f32.xlu0 %v1227
      %v1738 = vpop.xlane.xlu0 %1737
      %1739 = vadd.xlane.f32.xlu0 %v1228
      %v1740 = vpop.xlane.xlu0 %1739
      %v1741 = vld [vmem:[%s753] sm:$0xff]
      %v1742 = vld [vmem:[%s753 + $0x8] sm:$0xff]
      %v1743 = vld [vmem:[%s753 + $0x10] sm:$0xff]
      %v1744 = vld [vmem:[%s753 + $0x18] sm:$0xff]
      %v1745 = vld [vmem:[%s753 + $0x20] sm:$0xff]
      %v1746 = vld [vmem:[%s753 + $0x28] sm:$0xff]
      %v1747 = vld [vmem:[%s753 + $0x30] sm:$0xff]
      %v1748 = vld [vmem:[%s753 + $0x38] sm:$0xff]
      %v1749 = vld [vmem:[%s753 + $0x40] sm:$0xff]
      %v1750 = vld [vmem:[%s753 + $0x48] sm:$0xff]
      %v1751 = vld [vmem:[%s753 + $0x50] sm:$0xff]
      %v1752 = vld [vmem:[%s753 + $0x58] sm:$0xff]
      %v1753 = vld [vmem:[%s753 + $0x60] sm:$0xff]
      %v1754 = vld [vmem:[%s753 + $0x68] sm:$0xff]
      %v1755 = vld [vmem:[%s753 + $0x70] sm:$0xff]
      %v1756 = vld [vmem:[%s753 + $0x78] sm:$0xff]
      %v1757 = vadd.f32 %v1230, %v1741
      %v1758 = vadd.f32 %v1232, %v1742
      %v1759 = vadd.f32 %v1234, %v1743
      %v1760 = vadd.f32 %v1236, %v1744
      %v1761 = vadd.f32 %v1238, %v1745
      %v1762 = vadd.f32 %v1240, %v1746
      %v1763 = vadd.f32 %v1242, %v1747
      %v1764 = vadd.f32 %v1244, %v1748
      %v1765 = vadd.f32 %v1246, %v1749
      %v1766 = vadd.f32 %v1248, %v1750
      %v1767 = vadd.f32 %v1250, %v1751
      %v1768 = vadd.f32 %v1252, %v1752
      %v1769 = vadd.f32 %v1254, %v1753
      %v1770 = vadd.f32 %v1256, %v1754
      %v1771 = vadd.f32 %v1258, %v1755
      %v1772 = vadd.f32 %v1260, %v1756
      %v1773 = vadd.f32 %v1262, %v1741
      %v1774 = vadd.f32 %v1264, %v1742
      %v1775 = vadd.f32 %v1266, %v1743
      %v1776 = vadd.f32 %v1268, %v1744
      %v1777 = vadd.f32 %v1270, %v1745
      %v1778 = vadd.f32 %v1272, %v1746
      %v1779 = vadd.f32 %v1274, %v1747
      %v1780 = vadd.f32 %v1276, %v1748
      %v1781 = vadd.f32 %v1278, %v1749
      %v1782 = vadd.f32 %v1280, %v1750
      %v1783 = vadd.f32 %v1282, %v1751
      %v1784 = vadd.f32 %v1284, %v1752
      %v1785 = vadd.f32 %v1286, %v1753
      %v1786 = vadd.f32 %v1288, %v1754
      %v1787 = vadd.f32 %v1290, %v1755
      %v1788 = vadd.f32 %v1292, %v1756
      %v1789 = vadd.f32 %v1294, %v1741
      %v1790 = vadd.f32 %v1296, %v1742
      %v1791 = vadd.f32 %v1298, %v1743
      %v1792 = vadd.f32 %v1300, %v1744
      %v1793 = vadd.f32 %v1302, %v1745
      %v1794 = vadd.f32 %v1304, %v1746
      %v1795 = vadd.f32 %v1306, %v1747
      %v1796 = vadd.f32 %v1308, %v1748
      %v1797 = vadd.f32 %v1310, %v1749
      %v1798 = vadd.f32 %v1312, %v1750
      %v1799 = vadd.f32 %v1314, %v1751
      %v1800 = vadd.f32 %v1316, %v1752
      %v1801 = vadd.f32 %v1318, %v1753
      %v1802 = vadd.f32 %v1320, %v1754
      %v1803 = vadd.f32 %v1322, %v1755
      %v1804 = vadd.f32 %v1324, %v1756
      %v1805 = vadd.f32 %v1326, %v1741
      %v1806 = vadd.f32 %v1328, %v1742
      %v1807 = vadd.f32 %v1330, %v1743
      %v1808 = vadd.f32 %v1332, %v1744
      %v1809 = vadd.f32 %v1334, %v1745
      %v1810 = vadd.f32 %v1336, %v1746
      %v1811 = vadd.f32 %v1338, %v1747
      %v1812 = vadd.f32 %v1340, %v1748
      %v1813 = vadd.f32 %v1342, %v1749
      %v1814 = vadd.f32 %v1344, %v1750
      %v1815 = vadd.f32 %v1346, %v1751
      %v1816 = vadd.f32 %v1348, %v1752
      %v1817 = vadd.f32 %v1350, %v1753
      %v1818 = vadd.f32 %v1352, %v1754
      %v1819 = vadd.f32 %v1354, %v1755
      %v1820 = vadd.f32 %v1356, %v1756
      %v1821 = vadd.f32 %v1358, %v1741
      %v1822 = vadd.f32 %v1360, %v1742
      %v1823 = vadd.f32 %v1362, %v1743
      %v1824 = vadd.f32 %v1364, %v1744
      %v1825 = vadd.f32 %v1366, %v1745
      %v1826 = vadd.f32 %v1368, %v1746
      %v1827 = vadd.f32 %v1370, %v1747
      %v1828 = vadd.f32 %v1372, %v1748
      %v1829 = vadd.f32 %v1374, %v1749
      %v1830 = vadd.f32 %v1376, %v1750
      %v1831 = vadd.f32 %v1378, %v1751
      %v1832 = vadd.f32 %v1380, %v1752
      %v1833 = vadd.f32 %v1382, %v1753
      %v1834 = vadd.f32 %v1384, %v1754
      %v1835 = vadd.f32 %v1386, %v1755
      %v1836 = vadd.f32 %v1388, %v1756
      %v1837 = vadd.f32 %v1390, %v1741
      %v1838 = vadd.f32 %v1392, %v1742
      %v1839 = vadd.f32 %v1394, %v1743
      %v1840 = vadd.f32 %v1396, %v1744
      %v1841 = vadd.f32 %v1398, %v1745
      %v1842 = vadd.f32 %v1400, %v1746
      %v1843 = vadd.f32 %v1402, %v1747
      %v1844 = vadd.f32 %v1404, %v1748
      %v1845 = vadd.f32 %v1406, %v1749
      %v1846 = vadd.f32 %v1408, %v1750
      %v1847 = vadd.f32 %v1410, %v1751
      %v1848 = vadd.f32 %v1412, %v1752
      %v1849 = vadd.f32 %v1414, %v1753
      %v1850 = vadd.f32 %v1416, %v1754
      %v1851 = vadd.f32 %v1418, %v1755
      %v1852 = vadd.f32 %v1420, %v1756
      %v1853 = vadd.f32 %v1422, %v1741
      %v1854 = vadd.f32 %v1424, %v1742
      %v1855 = vadd.f32 %v1426, %v1743
      %v1856 = vadd.f32 %v1428, %v1744
      %v1857 = vadd.f32 %v1430, %v1745
      %v1858 = vadd.f32 %v1432, %v1746
      %v1859 = vadd.f32 %v1434, %v1747
      %v1860 = vadd.f32 %v1436, %v1748
      %v1861 = vadd.f32 %v1438, %v1749
      %v1862 = vadd.f32 %v1440, %v1750
      %v1863 = vadd.f32 %v1442, %v1751
      %v1864 = vadd.f32 %v1444, %v1752
      %v1865 = vadd.f32 %v1446, %v1753
      %v1866 = vadd.f32 %v1448, %v1754
      %v1867 = vadd.f32 %v1450, %v1755
      %v1868 = vadd.f32 %v1452, %v1756
      %v1869 = vadd.f32 %v1454, %v1741
      %v1870 = vadd.f32 %v1456, %v1742
      %v1871 = vadd.f32 %v1458, %v1743
      %v1872 = vadd.f32 %v1460, %v1744
      %v1873 = vadd.f32 %v1462, %v1745
      %v1874 = vadd.f32 %v1464, %v1746
      %v1875 = vadd.f32 %v1466, %v1747
      %v1876 = vadd.f32 %v1468, %v1748
      %v1877 = vadd.f32 %v1470, %v1749
      %v1878 = vadd.f32 %v1472, %v1750
      %v1879 = vadd.f32 %v1474, %v1751
      %v1880 = vadd.f32 %v1476, %v1752
      %v1881 = vadd.f32 %v1478, %v1753
      %v1882 = vadd.f32 %v1480, %v1754
      %v1883 = vadd.f32 %v1482, %v1755
      %v1884 = vadd.f32 %v1484, %v1756
      %v1885 = vadd.f32 %v1486, %v1741
      %v1886 = vadd.f32 %v1488, %v1742
      %v1887 = vadd.f32 %v1490, %v1743
      %v1888 = vadd.f32 %v1492, %v1744
      %v1889 = vadd.f32 %v1494, %v1745
      %v1890 = vadd.f32 %v1496, %v1746
      %v1891 = vadd.f32 %v1498, %v1747
      %v1892 = vadd.f32 %v1500, %v1748
      %v1893 = vadd.f32 %v1502, %v1749
      %v1894 = vadd.f32 %v1504, %v1750
      %v1895 = vadd.f32 %v1506, %v1751
      %v1896 = vadd.f32 %v1508, %v1752
      %v1897 = vadd.f32 %v1510, %v1753
      %v1898 = vadd.f32 %v1512, %v1754
      %v1899 = vadd.f32 %v1514, %v1755
      %v1900 = vadd.f32 %v1516, %v1756
      %v1901 = vadd.f32 %v1518, %v1741
      %v1902 = vadd.f32 %v1520, %v1742
      %v1903 = vadd.f32 %v1522, %v1743
      %v1904 = vadd.f32 %v1524, %v1744
      %v1905 = vadd.f32 %v1526, %v1745
      %v1906 = vadd.f32 %v1528, %v1746
      %v1907 = vadd.f32 %v1530, %v1747
      %v1908 = vadd.f32 %v1532, %v1748
      %v1909 = vadd.f32 %v1534, %v1749
      %v1910 = vadd.f32 %v1536, %v1750
      %v1911 = vadd.f32 %v1538, %v1751
      %v1912 = vadd.f32 %v1540, %v1752
      %v1913 = vadd.f32 %v1542, %v1753
      %v1914 = vadd.f32 %v1544, %v1754
      %v1915 = vadd.f32 %v1546, %v1755
      %v1916 = vadd.f32 %v1548, %v1756
      %v1917 = vadd.f32 %v1550, %v1741
      %v1918 = vadd.f32 %v1552, %v1742
      %v1919 = vadd.f32 %v1554, %v1743
      %v1920 = vadd.f32 %v1556, %v1744
      %v1921 = vadd.f32 %v1558, %v1745
      %v1922 = vadd.f32 %v1560, %v1746
      %v1923 = vadd.f32 %v1562, %v1747
      %v1924 = vadd.f32 %v1564, %v1748
      %v1925 = vadd.f32 %v1566, %v1749
      %v1926 = vadd.f32 %v1568, %v1750
      %v1927 = vadd.f32 %v1570, %v1751
      %v1928 = vadd.f32 %v1572, %v1752
      %v1929 = vadd.f32 %v1574, %v1753
      %v1930 = vadd.f32 %v1576, %v1754
      %v1931 = vadd.f32 %v1578, %v1755
      %v1932 = vadd.f32 %v1580, %v1756
      %v1933 = vadd.f32 %v1582, %v1741
      %v1934 = vadd.f32 %v1584, %v1742
      %v1935 = vadd.f32 %v1586, %v1743
      %v1936 = vadd.f32 %v1588, %v1744
      %v1937 = vadd.f32 %v1590, %v1745
      %v1938 = vadd.f32 %v1592, %v1746
      %v1939 = vadd.f32 %v1594, %v1747
      %v1940 = vadd.f32 %v1596, %v1748
      %v1941 = vadd.f32 %v1598, %v1749
      %v1942 = vadd.f32 %v1600, %v1750
      %v1943 = vadd.f32 %v1602, %v1751
      %v1944 = vadd.f32 %v1604, %v1752
      %v1945 = vadd.f32 %v1606, %v1753
      %v1946 = vadd.f32 %v1608, %v1754
      %v1947 = vadd.f32 %v1610, %v1755
      %v1948 = vadd.f32 %v1612, %v1756
      %v1949 = vadd.f32 %v1614, %v1741
      %v1950 = vadd.f32 %v1616, %v1742
      %v1951 = vadd.f32 %v1618, %v1743
      %v1952 = vadd.f32 %v1620, %v1744
      %v1953 = vadd.f32 %v1622, %v1745
      %v1954 = vadd.f32 %v1624, %v1746
      %v1955 = vadd.f32 %v1626, %v1747
      %v1956 = vadd.f32 %v1628, %v1748
      %v1957 = vadd.f32 %v1630, %v1749
      %v1958 = vadd.f32 %v1632, %v1750
      %v1959 = vadd.f32 %v1634, %v1751
      %v1960 = vadd.f32 %v1636, %v1752
      %v1961 = vadd.f32 %v1638, %v1753
      %v1962 = vadd.f32 %v1640, %v1754
      %v1963 = vadd.f32 %v1642, %v1755
      %v1964 = vadd.f32 %v1644, %v1756
      %v1965 = vadd.f32 %v1646, %v1741
      %v1966 = vadd.f32 %v1648, %v1742
      %v1967 = vadd.f32 %v1650, %v1743
      %v1968 = vadd.f32 %v1652, %v1744
      %v1969 = vadd.f32 %v1654, %v1745
      %v1970 = vadd.f32 %v1656, %v1746
      %v1971 = vadd.f32 %v1658, %v1747
      %v1972 = vadd.f32 %v1660, %v1748
      %v1973 = vadd.f32 %v1662, %v1749
      %v1974 = vadd.f32 %v1664, %v1750
      %v1975 = vadd.f32 %v1666, %v1751
      %v1976 = vadd.f32 %v1668, %v1752
      %v1977 = vadd.f32 %v1670, %v1753
      %v1978 = vadd.f32 %v1672, %v1754
      %v1979 = vadd.f32 %v1674, %v1755
      %v1980 = vadd.f32 %v1676, %v1756
      %v1981 = vadd.f32 %v1678, %v1741
      %v1982 = vadd.f32 %v1680, %v1742
      %v1983 = vadd.f32 %v1682, %v1743
      %v1984 = vadd.f32 %v1684, %v1744
      %v1985 = vadd.f32 %v1686, %v1745
      %v1986 = vadd.f32 %v1688, %v1746
      %v1987 = vadd.f32 %v1690, %v1747
      %v1988 = vadd.f32 %v1692, %v1748
      %v1989 = vadd.f32 %v1694, %v1749
      %v1990 = vadd.f32 %v1696, %v1750
      %v1991 = vadd.f32 %v1698, %v1751
      %v1992 = vadd.f32 %v1700, %v1752
      %v1993 = vadd.f32 %v1702, %v1753
      %v1994 = vadd.f32 %v1704, %v1754
      %v1995 = vadd.f32 %v1706, %v1755
      %v1996 = vadd.f32 %v1708, %v1756
      %v1997 = vadd.f32 %v1710, %v1741
      %v1998 = vadd.f32 %v1712, %v1742
      %v1999 = vadd.f32 %v1714, %v1743
      %v2000 = vadd.f32 %v1716, %v1744
      %v2001 = vadd.f32 %v1718, %v1745
      %v2002 = vadd.f32 %v1720, %v1746
      %v2003 = vadd.f32 %v1722, %v1747
      %v2004 = vadd.f32 %v1724, %v1748
      %v2005 = vadd.f32 %v1726, %v1749
      %v2006 = vadd.f32 %v1728, %v1750
      %v2007 = vadd.f32 %v1730, %v1751
      %v2008 = vadd.f32 %v1732, %v1752
      %v2009 = vadd.f32 %v1734, %v1753
      %v2010 = vadd.f32 %v1736, %v1754
      %v2011 = vadd.f32 %v1738, %v1755
      %v2012 = vadd.f32 %v1740, %v1756
      %v2013 = vld [vmem:[%s758] sm:$0xff]
      %v2014 = vld [vmem:[%s758 + $0x8] sm:$0xff]
      %v2015 = vld [vmem:[%s758 + $0x10] sm:$0xff]
      %v2016 = vld [vmem:[%s758 + $0x18] sm:$0xff]
      %v2017 = vld [vmem:[%s758 + $0x20] sm:$0xff]
      %v2018 = vld [vmem:[%s758 + $0x28] sm:$0xff]
      %v2019 = vld [vmem:[%s758 + $0x30] sm:$0xff]
      %v2020 = vld [vmem:[%s758 + $0x38] sm:$0xff]
      %v2021 = vld [vmem:[%s758 + $0x40] sm:$0xff]
      %v2022 = vld [vmem:[%s758 + $0x48] sm:$0xff]
      %v2023 = vld [vmem:[%s758 + $0x50] sm:$0xff]
      %v2024 = vld [vmem:[%s758 + $0x58] sm:$0xff]
      %v2025 = vld [vmem:[%s758 + $0x60] sm:$0xff]
      %v2026 = vld [vmem:[%s758 + $0x68] sm:$0xff]
      %v2027 = vld [vmem:[%s758 + $0x70] sm:$0xff]
      %v2028 = vld [vmem:[%s758 + $0x78] sm:$0xff]
      %vm2029 = vcmask 64512
      %v2031 = vsel %vm2029, %v2013, 0
      %v2034 = vsel %vm2029, %v2014, 0
      %v2037 = vsel %vm2029, %v2015, 0
      %v2040 = vsel %vm2029, %v2016, 0
      %v2043 = vsel %vm2029, %v2017, 0
      %v2046 = vsel %vm2029, %v2018, 0
      %v2049 = vsel %vm2029, %v2019, 0
      %v2052 = vsel %vm2029, %v2020, 0
      %v2055 = vsel %vm2029, %v2021, 0
      %v2058 = vsel %vm2029, %v2022, 0
      %v2061 = vsel %vm2029, %v2023, 0
      %v2064 = vsel %vm2029, %v2024, 0
      %v2067 = vsel %vm2029, %v2025, 0
      %v2070 = vsel %vm2029, %v2026, 0
      %v2073 = vsel %vm2029, %v2027, 0
      %v2076 = vsel %vm2029, %v2028, 0
      %2078 = vmatpush.msra.mxu0 0.0
      %2079 = vmatpush.msra.mxu0 0.0
      %2080 = vmatpush.msra.mxu0 0.0
      %2081 = vmatpush.msra.mxu0 0.0
      %2082 = vmatpush.msra.mxu0 0.0
      %2083 = vmatpush.msra.mxu0 0.0
      %2084 = vmatpush.msra.mxu0 0.0
      %2085 = vmatpush.msra.mxu0 0.0
      %2086 = vmatpush.msra.mxu0 0.0
      %2087 = vmatpush.msra.mxu0 0.0
      %2088 = vmatpush.msra.mxu0 0.0
      %2089 = vmatpush.msra.mxu0 0.0
      %2090 = vmatpush.msra.mxu0 0.0
      %2091 = vmatpush.msra.mxu0 0.0
      %2092 = vmatpush.msra.mxu0 0.0
      %2093 = vmatpush.msra.mxu0 %v893
      %2094 = vmatmul.f32.gmra.mxu0 %v2031
      %v2095 = vpop.f32.mrf.mxu0
      %v2096 = vadd.f32 0.0, %v2095
      %2097 = vmatmul.f32.gmra.mxu0 %v2034
      %v2098 = vpop.f32.mrf.mxu0
      %v2099 = vadd.f32 0.0, %v2098
      %2100 = vmatmul.f32.gmra.mxu0 %v2037
      %v2101 = vpop.f32.mrf.mxu0
      %v2102 = vadd.f32 0.0, %v2101
      %2103 = vmatmul.f32.gmra.mxu0 %v2040
      %v2104 = vpop.f32.mrf.mxu0
      %v2105 = vadd.f32 0.0, %v2104
      %2106 = vmatmul.f32.gmra.mxu0 %v2043
      %v2107 = vpop.f32.mrf.mxu0
      %v2108 = vadd.f32 0.0, %v2107
      %2109 = vmatmul.f32.gmra.mxu0 %v2046
      %v2110 = vpop.f32.mrf.mxu0
      %v2111 = vadd.f32 0.0, %v2110
      %2112 = vmatmul.f32.gmra.mxu0 %v2049
      %v2113 = vpop.f32.mrf.mxu0
      %v2114 = vadd.f32 0.0, %v2113
      %2115 = vmatmul.f32.gmra.mxu0 %v2052
      %v2116 = vpop.f32.mrf.mxu0
      %v2117 = vadd.f32 0.0, %v2116
      %2118 = vmatmul.f32.gmra.mxu0 %v2055
      %v2119 = vpop.f32.mrf.mxu0
      %v2120 = vadd.f32 0.0, %v2119
      %2121 = vmatmul.f32.gmra.mxu0 %v2058
      %v2122 = vpop.f32.mrf.mxu0
      %v2123 = vadd.f32 0.0, %v2122
      %2124 = vmatmul.f32.gmra.mxu0 %v2061
      %v2125 = vpop.f32.mrf.mxu0
      %v2126 = vadd.f32 0.0, %v2125
      %2127 = vmatmul.f32.gmra.mxu0 %v2064
      %v2128 = vpop.f32.mrf.mxu0
      %v2129 = vadd.f32 0.0, %v2128
      %2130 = vmatmul.f32.gmra.mxu0 %v2067
      %v2131 = vpop.f32.mrf.mxu0
      %v2132 = vadd.f32 0.0, %v2131
      %2133 = vmatmul.f32.gmra.mxu0 %v2070
      %v2134 = vpop.f32.mrf.mxu0
      %v2135 = vadd.f32 0.0, %v2134
      %2136 = vmatmul.f32.gmra.mxu0 %v2073
      %v2137 = vpop.f32.mrf.mxu0
      %v2138 = vadd.f32 0.0, %v2137
      %2139 = vmatmul.f32.gmra.mxu0 %v2076
      %v2140 = vpop.f32.mrf.mxu0
      %v2141 = vadd.f32 0.0, %v2140
      %2142 = vdwg.mxu0
      %2143 = vmatpush.msra.mxu0 0.0
      %2144 = vmatpush.msra.mxu0 0.0
      %2145 = vmatpush.msra.mxu0 0.0
      %2146 = vmatpush.msra.mxu0 0.0
      %2147 = vmatpush.msra.mxu0 0.0
      %2148 = vmatpush.msra.mxu0 0.0
      %2149 = vmatpush.msra.mxu0 0.0
      %2150 = vmatpush.msra.mxu0 0.0
      %2151 = vmatpush.msra.mxu0 0.0
      %2152 = vmatpush.msra.mxu0 0.0
      %2153 = vmatpush.msra.mxu0 0.0
      %2154 = vmatpush.msra.mxu0 0.0
      %2155 = vmatpush.msra.mxu0 0.0
      %2156 = vmatpush.msra.mxu0 0.0
      %2157 = vmatpush.msra.mxu0 0.0
      %2158 = vmatpush.msra.mxu0 %v894
      %2159 = vmatmul.f32.gmra.mxu0 %v2031
      %v2160 = vpop.f32.mrf.mxu0
      %v2161 = vadd.f32 0.0, %v2160
      %2162 = vmatmul.f32.gmra.mxu0 %v2034
      %v2163 = vpop.f32.mrf.mxu0
      %v2164 = vadd.f32 0.0, %v2163
      %2165 = vmatmul.f32.gmra.mxu0 %v2037
      %v2166 = vpop.f32.mrf.mxu0
      %v2167 = vadd.f32 0.0, %v2166
      %2168 = vmatmul.f32.gmra.mxu0 %v2040
      %v2169 = vpop.f32.mrf.mxu0
      %v2170 = vadd.f32 0.0, %v2169
      %2171 = vmatmul.f32.gmra.mxu0 %v2043
      %v2172 = vpop.f32.mrf.mxu0
      %v2173 = vadd.f32 0.0, %v2172
      %2174 = vmatmul.f32.gmra.mxu0 %v2046
      %v2175 = vpop.f32.mrf.mxu0
      %v2176 = vadd.f32 0.0, %v2175
      %2177 = vmatmul.f32.gmra.mxu0 %v2049
      %v2178 = vpop.f32.mrf.mxu0
      %v2179 = vadd.f32 0.0, %v2178
      %2180 = vmatmul.f32.gmra.mxu0 %v2052
      %v2181 = vpop.f32.mrf.mxu0
      %v2182 = vadd.f32 0.0, %v2181
      %2183 = vmatmul.f32.gmra.mxu0 %v2055
      %v2184 = vpop.f32.mrf.mxu0
      %v2185 = vadd.f32 0.0, %v2184
      %2186 = vmatmul.f32.gmra.mxu0 %v2058
      %v2187 = vpop.f32.mrf.mxu0
      %v2188 = vadd.f32 0.0, %v2187
      %2189 = vmatmul.f32.gmra.mxu0 %v2061
      %v2190 = vpop.f32.mrf.mxu0
      %v2191 = vadd.f32 0.0, %v2190
      %2192 = vmatmul.f32.gmra.mxu0 %v2064
      %v2193 = vpop.f32.mrf.mxu0
      %v2194 = vadd.f32 0.0, %v2193
      %2195 = vmatmul.f32.gmra.mxu0 %v2067
      %v2196 = vpop.f32.mrf.mxu0
      %v2197 = vadd.f32 0.0, %v2196
      %2198 = vmatmul.f32.gmra.mxu0 %v2070
      %v2199 = vpop.f32.mrf.mxu0
      %v2200 = vadd.f32 0.0, %v2199
      %2201 = vmatmul.f32.gmra.mxu0 %v2073
      %v2202 = vpop.f32.mrf.mxu0
      %v2203 = vadd.f32 0.0, %v2202
      %2204 = vmatmul.f32.gmra.mxu0 %v2076
      %v2205 = vpop.f32.mrf.mxu0
      %v2206 = vadd.f32 0.0, %v2205
      %2207 = vdwg.mxu0
      %2208 = vmatpush.msra.mxu0 0.0
      %2209 = vmatpush.msra.mxu0 0.0
      %2210 = vmatpush.msra.mxu0 0.0
      %2211 = vmatpush.msra.mxu0 0.0
      %2212 = vmatpush.msra.mxu0 0.0
      %2213 = vmatpush.msra.mxu0 0.0
      %2214 = vmatpush.msra.mxu0 0.0
      %2215 = vmatpush.msra.mxu0 0.0
      %2216 = vmatpush.msra.mxu0 0.0
      %2217 = vmatpush.msra.mxu0 0.0
      %2218 = vmatpush.msra.mxu0 0.0
      %2219 = vmatpush.msra.mxu0 0.0
      %2220 = vmatpush.msra.mxu0 0.0
      %2221 = vmatpush.msra.mxu0 0.0
      %2222 = vmatpush.msra.mxu0 0.0
      %2223 = vmatpush.msra.mxu0 %v895
      %2224 = vmatmul.f32.gmra.mxu0 %v2031
      %v2225 = vpop.f32.mrf.mxu0
      %v2226 = vadd.f32 0.0, %v2225
      %2227 = vmatmul.f32.gmra.mxu0 %v2034
      %v2228 = vpop.f32.mrf.mxu0
      %v2229 = vadd.f32 0.0, %v2228
      %2230 = vmatmul.f32.gmra.mxu0 %v2037
      %v2231 = vpop.f32.mrf.mxu0
      %v2232 = vadd.f32 0.0, %v2231
      %2233 = vmatmul.f32.gmra.mxu0 %v2040
      %v2234 = vpop.f32.mrf.mxu0
      %v2235 = vadd.f32 0.0, %v2234
      %2236 = vmatmul.f32.gmra.mxu0 %v2043
      %v2237 = vpop.f32.mrf.mxu0
      %v2238 = vadd.f32 0.0, %v2237
      %2239 = vmatmul.f32.gmra.mxu0 %v2046
      %v2240 = vpop.f32.mrf.mxu0
      %v2241 = vadd.f32 0.0, %v2240
      %2242 = vmatmul.f32.gmra.mxu0 %v2049
      %v2243 = vpop.f32.mrf.mxu0
      %v2244 = vadd.f32 0.0, %v2243
      %2245 = vmatmul.f32.gmra.mxu0 %v2052
      %v2246 = vpop.f32.mrf.mxu0
      %v2247 = vadd.f32 0.0, %v2246
      %2248 = vmatmul.f32.gmra.mxu0 %v2055
      %v2249 = vpop.f32.mrf.mxu0
      %v2250 = vadd.f32 0.0, %v2249
      %2251 = vmatmul.f32.gmra.mxu0 %v2058
      %v2252 = vpop.f32.mrf.mxu0
      %v2253 = vadd.f32 0.0, %v2252
      %2254 = vmatmul.f32.gmra.mxu0 %v2061
      %v2255 = vpop.f32.mrf.mxu0
      %v2256 = vadd.f32 0.0, %v2255
      %2257 = vmatmul.f32.gmra.mxu0 %v2064
      %v2258 = vpop.f32.mrf.mxu0
      %v2259 = vadd.f32 0.0, %v2258
      %2260 = vmatmul.f32.gmra.mxu0 %v2067
      %v2261 = vpop.f32.mrf.mxu0
      %v2262 = vadd.f32 0.0, %v2261
      %2263 = vmatmul.f32.gmra.mxu0 %v2070
      %v2264 = vpop.f32.mrf.mxu0
      %v2265 = vadd.f32 0.0, %v2264
      %2266 = vmatmul.f32.gmra.mxu0 %v2073
      %v2267 = vpop.f32.mrf.mxu0
      %v2268 = vadd.f32 0.0, %v2267
      %2269 = vmatmul.f32.gmra.mxu0 %v2076
      %v2270 = vpop.f32.mrf.mxu0
      %v2271 = vadd.f32 0.0, %v2270
      %2272 = vdwg.mxu0
      %2273 = vmatpush.msra.mxu0 0.0
      %2274 = vmatpush.msra.mxu0 0.0
      %2275 = vmatpush.msra.mxu0 0.0
      %2276 = vmatpush.msra.mxu0 0.0
      %2277 = vmatpush.msra.mxu0 0.0
      %2278 = vmatpush.msra.mxu0 0.0
      %2279 = vmatpush.msra.mxu0 0.0
      %2280 = vmatpush.msra.mxu0 0.0
      %2281 = vmatpush.msra.mxu0 0.0
      %2282 = vmatpush.msra.mxu0 0.0
      %2283 = vmatpush.msra.mxu0 0.0
      %2284 = vmatpush.msra.mxu0 0.0
      %2285 = vmatpush.msra.mxu0 0.0
      %2286 = vmatpush.msra.mxu0 0.0
      %2287 = vmatpush.msra.mxu0 0.0
      %2288 = vmatpush.msra.mxu0 %v896
      %2289 = vmatmul.f32.gmra.mxu0 %v2031
      %v2290 = vpop.f32.mrf.mxu0
      %v2291 = vadd.f32 0.0, %v2290
      %2292 = vmatmul.f32.gmra.mxu0 %v2034
      %v2293 = vpop.f32.mrf.mxu0
      %v2294 = vadd.f32 0.0, %v2293
      %2295 = vmatmul.f32.gmra.mxu0 %v2037
      %v2296 = vpop.f32.mrf.mxu0
      %v2297 = vadd.f32 0.0, %v2296
      %2298 = vmatmul.f32.gmra.mxu0 %v2040
      %v2299 = vpop.f32.mrf.mxu0
      %v2300 = vadd.f32 0.0, %v2299
      %2301 = vmatmul.f32.gmra.mxu0 %v2043
      %v2302 = vpop.f32.mrf.mxu0
      %v2303 = vadd.f32 0.0, %v2302
      %2304 = vmatmul.f32.gmra.mxu0 %v2046
      %v2305 = vpop.f32.mrf.mxu0
      %v2306 = vadd.f32 0.0, %v2305
      %2307 = vmatmul.f32.gmra.mxu0 %v2049
      %v2308 = vpop.f32.mrf.mxu0
      %v2309 = vadd.f32 0.0, %v2308
      %2310 = vmatmul.f32.gmra.mxu0 %v2052
      %v2311 = vpop.f32.mrf.mxu0
      %v2312 = vadd.f32 0.0, %v2311
      %2313 = vmatmul.f32.gmra.mxu0 %v2055
      %v2314 = vpop.f32.mrf.mxu0
      %v2315 = vadd.f32 0.0, %v2314
      %2316 = vmatmul.f32.gmra.mxu0 %v2058
      %v2317 = vpop.f32.mrf.mxu0
      %v2318 = vadd.f32 0.0, %v2317
      %2319 = vmatmul.f32.gmra.mxu0 %v2061
      %v2320 = vpop.f32.mrf.mxu0
      %v2321 = vadd.f32 0.0, %v2320
      %2322 = vmatmul.f32.gmra.mxu0 %v2064
      %v2323 = vpop.f32.mrf.mxu0
      %v2324 = vadd.f32 0.0, %v2323
      %2325 = vmatmul.f32.gmra.mxu0 %v2067
      %v2326 = vpop.f32.mrf.mxu0
      %v2327 = vadd.f32 0.0, %v2326
      %2328 = vmatmul.f32.gmra.mxu0 %v2070
      %v2329 = vpop.f32.mrf.mxu0
      %v2330 = vadd.f32 0.0, %v2329
      %2331 = vmatmul.f32.gmra.mxu0 %v2073
      %v2332 = vpop.f32.mrf.mxu0
      %v2333 = vadd.f32 0.0, %v2332
      %2334 = vmatmul.f32.gmra.mxu0 %v2076
      %v2335 = vpop.f32.mrf.mxu0
      %v2336 = vadd.f32 0.0, %v2335
      %2337 = vdwg.mxu0
      %2338 = vmatpush.msra.mxu0 0.0
      %2339 = vmatpush.msra.mxu0 0.0
      %2340 = vmatpush.msra.mxu0 0.0
      %2341 = vmatpush.msra.mxu0 0.0
      %2342 = vmatpush.msra.mxu0 0.0
      %2343 = vmatpush.msra.mxu0 0.0
      %2344 = vmatpush.msra.mxu0 0.0
      %2345 = vmatpush.msra.mxu0 0.0
      %2346 = vmatpush.msra.mxu0 0.0
      %2347 = vmatpush.msra.mxu0 0.0
      %2348 = vmatpush.msra.mxu0 0.0
      %2349 = vmatpush.msra.mxu0 0.0
      %2350 = vmatpush.msra.mxu0 0.0
      %2351 = vmatpush.msra.mxu0 0.0
      %2352 = vmatpush.msra.mxu0 0.0
      %2353 = vmatpush.msra.mxu0 %v897
      %2354 = vmatmul.f32.gmra.mxu0 %v2031
      %v2355 = vpop.f32.mrf.mxu0
      %v2356 = vadd.f32 0.0, %v2355
      %2357 = vmatmul.f32.gmra.mxu0 %v2034
      %v2358 = vpop.f32.mrf.mxu0
      %v2359 = vadd.f32 0.0, %v2358
      %2360 = vmatmul.f32.gmra.mxu0 %v2037
      %v2361 = vpop.f32.mrf.mxu0
      %v2362 = vadd.f32 0.0, %v2361
      %2363 = vmatmul.f32.gmra.mxu0 %v2040
      %v2364 = vpop.f32.mrf.mxu0
      %v2365 = vadd.f32 0.0, %v2364
      %2366 = vmatmul.f32.gmra.mxu0 %v2043
      %v2367 = vpop.f32.mrf.mxu0
      %v2368 = vadd.f32 0.0, %v2367
      %2369 = vmatmul.f32.gmra.mxu0 %v2046
      %v2370 = vpop.f32.mrf.mxu0
      %v2371 = vadd.f32 0.0, %v2370
      %2372 = vmatmul.f32.gmra.mxu0 %v2049
      %v2373 = vpop.f32.mrf.mxu0
      %v2374 = vadd.f32 0.0, %v2373
      %2375 = vmatmul.f32.gmra.mxu0 %v2052
      %v2376 = vpop.f32.mrf.mxu0
      %v2377 = vadd.f32 0.0, %v2376
      %2378 = vmatmul.f32.gmra.mxu0 %v2055
      %v2379 = vpop.f32.mrf.mxu0
      %v2380 = vadd.f32 0.0, %v2379
      %2381 = vmatmul.f32.gmra.mxu0 %v2058
      %v2382 = vpop.f32.mrf.mxu0
      %v2383 = vadd.f32 0.0, %v2382
      %2384 = vmatmul.f32.gmra.mxu0 %v2061
      %v2385 = vpop.f32.mrf.mxu0
      %v2386 = vadd.f32 0.0, %v2385
      %2387 = vmatmul.f32.gmra.mxu0 %v2064
      %v2388 = vpop.f32.mrf.mxu0
      %v2389 = vadd.f32 0.0, %v2388
      %2390 = vmatmul.f32.gmra.mxu0 %v2067
      %v2391 = vpop.f32.mrf.mxu0
      %v2392 = vadd.f32 0.0, %v2391
      %2393 = vmatmul.f32.gmra.mxu0 %v2070
      %v2394 = vpop.f32.mrf.mxu0
      %v2395 = vadd.f32 0.0, %v2394
      %2396 = vmatmul.f32.gmra.mxu0 %v2073
      %v2397 = vpop.f32.mrf.mxu0
      %v2398 = vadd.f32 0.0, %v2397
      %2399 = vmatmul.f32.gmra.mxu0 %v2076
      %v2400 = vpop.f32.mrf.mxu0
      %v2401 = vadd.f32 0.0, %v2400
      %2402 = vdwg.mxu0
      %2403 = vmatpush.msra.mxu0 0.0
      %2404 = vmatpush.msra.mxu0 0.0
      %2405 = vmatpush.msra.mxu0 0.0
      %2406 = vmatpush.msra.mxu0 0.0
      %2407 = vmatpush.msra.mxu0 0.0
      %2408 = vmatpush.msra.mxu0 0.0
      %2409 = vmatpush.msra.mxu0 0.0
      %2410 = vmatpush.msra.mxu0 0.0
      %2411 = vmatpush.msra.mxu0 0.0
      %2412 = vmatpush.msra.mxu0 0.0
      %2413 = vmatpush.msra.mxu0 0.0
      %2414 = vmatpush.msra.mxu0 0.0
      %2415 = vmatpush.msra.mxu0 0.0
      %2416 = vmatpush.msra.mxu0 0.0
      %2417 = vmatpush.msra.mxu0 0.0
      %2418 = vmatpush.msra.mxu0 %v898
      %2419 = vmatmul.f32.gmra.mxu0 %v2031
      %v2420 = vpop.f32.mrf.mxu0
      %v2421 = vadd.f32 0.0, %v2420
      %2422 = vmatmul.f32.gmra.mxu0 %v2034
      %v2423 = vpop.f32.mrf.mxu0
      %v2424 = vadd.f32 0.0, %v2423
      %2425 = vmatmul.f32.gmra.mxu0 %v2037
      %v2426 = vpop.f32.mrf.mxu0
      %v2427 = vadd.f32 0.0, %v2426
      %2428 = vmatmul.f32.gmra.mxu0 %v2040
      %v2429 = vpop.f32.mrf.mxu0
      %v2430 = vadd.f32 0.0, %v2429
      %2431 = vmatmul.f32.gmra.mxu0 %v2043
      %v2432 = vpop.f32.mrf.mxu0
      %v2433 = vadd.f32 0.0, %v2432
      %2434 = vmatmul.f32.gmra.mxu0 %v2046
      %v2435 = vpop.f32.mrf.mxu0
      %v2436 = vadd.f32 0.0, %v2435
      %2437 = vmatmul.f32.gmra.mxu0 %v2049
      %v2438 = vpop.f32.mrf.mxu0
      %v2439 = vadd.f32 0.0, %v2438
      %2440 = vmatmul.f32.gmra.mxu0 %v2052
      %v2441 = vpop.f32.mrf.mxu0
      %v2442 = vadd.f32 0.0, %v2441
      %2443 = vmatmul.f32.gmra.mxu0 %v2055
      %v2444 = vpop.f32.mrf.mxu0
      %v2445 = vadd.f32 0.0, %v2444
      %2446 = vmatmul.f32.gmra.mxu0 %v2058
      %v2447 = vpop.f32.mrf.mxu0
      %v2448 = vadd.f32 0.0, %v2447
      %2449 = vmatmul.f32.gmra.mxu0 %v2061
      %v2450 = vpop.f32.mrf.mxu0
      %v2451 = vadd.f32 0.0, %v2450
      %2452 = vmatmul.f32.gmra.mxu0 %v2064
      %v2453 = vpop.f32.mrf.mxu0
      %v2454 = vadd.f32 0.0, %v2453
      %2455 = vmatmul.f32.gmra.mxu0 %v2067
      %v2456 = vpop.f32.mrf.mxu0
      %v2457 = vadd.f32 0.0, %v2456
      %2458 = vmatmul.f32.gmra.mxu0 %v2070
      %v2459 = vpop.f32.mrf.mxu0
      %v2460 = vadd.f32 0.0, %v2459
      %2461 = vmatmul.f32.gmra.mxu0 %v2073
      %v2462 = vpop.f32.mrf.mxu0
      %v2463 = vadd.f32 0.0, %v2462
      %2464 = vmatmul.f32.gmra.mxu0 %v2076
      %v2465 = vpop.f32.mrf.mxu0
      %v2466 = vadd.f32 0.0, %v2465
      %2467 = vdwg.mxu0
      %2468 = vmatpush.msra.mxu0 0.0
      %2469 = vmatpush.msra.mxu0 0.0
      %2470 = vmatpush.msra.mxu0 0.0
      %2471 = vmatpush.msra.mxu0 0.0
      %2472 = vmatpush.msra.mxu0 0.0
      %2473 = vmatpush.msra.mxu0 0.0
      %2474 = vmatpush.msra.mxu0 0.0
      %2475 = vmatpush.msra.mxu0 0.0
      %2476 = vmatpush.msra.mxu0 0.0
      %2477 = vmatpush.msra.mxu0 0.0
      %2478 = vmatpush.msra.mxu0 0.0
      %2479 = vmatpush.msra.mxu0 0.0
      %2480 = vmatpush.msra.mxu0 0.0
      %2481 = vmatpush.msra.mxu0 0.0
      %2482 = vmatpush.msra.mxu0 0.0
      %2483 = vmatpush.msra.mxu0 %v899
      %2484 = vmatmul.f32.gmra.mxu0 %v2031
      %v2485 = vpop.f32.mrf.mxu0
      %v2486 = vadd.f32 0.0, %v2485
      %2487 = vmatmul.f32.gmra.mxu0 %v2034
      %v2488 = vpop.f32.mrf.mxu0
      %v2489 = vadd.f32 0.0, %v2488
      %2490 = vmatmul.f32.gmra.mxu0 %v2037
      %v2491 = vpop.f32.mrf.mxu0
      %v2492 = vadd.f32 0.0, %v2491
      %2493 = vmatmul.f32.gmra.mxu0 %v2040
      %v2494 = vpop.f32.mrf.mxu0
      %v2495 = vadd.f32 0.0, %v2494
      %2496 = vmatmul.f32.gmra.mxu0 %v2043
      %v2497 = vpop.f32.mrf.mxu0
      %v2498 = vadd.f32 0.0, %v2497
      %2499 = vmatmul.f32.gmra.mxu0 %v2046
      %v2500 = vpop.f32.mrf.mxu0
      %v2501 = vadd.f32 0.0, %v2500
      %2502 = vmatmul.f32.gmra.mxu0 %v2049
      %v2503 = vpop.f32.mrf.mxu0
      %v2504 = vadd.f32 0.0, %v2503
      %2505 = vmatmul.f32.gmra.mxu0 %v2052
      %v2506 = vpop.f32.mrf.mxu0
      %v2507 = vadd.f32 0.0, %v2506
      %2508 = vmatmul.f32.gmra.mxu0 %v2055
      %v2509 = vpop.f32.mrf.mxu0
      %v2510 = vadd.f32 0.0, %v2509
      %2511 = vmatmul.f32.gmra.mxu0 %v2058
      %v2512 = vpop.f32.mrf.mxu0
      %v2513 = vadd.f32 0.0, %v2512
      %2514 = vmatmul.f32.gmra.mxu0 %v2061
      %v2515 = vpop.f32.mrf.mxu0
      %v2516 = vadd.f32 0.0, %v2515
      %2517 = vmatmul.f32.gmra.mxu0 %v2064
      %v2518 = vpop.f32.mrf.mxu0
      %v2519 = vadd.f32 0.0, %v2518
      %2520 = vmatmul.f32.gmra.mxu0 %v2067
      %v2521 = vpop.f32.mrf.mxu0
      %v2522 = vadd.f32 0.0, %v2521
      %2523 = vmatmul.f32.gmra.mxu0 %v2070
      %v2524 = vpop.f32.mrf.mxu0
      %v2525 = vadd.f32 0.0, %v2524
      %2526 = vmatmul.f32.gmra.mxu0 %v2073
      %v2527 = vpop.f32.mrf.mxu0
      %v2528 = vadd.f32 0.0, %v2527
      %2529 = vmatmul.f32.gmra.mxu0 %v2076
      %v2530 = vpop.f32.mrf.mxu0
      %v2531 = vadd.f32 0.0, %v2530
      %2532 = vdwg.mxu0
      %2533 = vmatpush.msra.mxu0 0.0
      %2534 = vmatpush.msra.mxu0 0.0
      %2535 = vmatpush.msra.mxu0 0.0
      %2536 = vmatpush.msra.mxu0 0.0
      %2537 = vmatpush.msra.mxu0 0.0
      %2538 = vmatpush.msra.mxu0 0.0
      %2539 = vmatpush.msra.mxu0 0.0
      %2540 = vmatpush.msra.mxu0 0.0
      %2541 = vmatpush.msra.mxu0 0.0
      %2542 = vmatpush.msra.mxu0 0.0
      %2543 = vmatpush.msra.mxu0 0.0
      %2544 = vmatpush.msra.mxu0 0.0
      %2545 = vmatpush.msra.mxu0 0.0
      %2546 = vmatpush.msra.mxu0 0.0
      %2547 = vmatpush.msra.mxu0 0.0
      %2548 = vmatpush.msra.mxu0 %v900
      %2549 = vmatmul.f32.gmra.mxu0 %v2031
      %v2550 = vpop.f32.mrf.mxu0
      %v2551 = vadd.f32 0.0, %v2550
      %2552 = vmatmul.f32.gmra.mxu0 %v2034
      %v2553 = vpop.f32.mrf.mxu0
      %v2554 = vadd.f32 0.0, %v2553
      %2555 = vmatmul.f32.gmra.mxu0 %v2037
      %v2556 = vpop.f32.mrf.mxu0
      %v2557 = vadd.f32 0.0, %v2556
      %2558 = vmatmul.f32.gmra.mxu0 %v2040
      %v2559 = vpop.f32.mrf.mxu0
      %v2560 = vadd.f32 0.0, %v2559
      %2561 = vmatmul.f32.gmra.mxu0 %v2043
      %v2562 = vpop.f32.mrf.mxu0
      %v2563 = vadd.f32 0.0, %v2562
      %2564 = vmatmul.f32.gmra.mxu0 %v2046
      %v2565 = vpop.f32.mrf.mxu0
      %v2566 = vadd.f32 0.0, %v2565
      %2567 = vmatmul.f32.gmra.mxu0 %v2049
      %v2568 = vpop.f32.mrf.mxu0
      %v2569 = vadd.f32 0.0, %v2568
      %2570 = vmatmul.f32.gmra.mxu0 %v2052
      %v2571 = vpop.f32.mrf.mxu0
      %v2572 = vadd.f32 0.0, %v2571
      %2573 = vmatmul.f32.gmra.mxu0 %v2055
      %v2574 = vpop.f32.mrf.mxu0
      %v2575 = vadd.f32 0.0, %v2574
      %2576 = vmatmul.f32.gmra.mxu0 %v2058
      %v2577 = vpop.f32.mrf.mxu0
      %v2578 = vadd.f32 0.0, %v2577
      %2579 = vmatmul.f32.gmra.mxu0 %v2061
      %v2580 = vpop.f32.mrf.mxu0
      %v2581 = vadd.f32 0.0, %v2580
      %2582 = vmatmul.f32.gmra.mxu0 %v2064
      %v2583 = vpop.f32.mrf.mxu0
      %v2584 = vadd.f32 0.0, %v2583
      %2585 = vmatmul.f32.gmra.mxu0 %v2067
      %v2586 = vpop.f32.mrf.mxu0
      %v2587 = vadd.f32 0.0, %v2586
      %2588 = vmatmul.f32.gmra.mxu0 %v2070
      %v2589 = vpop.f32.mrf.mxu0
      %v2590 = vadd.f32 0.0, %v2589
      %2591 = vmatmul.f32.gmra.mxu0 %v2073
      %v2592 = vpop.f32.mrf.mxu0
      %v2593 = vadd.f32 0.0, %v2592
      %2594 = vmatmul.f32.gmra.mxu0 %v2076
      %v2595 = vpop.f32.mrf.mxu0
      %v2596 = vadd.f32 0.0, %v2595
      %2597 = vdwg.mxu0
      %2598 = vmatpush.msra.mxu0 0.0
      %2599 = vmatpush.msra.mxu0 0.0
      %2600 = vmatpush.msra.mxu0 0.0
      %2601 = vmatpush.msra.mxu0 0.0
      %2602 = vmatpush.msra.mxu0 0.0
      %2603 = vmatpush.msra.mxu0 0.0
      %2604 = vmatpush.msra.mxu0 0.0
      %2605 = vmatpush.msra.mxu0 0.0
      %2606 = vmatpush.msra.mxu0 0.0
      %2607 = vmatpush.msra.mxu0 0.0
      %2608 = vmatpush.msra.mxu0 0.0
      %2609 = vmatpush.msra.mxu0 0.0
      %2610 = vmatpush.msra.mxu0 0.0
      %2611 = vmatpush.msra.mxu0 0.0
      %2612 = vmatpush.msra.mxu0 0.0
      %2613 = vmatpush.msra.mxu0 %v901
      %2614 = vmatmul.f32.gmra.mxu0 %v2031
      %v2615 = vpop.f32.mrf.mxu0
      %v2616 = vadd.f32 0.0, %v2615
      %2617 = vmatmul.f32.gmra.mxu0 %v2034
      %v2618 = vpop.f32.mrf.mxu0
      %v2619 = vadd.f32 0.0, %v2618
      %2620 = vmatmul.f32.gmra.mxu0 %v2037
      %v2621 = vpop.f32.mrf.mxu0
      %v2622 = vadd.f32 0.0, %v2621
      %2623 = vmatmul.f32.gmra.mxu0 %v2040
      %v2624 = vpop.f32.mrf.mxu0
      %v2625 = vadd.f32 0.0, %v2624
      %2626 = vmatmul.f32.gmra.mxu0 %v2043
      %v2627 = vpop.f32.mrf.mxu0
      %v2628 = vadd.f32 0.0, %v2627
      %2629 = vmatmul.f32.gmra.mxu0 %v2046
      %v2630 = vpop.f32.mrf.mxu0
      %v2631 = vadd.f32 0.0, %v2630
      %2632 = vmatmul.f32.gmra.mxu0 %v2049
      %v2633 = vpop.f32.mrf.mxu0
      %v2634 = vadd.f32 0.0, %v2633
      %2635 = vmatmul.f32.gmra.mxu0 %v2052
      %v2636 = vpop.f32.mrf.mxu0
      %v2637 = vadd.f32 0.0, %v2636
      %2638 = vmatmul.f32.gmra.mxu0 %v2055
      %v2639 = vpop.f32.mrf.mxu0
      %v2640 = vadd.f32 0.0, %v2639
      %2641 = vmatmul.f32.gmra.mxu0 %v2058
      %v2642 = vpop.f32.mrf.mxu0
      %v2643 = vadd.f32 0.0, %v2642
      %2644 = vmatmul.f32.gmra.mxu0 %v2061
      %v2645 = vpop.f32.mrf.mxu0
      %v2646 = vadd.f32 0.0, %v2645
      %2647 = vmatmul.f32.gmra.mxu0 %v2064
      %v2648 = vpop.f32.mrf.mxu0
      %v2649 = vadd.f32 0.0, %v2648
      %2650 = vmatmul.f32.gmra.mxu0 %v2067
      %v2651 = vpop.f32.mrf.mxu0
      %v2652 = vadd.f32 0.0, %v2651
      %2653 = vmatmul.f32.gmra.mxu0 %v2070
      %v2654 = vpop.f32.mrf.mxu0
      %v2655 = vadd.f32 0.0, %v2654
      %2656 = vmatmul.f32.gmra.mxu0 %v2073
      %v2657 = vpop.f32.mrf.mxu0
      %v2658 = vadd.f32 0.0, %v2657
      %2659 = vmatmul.f32.gmra.mxu0 %v2076
      %v2660 = vpop.f32.mrf.mxu0
      %v2661 = vadd.f32 0.0, %v2660
      %2662 = vdwg.mxu0
      %2663 = vmatpush.msra.mxu0 0.0
      %2664 = vmatpush.msra.mxu0 0.0
      %2665 = vmatpush.msra.mxu0 0.0
      %2666 = vmatpush.msra.mxu0 0.0
      %2667 = vmatpush.msra.mxu0 0.0
      %2668 = vmatpush.msra.mxu0 0.0
      %2669 = vmatpush.msra.mxu0 0.0
      %2670 = vmatpush.msra.mxu0 0.0
      %2671 = vmatpush.msra.mxu0 0.0
      %2672 = vmatpush.msra.mxu0 0.0
      %2673 = vmatpush.msra.mxu0 0.0
      %2674 = vmatpush.msra.mxu0 0.0
      %2675 = vmatpush.msra.mxu0 0.0
      %2676 = vmatpush.msra.mxu0 0.0
      %2677 = vmatpush.msra.mxu0 0.0
      %2678 = vmatpush.msra.mxu0 %v902
      %2679 = vmatmul.f32.gmra.mxu0 %v2031
      %v2680 = vpop.f32.mrf.mxu0
      %v2681 = vadd.f32 0.0, %v2680
      %2682 = vmatmul.f32.gmra.mxu0 %v2034
      %v2683 = vpop.f32.mrf.mxu0
      %v2684 = vadd.f32 0.0, %v2683
      %2685 = vmatmul.f32.gmra.mxu0 %v2037
      %v2686 = vpop.f32.mrf.mxu0
      %v2687 = vadd.f32 0.0, %v2686
      %2688 = vmatmul.f32.gmra.mxu0 %v2040
      %v2689 = vpop.f32.mrf.mxu0
      %v2690 = vadd.f32 0.0, %v2689
      %2691 = vmatmul.f32.gmra.mxu0 %v2043
      %v2692 = vpop.f32.mrf.mxu0
      %v2693 = vadd.f32 0.0, %v2692
      %2694 = vmatmul.f32.gmra.mxu0 %v2046
      %v2695 = vpop.f32.mrf.mxu0
      %v2696 = vadd.f32 0.0, %v2695
      %2697 = vmatmul.f32.gmra.mxu0 %v2049
      %v2698 = vpop.f32.mrf.mxu0
      %v2699 = vadd.f32 0.0, %v2698
      %2700 = vmatmul.f32.gmra.mxu0 %v2052
      %v2701 = vpop.f32.mrf.mxu0
      %v2702 = vadd.f32 0.0, %v2701
      %2703 = vmatmul.f32.gmra.mxu0 %v2055
      %v2704 = vpop.f32.mrf.mxu0
      %v2705 = vadd.f32 0.0, %v2704
      %2706 = vmatmul.f32.gmra.mxu0 %v2058
      %v2707 = vpop.f32.mrf.mxu0
      %v2708 = vadd.f32 0.0, %v2707
      %2709 = vmatmul.f32.gmra.mxu0 %v2061
      %v2710 = vpop.f32.mrf.mxu0
      %v2711 = vadd.f32 0.0, %v2710
      %2712 = vmatmul.f32.gmra.mxu0 %v2064
      %v2713 = vpop.f32.mrf.mxu0
      %v2714 = vadd.f32 0.0, %v2713
      %2715 = vmatmul.f32.gmra.mxu0 %v2067
      %v2716 = vpop.f32.mrf.mxu0
      %v2717 = vadd.f32 0.0, %v2716
      %2718 = vmatmul.f32.gmra.mxu0 %v2070
      %v2719 = vpop.f32.mrf.mxu0
      %v2720 = vadd.f32 0.0, %v2719
      %2721 = vmatmul.f32.gmra.mxu0 %v2073
      %v2722 = vpop.f32.mrf.mxu0
      %v2723 = vadd.f32 0.0, %v2722
      %2724 = vmatmul.f32.gmra.mxu0 %v2076
      %v2725 = vpop.f32.mrf.mxu0
      %v2726 = vadd.f32 0.0, %v2725
      %2727 = vdwg.mxu0
      %2728 = vmatpush.msra.mxu0 0.0
      %2729 = vmatpush.msra.mxu0 0.0
      %2730 = vmatpush.msra.mxu0 0.0
      %2731 = vmatpush.msra.mxu0 0.0
      %2732 = vmatpush.msra.mxu0 0.0
      %2733 = vmatpush.msra.mxu0 0.0
      %2734 = vmatpush.msra.mxu0 0.0
      %2735 = vmatpush.msra.mxu0 0.0
      %2736 = vmatpush.msra.mxu0 0.0
      %2737 = vmatpush.msra.mxu0 0.0
      %2738 = vmatpush.msra.mxu0 0.0
      %2739 = vmatpush.msra.mxu0 0.0
      %2740 = vmatpush.msra.mxu0 0.0
      %2741 = vmatpush.msra.mxu0 0.0
      %2742 = vmatpush.msra.mxu0 0.0
      %2743 = vmatpush.msra.mxu0 %v903
      %2744 = vmatmul.f32.gmra.mxu0 %v2031
      %v2745 = vpop.f32.mrf.mxu0
      %v2746 = vadd.f32 0.0, %v2745
      %2747 = vmatmul.f32.gmra.mxu0 %v2034
      %v2748 = vpop.f32.mrf.mxu0
      %v2749 = vadd.f32 0.0, %v2748
      %2750 = vmatmul.f32.gmra.mxu0 %v2037
      %v2751 = vpop.f32.mrf.mxu0
      %v2752 = vadd.f32 0.0, %v2751
      %2753 = vmatmul.f32.gmra.mxu0 %v2040
      %v2754 = vpop.f32.mrf.mxu0
      %v2755 = vadd.f32 0.0, %v2754
      %2756 = vmatmul.f32.gmra.mxu0 %v2043
      %v2757 = vpop.f32.mrf.mxu0
      %v2758 = vadd.f32 0.0, %v2757
      %2759 = vmatmul.f32.gmra.mxu0 %v2046
      %v2760 = vpop.f32.mrf.mxu0
      %v2761 = vadd.f32 0.0, %v2760
      %2762 = vmatmul.f32.gmra.mxu0 %v2049
      %v2763 = vpop.f32.mrf.mxu0
      %v2764 = vadd.f32 0.0, %v2763
      %2765 = vmatmul.f32.gmra.mxu0 %v2052
      %v2766 = vpop.f32.mrf.mxu0
      %v2767 = vadd.f32 0.0, %v2766
      %2768 = vmatmul.f32.gmra.mxu0 %v2055
      %v2769 = vpop.f32.mrf.mxu0
      %v2770 = vadd.f32 0.0, %v2769
      %2771 = vmatmul.f32.gmra.mxu0 %v2058
      %v2772 = vpop.f32.mrf.mxu0
      %v2773 = vadd.f32 0.0, %v2772
      %2774 = vmatmul.f32.gmra.mxu0 %v2061
      %v2775 = vpop.f32.mrf.mxu0
      %v2776 = vadd.f32 0.0, %v2775
      %2777 = vmatmul.f32.gmra.mxu0 %v2064
      %v2778 = vpop.f32.mrf.mxu0
      %v2779 = vadd.f32 0.0, %v2778
      %2780 = vmatmul.f32.gmra.mxu0 %v2067
      %v2781 = vpop.f32.mrf.mxu0
      %v2782 = vadd.f32 0.0, %v2781
      %2783 = vmatmul.f32.gmra.mxu0 %v2070
      %v2784 = vpop.f32.mrf.mxu0
      %v2785 = vadd.f32 0.0, %v2784
      %2786 = vmatmul.f32.gmra.mxu0 %v2073
      %v2787 = vpop.f32.mrf.mxu0
      %v2788 = vadd.f32 0.0, %v2787
      %2789 = vmatmul.f32.gmra.mxu0 %v2076
      %v2790 = vpop.f32.mrf.mxu0
      %v2791 = vadd.f32 0.0, %v2790
      %2792 = vdwg.mxu0
      %2793 = vmatpush.msra.mxu0 0.0
      %2794 = vmatpush.msra.mxu0 0.0
      %2795 = vmatpush.msra.mxu0 0.0
      %2796 = vmatpush.msra.mxu0 0.0
      %2797 = vmatpush.msra.mxu0 0.0
      %2798 = vmatpush.msra.mxu0 0.0
      %2799 = vmatpush.msra.mxu0 0.0
      %2800 = vmatpush.msra.mxu0 0.0
      %2801 = vmatpush.msra.mxu0 0.0
      %2802 = vmatpush.msra.mxu0 0.0
      %2803 = vmatpush.msra.mxu0 0.0
      %2804 = vmatpush.msra.mxu0 0.0
      %2805 = vmatpush.msra.mxu0 0.0
      %2806 = vmatpush.msra.mxu0 0.0
      %2807 = vmatpush.msra.mxu0 0.0
      %2808 = vmatpush.msra.mxu0 %v904
      %2809 = vmatmul.f32.gmra.mxu0 %v2031
      %v2810 = vpop.f32.mrf.mxu0
      %v2811 = vadd.f32 0.0, %v2810
      %2812 = vmatmul.f32.gmra.mxu0 %v2034
      %v2813 = vpop.f32.mrf.mxu0
      %v2814 = vadd.f32 0.0, %v2813
      %2815 = vmatmul.f32.gmra.mxu0 %v2037
      %v2816 = vpop.f32.mrf.mxu0
      %v2817 = vadd.f32 0.0, %v2816
      %2818 = vmatmul.f32.gmra.mxu0 %v2040
      %v2819 = vpop.f32.mrf.mxu0
      %v2820 = vadd.f32 0.0, %v2819
      %2821 = vmatmul.f32.gmra.mxu0 %v2043
      %v2822 = vpop.f32.mrf.mxu0
      %v2823 = vadd.f32 0.0, %v2822
      %2824 = vmatmul.f32.gmra.mxu0 %v2046
      %v2825 = vpop.f32.mrf.mxu0
      %v2826 = vadd.f32 0.0, %v2825
      %2827 = vmatmul.f32.gmra.mxu0 %v2049
      %v2828 = vpop.f32.mrf.mxu0
      %v2829 = vadd.f32 0.0, %v2828
      %2830 = vmatmul.f32.gmra.mxu0 %v2052
      %v2831 = vpop.f32.mrf.mxu0
      %v2832 = vadd.f32 0.0, %v2831
      %2833 = vmatmul.f32.gmra.mxu0 %v2055
      %v2834 = vpop.f32.mrf.mxu0
      %v2835 = vadd.f32 0.0, %v2834
      %2836 = vmatmul.f32.gmra.mxu0 %v2058
      %v2837 = vpop.f32.mrf.mxu0
      %v2838 = vadd.f32 0.0, %v2837
      %2839 = vmatmul.f32.gmra.mxu0 %v2061
      %v2840 = vpop.f32.mrf.mxu0
      %v2841 = vadd.f32 0.0, %v2840
      %2842 = vmatmul.f32.gmra.mxu0 %v2064
      %v2843 = vpop.f32.mrf.mxu0
      %v2844 = vadd.f32 0.0, %v2843
      %2845 = vmatmul.f32.gmra.mxu0 %v2067
      %v2846 = vpop.f32.mrf.mxu0
      %v2847 = vadd.f32 0.0, %v2846
      %2848 = vmatmul.f32.gmra.mxu0 %v2070
      %v2849 = vpop.f32.mrf.mxu0
      %v2850 = vadd.f32 0.0, %v2849
      %2851 = vmatmul.f32.gmra.mxu0 %v2073
      %v2852 = vpop.f32.mrf.mxu0
      %v2853 = vadd.f32 0.0, %v2852
      %2854 = vmatmul.f32.gmra.mxu0 %v2076
      %v2855 = vpop.f32.mrf.mxu0
      %v2856 = vadd.f32 0.0, %v2855
      %2857 = vdwg.mxu0
      %2858 = vmatpush.msra.mxu0 0.0
      %2859 = vmatpush.msra.mxu0 0.0
      %2860 = vmatpush.msra.mxu0 0.0
      %2861 = vmatpush.msra.mxu0 0.0
      %2862 = vmatpush.msra.mxu0 0.0
      %2863 = vmatpush.msra.mxu0 0.0
      %2864 = vmatpush.msra.mxu0 0.0
      %2865 = vmatpush.msra.mxu0 0.0
      %2866 = vmatpush.msra.mxu0 0.0
      %2867 = vmatpush.msra.mxu0 0.0
      %2868 = vmatpush.msra.mxu0 0.0
      %2869 = vmatpush.msra.mxu0 0.0
      %2870 = vmatpush.msra.mxu0 0.0
      %2871 = vmatpush.msra.mxu0 0.0
      %2872 = vmatpush.msra.mxu0 0.0
      %2873 = vmatpush.msra.mxu0 %v905
      %2874 = vmatmul.f32.gmra.mxu0 %v2031
      %v2875 = vpop.f32.mrf.mxu0
      %v2876 = vadd.f32 0.0, %v2875
      %2877 = vmatmul.f32.gmra.mxu0 %v2034
      %v2878 = vpop.f32.mrf.mxu0
      %v2879 = vadd.f32 0.0, %v2878
      %2880 = vmatmul.f32.gmra.mxu0 %v2037
      %v2881 = vpop.f32.mrf.mxu0
      %v2882 = vadd.f32 0.0, %v2881
      %2883 = vmatmul.f32.gmra.mxu0 %v2040
      %v2884 = vpop.f32.mrf.mxu0
      %v2885 = vadd.f32 0.0, %v2884
      %2886 = vmatmul.f32.gmra.mxu0 %v2043
      %v2887 = vpop.f32.mrf.mxu0
      %v2888 = vadd.f32 0.0, %v2887
      %2889 = vmatmul.f32.gmra.mxu0 %v2046
      %v2890 = vpop.f32.mrf.mxu0
      %v2891 = vadd.f32 0.0, %v2890
      %2892 = vmatmul.f32.gmra.mxu0 %v2049
      %v2893 = vpop.f32.mrf.mxu0
      %v2894 = vadd.f32 0.0, %v2893
      %2895 = vmatmul.f32.gmra.mxu0 %v2052
      %v2896 = vpop.f32.mrf.mxu0
      %v2897 = vadd.f32 0.0, %v2896
      %2898 = vmatmul.f32.gmra.mxu0 %v2055
      %v2899 = vpop.f32.mrf.mxu0
      %v2900 = vadd.f32 0.0, %v2899
      %2901 = vmatmul.f32.gmra.mxu0 %v2058
      %v2902 = vpop.f32.mrf.mxu0
      %v2903 = vadd.f32 0.0, %v2902
      %2904 = vmatmul.f32.gmra.mxu0 %v2061
      %v2905 = vpop.f32.mrf.mxu0
      %v2906 = vadd.f32 0.0, %v2905
      %2907 = vmatmul.f32.gmra.mxu0 %v2064
      %v2908 = vpop.f32.mrf.mxu0
      %v2909 = vadd.f32 0.0, %v2908
      %2910 = vmatmul.f32.gmra.mxu0 %v2067
      %v2911 = vpop.f32.mrf.mxu0
      %v2912 = vadd.f32 0.0, %v2911
      %2913 = vmatmul.f32.gmra.mxu0 %v2070
      %v2914 = vpop.f32.mrf.mxu0
      %v2915 = vadd.f32 0.0, %v2914
      %2916 = vmatmul.f32.gmra.mxu0 %v2073
      %v2917 = vpop.f32.mrf.mxu0
      %v2918 = vadd.f32 0.0, %v2917
      %2919 = vmatmul.f32.gmra.mxu0 %v2076
      %v2920 = vpop.f32.mrf.mxu0
      %v2921 = vadd.f32 0.0, %v2920
      %2922 = vdwg.mxu0
      %2923 = vmatpush.msra.mxu0 0.0
      %2924 = vmatpush.msra.mxu0 0.0
      %2925 = vmatpush.msra.mxu0 0.0
      %2926 = vmatpush.msra.mxu0 0.0
      %2927 = vmatpush.msra.mxu0 0.0
      %2928 = vmatpush.msra.mxu0 0.0
      %2929 = vmatpush.msra.mxu0 0.0
      %2930 = vmatpush.msra.mxu0 0.0
      %2931 = vmatpush.msra.mxu0 0.0
      %2932 = vmatpush.msra.mxu0 0.0
      %2933 = vmatpush.msra.mxu0 0.0
      %2934 = vmatpush.msra.mxu0 0.0
      %2935 = vmatpush.msra.mxu0 0.0
      %2936 = vmatpush.msra.mxu0 0.0
      %2937 = vmatpush.msra.mxu0 0.0
      %2938 = vmatpush.msra.mxu0 %v906
      %2939 = vmatmul.f32.gmra.mxu0 %v2031
      %v2940 = vpop.f32.mrf.mxu0
      %v2941 = vadd.f32 0.0, %v2940
      %2942 = vmatmul.f32.gmra.mxu0 %v2034
      %v2943 = vpop.f32.mrf.mxu0
      %v2944 = vadd.f32 0.0, %v2943
      %2945 = vmatmul.f32.gmra.mxu0 %v2037
      %v2946 = vpop.f32.mrf.mxu0
      %v2947 = vadd.f32 0.0, %v2946
      %2948 = vmatmul.f32.gmra.mxu0 %v2040
      %v2949 = vpop.f32.mrf.mxu0
      %v2950 = vadd.f32 0.0, %v2949
      %2951 = vmatmul.f32.gmra.mxu0 %v2043
      %v2952 = vpop.f32.mrf.mxu0
      %v2953 = vadd.f32 0.0, %v2952
      %2954 = vmatmul.f32.gmra.mxu0 %v2046
      %v2955 = vpop.f32.mrf.mxu0
      %v2956 = vadd.f32 0.0, %v2955
      %2957 = vmatmul.f32.gmra.mxu0 %v2049
      %v2958 = vpop.f32.mrf.mxu0
      %v2959 = vadd.f32 0.0, %v2958
      %2960 = vmatmul.f32.gmra.mxu0 %v2052
      %v2961 = vpop.f32.mrf.mxu0
      %v2962 = vadd.f32 0.0, %v2961
      %2963 = vmatmul.f32.gmra.mxu0 %v2055
      %v2964 = vpop.f32.mrf.mxu0
      %v2965 = vadd.f32 0.0, %v2964
      %2966 = vmatmul.f32.gmra.mxu0 %v2058
      %v2967 = vpop.f32.mrf.mxu0
      %v2968 = vadd.f32 0.0, %v2967
      %2969 = vmatmul.f32.gmra.mxu0 %v2061
      %v2970 = vpop.f32.mrf.mxu0
      %v2971 = vadd.f32 0.0, %v2970
      %2972 = vmatmul.f32.gmra.mxu0 %v2064
      %v2973 = vpop.f32.mrf.mxu0
      %v2974 = vadd.f32 0.0, %v2973
      %2975 = vmatmul.f32.gmra.mxu0 %v2067
      %v2976 = vpop.f32.mrf.mxu0
      %v2977 = vadd.f32 0.0, %v2976
      %2978 = vmatmul.f32.gmra.mxu0 %v2070
      %v2979 = vpop.f32.mrf.mxu0
      %v2980 = vadd.f32 0.0, %v2979
      %2981 = vmatmul.f32.gmra.mxu0 %v2073
      %v2982 = vpop.f32.mrf.mxu0
      %v2983 = vadd.f32 0.0, %v2982
      %2984 = vmatmul.f32.gmra.mxu0 %v2076
      %v2985 = vpop.f32.mrf.mxu0
      %v2986 = vadd.f32 0.0, %v2985
      %2987 = vdwg.mxu0
      %2988 = vmatpush.msra.mxu0 0.0
      %2989 = vmatpush.msra.mxu0 0.0
      %2990 = vmatpush.msra.mxu0 0.0
      %2991 = vmatpush.msra.mxu0 0.0
      %2992 = vmatpush.msra.mxu0 0.0
      %2993 = vmatpush.msra.mxu0 0.0
      %2994 = vmatpush.msra.mxu0 0.0
      %2995 = vmatpush.msra.mxu0 0.0
      %2996 = vmatpush.msra.mxu0 0.0
      %2997 = vmatpush.msra.mxu0 0.0
      %2998 = vmatpush.msra.mxu0 0.0
      %2999 = vmatpush.msra.mxu0 0.0
      %3000 = vmatpush.msra.mxu0 0.0
      %3001 = vmatpush.msra.mxu0 0.0
      %3002 = vmatpush.msra.mxu0 0.0
      %3003 = vmatpush.msra.mxu0 %v907
      %3004 = vmatmul.f32.gmra.mxu0 %v2031
      %v3005 = vpop.f32.mrf.mxu0
      %v3006 = vadd.f32 0.0, %v3005
      %3007 = vmatmul.f32.gmra.mxu0 %v2034
      %v3008 = vpop.f32.mrf.mxu0
      %v3009 = vadd.f32 0.0, %v3008
      %3010 = vmatmul.f32.gmra.mxu0 %v2037
      %v3011 = vpop.f32.mrf.mxu0
      %v3012 = vadd.f32 0.0, %v3011
      %3013 = vmatmul.f32.gmra.mxu0 %v2040
      %v3014 = vpop.f32.mrf.mxu0
      %v3015 = vadd.f32 0.0, %v3014
      %3016 = vmatmul.f32.gmra.mxu0 %v2043
      %v3017 = vpop.f32.mrf.mxu0
      %v3018 = vadd.f32 0.0, %v3017
      %3019 = vmatmul.f32.gmra.mxu0 %v2046
      %v3020 = vpop.f32.mrf.mxu0
      %v3021 = vadd.f32 0.0, %v3020
      %3022 = vmatmul.f32.gmra.mxu0 %v2049
      %v3023 = vpop.f32.mrf.mxu0
      %v3024 = vadd.f32 0.0, %v3023
      %3025 = vmatmul.f32.gmra.mxu0 %v2052
      %v3026 = vpop.f32.mrf.mxu0
      %v3027 = vadd.f32 0.0, %v3026
      %3028 = vmatmul.f32.gmra.mxu0 %v2055
      %v3029 = vpop.f32.mrf.mxu0
      %v3030 = vadd.f32 0.0, %v3029
      %3031 = vmatmul.f32.gmra.mxu0 %v2058
      %v3032 = vpop.f32.mrf.mxu0
      %v3033 = vadd.f32 0.0, %v3032
      %3034 = vmatmul.f32.gmra.mxu0 %v2061
      %v3035 = vpop.f32.mrf.mxu0
      %v3036 = vadd.f32 0.0, %v3035
      %3037 = vmatmul.f32.gmra.mxu0 %v2064
      %v3038 = vpop.f32.mrf.mxu0
      %v3039 = vadd.f32 0.0, %v3038
      %3040 = vmatmul.f32.gmra.mxu0 %v2067
      %v3041 = vpop.f32.mrf.mxu0
      %v3042 = vadd.f32 0.0, %v3041
      %3043 = vmatmul.f32.gmra.mxu0 %v2070
      %v3044 = vpop.f32.mrf.mxu0
      %v3045 = vadd.f32 0.0, %v3044
      %3046 = vmatmul.f32.gmra.mxu0 %v2073
      %v3047 = vpop.f32.mrf.mxu0
      %v3048 = vadd.f32 0.0, %v3047
      %3049 = vmatmul.f32.gmra.mxu0 %v2076
      %v3050 = vpop.f32.mrf.mxu0
      %v3051 = vadd.f32 0.0, %v3050
      %3052 = vdwg.mxu0
      %3053 = vmatpush.msra.mxu0 0.0
      %3054 = vmatpush.msra.mxu0 0.0
      %3055 = vmatpush.msra.mxu0 0.0
      %3056 = vmatpush.msra.mxu0 0.0
      %3057 = vmatpush.msra.mxu0 0.0
      %3058 = vmatpush.msra.mxu0 0.0
      %3059 = vmatpush.msra.mxu0 0.0
      %3060 = vmatpush.msra.mxu0 0.0
      %3061 = vmatpush.msra.mxu0 0.0
      %3062 = vmatpush.msra.mxu0 0.0
      %3063 = vmatpush.msra.mxu0 0.0
      %3064 = vmatpush.msra.mxu0 0.0
      %3065 = vmatpush.msra.mxu0 0.0
      %3066 = vmatpush.msra.mxu0 0.0
      %3067 = vmatpush.msra.mxu0 0.0
      %3068 = vmatpush.msra.mxu0 %v908
      %3069 = vmatmul.f32.gmra.mxu0 %v2031
      %v3070 = vpop.f32.mrf.mxu0
      %v3071 = vadd.f32 0.0, %v3070
      %3072 = vmatmul.f32.gmra.mxu0 %v2034
      %v3073 = vpop.f32.mrf.mxu0
      %v3074 = vadd.f32 0.0, %v3073
      %3075 = vmatmul.f32.gmra.mxu0 %v2037
      %v3076 = vpop.f32.mrf.mxu0
      %v3077 = vadd.f32 0.0, %v3076
      %3078 = vmatmul.f32.gmra.mxu0 %v2040
      %v3079 = vpop.f32.mrf.mxu0
      %v3080 = vadd.f32 0.0, %v3079
      %3081 = vmatmul.f32.gmra.mxu0 %v2043
      %v3082 = vpop.f32.mrf.mxu0
      %v3083 = vadd.f32 0.0, %v3082
      %3084 = vmatmul.f32.gmra.mxu0 %v2046
      %v3085 = vpop.f32.mrf.mxu0
      %v3086 = vadd.f32 0.0, %v3085
      %3087 = vmatmul.f32.gmra.mxu0 %v2049
      %v3088 = vpop.f32.mrf.mxu0
      %v3089 = vadd.f32 0.0, %v3088
      %3090 = vmatmul.f32.gmra.mxu0 %v2052
      %v3091 = vpop.f32.mrf.mxu0
      %v3092 = vadd.f32 0.0, %v3091
      %3093 = vmatmul.f32.gmra.mxu0 %v2055
      %v3094 = vpop.f32.mrf.mxu0
      %v3095 = vadd.f32 0.0, %v3094
      %3096 = vmatmul.f32.gmra.mxu0 %v2058
      %v3097 = vpop.f32.mrf.mxu0
      %v3098 = vadd.f32 0.0, %v3097
      %3099 = vmatmul.f32.gmra.mxu0 %v2061
      %v3100 = vpop.f32.mrf.mxu0
      %v3101 = vadd.f32 0.0, %v3100
      %3102 = vmatmul.f32.gmra.mxu0 %v2064
      %v3103 = vpop.f32.mrf.mxu0
      %v3104 = vadd.f32 0.0, %v3103
      %3105 = vmatmul.f32.gmra.mxu0 %v2067
      %v3106 = vpop.f32.mrf.mxu0
      %v3107 = vadd.f32 0.0, %v3106
      %3108 = vmatmul.f32.gmra.mxu0 %v2070
      %v3109 = vpop.f32.mrf.mxu0
      %v3110 = vadd.f32 0.0, %v3109
      %3111 = vmatmul.f32.gmra.mxu0 %v2073
      %v3112 = vpop.f32.mrf.mxu0
      %v3113 = vadd.f32 0.0, %v3112
      %3114 = vmatmul.f32.gmra.mxu0 %v2076
      %v3115 = vpop.f32.mrf.mxu0
      %v3116 = vadd.f32 0.0, %v3115
      %3117 = vdwg.mxu0
      %v3118 = vld [vmem:[#allocation4] sm:$0xff]
      %v3119 = vld [vmem:[#allocation4 + $0x8] sm:$0xff]
      %v3120 = vld [vmem:[#allocation4 + $0x10] sm:$0xff]
      %v3121 = vld [vmem:[#allocation4 + $0x18] sm:$0xff]
      %v3122 = vld [vmem:[#allocation4 + $0x20] sm:$0xff]
      %v3123 = vld [vmem:[#allocation4 + $0x28] sm:$0xff]
      %v3124 = vld [vmem:[#allocation4 + $0x30] sm:$0xff]
      %v3125 = vld [vmem:[#allocation4 + $0x38] sm:$0xff]
      %v3126 = vld [vmem:[#allocation4 + $0x40] sm:$0xff]
      %v3127 = vld [vmem:[#allocation4 + $0x48] sm:$0xff]
      %v3128 = vld [vmem:[#allocation4 + $0x50] sm:$0xff]
      %v3129 = vld [vmem:[#allocation4 + $0x58] sm:$0xff]
      %v3130 = vld [vmem:[#allocation4 + $0x60] sm:$0xff]
      %v3131 = vld [vmem:[#allocation4 + $0x68] sm:$0xff]
      %v3132 = vld [vmem:[#allocation4 + $0x70] sm:$0xff]
      %v3133 = vld [vmem:[#allocation4 + $0x78] sm:$0xff]
      %3135 = vset.pattern.permute.xlu0 0
      %3136 = vperm.xlu0 %3135, %v1757
      %v3137 = vpop.permute.xlu0 %3136
      %3140 = vset.pattern.permute.xlu0 0
      %3141 = vperm.xlu0 %3140, %v1758
      %v3142 = vpop.permute.xlu0 %3141
      %3145 = vset.pattern.permute.xlu0 0
      %3146 = vperm.xlu0 %3145, %v1759
      %v3147 = vpop.permute.xlu0 %3146
      %3150 = vset.pattern.permute.xlu0 0
      %3151 = vperm.xlu0 %3150, %v1760
      %v3152 = vpop.permute.xlu0 %3151
      %3155 = vset.pattern.permute.xlu0 0
      %3156 = vperm.xlu0 %3155, %v1761
      %v3157 = vpop.permute.xlu0 %3156
      %3160 = vset.pattern.permute.xlu0 0
      %3161 = vperm.xlu0 %3160, %v1762
      %v3162 = vpop.permute.xlu0 %3161
      %3165 = vset.pattern.permute.xlu0 0
      %3166 = vperm.xlu0 %3165, %v1763
      %v3167 = vpop.permute.xlu0 %3166
      %3170 = vset.pattern.permute.xlu0 0
      %3171 = vperm.xlu0 %3170, %v1764
      %v3172 = vpop.permute.xlu0 %3171
      %3175 = vset.pattern.permute.xlu0 0
      %3176 = vperm.xlu0 %3175, %v1765
      %v3177 = vpop.permute.xlu0 %3176
      %3180 = vset.pattern.permute.xlu0 0
      %3181 = vperm.xlu0 %3180, %v1766
      %v3182 = vpop.permute.xlu0 %3181
      %3185 = vset.pattern.permute.xlu0 0
      %3186 = vperm.xlu0 %3185, %v1767
      %v3187 = vpop.permute.xlu0 %3186
      %3190 = vset.pattern.permute.xlu0 0
      %3191 = vperm.xlu0 %3190, %v1768
      %v3192 = vpop.permute.xlu0 %3191
      %3195 = vset.pattern.permute.xlu0 0
      %3196 = vperm.xlu0 %3195, %v1769
      %v3197 = vpop.permute.xlu0 %3196
      %3200 = vset.pattern.permute.xlu0 0
      %3201 = vperm.xlu0 %3200, %v1770
      %v3202 = vpop.permute.xlu0 %3201
      %3205 = vset.pattern.permute.xlu0 0
      %3206 = vperm.xlu0 %3205, %v1771
      %v3207 = vpop.permute.xlu0 %3206
      %3210 = vset.pattern.permute.xlu0 0
      %3211 = vperm.xlu0 %3210, %v1772
      %v3212 = vpop.permute.xlu0 %3211
      %3215 = vset.pattern.permute.xlu0 0
      %3216 = vperm.xlu0 %3215, %v1773
      %v3217 = vpop.permute.xlu0 %3216
      %3220 = vset.pattern.permute.xlu0 0
      %3221 = vperm.xlu0 %3220, %v1774
      %v3222 = vpop.permute.xlu0 %3221
      %3225 = vset.pattern.permute.xlu0 0
      %3226 = vperm.xlu0 %3225, %v1775
      %v3227 = vpop.permute.xlu0 %3226
      %3230 = vset.pattern.permute.xlu0 0
      %3231 = vperm.xlu0 %3230, %v1776
      %v3232 = vpop.permute.xlu0 %3231
      %3235 = vset.pattern.permute.xlu0 0
      %3236 = vperm.xlu0 %3235, %v1777
      %v3237 = vpop.permute.xlu0 %3236
      %3240 = vset.pattern.permute.xlu0 0
      %3241 = vperm.xlu0 %3240, %v1778
      %v3242 = vpop.permute.xlu0 %3241
      %3245 = vset.pattern.permute.xlu0 0
      %3246 = vperm.xlu0 %3245, %v1779
      %v3247 = vpop.permute.xlu0 %3246
      %3250 = vset.pattern.permute.xlu0 0
      %3251 = vperm.xlu0 %3250, %v1780
      %v3252 = vpop.permute.xlu0 %3251
      %3255 = vset.pattern.permute.xlu0 0
      %3256 = vperm.xlu0 %3255, %v1781
      %v3257 = vpop.permute.xlu0 %3256
      %3260 = vset.pattern.permute.xlu0 0
      %3261 = vperm.xlu0 %3260, %v1782
      %v3262 = vpop.permute.xlu0 %3261
      %3265 = vset.pattern.permute.xlu0 0
      %3266 = vperm.xlu0 %3265, %v1783
      %v3267 = vpop.permute.xlu0 %3266
      %3270 = vset.pattern.permute.xlu0 0
      %3271 = vperm.xlu0 %3270, %v1784
      %v3272 = vpop.permute.xlu0 %3271
      %3275 = vset.pattern.permute.xlu0 0
      %3276 = vperm.xlu0 %3275, %v1785
      %v3277 = vpop.permute.xlu0 %3276
      %3280 = vset.pattern.permute.xlu0 0
      %3281 = vperm.xlu0 %3280, %v1786
      %v3282 = vpop.permute.xlu0 %3281
      %3285 = vset.pattern.permute.xlu0 0
      %3286 = vperm.xlu0 %3285, %v1787
      %v3287 = vpop.permute.xlu0 %3286
      %3290 = vset.pattern.permute.xlu0 0
      %3291 = vperm.xlu0 %3290, %v1788
      %v3292 = vpop.permute.xlu0 %3291
      %3295 = vset.pattern.permute.xlu0 0
      %3296 = vperm.xlu0 %3295, %v1789
      %v3297 = vpop.permute.xlu0 %3296
      %3300 = vset.pattern.permute.xlu0 0
      %3301 = vperm.xlu0 %3300, %v1790
      %v3302 = vpop.permute.xlu0 %3301
      %3305 = vset.pattern.permute.xlu0 0
      %3306 = vperm.xlu0 %3305, %v1791
      %v3307 = vpop.permute.xlu0 %3306
      %3310 = vset.pattern.permute.xlu0 0
      %3311 = vperm.xlu0 %3310, %v1792
      %v3312 = vpop.permute.xlu0 %3311
      %3315 = vset.pattern.permute.xlu0 0
      %3316 = vperm.xlu0 %3315, %v1793
      %v3317 = vpop.permute.xlu0 %3316
      %3320 = vset.pattern.permute.xlu0 0
      %3321 = vperm.xlu0 %3320, %v1794
      %v3322 = vpop.permute.xlu0 %3321
      %3325 = vset.pattern.permute.xlu0 0
      %3326 = vperm.xlu0 %3325, %v1795
      %v3327 = vpop.permute.xlu0 %3326
      %3330 = vset.pattern.permute.xlu0 0
      %3331 = vperm.xlu0 %3330, %v1796
      %v3332 = vpop.permute.xlu0 %3331
      %3335 = vset.pattern.permute.xlu0 0
      %3336 = vperm.xlu0 %3335, %v1797
      %v3337 = vpop.permute.xlu0 %3336
      %3340 = vset.pattern.permute.xlu0 0
      %3341 = vperm.xlu0 %3340, %v1798
      %v3342 = vpop.permute.xlu0 %3341
      %3345 = vset.pattern.permute.xlu0 0
      %3346 = vperm.xlu0 %3345, %v1799
      %v3347 = vpop.permute.xlu0 %3346
      %3350 = vset.pattern.permute.xlu0 0
      %3351 = vperm.xlu0 %3350, %v1800
      %v3352 = vpop.permute.xlu0 %3351
      %3355 = vset.pattern.permute.xlu0 0
      %3356 = vperm.xlu0 %3355, %v1801
      %v3357 = vpop.permute.xlu0 %3356
      %3360 = vset.pattern.permute.xlu0 0
      %3361 = vperm.xlu0 %3360, %v1802
      %v3362 = vpop.permute.xlu0 %3361
      %3365 = vset.pattern.permute.xlu0 0
      %3366 = vperm.xlu0 %3365, %v1803
      %v3367 = vpop.permute.xlu0 %3366
      %3370 = vset.pattern.permute.xlu0 0
      %3371 = vperm.xlu0 %3370, %v1804
      %v3372 = vpop.permute.xlu0 %3371
      %3375 = vset.pattern.permute.xlu0 0
      %3376 = vperm.xlu0 %3375, %v1805
      %v3377 = vpop.permute.xlu0 %3376
      %3380 = vset.pattern.permute.xlu0 0
      %3381 = vperm.xlu0 %3380, %v1806
      %v3382 = vpop.permute.xlu0 %3381
      %3385 = vset.pattern.permute.xlu0 0
      %3386 = vperm.xlu0 %3385, %v1807
      %v3387 = vpop.permute.xlu0 %3386
      %3390 = vset.pattern.permute.xlu0 0
      %3391 = vperm.xlu0 %3390, %v1808
      %v3392 = vpop.permute.xlu0 %3391
      %3395 = vset.pattern.permute.xlu0 0
      %3396 = vperm.xlu0 %3395, %v1809
      %v3397 = vpop.permute.xlu0 %3396
      %3400 = vset.pattern.permute.xlu0 0
      %3401 = vperm.xlu0 %3400, %v1810
      %v3402 = vpop.permute.xlu0 %3401
      %3405 = vset.pattern.permute.xlu0 0
      %3406 = vperm.xlu0 %3405, %v1811
      %v3407 = vpop.permute.xlu0 %3406
      %3410 = vset.pattern.permute.xlu0 0
      %3411 = vperm.xlu0 %3410, %v1812
      %v3412 = vpop.permute.xlu0 %3411
      %3415 = vset.pattern.permute.xlu0 0
      %3416 = vperm.xlu0 %3415, %v1813
      %v3417 = vpop.permute.xlu0 %3416
      %3420 = vset.pattern.permute.xlu0 0
      %3421 = vperm.xlu0 %3420, %v1814
      %v3422 = vpop.permute.xlu0 %3421
      %3425 = vset.pattern.permute.xlu0 0
      %3426 = vperm.xlu0 %3425, %v1815
      %v3427 = vpop.permute.xlu0 %3426
      %3430 = vset.pattern.permute.xlu0 0
      %3431 = vperm.xlu0 %3430, %v1816
      %v3432 = vpop.permute.xlu0 %3431
      %3435 = vset.pattern.permute.xlu0 0
      %3436 = vperm.xlu0 %3435, %v1817
      %v3437 = vpop.permute.xlu0 %3436
      %3440 = vset.pattern.permute.xlu0 0
      %3441 = vperm.xlu0 %3440, %v1818
      %v3442 = vpop.permute.xlu0 %3441
      %3445 = vset.pattern.permute.xlu0 0
      %3446 = vperm.xlu0 %3445, %v1819
      %v3447 = vpop.permute.xlu0 %3446
      %3450 = vset.pattern.permute.xlu0 0
      %3451 = vperm.xlu0 %3450, %v1820
      %v3452 = vpop.permute.xlu0 %3451
      %3455 = vset.pattern.permute.xlu0 0
      %3456 = vperm.xlu0 %3455, %v1821
      %v3457 = vpop.permute.xlu0 %3456
      %3460 = vset.pattern.permute.xlu0 0
      %3461 = vperm.xlu0 %3460, %v1822
      %v3462 = vpop.permute.xlu0 %3461
      %3465 = vset.pattern.permute.xlu0 0
      %3466 = vperm.xlu0 %3465, %v1823
      %v3467 = vpop.permute.xlu0 %3466
      %3470 = vset.pattern.permute.xlu0 0
      %3471 = vperm.xlu0 %3470, %v1824
      %v3472 = vpop.permute.xlu0 %3471
      %3475 = vset.pattern.permute.xlu0 0
      %3476 = vperm.xlu0 %3475, %v1825
      %v3477 = vpop.permute.xlu0 %3476
      %3480 = vset.pattern.permute.xlu0 0
      %3481 = vperm.xlu0 %3480, %v1826
      %v3482 = vpop.permute.xlu0 %3481
      %3485 = vset.pattern.permute.xlu0 0
      %3486 = vperm.xlu0 %3485, %v1827
      %v3487 = vpop.permute.xlu0 %3486
      %3490 = vset.pattern.permute.xlu0 0
      %3491 = vperm.xlu0 %3490, %v1828
      %v3492 = vpop.permute.xlu0 %3491
      %3495 = vset.pattern.permute.xlu0 0
      %3496 = vperm.xlu0 %3495, %v1829
      %v3497 = vpop.permute.xlu0 %3496
      %3500 = vset.pattern.permute.xlu0 0
      %3501 = vperm.xlu0 %3500, %v1830
      %v3502 = vpop.permute.xlu0 %3501
      %3505 = vset.pattern.permute.xlu0 0
      %3506 = vperm.xlu0 %3505, %v1831
      %v3507 = vpop.permute.xlu0 %3506
      %3510 = vset.pattern.permute.xlu0 0
      %3511 = vperm.xlu0 %3510, %v1832
      %v3512 = vpop.permute.xlu0 %3511
      %3515 = vset.pattern.permute.xlu0 0
      %3516 = vperm.xlu0 %3515, %v1833
      %v3517 = vpop.permute.xlu0 %3516
      %3520 = vset.pattern.permute.xlu0 0
      %3521 = vperm.xlu0 %3520, %v1834
      %v3522 = vpop.permute.xlu0 %3521
      %3525 = vset.pattern.permute.xlu0 0
      %3526 = vperm.xlu0 %3525, %v1835
      %v3527 = vpop.permute.xlu0 %3526
      %3530 = vset.pattern.permute.xlu0 0
      %3531 = vperm.xlu0 %3530, %v1836
      %v3532 = vpop.permute.xlu0 %3531
      %3535 = vset.pattern.permute.xlu0 0
      %3536 = vperm.xlu0 %3535, %v1837
      %v3537 = vpop.permute.xlu0 %3536
      %3540 = vset.pattern.permute.xlu0 0
      %3541 = vperm.xlu0 %3540, %v1838
      %v3542 = vpop.permute.xlu0 %3541
      %3545 = vset.pattern.permute.xlu0 0
      %3546 = vperm.xlu0 %3545, %v1839
      %v3547 = vpop.permute.xlu0 %3546
      %3550 = vset.pattern.permute.xlu0 0
      %3551 = vperm.xlu0 %3550, %v1840
      %v3552 = vpop.permute.xlu0 %3551
      %3555 = vset.pattern.permute.xlu0 0
      %3556 = vperm.xlu0 %3555, %v1841
      %v3557 = vpop.permute.xlu0 %3556
      %3560 = vset.pattern.permute.xlu0 0
      %3561 = vperm.xlu0 %3560, %v1842
      %v3562 = vpop.permute.xlu0 %3561
      %3565 = vset.pattern.permute.xlu0 0
      %3566 = vperm.xlu0 %3565, %v1843
      %v3567 = vpop.permute.xlu0 %3566
      %3570 = vset.pattern.permute.xlu0 0
      %3571 = vperm.xlu0 %3570, %v1844
      %v3572 = vpop.permute.xlu0 %3571
      %3575 = vset.pattern.permute.xlu0 0
      %3576 = vperm.xlu0 %3575, %v1845
      %v3577 = vpop.permute.xlu0 %3576
      %3580 = vset.pattern.permute.xlu0 0
      %3581 = vperm.xlu0 %3580, %v1846
      %v3582 = vpop.permute.xlu0 %3581
      %3585 = vset.pattern.permute.xlu0 0
      %3586 = vperm.xlu0 %3585, %v1847
      %v3587 = vpop.permute.xlu0 %3586
      %3590 = vset.pattern.permute.xlu0 0
      %3591 = vperm.xlu0 %3590, %v1848
      %v3592 = vpop.permute.xlu0 %3591
      %3595 = vset.pattern.permute.xlu0 0
      %3596 = vperm.xlu0 %3595, %v1849
      %v3597 = vpop.permute.xlu0 %3596
      %3600 = vset.pattern.permute.xlu0 0
      %3601 = vperm.xlu0 %3600, %v1850
      %v3602 = vpop.permute.xlu0 %3601
      %3605 = vset.pattern.permute.xlu0 0
      %3606 = vperm.xlu0 %3605, %v1851
      %v3607 = vpop.permute.xlu0 %3606
      %3610 = vset.pattern.permute.xlu0 0
      %3611 = vperm.xlu0 %3610, %v1852
      %v3612 = vpop.permute.xlu0 %3611
      %3615 = vset.pattern.permute.xlu0 0
      %3616 = vperm.xlu0 %3615, %v1853
      %v3617 = vpop.permute.xlu0 %3616
      %3620 = vset.pattern.permute.xlu0 0
      %3621 = vperm.xlu0 %3620, %v1854
      %v3622 = vpop.permute.xlu0 %3621
      %3625 = vset.pattern.permute.xlu0 0
      %3626 = vperm.xlu0 %3625, %v1855
      %v3627 = vpop.permute.xlu0 %3626
      %3630 = vset.pattern.permute.xlu0 0
      %3631 = vperm.xlu0 %3630, %v1856
      %v3632 = vpop.permute.xlu0 %3631
      %3635 = vset.pattern.permute.xlu0 0
      %3636 = vperm.xlu0 %3635, %v1857
      %v3637 = vpop.permute.xlu0 %3636
      %3640 = vset.pattern.permute.xlu0 0
      %3641 = vperm.xlu0 %3640, %v1858
      %v3642 = vpop.permute.xlu0 %3641
      %3645 = vset.pattern.permute.xlu0 0
      %3646 = vperm.xlu0 %3645, %v1859
      %v3647 = vpop.permute.xlu0 %3646
      %3650 = vset.pattern.permute.xlu0 0
      %3651 = vperm.xlu0 %3650, %v1860
      %v3652 = vpop.permute.xlu0 %3651
      %3655 = vset.pattern.permute.xlu0 0
      %3656 = vperm.xlu0 %3655, %v1861
      %v3657 = vpop.permute.xlu0 %3656
      %3660 = vset.pattern.permute.xlu0 0
      %3661 = vperm.xlu0 %3660, %v1862
      %v3662 = vpop.permute.xlu0 %3661
      %3665 = vset.pattern.permute.xlu0 0
      %3666 = vperm.xlu0 %3665, %v1863
      %v3667 = vpop.permute.xlu0 %3666
      %3670 = vset.pattern.permute.xlu0 0
      %3671 = vperm.xlu0 %3670, %v1864
      %v3672 = vpop.permute.xlu0 %3671
      %3675 = vset.pattern.permute.xlu0 0
      %3676 = vperm.xlu0 %3675, %v1865
      %v3677 = vpop.permute.xlu0 %3676
      %3680 = vset.pattern.permute.xlu0 0
      %3681 = vperm.xlu0 %3680, %v1866
      %v3682 = vpop.permute.xlu0 %3681
      %3685 = vset.pattern.permute.xlu0 0
      %3686 = vperm.xlu0 %3685, %v1867
      %v3687 = vpop.permute.xlu0 %3686
      %3690 = vset.pattern.permute.xlu0 0
      %3691 = vperm.xlu0 %3690, %v1868
      %v3692 = vpop.permute.xlu0 %3691
      %3695 = vset.pattern.permute.xlu0 0
      %3696 = vperm.xlu0 %3695, %v1869
      %v3697 = vpop.permute.xlu0 %3696
      %3700 = vset.pattern.permute.xlu0 0
      %3701 = vperm.xlu0 %3700, %v1870
      %v3702 = vpop.permute.xlu0 %3701
      %3705 = vset.pattern.permute.xlu0 0
      %3706 = vperm.xlu0 %3705, %v1871
      %v3707 = vpop.permute.xlu0 %3706
      %3710 = vset.pattern.permute.xlu0 0
      %3711 = vperm.xlu0 %3710, %v1872
      %v3712 = vpop.permute.xlu0 %3711
      %3715 = vset.pattern.permute.xlu0 0
      %3716 = vperm.xlu0 %3715, %v1873
      %v3717 = vpop.permute.xlu0 %3716
      %3720 = vset.pattern.permute.xlu0 0
      %3721 = vperm.xlu0 %3720, %v1874
      %v3722 = vpop.permute.xlu0 %3721
      %3725 = vset.pattern.permute.xlu0 0
      %3726 = vperm.xlu0 %3725, %v1875
      %v3727 = vpop.permute.xlu0 %3726
      %3730 = vset.pattern.permute.xlu0 0
      %3731 = vperm.xlu0 %3730, %v1876
      %v3732 = vpop.permute.xlu0 %3731
      %3735 = vset.pattern.permute.xlu0 0
      %3736 = vperm.xlu0 %3735, %v1877
      %v3737 = vpop.permute.xlu0 %3736
      %3740 = vset.pattern.permute.xlu0 0
      %3741 = vperm.xlu0 %3740, %v1878
      %v3742 = vpop.permute.xlu0 %3741
      %3745 = vset.pattern.permute.xlu0 0
      %3746 = vperm.xlu0 %3745, %v1879
      %v3747 = vpop.permute.xlu0 %3746
      %3750 = vset.pattern.permute.xlu0 0
      %3751 = vperm.xlu0 %3750, %v1880
      %v3752 = vpop.permute.xlu0 %3751
      %3755 = vset.pattern.permute.xlu0 0
      %3756 = vperm.xlu0 %3755, %v1881
      %v3757 = vpop.permute.xlu0 %3756
      %3760 = vset.pattern.permute.xlu0 0
      %3761 = vperm.xlu0 %3760, %v1882
      %v3762 = vpop.permute.xlu0 %3761
      %3765 = vset.pattern.permute.xlu0 0
      %3766 = vperm.xlu0 %3765, %v1883
      %v3767 = vpop.permute.xlu0 %3766
      %3770 = vset.pattern.permute.xlu0 0
      %3771 = vperm.xlu0 %3770, %v1884
      %v3772 = vpop.permute.xlu0 %3771
      %3775 = vset.pattern.permute.xlu0 0
      %3776 = vperm.xlu0 %3775, %v1885
      %v3777 = vpop.permute.xlu0 %3776
      %3780 = vset.pattern.permute.xlu0 0
      %3781 = vperm.xlu0 %3780, %v1886
      %v3782 = vpop.permute.xlu0 %3781
      %3785 = vset.pattern.permute.xlu0 0
      %3786 = vperm.xlu0 %3785, %v1887
      %v3787 = vpop.permute.xlu0 %3786
      %3790 = vset.pattern.permute.xlu0 0
      %3791 = vperm.xlu0 %3790, %v1888
      %v3792 = vpop.permute.xlu0 %3791
      %3795 = vset.pattern.permute.xlu0 0
      %3796 = vperm.xlu0 %3795, %v1889
      %v3797 = vpop.permute.xlu0 %3796
      %3800 = vset.pattern.permute.xlu0 0
      %3801 = vperm.xlu0 %3800, %v1890
      %v3802 = vpop.permute.xlu0 %3801
      %3805 = vset.pattern.permute.xlu0 0
      %3806 = vperm.xlu0 %3805, %v1891
      %v3807 = vpop.permute.xlu0 %3806
      %3810 = vset.pattern.permute.xlu0 0
      %3811 = vperm.xlu0 %3810, %v1892
      %v3812 = vpop.permute.xlu0 %3811
      %3815 = vset.pattern.permute.xlu0 0
      %3816 = vperm.xlu0 %3815, %v1893
      %v3817 = vpop.permute.xlu0 %3816
      %3820 = vset.pattern.permute.xlu0 0
      %3821 = vperm.xlu0 %3820, %v1894
      %v3822 = vpop.permute.xlu0 %3821
      %3825 = vset.pattern.permute.xlu0 0
      %3826 = vperm.xlu0 %3825, %v1895
      %v3827 = vpop.permute.xlu0 %3826
      %3830 = vset.pattern.permute.xlu0 0
      %3831 = vperm.xlu0 %3830, %v1896
      %v3832 = vpop.permute.xlu0 %3831
      %3835 = vset.pattern.permute.xlu0 0
      %3836 = vperm.xlu0 %3835, %v1897
      %v3837 = vpop.permute.xlu0 %3836
      %3840 = vset.pattern.permute.xlu0 0
      %3841 = vperm.xlu0 %3840, %v1898
      %v3842 = vpop.permute.xlu0 %3841
      %3845 = vset.pattern.permute.xlu0 0
      %3846 = vperm.xlu0 %3845, %v1899
      %v3847 = vpop.permute.xlu0 %3846
      %3850 = vset.pattern.permute.xlu0 0
      %3851 = vperm.xlu0 %3850, %v1900
      %v3852 = vpop.permute.xlu0 %3851
      %3855 = vset.pattern.permute.xlu0 0
      %3856 = vperm.xlu0 %3855, %v1901
      %v3857 = vpop.permute.xlu0 %3856
      %3860 = vset.pattern.permute.xlu0 0
      %3861 = vperm.xlu0 %3860, %v1902
      %v3862 = vpop.permute.xlu0 %3861
      %3865 = vset.pattern.permute.xlu0 0
      %3866 = vperm.xlu0 %3865, %v1903
      %v3867 = vpop.permute.xlu0 %3866
      %3870 = vset.pattern.permute.xlu0 0
      %3871 = vperm.xlu0 %3870, %v1904
      %v3872 = vpop.permute.xlu0 %3871
      %3875 = vset.pattern.permute.xlu0 0
      %3876 = vperm.xlu0 %3875, %v1905
      %v3877 = vpop.permute.xlu0 %3876
      %3880 = vset.pattern.permute.xlu0 0
      %3881 = vperm.xlu0 %3880, %v1906
      %v3882 = vpop.permute.xlu0 %3881
      %3885 = vset.pattern.permute.xlu0 0
      %3886 = vperm.xlu0 %3885, %v1907
      %v3887 = vpop.permute.xlu0 %3886
      %3890 = vset.pattern.permute.xlu0 0
      %3891 = vperm.xlu0 %3890, %v1908
      %v3892 = vpop.permute.xlu0 %3891
      %3895 = vset.pattern.permute.xlu0 0
      %3896 = vperm.xlu0 %3895, %v1909
      %v3897 = vpop.permute.xlu0 %3896
      %3900 = vset.pattern.permute.xlu0 0
      %3901 = vperm.xlu0 %3900, %v1910
      %v3902 = vpop.permute.xlu0 %3901
      %3905 = vset.pattern.permute.xlu0 0
      %3906 = vperm.xlu0 %3905, %v1911
      %v3907 = vpop.permute.xlu0 %3906
      %3910 = vset.pattern.permute.xlu0 0
      %3911 = vperm.xlu0 %3910, %v1912
      %v3912 = vpop.permute.xlu0 %3911
      %3915 = vset.pattern.permute.xlu0 0
      %3916 = vperm.xlu0 %3915, %v1913
      %v3917 = vpop.permute.xlu0 %3916
      %3920 = vset.pattern.permute.xlu0 0
      %3921 = vperm.xlu0 %3920, %v1914
      %v3922 = vpop.permute.xlu0 %3921
      %3925 = vset.pattern.permute.xlu0 0
      %3926 = vperm.xlu0 %3925, %v1915
      %v3927 = vpop.permute.xlu0 %3926
      %3930 = vset.pattern.permute.xlu0 0
      %3931 = vperm.xlu0 %3930, %v1916
      %v3932 = vpop.permute.xlu0 %3931
      %3935 = vset.pattern.permute.xlu0 0
      %3936 = vperm.xlu0 %3935, %v1917
      %v3937 = vpop.permute.xlu0 %3936
      %3940 = vset.pattern.permute.xlu0 0
      %3941 = vperm.xlu0 %3940, %v1918
      %v3942 = vpop.permute.xlu0 %3941
      %3945 = vset.pattern.permute.xlu0 0
      %3946 = vperm.xlu0 %3945, %v1919
      %v3947 = vpop.permute.xlu0 %3946
      %3950 = vset.pattern.permute.xlu0 0
      %3951 = vperm.xlu0 %3950, %v1920
      %v3952 = vpop.permute.xlu0 %3951
      %3955 = vset.pattern.permute.xlu0 0
      %3956 = vperm.xlu0 %3955, %v1921
      %v3957 = vpop.permute.xlu0 %3956
      %3960 = vset.pattern.permute.xlu0 0
      %3961 = vperm.xlu0 %3960, %v1922
      %v3962 = vpop.permute.xlu0 %3961
      %3965 = vset.pattern.permute.xlu0 0
      %3966 = vperm.xlu0 %3965, %v1923
      %v3967 = vpop.permute.xlu0 %3966
      %3970 = vset.pattern.permute.xlu0 0
      %3971 = vperm.xlu0 %3970, %v1924
      %v3972 = vpop.permute.xlu0 %3971
      %3975 = vset.pattern.permute.xlu0 0
      %3976 = vperm.xlu0 %3975, %v1925
      %v3977 = vpop.permute.xlu0 %3976
      %3980 = vset.pattern.permute.xlu0 0
      %3981 = vperm.xlu0 %3980, %v1926
      %v3982 = vpop.permute.xlu0 %3981
      %3985 = vset.pattern.permute.xlu0 0
      %3986 = vperm.xlu0 %3985, %v1927
      %v3987 = vpop.permute.xlu0 %3986
      %3990 = vset.pattern.permute.xlu0 0
      %3991 = vperm.xlu0 %3990, %v1928
      %v3992 = vpop.permute.xlu0 %3991
      %3995 = vset.pattern.permute.xlu0 0
      %3996 = vperm.xlu0 %3995, %v1929
      %v3997 = vpop.permute.xlu0 %3996
      %4000 = vset.pattern.permute.xlu0 0
      %4001 = vperm.xlu0 %4000, %v1930
      %v4002 = vpop.permute.xlu0 %4001
      %4005 = vset.pattern.permute.xlu0 0
      %4006 = vperm.xlu0 %4005, %v1931
      %v4007 = vpop.permute.xlu0 %4006
      %4010 = vset.pattern.permute.xlu0 0
      %4011 = vperm.xlu0 %4010, %v1932
      %v4012 = vpop.permute.xlu0 %4011
      %4015 = vset.pattern.permute.xlu0 0
      %4016 = vperm.xlu0 %4015, %v1933
      %v4017 = vpop.permute.xlu0 %4016
      %4020 = vset.pattern.permute.xlu0 0
      %4021 = vperm.xlu0 %4020, %v1934
      %v4022 = vpop.permute.xlu0 %4021
      %4025 = vset.pattern.permute.xlu0 0
      %4026 = vperm.xlu0 %4025, %v1935
      %v4027 = vpop.permute.xlu0 %4026
      %4030 = vset.pattern.permute.xlu0 0
      %4031 = vperm.xlu0 %4030, %v1936
      %v4032 = vpop.permute.xlu0 %4031
      %4035 = vset.pattern.permute.xlu0 0
      %4036 = vperm.xlu0 %4035, %v1937
      %v4037 = vpop.permute.xlu0 %4036
      %4040 = vset.pattern.permute.xlu0 0
      %4041 = vperm.xlu0 %4040, %v1938
      %v4042 = vpop.permute.xlu0 %4041
      %4045 = vset.pattern.permute.xlu0 0
      %4046 = vperm.xlu0 %4045, %v1939
      %v4047 = vpop.permute.xlu0 %4046
      %4050 = vset.pattern.permute.xlu0 0
      %4051 = vperm.xlu0 %4050, %v1940
      %v4052 = vpop.permute.xlu0 %4051
      %4055 = vset.pattern.permute.xlu0 0
      %4056 = vperm.xlu0 %4055, %v1941
      %v4057 = vpop.permute.xlu0 %4056
      %4060 = vset.pattern.permute.xlu0 0
      %4061 = vperm.xlu0 %4060, %v1942
      %v4062 = vpop.permute.xlu0 %4061
      %4065 = vset.pattern.permute.xlu0 0
      %4066 = vperm.xlu0 %4065, %v1943
      %v4067 = vpop.permute.xlu0 %4066
      %4070 = vset.pattern.permute.xlu0 0
      %4071 = vperm.xlu0 %4070, %v1944
      %v4072 = vpop.permute.xlu0 %4071
      %4075 = vset.pattern.permute.xlu0 0
      %4076 = vperm.xlu0 %4075, %v1945
      %v4077 = vpop.permute.xlu0 %4076
      %4080 = vset.pattern.permute.xlu0 0
      %4081 = vperm.xlu0 %4080, %v1946
      %v4082 = vpop.permute.xlu0 %4081
      %4085 = vset.pattern.permute.xlu0 0
      %4086 = vperm.xlu0 %4085, %v1947
      %v4087 = vpop.permute.xlu0 %4086
      %4090 = vset.pattern.permute.xlu0 0
      %4091 = vperm.xlu0 %4090, %v1948
      %v4092 = vpop.permute.xlu0 %4091
      %4095 = vset.pattern.permute.xlu0 0
      %4096 = vperm.xlu0 %4095, %v1949
      %v4097 = vpop.permute.xlu0 %4096
      %4100 = vset.pattern.permute.xlu0 0
      %4101 = vperm.xlu0 %4100, %v1950
      %v4102 = vpop.permute.xlu0 %4101
      %4105 = vset.pattern.permute.xlu0 0
      %4106 = vperm.xlu0 %4105, %v1951
      %v4107 = vpop.permute.xlu0 %4106
      %4110 = vset.pattern.permute.xlu0 0
      %4111 = vperm.xlu0 %4110, %v1952
      %v4112 = vpop.permute.xlu0 %4111
      %4115 = vset.pattern.permute.xlu0 0
      %4116 = vperm.xlu0 %4115, %v1953
      %v4117 = vpop.permute.xlu0 %4116
      %4120 = vset.pattern.permute.xlu0 0
      %4121 = vperm.xlu0 %4120, %v1954
      %v4122 = vpop.permute.xlu0 %4121
      %4125 = vset.pattern.permute.xlu0 0
      %4126 = vperm.xlu0 %4125, %v1955
      %v4127 = vpop.permute.xlu0 %4126
      %4130 = vset.pattern.permute.xlu0 0
      %4131 = vperm.xlu0 %4130, %v1956
      %v4132 = vpop.permute.xlu0 %4131
      %4135 = vset.pattern.permute.xlu0 0
      %4136 = vperm.xlu0 %4135, %v1957
      %v4137 = vpop.permute.xlu0 %4136
      %4140 = vset.pattern.permute.xlu0 0
      %4141 = vperm.xlu0 %4140, %v1958
      %v4142 = vpop.permute.xlu0 %4141
      %4145 = vset.pattern.permute.xlu0 0
      %4146 = vperm.xlu0 %4145, %v1959
      %v4147 = vpop.permute.xlu0 %4146
      %4150 = vset.pattern.permute.xlu0 0
      %4151 = vperm.xlu0 %4150, %v1960
      %v4152 = vpop.permute.xlu0 %4151
      %4155 = vset.pattern.permute.xlu0 0
      %4156 = vperm.xlu0 %4155, %v1961
      %v4157 = vpop.permute.xlu0 %4156
      %4160 = vset.pattern.permute.xlu0 0
      %4161 = vperm.xlu0 %4160, %v1962
      %v4162 = vpop.permute.xlu0 %4161
      %4165 = vset.pattern.permute.xlu0 0
      %4166 = vperm.xlu0 %4165, %v1963
      %v4167 = vpop.permute.xlu0 %4166
      %4170 = vset.pattern.permute.xlu0 0
      %4171 = vperm.xlu0 %4170, %v1964
      %v4172 = vpop.permute.xlu0 %4171
      %4175 = vset.pattern.permute.xlu0 0
      %4176 = vperm.xlu0 %4175, %v1965
      %v4177 = vpop.permute.xlu0 %4176
      %4180 = vset.pattern.permute.xlu0 0
      %4181 = vperm.xlu0 %4180, %v1966
      %v4182 = vpop.permute.xlu0 %4181
      %4185 = vset.pattern.permute.xlu0 0
      %4186 = vperm.xlu0 %4185, %v1967
      %v4187 = vpop.permute.xlu0 %4186
      %4190 = vset.pattern.permute.xlu0 0
      %4191 = vperm.xlu0 %4190, %v1968
      %v4192 = vpop.permute.xlu0 %4191
      %4195 = vset.pattern.permute.xlu0 0
      %4196 = vperm.xlu0 %4195, %v1969
      %v4197 = vpop.permute.xlu0 %4196
      %4200 = vset.pattern.permute.xlu0 0
      %4201 = vperm.xlu0 %4200, %v1970
      %v4202 = vpop.permute.xlu0 %4201
      %4205 = vset.pattern.permute.xlu0 0
      %4206 = vperm.xlu0 %4205, %v1971
      %v4207 = vpop.permute.xlu0 %4206
      %4210 = vset.pattern.permute.xlu0 0
      %4211 = vperm.xlu0 %4210, %v1972
      %v4212 = vpop.permute.xlu0 %4211
      %4215 = vset.pattern.permute.xlu0 0
      %4216 = vperm.xlu0 %4215, %v1973
      %v4217 = vpop.permute.xlu0 %4216
      %4220 = vset.pattern.permute.xlu0 0
      %4221 = vperm.xlu0 %4220, %v1974
      %v4222 = vpop.permute.xlu0 %4221
      %4225 = vset.pattern.permute.xlu0 0
      %4226 = vperm.xlu0 %4225, %v1975
      %v4227 = vpop.permute.xlu0 %4226
      %4230 = vset.pattern.permute.xlu0 0
      %4231 = vperm.xlu0 %4230, %v1976
      %v4232 = vpop.permute.xlu0 %4231
      %4235 = vset.pattern.permute.xlu0 0
      %4236 = vperm.xlu0 %4235, %v1977
      %v4237 = vpop.permute.xlu0 %4236
      %4240 = vset.pattern.permute.xlu0 0
      %4241 = vperm.xlu0 %4240, %v1978
      %v4242 = vpop.permute.xlu0 %4241
      %4245 = vset.pattern.permute.xlu0 0
      %4246 = vperm.xlu0 %4245, %v1979
      %v4247 = vpop.permute.xlu0 %4246
      %4250 = vset.pattern.permute.xlu0 0
      %4251 = vperm.xlu0 %4250, %v1980
      %v4252 = vpop.permute.xlu0 %4251
      %4255 = vset.pattern.permute.xlu0 0
      %4256 = vperm.xlu0 %4255, %v1981
      %v4257 = vpop.permute.xlu0 %4256
      %4260 = vset.pattern.permute.xlu0 0
      %4261 = vperm.xlu0 %4260, %v1982
      %v4262 = vpop.permute.xlu0 %4261
      %4265 = vset.pattern.permute.xlu0 0
      %4266 = vperm.xlu0 %4265, %v1983
      %v4267 = vpop.permute.xlu0 %4266
      %4270 = vset.pattern.permute.xlu0 0
      %4271 = vperm.xlu0 %4270, %v1984
      %v4272 = vpop.permute.xlu0 %4271
      %4275 = vset.pattern.permute.xlu0 0
      %4276 = vperm.xlu0 %4275, %v1985
      %v4277 = vpop.permute.xlu0 %4276
      %4280 = vset.pattern.permute.xlu0 0
      %4281 = vperm.xlu0 %4280, %v1986
      %v4282 = vpop.permute.xlu0 %4281
      %4285 = vset.pattern.permute.xlu0 0
      %4286 = vperm.xlu0 %4285, %v1987
      %v4287 = vpop.permute.xlu0 %4286
      %4290 = vset.pattern.permute.xlu0 0
      %4291 = vperm.xlu0 %4290, %v1988
      %v4292 = vpop.permute.xlu0 %4291
      %4295 = vset.pattern.permute.xlu0 0
      %4296 = vperm.xlu0 %4295, %v1989
      %v4297 = vpop.permute.xlu0 %4296
      %4300 = vset.pattern.permute.xlu0 0
      %4301 = vperm.xlu0 %4300, %v1990
      %v4302 = vpop.permute.xlu0 %4301
      %4305 = vset.pattern.permute.xlu0 0
      %4306 = vperm.xlu0 %4305, %v1991
      %v4307 = vpop.permute.xlu0 %4306
      %4310 = vset.pattern.permute.xlu0 0
      %4311 = vperm.xlu0 %4310, %v1992
      %v4312 = vpop.permute.xlu0 %4311
      %4315 = vset.pattern.permute.xlu0 0
      %4316 = vperm.xlu0 %4315, %v1993
      %v4317 = vpop.permute.xlu0 %4316
      %4320 = vset.pattern.permute.xlu0 0
      %4321 = vperm.xlu0 %4320, %v1994
      %v4322 = vpop.permute.xlu0 %4321
      %4325 = vset.pattern.permute.xlu0 0
      %4326 = vperm.xlu0 %4325, %v1995
      %v4327 = vpop.permute.xlu0 %4326
      %4330 = vset.pattern.permute.xlu0 0
      %4331 = vperm.xlu0 %4330, %v1996
      %v4332 = vpop.permute.xlu0 %4331
      %4335 = vset.pattern.permute.xlu0 0
      %4336 = vperm.xlu0 %4335, %v1997
      %v4337 = vpop.permute.xlu0 %4336
      %4340 = vset.pattern.permute.xlu0 0
      %4341 = vperm.xlu0 %4340, %v1998
      %v4342 = vpop.permute.xlu0 %4341
      %4345 = vset.pattern.permute.xlu0 0
      %4346 = vperm.xlu0 %4345, %v1999
      %v4347 = vpop.permute.xlu0 %4346
      %4350 = vset.pattern.permute.xlu0 0
      %4351 = vperm.xlu0 %4350, %v2000
      %v4352 = vpop.permute.xlu0 %4351
      %4355 = vset.pattern.permute.xlu0 0
      %4356 = vperm.xlu0 %4355, %v2001
      %v4357 = vpop.permute.xlu0 %4356
      %4360 = vset.pattern.permute.xlu0 0
      %4361 = vperm.xlu0 %4360, %v2002
      %v4362 = vpop.permute.xlu0 %4361
      %4365 = vset.pattern.permute.xlu0 0
      %4366 = vperm.xlu0 %4365, %v2003
      %v4367 = vpop.permute.xlu0 %4366
      %4370 = vset.pattern.permute.xlu0 0
      %4371 = vperm.xlu0 %4370, %v2004
      %v4372 = vpop.permute.xlu0 %4371
      %4375 = vset.pattern.permute.xlu0 0
      %4376 = vperm.xlu0 %4375, %v2005
      %v4377 = vpop.permute.xlu0 %4376
      %4380 = vset.pattern.permute.xlu0 0
      %4381 = vperm.xlu0 %4380, %v2006
      %v4382 = vpop.permute.xlu0 %4381
      %4385 = vset.pattern.permute.xlu0 0
      %4386 = vperm.xlu0 %4385, %v2007
      %v4387 = vpop.permute.xlu0 %4386
      %4390 = vset.pattern.permute.xlu0 0
      %4391 = vperm.xlu0 %4390, %v2008
      %v4392 = vpop.permute.xlu0 %4391
      %4395 = vset.pattern.permute.xlu0 0
      %4396 = vperm.xlu0 %4395, %v2009
      %v4397 = vpop.permute.xlu0 %4396
      %4400 = vset.pattern.permute.xlu0 0
      %4401 = vperm.xlu0 %4400, %v2010
      %v4402 = vpop.permute.xlu0 %4401
      %4405 = vset.pattern.permute.xlu0 0
      %4406 = vperm.xlu0 %4405, %v2011
      %v4407 = vpop.permute.xlu0 %4406
      %4410 = vset.pattern.permute.xlu0 0
      %4411 = vperm.xlu0 %4410, %v2012
      %v4412 = vpop.permute.xlu0 %4411
      %v4414 = vadd.f32 %v3137, %v3118
      %v4415 = vadd.f32 %v3142, %v3119
      %v4416 = vadd.f32 %v3147, %v3120
      %v4417 = vadd.f32 %v3152, %v3121
      %v4418 = vadd.f32 %v3157, %v3122
      %v4419 = vadd.f32 %v3162, %v3123
      %v4420 = vadd.f32 %v3167, %v3124
      %v4421 = vadd.f32 %v3172, %v3125
      %v4422 = vadd.f32 %v3177, %v3126
      %v4423 = vadd.f32 %v3182, %v3127
      %v4424 = vadd.f32 %v3187, %v3128
      %v4425 = vadd.f32 %v3192, %v3129
      %v4426 = vadd.f32 %v3197, %v3130
      %v4427 = vadd.f32 %v3202, %v3131
      %v4428 = vadd.f32 %v3207, %v3132
      %v4429 = vadd.f32 %v3212, %v3133
      %v4430 = vadd.f32 %v3217, %v3118
      %v4431 = vadd.f32 %v3222, %v3119
      %v4432 = vadd.f32 %v3227, %v3120
      %v4433 = vadd.f32 %v3232, %v3121
      %v4434 = vadd.f32 %v3237, %v3122
      %v4435 = vadd.f32 %v3242, %v3123
      %v4436 = vadd.f32 %v3247, %v3124
      %v4437 = vadd.f32 %v3252, %v3125
      %v4438 = vadd.f32 %v3257, %v3126
      %v4439 = vadd.f32 %v3262, %v3127
      %v4440 = vadd.f32 %v3267, %v3128
      %v4441 = vadd.f32 %v3272, %v3129
      %v4442 = vadd.f32 %v3277, %v3130
      %v4443 = vadd.f32 %v3282, %v3131
      %v4444 = vadd.f32 %v3287, %v3132
      %v4445 = vadd.f32 %v3292, %v3133
      %v4446 = vadd.f32 %v3297, %v3118
      %v4447 = vadd.f32 %v3302, %v3119
      %v4448 = vadd.f32 %v3307, %v3120
      %v4449 = vadd.f32 %v3312, %v3121
      %v4450 = vadd.f32 %v3317, %v3122
      %v4451 = vadd.f32 %v3322, %v3123
      %v4452 = vadd.f32 %v3327, %v3124
      %v4453 = vadd.f32 %v3332, %v3125
      %v4454 = vadd.f32 %v3337, %v3126
      %v4455 = vadd.f32 %v3342, %v3127
      %v4456 = vadd.f32 %v3347, %v3128
      %v4457 = vadd.f32 %v3352, %v3129
      %v4458 = vadd.f32 %v3357, %v3130
      %v4459 = vadd.f32 %v3362, %v3131
      %v4460 = vadd.f32 %v3367, %v3132
      %v4461 = vadd.f32 %v3372, %v3133
      %v4462 = vadd.f32 %v3377, %v3118
      %v4463 = vadd.f32 %v3382, %v3119
      %v4464 = vadd.f32 %v3387, %v3120
      %v4465 = vadd.f32 %v3392, %v3121
      %v4466 = vadd.f32 %v3397, %v3122
      %v4467 = vadd.f32 %v3402, %v3123
      %v4468 = vadd.f32 %v3407, %v3124
      %v4469 = vadd.f32 %v3412, %v3125
      %v4470 = vadd.f32 %v3417, %v3126
      %v4471 = vadd.f32 %v3422, %v3127
      %v4472 = vadd.f32 %v3427, %v3128
      %v4473 = vadd.f32 %v3432, %v3129
      %v4474 = vadd.f32 %v3437, %v3130
      %v4475 = vadd.f32 %v3442, %v3131
      %v4476 = vadd.f32 %v3447, %v3132
      %v4477 = vadd.f32 %v3452, %v3133
      %v4478 = vadd.f32 %v3457, %v3118
      %v4479 = vadd.f32 %v3462, %v3119
      %v4480 = vadd.f32 %v3467, %v3120
      %v4481 = vadd.f32 %v3472, %v3121
      %v4482 = vadd.f32 %v3477, %v3122
      %v4483 = vadd.f32 %v3482, %v3123
      %v4484 = vadd.f32 %v3487, %v3124
      %v4485 = vadd.f32 %v3492, %v3125
      %v4486 = vadd.f32 %v3497, %v3126
      %v4487 = vadd.f32 %v3502, %v3127
      %v4488 = vadd.f32 %v3507, %v3128
      %v4489 = vadd.f32 %v3512, %v3129
      %v4490 = vadd.f32 %v3517, %v3130
      %v4491 = vadd.f32 %v3522, %v3131
      %v4492 = vadd.f32 %v3527, %v3132
      %v4493 = vadd.f32 %v3532, %v3133
      %v4494 = vadd.f32 %v3537, %v3118
      %v4495 = vadd.f32 %v3542, %v3119
      %v4496 = vadd.f32 %v3547, %v3120
      %v4497 = vadd.f32 %v3552, %v3121
      %v4498 = vadd.f32 %v3557, %v3122
      %v4499 = vadd.f32 %v3562, %v3123
      %v4500 = vadd.f32 %v3567, %v3124
      %v4501 = vadd.f32 %v3572, %v3125
      %v4502 = vadd.f32 %v3577, %v3126
      %v4503 = vadd.f32 %v3582, %v3127
      %v4504 = vadd.f32 %v3587, %v3128
      %v4505 = vadd.f32 %v3592, %v3129
      %v4506 = vadd.f32 %v3597, %v3130
      %v4507 = vadd.f32 %v3602, %v3131
      %v4508 = vadd.f32 %v3607, %v3132
      %v4509 = vadd.f32 %v3612, %v3133
      %v4510 = vadd.f32 %v3617, %v3118
      %v4511 = vadd.f32 %v3622, %v3119
      %v4512 = vadd.f32 %v3627, %v3120
      %v4513 = vadd.f32 %v3632, %v3121
      %v4514 = vadd.f32 %v3637, %v3122
      %v4515 = vadd.f32 %v3642, %v3123
      %v4516 = vadd.f32 %v3647, %v3124
      %v4517 = vadd.f32 %v3652, %v3125
      %v4518 = vadd.f32 %v3657, %v3126
      %v4519 = vadd.f32 %v3662, %v3127
      %v4520 = vadd.f32 %v3667, %v3128
      %v4521 = vadd.f32 %v3672, %v3129
      %v4522 = vadd.f32 %v3677, %v3130
      %v4523 = vadd.f32 %v3682, %v3131
      %v4524 = vadd.f32 %v3687, %v3132
      %v4525 = vadd.f32 %v3692, %v3133
      %v4526 = vadd.f32 %v3697, %v3118
      %v4527 = vadd.f32 %v3702, %v3119
      %v4528 = vadd.f32 %v3707, %v3120
      %v4529 = vadd.f32 %v3712, %v3121
      %v4530 = vadd.f32 %v3717, %v3122
      %v4531 = vadd.f32 %v3722, %v3123
      %v4532 = vadd.f32 %v3727, %v3124
      %v4533 = vadd.f32 %v3732, %v3125
      %v4534 = vadd.f32 %v3737, %v3126
      %v4535 = vadd.f32 %v3742, %v3127
      %v4536 = vadd.f32 %v3747, %v3128
      %v4537 = vadd.f32 %v3752, %v3129
      %v4538 = vadd.f32 %v3757, %v3130
      %v4539 = vadd.f32 %v3762, %v3131
      %v4540 = vadd.f32 %v3767, %v3132
      %v4541 = vadd.f32 %v3772, %v3133
      %v4542 = vadd.f32 %v3777, %v3118
      %v4543 = vadd.f32 %v3782, %v3119
      %v4544 = vadd.f32 %v3787, %v3120
      %v4545 = vadd.f32 %v3792, %v3121
      %v4546 = vadd.f32 %v3797, %v3122
      %v4547 = vadd.f32 %v3802, %v3123
      %v4548 = vadd.f32 %v3807, %v3124
      %v4549 = vadd.f32 %v3812, %v3125
      %v4550 = vadd.f32 %v3817, %v3126
      %v4551 = vadd.f32 %v3822, %v3127
      %v4552 = vadd.f32 %v3827, %v3128
      %v4553 = vadd.f32 %v3832, %v3129
      %v4554 = vadd.f32 %v3837, %v3130
      %v4555 = vadd.f32 %v3842, %v3131
      %v4556 = vadd.f32 %v3847, %v3132
      %v4557 = vadd.f32 %v3852, %v3133
      %v4558 = vadd.f32 %v3857, %v3118
      %v4559 = vadd.f32 %v3862, %v3119
      %v4560 = vadd.f32 %v3867, %v3120
      %v4561 = vadd.f32 %v3872, %v3121
      %v4562 = vadd.f32 %v3877, %v3122
      %v4563 = vadd.f32 %v3882, %v3123
      %v4564 = vadd.f32 %v3887, %v3124
      %v4565 = vadd.f32 %v3892, %v3125
      %v4566 = vadd.f32 %v3897, %v3126
      %v4567 = vadd.f32 %v3902, %v3127
      %v4568 = vadd.f32 %v3907, %v3128
      %v4569 = vadd.f32 %v3912, %v3129
      %v4570 = vadd.f32 %v3917, %v3130
      %v4571 = vadd.f32 %v3922, %v3131
      %v4572 = vadd.f32 %v3927, %v3132
      %v4573 = vadd.f32 %v3932, %v3133
      %v4574 = vadd.f32 %v3937, %v3118
      %v4575 = vadd.f32 %v3942, %v3119
      %v4576 = vadd.f32 %v3947, %v3120
      %v4577 = vadd.f32 %v3952, %v3121
      %v4578 = vadd.f32 %v3957, %v3122
      %v4579 = vadd.f32 %v3962, %v3123
      %v4580 = vadd.f32 %v3967, %v3124
      %v4581 = vadd.f32 %v3972, %v3125
      %v4582 = vadd.f32 %v3977, %v3126
      %v4583 = vadd.f32 %v3982, %v3127
      %v4584 = vadd.f32 %v3987, %v3128
      %v4585 = vadd.f32 %v3992, %v3129
      %v4586 = vadd.f32 %v3997, %v3130
      %v4587 = vadd.f32 %v4002, %v3131
      %v4588 = vadd.f32 %v4007, %v3132
      %v4589 = vadd.f32 %v4012, %v3133
      %v4590 = vadd.f32 %v4017, %v3118
      %v4591 = vadd.f32 %v4022, %v3119
      %v4592 = vadd.f32 %v4027, %v3120
      %v4593 = vadd.f32 %v4032, %v3121
      %v4594 = vadd.f32 %v4037, %v3122
      %v4595 = vadd.f32 %v4042, %v3123
      %v4596 = vadd.f32 %v4047, %v3124
      %v4597 = vadd.f32 %v4052, %v3125
      %v4598 = vadd.f32 %v4057, %v3126
      %v4599 = vadd.f32 %v4062, %v3127
      %v4600 = vadd.f32 %v4067, %v3128
      %v4601 = vadd.f32 %v4072, %v3129
      %v4602 = vadd.f32 %v4077, %v3130
      %v4603 = vadd.f32 %v4082, %v3131
      %v4604 = vadd.f32 %v4087, %v3132
      %v4605 = vadd.f32 %v4092, %v3133
      %v4606 = vadd.f32 %v4097, %v3118
      %v4607 = vadd.f32 %v4102, %v3119
      %v4608 = vadd.f32 %v4107, %v3120
      %v4609 = vadd.f32 %v4112, %v3121
      %v4610 = vadd.f32 %v4117, %v3122
      %v4611 = vadd.f32 %v4122, %v3123
      %v4612 = vadd.f32 %v4127, %v3124
      %v4613 = vadd.f32 %v4132, %v3125
      %v4614 = vadd.f32 %v4137, %v3126
      %v4615 = vadd.f32 %v4142, %v3127
      %v4616 = vadd.f32 %v4147, %v3128
      %v4617 = vadd.f32 %v4152, %v3129
      %v4618 = vadd.f32 %v4157, %v3130
      %v4619 = vadd.f32 %v4162, %v3131
      %v4620 = vadd.f32 %v4167, %v3132
      %v4621 = vadd.f32 %v4172, %v3133
      %v4622 = vadd.f32 %v4177, %v3118
      %v4623 = vadd.f32 %v4182, %v3119
      %v4624 = vadd.f32 %v4187, %v3120
      %v4625 = vadd.f32 %v4192, %v3121
      %v4626 = vadd.f32 %v4197, %v3122
      %v4627 = vadd.f32 %v4202, %v3123
      %v4628 = vadd.f32 %v4207, %v3124
      %v4629 = vadd.f32 %v4212, %v3125
      %v4630 = vadd.f32 %v4217, %v3126
      %v4631 = vadd.f32 %v4222, %v3127
      %v4632 = vadd.f32 %v4227, %v3128
      %v4633 = vadd.f32 %v4232, %v3129
      %v4634 = vadd.f32 %v4237, %v3130
      %v4635 = vadd.f32 %v4242, %v3131
      %v4636 = vadd.f32 %v4247, %v3132
      %v4637 = vadd.f32 %v4252, %v3133
      %v4638 = vadd.f32 %v4257, %v3118
      %v4639 = vadd.f32 %v4262, %v3119
      %v4640 = vadd.f32 %v4267, %v3120
      %v4641 = vadd.f32 %v4272, %v3121
      %v4642 = vadd.f32 %v4277, %v3122
      %v4643 = vadd.f32 %v4282, %v3123
      %v4644 = vadd.f32 %v4287, %v3124
      %v4645 = vadd.f32 %v4292, %v3125
      %v4646 = vadd.f32 %v4297, %v3126
      %v4647 = vadd.f32 %v4302, %v3127
      %v4648 = vadd.f32 %v4307, %v3128
      %v4649 = vadd.f32 %v4312, %v3129
      %v4650 = vadd.f32 %v4317, %v3130
      %v4651 = vadd.f32 %v4322, %v3131
      %v4652 = vadd.f32 %v4327, %v3132
      %v4653 = vadd.f32 %v4332, %v3133
      %v4654 = vadd.f32 %v4337, %v3118
      %v4655 = vadd.f32 %v4342, %v3119
      %v4656 = vadd.f32 %v4347, %v3120
      %v4657 = vadd.f32 %v4352, %v3121
      %v4658 = vadd.f32 %v4357, %v3122
      %v4659 = vadd.f32 %v4362, %v3123
      %v4660 = vadd.f32 %v4367, %v3124
      %v4661 = vadd.f32 %v4372, %v3125
      %v4662 = vadd.f32 %v4377, %v3126
      %v4663 = vadd.f32 %v4382, %v3127
      %v4664 = vadd.f32 %v4387, %v3128
      %v4665 = vadd.f32 %v4392, %v3129
      %v4666 = vadd.f32 %v4397, %v3130
      %v4667 = vadd.f32 %v4402, %v3131
      %v4668 = vadd.f32 %v4407, %v3132
      %v4669 = vadd.f32 %v4412, %v3133
      %v4670 = vadd.f32 %v4414, %v2096
      %v4671 = vadd.f32 %v4415, %v2099
      %v4672 = vadd.f32 %v4416, %v2102
      %v4673 = vadd.f32 %v4417, %v2105
      %v4674 = vadd.f32 %v4418, %v2108
      %v4675 = vadd.f32 %v4419, %v2111
      %v4676 = vadd.f32 %v4420, %v2114
      %v4677 = vadd.f32 %v4421, %v2117
      %v4678 = vadd.f32 %v4422, %v2120
      %v4679 = vadd.f32 %v4423, %v2123
      %v4680 = vadd.f32 %v4424, %v2126
      %v4681 = vadd.f32 %v4425, %v2129
      %v4682 = vadd.f32 %v4426, %v2132
      %v4683 = vadd.f32 %v4427, %v2135
      %v4684 = vadd.f32 %v4428, %v2138
      %v4685 = vadd.f32 %v4429, %v2141
      %v4686 = vadd.f32 %v4430, %v2161
      %v4687 = vadd.f32 %v4431, %v2164
      %v4688 = vadd.f32 %v4432, %v2167
      %v4689 = vadd.f32 %v4433, %v2170
      %v4690 = vadd.f32 %v4434, %v2173
      %v4691 = vadd.f32 %v4435, %v2176
      %v4692 = vadd.f32 %v4436, %v2179
      %v4693 = vadd.f32 %v4437, %v2182
      %v4694 = vadd.f32 %v4438, %v2185
      %v4695 = vadd.f32 %v4439, %v2188
      %v4696 = vadd.f32 %v4440, %v2191
      %v4697 = vadd.f32 %v4441, %v2194
      %v4698 = vadd.f32 %v4442, %v2197
      %v4699 = vadd.f32 %v4443, %v2200
      %v4700 = vadd.f32 %v4444, %v2203
      %v4701 = vadd.f32 %v4445, %v2206
      %v4702 = vadd.f32 %v4446, %v2226
      %v4703 = vadd.f32 %v4447, %v2229
      %v4704 = vadd.f32 %v4448, %v2232
      %v4705 = vadd.f32 %v4449, %v2235
      %v4706 = vadd.f32 %v4450, %v2238
      %v4707 = vadd.f32 %v4451, %v2241
      %v4708 = vadd.f32 %v4452, %v2244
      %v4709 = vadd.f32 %v4453, %v2247
      %v4710 = vadd.f32 %v4454, %v2250
      %v4711 = vadd.f32 %v4455, %v2253
      %v4712 = vadd.f32 %v4456, %v2256
      %v4713 = vadd.f32 %v4457, %v2259
      %v4714 = vadd.f32 %v4458, %v2262
      %v4715 = vadd.f32 %v4459, %v2265
      %v4716 = vadd.f32 %v4460, %v2268
      %v4717 = vadd.f32 %v4461, %v2271
      %v4718 = vadd.f32 %v4462, %v2291
      %v4719 = vadd.f32 %v4463, %v2294
      %v4720 = vadd.f32 %v4464, %v2297
      %v4721 = vadd.f32 %v4465, %v2300
      %v4722 = vadd.f32 %v4466, %v2303
      %v4723 = vadd.f32 %v4467, %v2306
      %v4724 = vadd.f32 %v4468, %v2309
      %v4725 = vadd.f32 %v4469, %v2312
      %v4726 = vadd.f32 %v4470, %v2315
      %v4727 = vadd.f32 %v4471, %v2318
      %v4728 = vadd.f32 %v4472, %v2321
      %v4729 = vadd.f32 %v4473, %v2324
      %v4730 = vadd.f32 %v4474, %v2327
      %v4731 = vadd.f32 %v4475, %v2330
      %v4732 = vadd.f32 %v4476, %v2333
      %v4733 = vadd.f32 %v4477, %v2336
      %v4734 = vadd.f32 %v4478, %v2356
      %v4735 = vadd.f32 %v4479, %v2359
      %v4736 = vadd.f32 %v4480, %v2362
      %v4737 = vadd.f32 %v4481, %v2365
      %v4738 = vadd.f32 %v4482, %v2368
      %v4739 = vadd.f32 %v4483, %v2371
      %v4740 = vadd.f32 %v4484, %v2374
      %v4741 = vadd.f32 %v4485, %v2377
      %v4742 = vadd.f32 %v4486, %v2380
      %v4743 = vadd.f32 %v4487, %v2383
      %v4744 = vadd.f32 %v4488, %v2386
      %v4745 = vadd.f32 %v4489, %v2389
      %v4746 = vadd.f32 %v4490, %v2392
      %v4747 = vadd.f32 %v4491, %v2395
      %v4748 = vadd.f32 %v4492, %v2398
      %v4749 = vadd.f32 %v4493, %v2401
      %v4750 = vadd.f32 %v4494, %v2421
      %v4751 = vadd.f32 %v4495, %v2424
      %v4752 = vadd.f32 %v4496, %v2427
      %v4753 = vadd.f32 %v4497, %v2430
      %v4754 = vadd.f32 %v4498, %v2433
      %v4755 = vadd.f32 %v4499, %v2436
      %v4756 = vadd.f32 %v4500, %v2439
      %v4757 = vadd.f32 %v4501, %v2442
      %v4758 = vadd.f32 %v4502, %v2445
      %v4759 = vadd.f32 %v4503, %v2448
      %v4760 = vadd.f32 %v4504, %v2451
      %v4761 = vadd.f32 %v4505, %v2454
      %v4762 = vadd.f32 %v4506, %v2457
      %v4763 = vadd.f32 %v4507, %v2460
      %v4764 = vadd.f32 %v4508, %v2463
      %v4765 = vadd.f32 %v4509, %v2466
      %v4766 = vadd.f32 %v4510, %v2486
      %v4767 = vadd.f32 %v4511, %v2489
      %v4768 = vadd.f32 %v4512, %v2492
      %v4769 = vadd.f32 %v4513, %v2495
      %v4770 = vadd.f32 %v4514, %v2498
      %v4771 = vadd.f32 %v4515, %v2501
      %v4772 = vadd.f32 %v4516, %v2504
      %v4773 = vadd.f32 %v4517, %v2507
      %v4774 = vadd.f32 %v4518, %v2510
      %v4775 = vadd.f32 %v4519, %v2513
      %v4776 = vadd.f32 %v4520, %v2516
      %v4777 = vadd.f32 %v4521, %v2519
      %v4778 = vadd.f32 %v4522, %v2522
      %v4779 = vadd.f32 %v4523, %v2525
      %v4780 = vadd.f32 %v4524, %v2528
      %v4781 = vadd.f32 %v4525, %v2531
      %v4782 = vadd.f32 %v4526, %v2551
      %v4783 = vadd.f32 %v4527, %v2554
      %v4784 = vadd.f32 %v4528, %v2557
      %v4785 = vadd.f32 %v4529, %v2560
      %v4786 = vadd.f32 %v4530, %v2563
      %v4787 = vadd.f32 %v4531, %v2566
      %v4788 = vadd.f32 %v4532, %v2569
      %v4789 = vadd.f32 %v4533, %v2572
      %v4790 = vadd.f32 %v4534, %v2575
      %v4791 = vadd.f32 %v4535, %v2578
      %v4792 = vadd.f32 %v4536, %v2581
      %v4793 = vadd.f32 %v4537, %v2584
      %v4794 = vadd.f32 %v4538, %v2587
      %v4795 = vadd.f32 %v4539, %v2590
      %v4796 = vadd.f32 %v4540, %v2593
      %v4797 = vadd.f32 %v4541, %v2596
      %v4798 = vadd.f32 %v4542, %v2616
      %v4799 = vadd.f32 %v4543, %v2619
      %v4800 = vadd.f32 %v4544, %v2622
      %v4801 = vadd.f32 %v4545, %v2625
      %v4802 = vadd.f32 %v4546, %v2628
      %v4803 = vadd.f32 %v4547, %v2631
      %v4804 = vadd.f32 %v4548, %v2634
      %v4805 = vadd.f32 %v4549, %v2637
      %v4806 = vadd.f32 %v4550, %v2640
      %v4807 = vadd.f32 %v4551, %v2643
      %v4808 = vadd.f32 %v4552, %v2646
      %v4809 = vadd.f32 %v4553, %v2649
      %v4810 = vadd.f32 %v4554, %v2652
      %v4811 = vadd.f32 %v4555, %v2655
      %v4812 = vadd.f32 %v4556, %v2658
      %v4813 = vadd.f32 %v4557, %v2661
      %v4814 = vadd.f32 %v4558, %v2681
      %v4815 = vadd.f32 %v4559, %v2684
      %v4816 = vadd.f32 %v4560, %v2687
      %v4817 = vadd.f32 %v4561, %v2690
      %v4818 = vadd.f32 %v4562, %v2693
      %v4819 = vadd.f32 %v4563, %v2696
      %v4820 = vadd.f32 %v4564, %v2699
      %v4821 = vadd.f32 %v4565, %v2702
      %v4822 = vadd.f32 %v4566, %v2705
      %v4823 = vadd.f32 %v4567, %v2708
      %v4824 = vadd.f32 %v4568, %v2711
      %v4825 = vadd.f32 %v4569, %v2714
      %v4826 = vadd.f32 %v4570, %v2717
      %v4827 = vadd.f32 %v4571, %v2720
      %v4828 = vadd.f32 %v4572, %v2723
      %v4829 = vadd.f32 %v4573, %v2726
      %v4830 = vadd.f32 %v4574, %v2746
      %v4831 = vadd.f32 %v4575, %v2749
      %v4832 = vadd.f32 %v4576, %v2752
      %v4833 = vadd.f32 %v4577, %v2755
      %v4834 = vadd.f32 %v4578, %v2758
      %v4835 = vadd.f32 %v4579, %v2761
      %v4836 = vadd.f32 %v4580, %v2764
      %v4837 = vadd.f32 %v4581, %v2767
      %v4838 = vadd.f32 %v4582, %v2770
      %v4839 = vadd.f32 %v4583, %v2773
      %v4840 = vadd.f32 %v4584, %v2776
      %v4841 = vadd.f32 %v4585, %v2779
      %v4842 = vadd.f32 %v4586, %v2782
      %v4843 = vadd.f32 %v4587, %v2785
      %v4844 = vadd.f32 %v4588, %v2788
      %v4845 = vadd.f32 %v4589, %v2791
      %v4846 = vadd.f32 %v4590, %v2811
      %v4847 = vadd.f32 %v4591, %v2814
      %v4848 = vadd.f32 %v4592, %v2817
      %v4849 = vadd.f32 %v4593, %v2820
      %v4850 = vadd.f32 %v4594, %v2823
      %v4851 = vadd.f32 %v4595, %v2826
      %v4852 = vadd.f32 %v4596, %v2829
      %v4853 = vadd.f32 %v4597, %v2832
      %v4854 = vadd.f32 %v4598, %v2835
      %v4855 = vadd.f32 %v4599, %v2838
      %v4856 = vadd.f32 %v4600, %v2841
      %v4857 = vadd.f32 %v4601, %v2844
      %v4858 = vadd.f32 %v4602, %v2847
      %v4859 = vadd.f32 %v4603, %v2850
      %v4860 = vadd.f32 %v4604, %v2853
      %v4861 = vadd.f32 %v4605, %v2856
      %v4862 = vadd.f32 %v4606, %v2876
      %v4863 = vadd.f32 %v4607, %v2879
      %v4864 = vadd.f32 %v4608, %v2882
      %v4865 = vadd.f32 %v4609, %v2885
      %v4866 = vadd.f32 %v4610, %v2888
      %v4867 = vadd.f32 %v4611, %v2891
      %v4868 = vadd.f32 %v4612, %v2894
      %v4869 = vadd.f32 %v4613, %v2897
      %v4870 = vadd.f32 %v4614, %v2900
      %v4871 = vadd.f32 %v4615, %v2903
      %v4872 = vadd.f32 %v4616, %v2906
      %v4873 = vadd.f32 %v4617, %v2909
      %v4874 = vadd.f32 %v4618, %v2912
      %v4875 = vadd.f32 %v4619, %v2915
      %v4876 = vadd.f32 %v4620, %v2918
      %v4877 = vadd.f32 %v4621, %v2921
      %v4878 = vadd.f32 %v4622, %v2941
      %v4879 = vadd.f32 %v4623, %v2944
      %v4880 = vadd.f32 %v4624, %v2947
      %v4881 = vadd.f32 %v4625, %v2950
      %v4882 = vadd.f32 %v4626, %v2953
      %v4883 = vadd.f32 %v4627, %v2956
      %v4884 = vadd.f32 %v4628, %v2959
      %v4885 = vadd.f32 %v4629, %v2962
      %v4886 = vadd.f32 %v4630, %v2965
      %v4887 = vadd.f32 %v4631, %v2968
      %v4888 = vadd.f32 %v4632, %v2971
      %v4889 = vadd.f32 %v4633, %v2974
      %v4890 = vadd.f32 %v4634, %v2977
      %v4891 = vadd.f32 %v4635, %v2980
      %v4892 = vadd.f32 %v4636, %v2983
      %v4893 = vadd.f32 %v4637, %v2986
      %v4894 = vadd.f32 %v4638, %v3006
      %v4895 = vadd.f32 %v4639, %v3009
      %v4896 = vadd.f32 %v4640, %v3012
      %v4897 = vadd.f32 %v4641, %v3015
      %v4898 = vadd.f32 %v4642, %v3018
      %v4899 = vadd.f32 %v4643, %v3021
      %v4900 = vadd.f32 %v4644, %v3024
      %v4901 = vadd.f32 %v4645, %v3027
      %v4902 = vadd.f32 %v4646, %v3030
      %v4903 = vadd.f32 %v4647, %v3033
      %v4904 = vadd.f32 %v4648, %v3036
      %v4905 = vadd.f32 %v4649, %v3039
      %v4906 = vadd.f32 %v4650, %v3042
      %v4907 = vadd.f32 %v4651, %v3045
      %v4908 = vadd.f32 %v4652, %v3048
      %v4909 = vadd.f32 %v4653, %v3051
      %v4910 = vadd.f32 %v4654, %v3071
      %v4911 = vadd.f32 %v4655, %v3074
      %v4912 = vadd.f32 %v4656, %v3077
      %v4913 = vadd.f32 %v4657, %v3080
      %v4914 = vadd.f32 %v4658, %v3083
      %v4915 = vadd.f32 %v4659, %v3086
      %v4916 = vadd.f32 %v4660, %v3089
      %v4917 = vadd.f32 %v4661, %v3092
      %v4918 = vadd.f32 %v4662, %v3095
      %v4919 = vadd.f32 %v4663, %v3098
      %v4920 = vadd.f32 %v4664, %v3101
      %v4921 = vadd.f32 %v4665, %v3104
      %v4922 = vadd.f32 %v4666, %v3107
      %v4923 = vadd.f32 %v4667, %v3110
      %v4924 = vadd.f32 %v4668, %v3113
      %v4925 = vadd.f32 %v4669, %v3116
      %vm4926 = vcmp.gt.f32.partialorder %v4670, 0.0
      %vm4927 = vcmp.gt.f32.partialorder %v4671, 0.0
      %vm4928 = vcmp.gt.f32.partialorder %v4672, 0.0
      %vm4929 = vcmp.gt.f32.partialorder %v4673, 0.0
      %vm4930 = vcmp.gt.f32.partialorder %v4674, 0.0
      %vm4931 = vcmp.gt.f32.partialorder %v4675, 0.0
      %vm4932 = vcmp.gt.f32.partialorder %v4676, 0.0
      %vm4933 = vcmp.gt.f32.partialorder %v4677, 0.0
      %vm4934 = vcmp.gt.f32.partialorder %v4678, 0.0
      %vm4935 = vcmp.gt.f32.partialorder %v4679, 0.0
      %vm4936 = vcmp.gt.f32.partialorder %v4680, 0.0
      %vm4937 = vcmp.gt.f32.partialorder %v4681, 0.0
      %vm4938 = vcmp.gt.f32.partialorder %v4682, 0.0
      %vm4939 = vcmp.gt.f32.partialorder %v4683, 0.0
      %vm4940 = vcmp.gt.f32.partialorder %v4684, 0.0
      %vm4941 = vcmp.gt.f32.partialorder %v4685, 0.0
      %vm4942 = vcmp.gt.f32.partialorder %v4686, 0.0
      %vm4943 = vcmp.gt.f32.partialorder %v4687, 0.0
      %vm4944 = vcmp.gt.f32.partialorder %v4688, 0.0
      %vm4945 = vcmp.gt.f32.partialorder %v4689, 0.0
      %vm4946 = vcmp.gt.f32.partialorder %v4690, 0.0
      %vm4947 = vcmp.gt.f32.partialorder %v4691, 0.0
      %vm4948 = vcmp.gt.f32.partialorder %v4692, 0.0
      %vm4949 = vcmp.gt.f32.partialorder %v4693, 0.0
      %vm4950 = vcmp.gt.f32.partialorder %v4694, 0.0
      %vm4951 = vcmp.gt.f32.partialorder %v4695, 0.0
      %vm4952 = vcmp.gt.f32.partialorder %v4696, 0.0
      %vm4953 = vcmp.gt.f32.partialorder %v4697, 0.0
      %vm4954 = vcmp.gt.f32.partialorder %v4698, 0.0
      %vm4955 = vcmp.gt.f32.partialorder %v4699, 0.0
      %vm4956 = vcmp.gt.f32.partialorder %v4700, 0.0
      %vm4957 = vcmp.gt.f32.partialorder %v4701, 0.0
      %vm4958 = vcmp.gt.f32.partialorder %v4702, 0.0
      %vm4959 = vcmp.gt.f32.partialorder %v4703, 0.0
      %vm4960 = vcmp.gt.f32.partialorder %v4704, 0.0
      %vm4961 = vcmp.gt.f32.partialorder %v4705, 0.0
      %vm4962 = vcmp.gt.f32.partialorder %v4706, 0.0
      %vm4963 = vcmp.gt.f32.partialorder %v4707, 0.0
      %vm4964 = vcmp.gt.f32.partialorder %v4708, 0.0
      %vm4965 = vcmp.gt.f32.partialorder %v4709, 0.0
      %vm4966 = vcmp.gt.f32.partialorder %v4710, 0.0
      %vm4967 = vcmp.gt.f32.partialorder %v4711, 0.0
      %vm4968 = vcmp.gt.f32.partialorder %v4712, 0.0
      %vm4969 = vcmp.gt.f32.partialorder %v4713, 0.0
      %vm4970 = vcmp.gt.f32.partialorder %v4714, 0.0
      %vm4971 = vcmp.gt.f32.partialorder %v4715, 0.0
      %vm4972 = vcmp.gt.f32.partialorder %v4716, 0.0
      %vm4973 = vcmp.gt.f32.partialorder %v4717, 0.0
      %vm4974 = vcmp.gt.f32.partialorder %v4718, 0.0
      %vm4975 = vcmp.gt.f32.partialorder %v4719, 0.0
      %vm4976 = vcmp.gt.f32.partialorder %v4720, 0.0
      %vm4977 = vcmp.gt.f32.partialorder %v4721, 0.0
      %vm4978 = vcmp.gt.f32.partialorder %v4722, 0.0
      %vm4979 = vcmp.gt.f32.partialorder %v4723, 0.0
      %vm4980 = vcmp.gt.f32.partialorder %v4724, 0.0
      %vm4981 = vcmp.gt.f32.partialorder %v4725, 0.0
      %vm4982 = vcmp.gt.f32.partialorder %v4726, 0.0
      %vm4983 = vcmp.gt.f32.partialorder %v4727, 0.0
      %vm4984 = vcmp.gt.f32.partialorder %v4728, 0.0
      %vm4985 = vcmp.gt.f32.partialorder %v4729, 0.0
      %vm4986 = vcmp.gt.f32.partialorder %v4730, 0.0
      %vm4987 = vcmp.gt.f32.partialorder %v4731, 0.0
      %vm4988 = vcmp.gt.f32.partialorder %v4732, 0.0
      %vm4989 = vcmp.gt.f32.partialorder %v4733, 0.0
      %vm4990 = vcmp.gt.f32.partialorder %v4734, 0.0
      %vm4991 = vcmp.gt.f32.partialorder %v4735, 0.0
      %vm4992 = vcmp.gt.f32.partialorder %v4736, 0.0
      %vm4993 = vcmp.gt.f32.partialorder %v4737, 0.0
      %vm4994 = vcmp.gt.f32.partialorder %v4738, 0.0
      %vm4995 = vcmp.gt.f32.partialorder %v4739, 0.0
      %vm4996 = vcmp.gt.f32.partialorder %v4740, 0.0
      %vm4997 = vcmp.gt.f32.partialorder %v4741, 0.0
      %vm4998 = vcmp.gt.f32.partialorder %v4742, 0.0
      %vm4999 = vcmp.gt.f32.partialorder %v4743, 0.0
      %vm5000 = vcmp.gt.f32.partialorder %v4744, 0.0
      %vm5001 = vcmp.gt.f32.partialorder %v4745, 0.0
      %vm5002 = vcmp.gt.f32.partialorder %v4746, 0.0
      %vm5003 = vcmp.gt.f32.partialorder %v4747, 0.0
      %vm5004 = vcmp.gt.f32.partialorder %v4748, 0.0
      %vm5005 = vcmp.gt.f32.partialorder %v4749, 0.0
      %vm5006 = vcmp.gt.f32.partialorder %v4750, 0.0
      %vm5007 = vcmp.gt.f32.partialorder %v4751, 0.0
      %vm5008 = vcmp.gt.f32.partialorder %v4752, 0.0
      %vm5009 = vcmp.gt.f32.partialorder %v4753, 0.0
      %vm5010 = vcmp.gt.f32.partialorder %v4754, 0.0
      %vm5011 = vcmp.gt.f32.partialorder %v4755, 0.0
      %vm5012 = vcmp.gt.f32.partialorder %v4756, 0.0
      %vm5013 = vcmp.gt.f32.partialorder %v4757, 0.0
      %vm5014 = vcmp.gt.f32.partialorder %v4758, 0.0
      %vm5015 = vcmp.gt.f32.partialorder %v4759, 0.0
      %vm5016 = vcmp.gt.f32.partialorder %v4760, 0.0
      %vm5017 = vcmp.gt.f32.partialorder %v4761, 0.0
      %vm5018 = vcmp.gt.f32.partialorder %v4762, 0.0
      %vm5019 = vcmp.gt.f32.partialorder %v4763, 0.0
      %vm5020 = vcmp.gt.f32.partialorder %v4764, 0.0
      %vm5021 = vcmp.gt.f32.partialorder %v4765, 0.0
      %vm5022 = vcmp.gt.f32.partialorder %v4766, 0.0
      %vm5023 = vcmp.gt.f32.partialorder %v4767, 0.0
      %vm5024 = vcmp.gt.f32.partialorder %v4768, 0.0
      %vm5025 = vcmp.gt.f32.partialorder %v4769, 0.0
      %vm5026 = vcmp.gt.f32.partialorder %v4770, 0.0
      %vm5027 = vcmp.gt.f32.partialorder %v4771, 0.0
      %vm5028 = vcmp.gt.f32.partialorder %v4772, 0.0
      %vm5029 = vcmp.gt.f32.partialorder %v4773, 0.0
      %vm5030 = vcmp.gt.f32.partialorder %v4774, 0.0
      %vm5031 = vcmp.gt.f32.partialorder %v4775, 0.0
      %vm5032 = vcmp.gt.f32.partialorder %v4776, 0.0
      %vm5033 = vcmp.gt.f32.partialorder %v4777, 0.0
      %vm5034 = vcmp.gt.f32.partialorder %v4778, 0.0
      %vm5035 = vcmp.gt.f32.partialorder %v4779, 0.0
      %vm5036 = vcmp.gt.f32.partialorder %v4780, 0.0
      %vm5037 = vcmp.gt.f32.partialorder %v4781, 0.0
      %vm5038 = vcmp.gt.f32.partialorder %v4782, 0.0
      %vm5039 = vcmp.gt.f32.partialorder %v4783, 0.0
      %vm5040 = vcmp.gt.f32.partialorder %v4784, 0.0
      %vm5041 = vcmp.gt.f32.partialorder %v4785, 0.0
      %vm5042 = vcmp.gt.f32.partialorder %v4786, 0.0
      %vm5043 = vcmp.gt.f32.partialorder %v4787, 0.0
      %vm5044 = vcmp.gt.f32.partialorder %v4788, 0.0
      %vm5045 = vcmp.gt.f32.partialorder %v4789, 0.0
      %vm5046 = vcmp.gt.f32.partialorder %v4790, 0.0
      %vm5047 = vcmp.gt.f32.partialorder %v4791, 0.0
      %vm5048 = vcmp.gt.f32.partialorder %v4792, 0.0
      %vm5049 = vcmp.gt.f32.partialorder %v4793, 0.0
      %vm5050 = vcmp.gt.f32.partialorder %v4794, 0.0
      %vm5051 = vcmp.gt.f32.partialorder %v4795, 0.0
      %vm5052 = vcmp.gt.f32.partialorder %v4796, 0.0
      %vm5053 = vcmp.gt.f32.partialorder %v4797, 0.0
      %vm5054 = vcmp.gt.f32.partialorder %v4798, 0.0
      %vm5055 = vcmp.gt.f32.partialorder %v4799, 0.0
      %vm5056 = vcmp.gt.f32.partialorder %v4800, 0.0
      %vm5057 = vcmp.gt.f32.partialorder %v4801, 0.0
      %vm5058 = vcmp.gt.f32.partialorder %v4802, 0.0
      %vm5059 = vcmp.gt.f32.partialorder %v4803, 0.0
      %vm5060 = vcmp.gt.f32.partialorder %v4804, 0.0
      %vm5061 = vcmp.gt.f32.partialorder %v4805, 0.0
      %vm5062 = vcmp.gt.f32.partialorder %v4806, 0.0
      %vm5063 = vcmp.gt.f32.partialorder %v4807, 0.0
      %vm5064 = vcmp.gt.f32.partialorder %v4808, 0.0
      %vm5065 = vcmp.gt.f32.partialorder %v4809, 0.0
      %vm5066 = vcmp.gt.f32.partialorder %v4810, 0.0
      %vm5067 = vcmp.gt.f32.partialorder %v4811, 0.0
      %vm5068 = vcmp.gt.f32.partialorder %v4812, 0.0
      %vm5069 = vcmp.gt.f32.partialorder %v4813, 0.0
      %vm5070 = vcmp.gt.f32.partialorder %v4814, 0.0
      %vm5071 = vcmp.gt.f32.partialorder %v4815, 0.0
      %vm5072 = vcmp.gt.f32.partialorder %v4816, 0.0
      %vm5073 = vcmp.gt.f32.partialorder %v4817, 0.0
      %vm5074 = vcmp.gt.f32.partialorder %v4818, 0.0
      %vm5075 = vcmp.gt.f32.partialorder %v4819, 0.0
      %vm5076 = vcmp.gt.f32.partialorder %v4820, 0.0
      %vm5077 = vcmp.gt.f32.partialorder %v4821, 0.0
      %vm5078 = vcmp.gt.f32.partialorder %v4822, 0.0
      %vm5079 = vcmp.gt.f32.partialorder %v4823, 0.0
      %vm5080 = vcmp.gt.f32.partialorder %v4824, 0.0
      %vm5081 = vcmp.gt.f32.partialorder %v4825, 0.0
      %vm5082 = vcmp.gt.f32.partialorder %v4826, 0.0
      %vm5083 = vcmp.gt.f32.partialorder %v4827, 0.0
      %vm5084 = vcmp.gt.f32.partialorder %v4828, 0.0
      %vm5085 = vcmp.gt.f32.partialorder %v4829, 0.0
      %vm5086 = vcmp.gt.f32.partialorder %v4830, 0.0
      %vm5087 = vcmp.gt.f32.partialorder %v4831, 0.0
      %vm5088 = vcmp.gt.f32.partialorder %v4832, 0.0
      %vm5089 = vcmp.gt.f32.partialorder %v4833, 0.0
      %vm5090 = vcmp.gt.f32.partialorder %v4834, 0.0
      %vm5091 = vcmp.gt.f32.partialorder %v4835, 0.0
      %vm5092 = vcmp.gt.f32.partialorder %v4836, 0.0
      %vm5093 = vcmp.gt.f32.partialorder %v4837, 0.0
      %vm5094 = vcmp.gt.f32.partialorder %v4838, 0.0
      %vm5095 = vcmp.gt.f32.partialorder %v4839, 0.0
      %vm5096 = vcmp.gt.f32.partialorder %v4840, 0.0
      %vm5097 = vcmp.gt.f32.partialorder %v4841, 0.0
      %vm5098 = vcmp.gt.f32.partialorder %v4842, 0.0
      %vm5099 = vcmp.gt.f32.partialorder %v4843, 0.0
      %vm5100 = vcmp.gt.f32.partialorder %v4844, 0.0
      %vm5101 = vcmp.gt.f32.partialorder %v4845, 0.0
      %vm5102 = vcmp.gt.f32.partialorder %v4846, 0.0
      %vm5103 = vcmp.gt.f32.partialorder %v4847, 0.0
      %vm5104 = vcmp.gt.f32.partialorder %v4848, 0.0
      %vm5105 = vcmp.gt.f32.partialorder %v4849, 0.0
      %vm5106 = vcmp.gt.f32.partialorder %v4850, 0.0
      %vm5107 = vcmp.gt.f32.partialorder %v4851, 0.0
      %vm5108 = vcmp.gt.f32.partialorder %v4852, 0.0
      %vm5109 = vcmp.gt.f32.partialorder %v4853, 0.0
      %vm5110 = vcmp.gt.f32.partialorder %v4854, 0.0
      %vm5111 = vcmp.gt.f32.partialorder %v4855, 0.0
      %vm5112 = vcmp.gt.f32.partialorder %v4856, 0.0
      %vm5113 = vcmp.gt.f32.partialorder %v4857, 0.0
      %vm5114 = vcmp.gt.f32.partialorder %v4858, 0.0
      %vm5115 = vcmp.gt.f32.partialorder %v4859, 0.0
      %vm5116 = vcmp.gt.f32.partialorder %v4860, 0.0
      %vm5117 = vcmp.gt.f32.partialorder %v4861, 0.0
      %vm5118 = vcmp.gt.f32.partialorder %v4862, 0.0
      %vm5119 = vcmp.gt.f32.partialorder %v4863, 0.0
      %vm5120 = vcmp.gt.f32.partialorder %v4864, 0.0
      %vm5121 = vcmp.gt.f32.partialorder %v4865, 0.0
      %vm5122 = vcmp.gt.f32.partialorder %v4866, 0.0
      %vm5123 = vcmp.gt.f32.partialorder %v4867, 0.0
      %vm5124 = vcmp.gt.f32.partialorder %v4868, 0.0
      %vm5125 = vcmp.gt.f32.partialorder %v4869, 0.0
      %vm5126 = vcmp.gt.f32.partialorder %v4870, 0.0
      %vm5127 = vcmp.gt.f32.partialorder %v4871, 0.0
      %vm5128 = vcmp.gt.f32.partialorder %v4872, 0.0
      %vm5129 = vcmp.gt.f32.partialorder %v4873, 0.0
      %vm5130 = vcmp.gt.f32.partialorder %v4874, 0.0
      %vm5131 = vcmp.gt.f32.partialorder %v4875, 0.0
      %vm5132 = vcmp.gt.f32.partialorder %v4876, 0.0
      %vm5133 = vcmp.gt.f32.partialorder %v4877, 0.0
      %vm5134 = vcmp.gt.f32.partialorder %v4878, 0.0
      %vm5135 = vcmp.gt.f32.partialorder %v4879, 0.0
      %vm5136 = vcmp.gt.f32.partialorder %v4880, 0.0
      %vm5137 = vcmp.gt.f32.partialorder %v4881, 0.0
      %vm5138 = vcmp.gt.f32.partialorder %v4882, 0.0
      %vm5139 = vcmp.gt.f32.partialorder %v4883, 0.0
      %vm5140 = vcmp.gt.f32.partialorder %v4884, 0.0
      %vm5141 = vcmp.gt.f32.partialorder %v4885, 0.0
      %vm5142 = vcmp.gt.f32.partialorder %v4886, 0.0
      %vm5143 = vcmp.gt.f32.partialorder %v4887, 0.0
      %vm5144 = vcmp.gt.f32.partialorder %v4888, 0.0
      %vm5145 = vcmp.gt.f32.partialorder %v4889, 0.0
      %vm5146 = vcmp.gt.f32.partialorder %v4890, 0.0
      %vm5147 = vcmp.gt.f32.partialorder %v4891, 0.0
      %vm5148 = vcmp.gt.f32.partialorder %v4892, 0.0
      %vm5149 = vcmp.gt.f32.partialorder %v4893, 0.0
      %vm5150 = vcmp.gt.f32.partialorder %v4894, 0.0
      %vm5151 = vcmp.gt.f32.partialorder %v4895, 0.0
      %vm5152 = vcmp.gt.f32.partialorder %v4896, 0.0
      %vm5153 = vcmp.gt.f32.partialorder %v4897, 0.0
      %vm5154 = vcmp.gt.f32.partialorder %v4898, 0.0
      %vm5155 = vcmp.gt.f32.partialorder %v4899, 0.0
      %vm5156 = vcmp.gt.f32.partialorder %v4900, 0.0
      %vm5157 = vcmp.gt.f32.partialorder %v4901, 0.0
      %vm5158 = vcmp.gt.f32.partialorder %v4902, 0.0
      %vm5159 = vcmp.gt.f32.partialorder %v4903, 0.0
      %vm5160 = vcmp.gt.f32.partialorder %v4904, 0.0
      %vm5161 = vcmp.gt.f32.partialorder %v4905, 0.0
      %vm5162 = vcmp.gt.f32.partialorder %v4906, 0.0
      %vm5163 = vcmp.gt.f32.partialorder %v4907, 0.0
      %vm5164 = vcmp.gt.f32.partialorder %v4908, 0.0
      %vm5165 = vcmp.gt.f32.partialorder %v4909, 0.0
      %vm5166 = vcmp.gt.f32.partialorder %v4910, 0.0
      %vm5167 = vcmp.gt.f32.partialorder %v4911, 0.0
      %vm5168 = vcmp.gt.f32.partialorder %v4912, 0.0
      %vm5169 = vcmp.gt.f32.partialorder %v4913, 0.0
      %vm5170 = vcmp.gt.f32.partialorder %v4914, 0.0
      %vm5171 = vcmp.gt.f32.partialorder %v4915, 0.0
      %vm5172 = vcmp.gt.f32.partialorder %v4916, 0.0
      %vm5173 = vcmp.gt.f32.partialorder %v4917, 0.0
      %vm5174 = vcmp.gt.f32.partialorder %v4918, 0.0
      %vm5175 = vcmp.gt.f32.partialorder %v4919, 0.0
      %vm5176 = vcmp.gt.f32.partialorder %v4920, 0.0
      %vm5177 = vcmp.gt.f32.partialorder %v4921, 0.0
      %vm5178 = vcmp.gt.f32.partialorder %v4922, 0.0
      %vm5179 = vcmp.gt.f32.partialorder %v4923, 0.0
      %vm5180 = vcmp.gt.f32.partialorder %v4924, 0.0
      %vm5181 = vcmp.gt.f32.partialorder %v4925, 0.0
      %v5182 = vmul.f32 %v4670, 0.2
      %v5183 = vmul.f32 %v4671, 0.2
      %v5184 = vmul.f32 %v4672, 0.2
      %v5185 = vmul.f32 %v4673, 0.2
      %v5186 = vmul.f32 %v4674, 0.2
      %v5187 = vmul.f32 %v4675, 0.2
      %v5188 = vmul.f32 %v4676, 0.2
      %v5189 = vmul.f32 %v4677, 0.2
      %v5190 = vmul.f32 %v4678, 0.2
      %v5191 = vmul.f32 %v4679, 0.2
      %v5192 = vmul.f32 %v4680, 0.2
      %v5193 = vmul.f32 %v4681, 0.2
      %v5194 = vmul.f32 %v4682, 0.2
      %v5195 = vmul.f32 %v4683, 0.2
      %v5196 = vmul.f32 %v4684, 0.2
      %v5197 = vmul.f32 %v4685, 0.2
      %v5198 = vmul.f32 %v4686, 0.2
      %v5199 = vmul.f32 %v4687, 0.2
      %v5200 = vmul.f32 %v4688, 0.2
      %v5201 = vmul.f32 %v4689, 0.2
      %v5202 = vmul.f32 %v4690, 0.2
      %v5203 = vmul.f32 %v4691, 0.2
      %v5204 = vmul.f32 %v4692, 0.2
      %v5205 = vmul.f32 %v4693, 0.2
      %v5206 = vmul.f32 %v4694, 0.2
      %v5207 = vmul.f32 %v4695, 0.2
      %v5208 = vmul.f32 %v4696, 0.2
      %v5209 = vmul.f32 %v4697, 0.2
      %v5210 = vmul.f32 %v4698, 0.2
      %v5211 = vmul.f32 %v4699, 0.2
      %v5212 = vmul.f32 %v4700, 0.2
      %v5213 = vmul.f32 %v4701, 0.2
      %v5214 = vmul.f32 %v4702, 0.2
      %v5215 = vmul.f32 %v4703, 0.2
      %v5216 = vmul.f32 %v4704, 0.2
      %v5217 = vmul.f32 %v4705, 0.2
      %v5218 = vmul.f32 %v4706, 0.2
      %v5219 = vmul.f32 %v4707, 0.2
      %v5220 = vmul.f32 %v4708, 0.2
      %v5221 = vmul.f32 %v4709, 0.2
      %v5222 = vmul.f32 %v4710, 0.2
      %v5223 = vmul.f32 %v4711, 0.2
      %v5224 = vmul.f32 %v4712, 0.2
      %v5225 = vmul.f32 %v4713, 0.2
      %v5226 = vmul.f32 %v4714, 0.2
      %v5227 = vmul.f32 %v4715, 0.2
      %v5228 = vmul.f32 %v4716, 0.2
      %v5229 = vmul.f32 %v4717, 0.2
      %v5230 = vmul.f32 %v4718, 0.2
      %v5231 = vmul.f32 %v4719, 0.2
      %v5232 = vmul.f32 %v4720, 0.2
      %v5233 = vmul.f32 %v4721, 0.2
      %v5234 = vmul.f32 %v4722, 0.2
      %v5235 = vmul.f32 %v4723, 0.2
      %v5236 = vmul.f32 %v4724, 0.2
      %v5237 = vmul.f32 %v4725, 0.2
      %v5238 = vmul.f32 %v4726, 0.2
      %v5239 = vmul.f32 %v4727, 0.2
      %v5240 = vmul.f32 %v4728, 0.2
      %v5241 = vmul.f32 %v4729, 0.2
      %v5242 = vmul.f32 %v4730, 0.2
      %v5243 = vmul.f32 %v4731, 0.2
      %v5244 = vmul.f32 %v4732, 0.2
      %v5245 = vmul.f32 %v4733, 0.2
      %v5246 = vmul.f32 %v4734, 0.2
      %v5247 = vmul.f32 %v4735, 0.2
      %v5248 = vmul.f32 %v4736, 0.2
      %v5249 = vmul.f32 %v4737, 0.2
      %v5250 = vmul.f32 %v4738, 0.2
      %v5251 = vmul.f32 %v4739, 0.2
      %v5252 = vmul.f32 %v4740, 0.2
      %v5253 = vmul.f32 %v4741, 0.2
      %v5254 = vmul.f32 %v4742, 0.2
      %v5255 = vmul.f32 %v4743, 0.2
      %v5256 = vmul.f32 %v4744, 0.2
      %v5257 = vmul.f32 %v4745, 0.2
      %v5258 = vmul.f32 %v4746, 0.2
      %v5259 = vmul.f32 %v4747, 0.2
      %v5260 = vmul.f32 %v4748, 0.2
      %v5261 = vmul.f32 %v4749, 0.2
      %v5262 = vmul.f32 %v4750, 0.2
      %v5263 = vmul.f32 %v4751, 0.2
      %v5264 = vmul.f32 %v4752, 0.2
      %v5265 = vmul.f32 %v4753, 0.2
      %v5266 = vmul.f32 %v4754, 0.2
      %v5267 = vmul.f32 %v4755, 0.2
      %v5268 = vmul.f32 %v4756, 0.2
      %v5269 = vmul.f32 %v4757, 0.2
      %v5270 = vmul.f32 %v4758, 0.2
      %v5271 = vmul.f32 %v4759, 0.2
      %v5272 = vmul.f32 %v4760, 0.2
      %v5273 = vmul.f32 %v4761, 0.2
      %v5274 = vmul.f32 %v4762, 0.2
      %v5275 = vmul.f32 %v4763, 0.2
      %v5276 = vmul.f32 %v4764, 0.2
      %v5277 = vmul.f32 %v4765, 0.2
      %v5278 = vmul.f32 %v4766, 0.2
      %v5279 = vmul.f32 %v4767, 0.2
      %v5280 = vmul.f32 %v4768, 0.2
      %v5281 = vmul.f32 %v4769, 0.2
      %v5282 = vmul.f32 %v4770, 0.2
      %v5283 = vmul.f32 %v4771, 0.2
      %v5284 = vmul.f32 %v4772, 0.2
      %v5285 = vmul.f32 %v4773, 0.2
      %v5286 = vmul.f32 %v4774, 0.2
      %v5287 = vmul.f32 %v4775, 0.2
      %v5288 = vmul.f32 %v4776, 0.2
      %v5289 = vmul.f32 %v4777, 0.2
      %v5290 = vmul.f32 %v4778, 0.2
      %v5291 = vmul.f32 %v4779, 0.2
      %v5292 = vmul.f32 %v4780, 0.2
      %v5293 = vmul.f32 %v4781, 0.2
      %v5294 = vmul.f32 %v4782, 0.2
      %v5295 = vmul.f32 %v4783, 0.2
      %v5296 = vmul.f32 %v4784, 0.2
      %v5297 = vmul.f32 %v4785, 0.2
      %v5298 = vmul.f32 %v4786, 0.2
      %v5299 = vmul.f32 %v4787, 0.2
      %v5300 = vmul.f32 %v4788, 0.2
      %v5301 = vmul.f32 %v4789, 0.2
      %v5302 = vmul.f32 %v4790, 0.2
      %v5303 = vmul.f32 %v4791, 0.2
      %v5304 = vmul.f32 %v4792, 0.2
      %v5305 = vmul.f32 %v4793, 0.2
      %v5306 = vmul.f32 %v4794, 0.2
      %v5307 = vmul.f32 %v4795, 0.2
      %v5308 = vmul.f32 %v4796, 0.2
      %v5309 = vmul.f32 %v4797, 0.2
      %v5310 = vmul.f32 %v4798, 0.2
      %v5311 = vmul.f32 %v4799, 0.2
      %v5312 = vmul.f32 %v4800, 0.2
      %v5313 = vmul.f32 %v4801, 0.2
      %v5314 = vmul.f32 %v4802, 0.2
      %v5315 = vmul.f32 %v4803, 0.2
      %v5316 = vmul.f32 %v4804, 0.2
      %v5317 = vmul.f32 %v4805, 0.2
      %v5318 = vmul.f32 %v4806, 0.2
      %v5319 = vmul.f32 %v4807, 0.2
      %v5320 = vmul.f32 %v4808, 0.2
      %v5321 = vmul.f32 %v4809, 0.2
      %v5322 = vmul.f32 %v4810, 0.2
      %v5323 = vmul.f32 %v4811, 0.2
      %v5324 = vmul.f32 %v4812, 0.2
      %v5325 = vmul.f32 %v4813, 0.2
      %v5326 = vmul.f32 %v4814, 0.2
      %v5327 = vmul.f32 %v4815, 0.2
      %v5328 = vmul.f32 %v4816, 0.2
      %v5329 = vmul.f32 %v4817, 0.2
      %v5330 = vmul.f32 %v4818, 0.2
      %v5331 = vmul.f32 %v4819, 0.2
      %v5332 = vmul.f32 %v4820, 0.2
      %v5333 = vmul.f32 %v4821, 0.2
      %v5334 = vmul.f32 %v4822, 0.2
      %v5335 = vmul.f32 %v4823, 0.2
      %v5336 = vmul.f32 %v4824, 0.2
      %v5337 = vmul.f32 %v4825, 0.2
      %v5338 = vmul.f32 %v4826, 0.2
      %v5339 = vmul.f32 %v4827, 0.2
      %v5340 = vmul.f32 %v4828, 0.2
      %v5341 = vmul.f32 %v4829, 0.2
      %v5342 = vmul.f32 %v4830, 0.2
      %v5343 = vmul.f32 %v4831, 0.2
      %v5344 = vmul.f32 %v4832, 0.2
      %v5345 = vmul.f32 %v4833, 0.2
      %v5346 = vmul.f32 %v4834, 0.2
      %v5347 = vmul.f32 %v4835, 0.2
      %v5348 = vmul.f32 %v4836, 0.2
      %v5349 = vmul.f32 %v4837, 0.2
      %v5350 = vmul.f32 %v4838, 0.2
      %v5351 = vmul.f32 %v4839, 0.2
      %v5352 = vmul.f32 %v4840, 0.2
      %v5353 = vmul.f32 %v4841, 0.2
      %v5354 = vmul.f32 %v4842, 0.2
      %v5355 = vmul.f32 %v4843, 0.2
      %v5356 = vmul.f32 %v4844, 0.2
      %v5357 = vmul.f32 %v4845, 0.2
      %v5358 = vmul.f32 %v4846, 0.2
      %v5359 = vmul.f32 %v4847, 0.2
      %v5360 = vmul.f32 %v4848, 0.2
      %v5361 = vmul.f32 %v4849, 0.2
      %v5362 = vmul.f32 %v4850, 0.2
      %v5363 = vmul.f32 %v4851, 0.2
      %v5364 = vmul.f32 %v4852, 0.2
      %v5365 = vmul.f32 %v4853, 0.2
      %v5366 = vmul.f32 %v4854, 0.2
      %v5367 = vmul.f32 %v4855, 0.2
      %v5368 = vmul.f32 %v4856, 0.2
      %v5369 = vmul.f32 %v4857, 0.2
      %v5370 = vmul.f32 %v4858, 0.2
      %v5371 = vmul.f32 %v4859, 0.2
      %v5372 = vmul.f32 %v4860, 0.2
      %v5373 = vmul.f32 %v4861, 0.2
      %v5374 = vmul.f32 %v4862, 0.2
      %v5375 = vmul.f32 %v4863, 0.2
      %v5376 = vmul.f32 %v4864, 0.2
      %v5377 = vmul.f32 %v4865, 0.2
      %v5378 = vmul.f32 %v4866, 0.2
      %v5379 = vmul.f32 %v4867, 0.2
      %v5380 = vmul.f32 %v4868, 0.2
      %v5381 = vmul.f32 %v4869, 0.2
      %v5382 = vmul.f32 %v4870, 0.2
      %v5383 = vmul.f32 %v4871, 0.2
      %v5384 = vmul.f32 %v4872, 0.2
      %v5385 = vmul.f32 %v4873, 0.2
      %v5386 = vmul.f32 %v4874, 0.2
      %v5387 = vmul.f32 %v4875, 0.2
      %v5388 = vmul.f32 %v4876, 0.2
      %v5389 = vmul.f32 %v4877, 0.2
      %v5390 = vmul.f32 %v4878, 0.2
      %v5391 = vmul.f32 %v4879, 0.2
      %v5392 = vmul.f32 %v4880, 0.2
      %v5393 = vmul.f32 %v4881, 0.2
      %v5394 = vmul.f32 %v4882, 0.2
      %v5395 = vmul.f32 %v4883, 0.2
      %v5396 = vmul.f32 %v4884, 0.2
      %v5397 = vmul.f32 %v4885, 0.2
      %v5398 = vmul.f32 %v4886, 0.2
      %v5399 = vmul.f32 %v4887, 0.2
      %v5400 = vmul.f32 %v4888, 0.2
      %v5401 = vmul.f32 %v4889, 0.2
      %v5402 = vmul.f32 %v4890, 0.2
      %v5403 = vmul.f32 %v4891, 0.2
      %v5404 = vmul.f32 %v4892, 0.2
      %v5405 = vmul.f32 %v4893, 0.2
      %v5406 = vmul.f32 %v4894, 0.2
      %v5407 = vmul.f32 %v4895, 0.2
      %v5408 = vmul.f32 %v4896, 0.2
      %v5409 = vmul.f32 %v4897, 0.2
      %v5410 = vmul.f32 %v4898, 0.2
      %v5411 = vmul.f32 %v4899, 0.2
      %v5412 = vmul.f32 %v4900, 0.2
      %v5413 = vmul.f32 %v4901, 0.2
      %v5414 = vmul.f32 %v4902, 0.2
      %v5415 = vmul.f32 %v4903, 0.2
      %v5416 = vmul.f32 %v4904, 0.2
      %v5417 = vmul.f32 %v4905, 0.2
      %v5418 = vmul.f32 %v4906, 0.2
      %v5419 = vmul.f32 %v4907, 0.2
      %v5420 = vmul.f32 %v4908, 0.2
      %v5421 = vmul.f32 %v4909, 0.2
      %v5422 = vmul.f32 %v4910, 0.2
      %v5423 = vmul.f32 %v4911, 0.2
      %v5424 = vmul.f32 %v4912, 0.2
      %v5425 = vmul.f32 %v4913, 0.2
      %v5426 = vmul.f32 %v4914, 0.2
      %v5427 = vmul.f32 %v4915, 0.2
      %v5428 = vmul.f32 %v4916, 0.2
      %v5429 = vmul.f32 %v4917, 0.2
      %v5430 = vmul.f32 %v4918, 0.2
      %v5431 = vmul.f32 %v4919, 0.2
      %v5432 = vmul.f32 %v4920, 0.2
      %v5433 = vmul.f32 %v4921, 0.2
      %v5434 = vmul.f32 %v4922, 0.2
      %v5435 = vmul.f32 %v4923, 0.2
      %v5436 = vmul.f32 %v4924, 0.2
      %v5437 = vmul.f32 %v4925, 0.2
      %v5438 = vsel %vm4926, %v4670, %v5182
      %v5439 = vsel %vm4927, %v4671, %v5183
      %v5440 = vsel %vm4928, %v4672, %v5184
      %v5441 = vsel %vm4929, %v4673, %v5185
      %v5442 = vsel %vm4930, %v4674, %v5186
      %v5443 = vsel %vm4931, %v4675, %v5187
      %v5444 = vsel %vm4932, %v4676, %v5188
      %v5445 = vsel %vm4933, %v4677, %v5189
      %v5446 = vsel %vm4934, %v4678, %v5190
      %v5447 = vsel %vm4935, %v4679, %v5191
      %v5448 = vsel %vm4936, %v4680, %v5192
      %v5449 = vsel %vm4937, %v4681, %v5193
      %v5450 = vsel %vm4938, %v4682, %v5194
      %v5451 = vsel %vm4939, %v4683, %v5195
      %v5452 = vsel %vm4940, %v4684, %v5196
      %v5453 = vsel %vm4941, %v4685, %v5197
      %v5454 = vsel %vm4942, %v4686, %v5198
      %v5455 = vsel %vm4943, %v4687, %v5199
      %v5456 = vsel %vm4944, %v4688, %v5200
      %v5457 = vsel %vm4945, %v4689, %v5201
      %v5458 = vsel %vm4946, %v4690, %v5202
      %v5459 = vsel %vm4947, %v4691, %v5203
      %v5460 = vsel %vm4948, %v4692, %v5204
      %v5461 = vsel %vm4949, %v4693, %v5205
      %v5462 = vsel %vm4950, %v4694, %v5206
      %v5463 = vsel %vm4951, %v4695, %v5207
      %v5464 = vsel %vm4952, %v4696, %v5208
      %v5465 = vsel %vm4953, %v4697, %v5209
      %v5466 = vsel %vm4954, %v4698, %v5210
      %v5467 = vsel %vm4955, %v4699, %v5211
      %v5468 = vsel %vm4956, %v4700, %v5212
      %v5469 = vsel %vm4957, %v4701, %v5213
      %v5470 = vsel %vm4958, %v4702, %v5214
      %v5471 = vsel %vm4959, %v4703, %v5215
      %v5472 = vsel %vm4960, %v4704, %v5216
      %v5473 = vsel %vm4961, %v4705, %v5217
      %v5474 = vsel %vm4962, %v4706, %v5218
      %v5475 = vsel %vm4963, %v4707, %v5219
      %v5476 = vsel %vm4964, %v4708, %v5220
      %v5477 = vsel %vm4965, %v4709, %v5221
      %v5478 = vsel %vm4966, %v4710, %v5222
      %v5479 = vsel %vm4967, %v4711, %v5223
      %v5480 = vsel %vm4968, %v4712, %v5224
      %v5481 = vsel %vm4969, %v4713, %v5225
      %v5482 = vsel %vm4970, %v4714, %v5226
      %v5483 = vsel %vm4971, %v4715, %v5227
      %v5484 = vsel %vm4972, %v4716, %v5228
      %v5485 = vsel %vm4973, %v4717, %v5229
      %v5486 = vsel %vm4974, %v4718, %v5230
      %v5487 = vsel %vm4975, %v4719, %v5231
      %v5488 = vsel %vm4976, %v4720, %v5232
      %v5489 = vsel %vm4977, %v4721, %v5233
      %v5490 = vsel %vm4978, %v4722, %v5234
      %v5491 = vsel %vm4979, %v4723, %v5235
      %v5492 = vsel %vm4980, %v4724, %v5236
      %v5493 = vsel %vm4981, %v4725, %v5237
      %v5494 = vsel %vm4982, %v4726, %v5238
      %v5495 = vsel %vm4983, %v4727, %v5239
      %v5496 = vsel %vm4984, %v4728, %v5240
      %v5497 = vsel %vm4985, %v4729, %v5241
      %v5498 = vsel %vm4986, %v4730, %v5242
      %v5499 = vsel %vm4987, %v4731, %v5243
      %v5500 = vsel %vm4988, %v4732, %v5244
      %v5501 = vsel %vm4989, %v4733, %v5245
      %v5502 = vsel %vm4990, %v4734, %v5246
      %v5503 = vsel %vm4991, %v4735, %v5247
      %v5504 = vsel %vm4992, %v4736, %v5248
      %v5505 = vsel %vm4993, %v4737, %v5249
      %v5506 = vsel %vm4994, %v4738, %v5250
      %v5507 = vsel %vm4995, %v4739, %v5251
      %v5508 = vsel %vm4996, %v4740, %v5252
      %v5509 = vsel %vm4997, %v4741, %v5253
      %v5510 = vsel %vm4998, %v4742, %v5254
      %v5511 = vsel %vm4999, %v4743, %v5255
      %v5512 = vsel %vm5000, %v4744, %v5256
      %v5513 = vsel %vm5001, %v4745, %v5257
      %v5514 = vsel %vm5002, %v4746, %v5258
      %v5515 = vsel %vm5003, %v4747, %v5259
      %v5516 = vsel %vm5004, %v4748, %v5260
      %v5517 = vsel %vm5005, %v4749, %v5261
      %v5518 = vsel %vm5006, %v4750, %v5262
      %v5519 = vsel %vm5007, %v4751, %v5263
      %v5520 = vsel %vm5008, %v4752, %v5264
      %v5521 = vsel %vm5009, %v4753, %v5265
      %v5522 = vsel %vm5010, %v4754, %v5266
      %v5523 = vsel %vm5011, %v4755, %v5267
      %v5524 = vsel %vm5012, %v4756, %v5268
      %v5525 = vsel %vm5013, %v4757, %v5269
      %v5526 = vsel %vm5014, %v4758, %v5270
      %v5527 = vsel %vm5015, %v4759, %v5271
      %v5528 = vsel %vm5016, %v4760, %v5272
      %v5529 = vsel %vm5017, %v4761, %v5273
      %v5530 = vsel %vm5018, %v4762, %v5274
      %v5531 = vsel %vm5019, %v4763, %v5275
      %v5532 = vsel %vm5020, %v4764, %v5276
      %v5533 = vsel %vm5021, %v4765, %v5277
      %v5534 = vsel %vm5022, %v4766, %v5278
      %v5535 = vsel %vm5023, %v4767, %v5279
      %v5536 = vsel %vm5024, %v4768, %v5280
      %v5537 = vsel %vm5025, %v4769, %v5281
      %v5538 = vsel %vm5026, %v4770, %v5282
      %v5539 = vsel %vm5027, %v4771, %v5283
      %v5540 = vsel %vm5028, %v4772, %v5284
      %v5541 = vsel %vm5029, %v4773, %v5285
      %v5542 = vsel %vm5030, %v4774, %v5286
      %v5543 = vsel %vm5031, %v4775, %v5287
      %v5544 = vsel %vm5032, %v4776, %v5288
      %v5545 = vsel %vm5033, %v4777, %v5289
      %v5546 = vsel %vm5034, %v4778, %v5290
      %v5547 = vsel %vm5035, %v4779, %v5291
      %v5548 = vsel %vm5036, %v4780, %v5292
      %v5549 = vsel %vm5037, %v4781, %v5293
      %v5550 = vsel %vm5038, %v4782, %v5294
      %v5551 = vsel %vm5039, %v4783, %v5295
      %v5552 = vsel %vm5040, %v4784, %v5296
      %v5553 = vsel %vm5041, %v4785, %v5297
      %v5554 = vsel %vm5042, %v4786, %v5298
      %v5555 = vsel %vm5043, %v4787, %v5299
      %v5556 = vsel %vm5044, %v4788, %v5300
      %v5557 = vsel %vm5045, %v4789, %v5301
      %v5558 = vsel %vm5046, %v4790, %v5302
      %v5559 = vsel %vm5047, %v4791, %v5303
      %v5560 = vsel %vm5048, %v4792, %v5304
      %v5561 = vsel %vm5049, %v4793, %v5305
      %v5562 = vsel %vm5050, %v4794, %v5306
      %v5563 = vsel %vm5051, %v4795, %v5307
      %v5564 = vsel %vm5052, %v4796, %v5308
      %v5565 = vsel %vm5053, %v4797, %v5309
      %v5566 = vsel %vm5054, %v4798, %v5310
      %v5567 = vsel %vm5055, %v4799, %v5311
      %v5568 = vsel %vm5056, %v4800, %v5312
      %v5569 = vsel %vm5057, %v4801, %v5313
      %v5570 = vsel %vm5058, %v4802, %v5314
      %v5571 = vsel %vm5059, %v4803, %v5315
      %v5572 = vsel %vm5060, %v4804, %v5316
      %v5573 = vsel %vm5061, %v4805, %v5317
      %v5574 = vsel %vm5062, %v4806, %v5318
      %v5575 = vsel %vm5063, %v4807, %v5319
      %v5576 = vsel %vm5064, %v4808, %v5320
      %v5577 = vsel %vm5065, %v4809, %v5321
      %v5578 = vsel %vm5066, %v4810, %v5322
      %v5579 = vsel %vm5067, %v4811, %v5323
      %v5580 = vsel %vm5068, %v4812, %v5324
      %v5581 = vsel %vm5069, %v4813, %v5325
      %v5582 = vsel %vm5070, %v4814, %v5326
      %v5583 = vsel %vm5071, %v4815, %v5327
      %v5584 = vsel %vm5072, %v4816, %v5328
      %v5585 = vsel %vm5073, %v4817, %v5329
      %v5586 = vsel %vm5074, %v4818, %v5330
      %v5587 = vsel %vm5075, %v4819, %v5331
      %v5588 = vsel %vm5076, %v4820, %v5332
      %v5589 = vsel %vm5077, %v4821, %v5333
      %v5590 = vsel %vm5078, %v4822, %v5334
      %v5591 = vsel %vm5079, %v4823, %v5335
      %v5592 = vsel %vm5080, %v4824, %v5336
      %v5593 = vsel %vm5081, %v4825, %v5337
      %v5594 = vsel %vm5082, %v4826, %v5338
      %v5595 = vsel %vm5083, %v4827, %v5339
      %v5596 = vsel %vm5084, %v4828, %v5340
      %v5597 = vsel %vm5085, %v4829, %v5341
      %v5598 = vsel %vm5086, %v4830, %v5342
      %v5599 = vsel %vm5087, %v4831, %v5343
      %v5600 = vsel %vm5088, %v4832, %v5344
      %v5601 = vsel %vm5089, %v4833, %v5345
      %v5602 = vsel %vm5090, %v4834, %v5346
      %v5603 = vsel %vm5091, %v4835, %v5347
      %v5604 = vsel %vm5092, %v4836, %v5348
      %v5605 = vsel %vm5093, %v4837, %v5349
      %v5606 = vsel %vm5094, %v4838, %v5350
      %v5607 = vsel %vm5095, %v4839, %v5351
      %v5608 = vsel %vm5096, %v4840, %v5352
      %v5609 = vsel %vm5097, %v4841, %v5353
      %v5610 = vsel %vm5098, %v4842, %v5354
      %v5611 = vsel %vm5099, %v4843, %v5355
      %v5612 = vsel %vm5100, %v4844, %v5356
      %v5613 = vsel %vm5101, %v4845, %v5357
      %v5614 = vsel %vm5102, %v4846, %v5358
      %v5615 = vsel %vm5103, %v4847, %v5359
      %v5616 = vsel %vm5104, %v4848, %v5360
      %v5617 = vsel %vm5105, %v4849, %v5361
      %v5618 = vsel %vm5106, %v4850, %v5362
      %v5619 = vsel %vm5107, %v4851, %v5363
      %v5620 = vsel %vm5108, %v4852, %v5364
      %v5621 = vsel %vm5109, %v4853, %v5365
      %v5622 = vsel %vm5110, %v4854, %v5366
      %v5623 = vsel %vm5111, %v4855, %v5367
      %v5624 = vsel %vm5112, %v4856, %v5368
      %v5625 = vsel %vm5113, %v4857, %v5369
      %v5626 = vsel %vm5114, %v4858, %v5370
      %v5627 = vsel %vm5115, %v4859, %v5371
      %v5628 = vsel %vm5116, %v4860, %v5372
      %v5629 = vsel %vm5117, %v4861, %v5373
      %v5630 = vsel %vm5118, %v4862, %v5374
      %v5631 = vsel %vm5119, %v4863, %v5375
      %v5632 = vsel %vm5120, %v4864, %v5376
      %v5633 = vsel %vm5121, %v4865, %v5377
      %v5634 = vsel %vm5122, %v4866, %v5378
      %v5635 = vsel %vm5123, %v4867, %v5379
      %v5636 = vsel %vm5124, %v4868, %v5380
      %v5637 = vsel %vm5125, %v4869, %v5381
      %v5638 = vsel %vm5126, %v4870, %v5382
      %v5639 = vsel %vm5127, %v4871, %v5383
      %v5640 = vsel %vm5128, %v4872, %v5384
      %v5641 = vsel %vm5129, %v4873, %v5385
      %v5642 = vsel %vm5130, %v4874, %v5386
      %v5643 = vsel %vm5131, %v4875, %v5387
      %v5644 = vsel %vm5132, %v4876, %v5388
      %v5645 = vsel %vm5133, %v4877, %v5389
      %v5646 = vsel %vm5134, %v4878, %v5390
      %v5647 = vsel %vm5135, %v4879, %v5391
      %v5648 = vsel %vm5136, %v4880, %v5392
      %v5649 = vsel %vm5137, %v4881, %v5393
      %v5650 = vsel %vm5138, %v4882, %v5394
      %v5651 = vsel %vm5139, %v4883, %v5395
      %v5652 = vsel %vm5140, %v4884, %v5396
      %v5653 = vsel %vm5141, %v4885, %v5397
      %v5654 = vsel %vm5142, %v4886, %v5398
      %v5655 = vsel %vm5143, %v4887, %v5399
      %v5656 = vsel %vm5144, %v4888, %v5400
      %v5657 = vsel %vm5145, %v4889, %v5401
      %v5658 = vsel %vm5146, %v4890, %v5402
      %v5659 = vsel %vm5147, %v4891, %v5403
      %v5660 = vsel %vm5148, %v4892, %v5404
      %v5661 = vsel %vm5149, %v4893, %v5405
      %v5662 = vsel %vm5150, %v4894, %v5406
      %v5663 = vsel %vm5151, %v4895, %v5407
      %v5664 = vsel %vm5152, %v4896, %v5408
      %v5665 = vsel %vm5153, %v4897, %v5409
      %v5666 = vsel %vm5154, %v4898, %v5410
      %v5667 = vsel %vm5155, %v4899, %v5411
      %v5668 = vsel %vm5156, %v4900, %v5412
      %v5669 = vsel %vm5157, %v4901, %v5413
      %v5670 = vsel %vm5158, %v4902, %v5414
      %v5671 = vsel %vm5159, %v4903, %v5415
      %v5672 = vsel %vm5160, %v4904, %v5416
      %v5673 = vsel %vm5161, %v4905, %v5417
      %v5674 = vsel %vm5162, %v4906, %v5418
      %v5675 = vsel %vm5163, %v4907, %v5419
      %v5676 = vsel %vm5164, %v4908, %v5420
      %v5677 = vsel %vm5165, %v4909, %v5421
      %v5678 = vsel %vm5166, %v4910, %v5422
      %v5679 = vsel %vm5167, %v4911, %v5423
      %v5680 = vsel %vm5168, %v4912, %v5424
      %v5681 = vsel %vm5169, %v4913, %v5425
      %v5682 = vsel %vm5170, %v4914, %v5426
      %v5683 = vsel %vm5171, %v4915, %v5427
      %v5684 = vsel %vm5172, %v4916, %v5428
      %v5685 = vsel %vm5173, %v4917, %v5429
      %v5686 = vsel %vm5174, %v4918, %v5430
      %v5687 = vsel %vm5175, %v4919, %v5431
      %v5688 = vsel %vm5176, %v4920, %v5432
      %v5689 = vsel %vm5177, %v4921, %v5433
      %v5690 = vsel %vm5178, %v4922, %v5434
      %v5691 = vsel %vm5179, %v4923, %v5435
      %v5692 = vsel %vm5180, %v4924, %v5436
      %v5693 = vsel %vm5181, %v4925, %v5437
      %v5694 = vld [vmem:[%s762] sm:$0xff]
      %5695 = vmatpush.msra.mxu0 %v5453
      %5696 = vmatpush.msra.mxu0 %v5452
      %5697 = vmatpush.msra.mxu0 %v5451
      %5698 = vmatpush.msra.mxu0 %v5450
      %5699 = vmatpush.msra.mxu0 %v5449
      %5700 = vmatpush.msra.mxu0 %v5448
      %5701 = vmatpush.msra.mxu0 %v5447
      %5702 = vmatpush.msra.mxu0 %v5446
      %5703 = vmatpush.msra.mxu0 %v5445
      %5704 = vmatpush.msra.mxu0 %v5444
      %5705 = vmatpush.msra.mxu0 %v5443
      %5706 = vmatpush.msra.mxu0 %v5442
      %5707 = vmatpush.msra.mxu0 %v5441
      %5708 = vmatpush.msra.mxu0 %v5440
      %5709 = vmatpush.msra.mxu0 %v5439
      %5710 = vmatpush.msra.mxu0 %v5438
      %5711 = vmatmul.f32.gmra.mxu0 %v5694
      %v5712 = vpop.f32.mrf.mxu0
      %v5713 = vadd.f32 0.0, %v5712
      %5714 = vdwg.mxu0
      %5715 = vmatpush.msra.mxu0 %v5469
      %5716 = vmatpush.msra.mxu0 %v5468
      %5717 = vmatpush.msra.mxu0 %v5467
      %5718 = vmatpush.msra.mxu0 %v5466
      %5719 = vmatpush.msra.mxu0 %v5465
      %5720 = vmatpush.msra.mxu0 %v5464
      %5721 = vmatpush.msra.mxu0 %v5463
      %5722 = vmatpush.msra.mxu0 %v5462
      %5723 = vmatpush.msra.mxu0 %v5461
      %5724 = vmatpush.msra.mxu0 %v5460
      %5725 = vmatpush.msra.mxu0 %v5459
      %5726 = vmatpush.msra.mxu0 %v5458
      %5727 = vmatpush.msra.mxu0 %v5457
      %5728 = vmatpush.msra.mxu0 %v5456
      %5729 = vmatpush.msra.mxu0 %v5455
      %5730 = vmatpush.msra.mxu0 %v5454
      %5731 = vmatmul.f32.gmra.mxu0 %v5694
      %v5732 = vpop.f32.mrf.mxu0
      %v5733 = vadd.f32 0.0, %v5732
      %5734 = vdwg.mxu0
      %5735 = vmatpush.msra.mxu0 %v5485
      %5736 = vmatpush.msra.mxu0 %v5484
      %5737 = vmatpush.msra.mxu0 %v5483
      %5738 = vmatpush.msra.mxu0 %v5482
      %5739 = vmatpush.msra.mxu0 %v5481
      %5740 = vmatpush.msra.mxu0 %v5480
      %5741 = vmatpush.msra.mxu0 %v5479
      %5742 = vmatpush.msra.mxu0 %v5478
      %5743 = vmatpush.msra.mxu0 %v5477
      %5744 = vmatpush.msra.mxu0 %v5476
      %5745 = vmatpush.msra.mxu0 %v5475
      %5746 = vmatpush.msra.mxu0 %v5474
      %5747 = vmatpush.msra.mxu0 %v5473
      %5748 = vmatpush.msra.mxu0 %v5472
      %5749 = vmatpush.msra.mxu0 %v5471
      %5750 = vmatpush.msra.mxu0 %v5470
      %5751 = vmatmul.f32.gmra.mxu0 %v5694
      %v5752 = vpop.f32.mrf.mxu0
      %v5753 = vadd.f32 0.0, %v5752
      %5754 = vdwg.mxu0
      %5755 = vmatpush.msra.mxu0 %v5501
      %5756 = vmatpush.msra.mxu0 %v5500
      %5757 = vmatpush.msra.mxu0 %v5499
      %5758 = vmatpush.msra.mxu0 %v5498
      %5759 = vmatpush.msra.mxu0 %v5497
      %5760 = vmatpush.msra.mxu0 %v5496
      %5761 = vmatpush.msra.mxu0 %v5495
      %5762 = vmatpush.msra.mxu0 %v5494
      %5763 = vmatpush.msra.mxu0 %v5493
      %5764 = vmatpush.msra.mxu0 %v5492
      %5765 = vmatpush.msra.mxu0 %v5491
      %5766 = vmatpush.msra.mxu0 %v5490
      %5767 = vmatpush.msra.mxu0 %v5489
      %5768 = vmatpush.msra.mxu0 %v5488
      %5769 = vmatpush.msra.mxu0 %v5487
      %5770 = vmatpush.msra.mxu0 %v5486
      %5771 = vmatmul.f32.gmra.mxu0 %v5694
      %v5772 = vpop.f32.mrf.mxu0
      %v5773 = vadd.f32 0.0, %v5772
      %5774 = vdwg.mxu0
      %5775 = vmatpush.msra.mxu0 %v5517
      %5776 = vmatpush.msra.mxu0 %v5516
      %5777 = vmatpush.msra.mxu0 %v5515
      %5778 = vmatpush.msra.mxu0 %v5514
      %5779 = vmatpush.msra.mxu0 %v5513
      %5780 = vmatpush.msra.mxu0 %v5512
      %5781 = vmatpush.msra.mxu0 %v5511
      %5782 = vmatpush.msra.mxu0 %v5510
      %5783 = vmatpush.msra.mxu0 %v5509
      %5784 = vmatpush.msra.mxu0 %v5508
      %5785 = vmatpush.msra.mxu0 %v5507
      %5786 = vmatpush.msra.mxu0 %v5506
      %5787 = vmatpush.msra.mxu0 %v5505
      %5788 = vmatpush.msra.mxu0 %v5504
      %5789 = vmatpush.msra.mxu0 %v5503
      %5790 = vmatpush.msra.mxu0 %v5502
      %5791 = vmatmul.f32.gmra.mxu0 %v5694
      %v5792 = vpop.f32.mrf.mxu0
      %v5793 = vadd.f32 0.0, %v5792
      %5794 = vdwg.mxu0
      %5795 = vmatpush.msra.mxu0 %v5533
      %5796 = vmatpush.msra.mxu0 %v5532
      %5797 = vmatpush.msra.mxu0 %v5531
      %5798 = vmatpush.msra.mxu0 %v5530
      %5799 = vmatpush.msra.mxu0 %v5529
      %5800 = vmatpush.msra.mxu0 %v5528
      %5801 = vmatpush.msra.mxu0 %v5527
      %5802 = vmatpush.msra.mxu0 %v5526
      %5803 = vmatpush.msra.mxu0 %v5525
      %5804 = vmatpush.msra.mxu0 %v5524
      %5805 = vmatpush.msra.mxu0 %v5523
      %5806 = vmatpush.msra.mxu0 %v5522
      %5807 = vmatpush.msra.mxu0 %v5521
      %5808 = vmatpush.msra.mxu0 %v5520
      %5809 = vmatpush.msra.mxu0 %v5519
      %5810 = vmatpush.msra.mxu0 %v5518
      %5811 = vmatmul.f32.gmra.mxu0 %v5694
      %v5812 = vpop.f32.mrf.mxu0
      %v5813 = vadd.f32 0.0, %v5812
      %5814 = vdwg.mxu0
      %5815 = vmatpush.msra.mxu0 %v5549
      %5816 = vmatpush.msra.mxu0 %v5548
      %5817 = vmatpush.msra.mxu0 %v5547
      %5818 = vmatpush.msra.mxu0 %v5546
      %5819 = vmatpush.msra.mxu0 %v5545
      %5820 = vmatpush.msra.mxu0 %v5544
      %5821 = vmatpush.msra.mxu0 %v5543
      %5822 = vmatpush.msra.mxu0 %v5542
      %5823 = vmatpush.msra.mxu0 %v5541
      %5824 = vmatpush.msra.mxu0 %v5540
      %5825 = vmatpush.msra.mxu0 %v5539
      %5826 = vmatpush.msra.mxu0 %v5538
      %5827 = vmatpush.msra.mxu0 %v5537
      %5828 = vmatpush.msra.mxu0 %v5536
      %5829 = vmatpush.msra.mxu0 %v5535
      %5830 = vmatpush.msra.mxu0 %v5534
      %5831 = vmatmul.f32.gmra.mxu0 %v5694
      %v5832 = vpop.f32.mrf.mxu0
      %v5833 = vadd.f32 0.0, %v5832
      %5834 = vdwg.mxu0
      %5835 = vmatpush.msra.mxu0 %v5565
      %5836 = vmatpush.msra.mxu0 %v5564
      %5837 = vmatpush.msra.mxu0 %v5563
      %5838 = vmatpush.msra.mxu0 %v5562
      %5839 = vmatpush.msra.mxu0 %v5561
      %5840 = vmatpush.msra.mxu0 %v5560
      %5841 = vmatpush.msra.mxu0 %v5559
      %5842 = vmatpush.msra.mxu0 %v5558
      %5843 = vmatpush.msra.mxu0 %v5557
      %5844 = vmatpush.msra.mxu0 %v5556
      %5845 = vmatpush.msra.mxu0 %v5555
      %5846 = vmatpush.msra.mxu0 %v5554
      %5847 = vmatpush.msra.mxu0 %v5553
      %5848 = vmatpush.msra.mxu0 %v5552
      %5849 = vmatpush.msra.mxu0 %v5551
      %5850 = vmatpush.msra.mxu0 %v5550
      %5851 = vmatmul.f32.gmra.mxu0 %v5694
      %v5852 = vpop.f32.mrf.mxu0
      %v5853 = vadd.f32 0.0, %v5852
      %5854 = vdwg.mxu0
      %5855 = vmatpush.msra.mxu0 %v5581
      %5856 = vmatpush.msra.mxu0 %v5580
      %5857 = vmatpush.msra.mxu0 %v5579
      %5858 = vmatpush.msra.mxu0 %v5578
      %5859 = vmatpush.msra.mxu0 %v5577
      %5860 = vmatpush.msra.mxu0 %v5576
      %5861 = vmatpush.msra.mxu0 %v5575
      %5862 = vmatpush.msra.mxu0 %v5574
      %5863 = vmatpush.msra.mxu0 %v5573
      %5864 = vmatpush.msra.mxu0 %v5572
      %5865 = vmatpush.msra.mxu0 %v5571
      %5866 = vmatpush.msra.mxu0 %v5570
      %5867 = vmatpush.msra.mxu0 %v5569
      %5868 = vmatpush.msra.mxu0 %v5568
      %5869 = vmatpush.msra.mxu0 %v5567
      %5870 = vmatpush.msra.mxu0 %v5566
      %5871 = vmatmul.f32.gmra.mxu0 %v5694
      %v5872 = vpop.f32.mrf.mxu0
      %v5873 = vadd.f32 0.0, %v5872
      %5874 = vdwg.mxu0
      %5875 = vmatpush.msra.mxu0 %v5597
      %5876 = vmatpush.msra.mxu0 %v5596
      %5877 = vmatpush.msra.mxu0 %v5595
      %5878 = vmatpush.msra.mxu0 %v5594
      %5879 = vmatpush.msra.mxu0 %v5593
      %5880 = vmatpush.msra.mxu0 %v5592
      %5881 = vmatpush.msra.mxu0 %v5591
      %5882 = vmatpush.msra.mxu0 %v5590
      %5883 = vmatpush.msra.mxu0 %v5589
      %5884 = vmatpush.msra.mxu0 %v5588
      %5885 = vmatpush.msra.mxu0 %v5587
      %5886 = vmatpush.msra.mxu0 %v5586
      %5887 = vmatpush.msra.mxu0 %v5585
      %5888 = vmatpush.msra.mxu0 %v5584
      %5889 = vmatpush.msra.mxu0 %v5583
      %5890 = vmatpush.msra.mxu0 %v5582
      %5891 = vmatmul.f32.gmra.mxu0 %v5694
      %v5892 = vpop.f32.mrf.mxu0
      %v5893 = vadd.f32 0.0, %v5892
      %5894 = vdwg.mxu0
      %5895 = vmatpush.msra.mxu0 %v5613
      %5896 = vmatpush.msra.mxu0 %v5612
      %5897 = vmatpush.msra.mxu0 %v5611
      %5898 = vmatpush.msra.mxu0 %v5610
      %5899 = vmatpush.msra.mxu0 %v5609
      %5900 = vmatpush.msra.mxu0 %v5608
      %5901 = vmatpush.msra.mxu0 %v5607
      %5902 = vmatpush.msra.mxu0 %v5606
      %5903 = vmatpush.msra.mxu0 %v5605
      %5904 = vmatpush.msra.mxu0 %v5604
      %5905 = vmatpush.msra.mxu0 %v5603
      %5906 = vmatpush.msra.mxu0 %v5602
      %5907 = vmatpush.msra.mxu0 %v5601
      %5908 = vmatpush.msra.mxu0 %v5600
      %5909 = vmatpush.msra.mxu0 %v5599
      %5910 = vmatpush.msra.mxu0 %v5598
      %5911 = vmatmul.f32.gmra.mxu0 %v5694
      %v5912 = vpop.f32.mrf.mxu0
      %v5913 = vadd.f32 0.0, %v5912
      %5914 = vdwg.mxu0
      %5915 = vmatpush.msra.mxu0 %v5629
      %5916 = vmatpush.msra.mxu0 %v5628
      %5917 = vmatpush.msra.mxu0 %v5627
      %5918 = vmatpush.msra.mxu0 %v5626
      %5919 = vmatpush.msra.mxu0 %v5625
      %5920 = vmatpush.msra.mxu0 %v5624
      %5921 = vmatpush.msra.mxu0 %v5623
      %5922 = vmatpush.msra.mxu0 %v5622
      %5923 = vmatpush.msra.mxu0 %v5621
      %5924 = vmatpush.msra.mxu0 %v5620
      %5925 = vmatpush.msra.mxu0 %v5619
      %5926 = vmatpush.msra.mxu0 %v5618
      %5927 = vmatpush.msra.mxu0 %v5617
      %5928 = vmatpush.msra.mxu0 %v5616
      %5929 = vmatpush.msra.mxu0 %v5615
      %5930 = vmatpush.msra.mxu0 %v5614
      %5931 = vmatmul.f32.gmra.mxu0 %v5694
      %v5932 = vpop.f32.mrf.mxu0
      %v5933 = vadd.f32 0.0, %v5932
      %5934 = vdwg.mxu0
      %5935 = vmatpush.msra.mxu0 %v5645
      %5936 = vmatpush.msra.mxu0 %v5644
      %5937 = vmatpush.msra.mxu0 %v5643
      %5938 = vmatpush.msra.mxu0 %v5642
      %5939 = vmatpush.msra.mxu0 %v5641
      %5940 = vmatpush.msra.mxu0 %v5640
      %5941 = vmatpush.msra.mxu0 %v5639
      %5942 = vmatpush.msra.mxu0 %v5638
      %5943 = vmatpush.msra.mxu0 %v5637
      %5944 = vmatpush.msra.mxu0 %v5636
      %5945 = vmatpush.msra.mxu0 %v5635
      %5946 = vmatpush.msra.mxu0 %v5634
      %5947 = vmatpush.msra.mxu0 %v5633
      %5948 = vmatpush.msra.mxu0 %v5632
      %5949 = vmatpush.msra.mxu0 %v5631
      %5950 = vmatpush.msra.mxu0 %v5630
      %5951 = vmatmul.f32.gmra.mxu0 %v5694
      %v5952 = vpop.f32.mrf.mxu0
      %v5953 = vadd.f32 0.0, %v5952
      %5954 = vdwg.mxu0
      %5955 = vmatpush.msra.mxu0 %v5661
      %5956 = vmatpush.msra.mxu0 %v5660
      %5957 = vmatpush.msra.mxu0 %v5659
      %5958 = vmatpush.msra.mxu0 %v5658
      %5959 = vmatpush.msra.mxu0 %v5657
      %5960 = vmatpush.msra.mxu0 %v5656
      %5961 = vmatpush.msra.mxu0 %v5655
      %5962 = vmatpush.msra.mxu0 %v5654
      %5963 = vmatpush.msra.mxu0 %v5653
      %5964 = vmatpush.msra.mxu0 %v5652
      %5965 = vmatpush.msra.mxu0 %v5651
      %5966 = vmatpush.msra.mxu0 %v5650
      %5967 = vmatpush.msra.mxu0 %v5649
      %5968 = vmatpush.msra.mxu0 %v5648
      %5969 = vmatpush.msra.mxu0 %v5647
      %5970 = vmatpush.msra.mxu0 %v5646
      %5971 = vmatmul.f32.gmra.mxu0 %v5694
      %v5972 = vpop.f32.mrf.mxu0
      %v5973 = vadd.f32 0.0, %v5972
      %5974 = vdwg.mxu0
      %5975 = vmatpush.msra.mxu0 %v5677
      %5976 = vmatpush.msra.mxu0 %v5676
      %5977 = vmatpush.msra.mxu0 %v5675
      %5978 = vmatpush.msra.mxu0 %v5674
      %5979 = vmatpush.msra.mxu0 %v5673
      %5980 = vmatpush.msra.mxu0 %v5672
      %5981 = vmatpush.msra.mxu0 %v5671
      %5982 = vmatpush.msra.mxu0 %v5670
      %5983 = vmatpush.msra.mxu0 %v5669
      %5984 = vmatpush.msra.mxu0 %v5668
      %5985 = vmatpush.msra.mxu0 %v5667
      %5986 = vmatpush.msra.mxu0 %v5666
      %5987 = vmatpush.msra.mxu0 %v5665
      %5988 = vmatpush.msra.mxu0 %v5664
      %5989 = vmatpush.msra.mxu0 %v5663
      %5990 = vmatpush.msra.mxu0 %v5662
      %5991 = vmatmul.f32.gmra.mxu0 %v5694
      %v5992 = vpop.f32.mrf.mxu0
      %v5993 = vadd.f32 0.0, %v5992
      %5994 = vdwg.mxu0
      %5995 = vmatpush.msra.mxu0 %v5693
      %5996 = vmatpush.msra.mxu0 %v5692
      %5997 = vmatpush.msra.mxu0 %v5691
      %5998 = vmatpush.msra.mxu0 %v5690
      %5999 = vmatpush.msra.mxu0 %v5689
      %6000 = vmatpush.msra.mxu0 %v5688
      %6001 = vmatpush.msra.mxu0 %v5687
      %6002 = vmatpush.msra.mxu0 %v5686
      %6003 = vmatpush.msra.mxu0 %v5685
      %6004 = vmatpush.msra.mxu0 %v5684
      %6005 = vmatpush.msra.mxu0 %v5683
      %6006 = vmatpush.msra.mxu0 %v5682
      %6007 = vmatpush.msra.mxu0 %v5681
      %6008 = vmatpush.msra.mxu0 %v5680
      %6009 = vmatpush.msra.mxu0 %v5679
      %6010 = vmatpush.msra.mxu0 %v5678
      %6011 = vmatmul.f32.gmra.mxu0 %v5694
      %v6012 = vpop.f32.mrf.mxu0
      %v6013 = vadd.f32 0.0, %v6012
      %6014 = vdwg.mxu0
      %v6017 = vrot.slane %v891, 1
      %v6018 = vrot.slane %v891, 2
      %v6019 = vrot.slane %v891, 3
      %v6020 = vrot.slane %v891, 4
      %v6021 = vrot.slane %v891, 5
      %v6022 = vrot.slane %v891, 6
      %v6023 = vrot.slane %v891, 7
      %v6024 = vrot.slane %v892, 1
      %v6025 = vrot.slane %v892, 2
      %v6026 = vrot.slane %v892, 3
      %v6027 = vrot.slane %v892, 4
      %v6028 = vrot.slane %v892, 5
      %v6029 = vrot.slane %v892, 6
      %v6030 = vrot.slane %v892, 7
      %vm6045 = vcmp.gt.f32.partialorder %v891, 0.0
      %vm6046 = vcmp.gt.f32.partialorder %v6017, 0.0
      %vm6047 = vcmp.gt.f32.partialorder %v6018, 0.0
      %vm6048 = vcmp.gt.f32.partialorder %v6019, 0.0
      %vm6049 = vcmp.gt.f32.partialorder %v6020, 0.0
      %vm6050 = vcmp.gt.f32.partialorder %v6021, 0.0
      %vm6051 = vcmp.gt.f32.partialorder %v6022, 0.0
      %vm6052 = vcmp.gt.f32.partialorder %v6023, 0.0
      %vm6053 = vcmp.gt.f32.partialorder %v892, 0.0
      %vm6054 = vcmp.gt.f32.partialorder %v6024, 0.0
      %vm6055 = vcmp.gt.f32.partialorder %v6025, 0.0
      %vm6056 = vcmp.gt.f32.partialorder %v6026, 0.0
      %vm6057 = vcmp.gt.f32.partialorder %v6027, 0.0
      %vm6058 = vcmp.gt.f32.partialorder %v6028, 0.0
      %vm6059 = vcmp.gt.f32.partialorder %v6029, 0.0
      %vm6060 = vcmp.gt.f32.partialorder %v6030, 0.0
      %v6061 = vsel %vm6045, 1, 0
      %v6062 = vsel %vm6046, 1, 0
      %v6063 = vsel %vm6047, 1, 0
      %v6064 = vsel %vm6048, 1, 0
      %v6065 = vsel %vm6049, 1, 0
      %v6066 = vsel %vm6050, 1, 0
      %v6067 = vsel %vm6051, 1, 0
      %v6068 = vsel %vm6052, 1, 0
      %v6069 = vsel %vm6053, 1, 0
      %v6070 = vsel %vm6054, 1, 0
      %v6071 = vsel %vm6055, 1, 0
      %v6072 = vsel %vm6056, 1, 0
      %v6073 = vsel %vm6057, 1, 0
      %v6074 = vsel %vm6058, 1, 0
      %v6075 = vsel %vm6059, 1, 0
      %v6076 = vsel %vm6060, 1, 0
      %v6077 = vperm.slane %v6061, 0
      %v6078 = vperm.slane %v6062, 0
      %v6079 = vperm.slane %v6063, 0
      %v6080 = vperm.slane %v6064, 0
      %v6081 = vperm.slane %v6065, 0
      %v6082 = vperm.slane %v6066, 0
      %v6083 = vperm.slane %v6067, 0
      %v6084 = vperm.slane %v6068, 0
      %v6085 = vperm.slane %v6069, 0
      %v6086 = vperm.slane %v6070, 0
      %v6087 = vperm.slane %v6071, 0
      %v6088 = vperm.slane %v6072, 0
      %v6089 = vperm.slane %v6073, 0
      %v6090 = vperm.slane %v6074, 0
      %v6091 = vperm.slane %v6075, 0
      %v6092 = vperm.slane %v6076, 0
      %vm6093 = vcmp.eq.s32.totalorder %v6077, 1
      %vm6094 = vcmp.eq.s32.totalorder %v6078, 1
      %vm6095 = vcmp.eq.s32.totalorder %v6079, 1
      %vm6096 = vcmp.eq.s32.totalorder %v6080, 1
      %vm6097 = vcmp.eq.s32.totalorder %v6081, 1
      %vm6098 = vcmp.eq.s32.totalorder %v6082, 1
      %vm6099 = vcmp.eq.s32.totalorder %v6083, 1
      %vm6100 = vcmp.eq.s32.totalorder %v6084, 1
      %vm6101 = vcmp.eq.s32.totalorder %v6085, 1
      %vm6102 = vcmp.eq.s32.totalorder %v6086, 1
      %vm6103 = vcmp.eq.s32.totalorder %v6087, 1
      %vm6104 = vcmp.eq.s32.totalorder %v6088, 1
      %vm6105 = vcmp.eq.s32.totalorder %v6089, 1
      %vm6106 = vcmp.eq.s32.totalorder %v6090, 1
      %vm6107 = vcmp.eq.s32.totalorder %v6091, 1
      %vm6108 = vcmp.eq.s32.totalorder %v6092, 1
      %v6109 = vsel %vm6093, %v5713, -1e+30
      %v6110 = vsel %vm6094, %v5733, -1e+30
      %v6111 = vsel %vm6095, %v5753, -1e+30
      %v6112 = vsel %vm6096, %v5773, -1e+30
      %v6113 = vsel %vm6097, %v5793, -1e+30
      %v6114 = vsel %vm6098, %v5813, -1e+30
      %v6115 = vsel %vm6099, %v5833, -1e+30
      %v6116 = vsel %vm6100, %v5853, -1e+30
      %v6117 = vsel %vm6101, %v5873, -1e+30
      %v6118 = vsel %vm6102, %v5893, -1e+30
      %v6119 = vsel %vm6103, %v5913, -1e+30
      %v6120 = vsel %vm6104, %v5933, -1e+30
      %v6121 = vsel %vm6105, %v5953, -1e+30
      %v6122 = vsel %vm6106, %v5973, -1e+30
      %v6123 = vsel %vm6107, %v5993, -1e+30
      %v6124 = vsel %vm6108, %v6013, -1e+30
      %vm6125 = vcmask 130048
      %v6126 = vsel %vm6125, %v6109, -inf
      %6127 = vmax.xlane.f32.xlu0 %v6126
      %v6128 = vpop.xlane.xlu0 %6127
      %v6129 = vsel %vm6125, %v6110, -inf
      %6130 = vmax.xlane.f32.xlu0 %v6129
      %v6131 = vpop.xlane.xlu0 %6130
      %v6132 = vsel %vm6125, %v6111, -inf
      %6133 = vmax.xlane.f32.xlu0 %v6132
      %v6134 = vpop.xlane.xlu0 %6133
      %v6135 = vsel %vm6125, %v6112, -inf
      %6136 = vmax.xlane.f32.xlu0 %v6135
      %v6137 = vpop.xlane.xlu0 %6136
      %v6138 = vsel %vm6125, %v6113, -inf
      %6139 = vmax.xlane.f32.xlu0 %v6138
      %v6140 = vpop.xlane.xlu0 %6139
      %v6141 = vsel %vm6125, %v6114, -inf
      %6142 = vmax.xlane.f32.xlu0 %v6141
      %v6143 = vpop.xlane.xlu0 %6142
      %v6144 = vsel %vm6125, %v6115, -inf
      %6145 = vmax.xlane.f32.xlu0 %v6144
      %v6146 = vpop.xlane.xlu0 %6145
      %v6147 = vsel %vm6125, %v6116, -inf
      %6148 = vmax.xlane.f32.xlu0 %v6147
      %v6149 = vpop.xlane.xlu0 %6148
      %v6150 = vsel %vm6125, %v6117, -inf
      %6151 = vmax.xlane.f32.xlu0 %v6150
      %v6152 = vpop.xlane.xlu0 %6151
      %v6153 = vsel %vm6125, %v6118, -inf
      %6154 = vmax.xlane.f32.xlu0 %v6153
      %v6155 = vpop.xlane.xlu0 %6154
      %v6156 = vsel %vm6125, %v6119, -inf
      %6157 = vmax.xlane.f32.xlu0 %v6156
      %v6158 = vpop.xlane.xlu0 %6157
      %v6159 = vsel %vm6125, %v6120, -inf
      %6160 = vmax.xlane.f32.xlu0 %v6159
      %v6161 = vpop.xlane.xlu0 %6160
      %v6162 = vsel %vm6125, %v6121, -inf
      %6163 = vmax.xlane.f32.xlu0 %v6162
      %v6164 = vpop.xlane.xlu0 %6163
      %v6165 = vsel %vm6125, %v6122, -inf
      %6166 = vmax.xlane.f32.xlu0 %v6165
      %v6167 = vpop.xlane.xlu0 %6166
      %v6168 = vsel %vm6125, %v6123, -inf
      %6169 = vmax.xlane.f32.xlu0 %v6168
      %v6170 = vpop.xlane.xlu0 %6169
      %v6171 = vsel %vm6125, %v6124, -inf
      %6172 = vmax.xlane.f32.xlu0 %v6171
      %v6173 = vpop.xlane.xlu0 %6172
      %v6174 = vsub.f32 %v6109, %v6128
      %v6175 = vsub.f32 %v6110, %v6131
      %v6176 = vsub.f32 %v6111, %v6134
      %v6177 = vsub.f32 %v6112, %v6137
      %v6178 = vsub.f32 %v6113, %v6140
      %v6179 = vsub.f32 %v6114, %v6143
      %v6180 = vsub.f32 %v6115, %v6146
      %v6181 = vsub.f32 %v6116, %v6149
      %v6182 = vsub.f32 %v6117, %v6152
      %v6183 = vsub.f32 %v6118, %v6155
      %v6184 = vsub.f32 %v6119, %v6158
      %v6185 = vsub.f32 %v6120, %v6161
      %v6186 = vsub.f32 %v6121, %v6164
      %v6187 = vsub.f32 %v6122, %v6167
      %v6188 = vsub.f32 %v6123, %v6170
      %v6189 = vsub.f32 %v6124, %v6173
      %v6190 = vmul.f32 %v6174, 1.442695
      %v6191 = vpow.pop %v6190
      %v6192 = vmul.f32 %v6175, 1.442695
      %v6193 = vpow.pop %v6192
      %v6194 = vmul.f32 %v6176, 1.442695
      %v6195 = vpow.pop %v6194
      %v6196 = vmul.f32 %v6177, 1.442695
      %v6197 = vpow.pop %v6196
      %v6198 = vmul.f32 %v6178, 1.442695
      %v6199 = vpow.pop %v6198
      %v6200 = vmul.f32 %v6179, 1.442695
      %v6201 = vpow.pop %v6200
      %v6202 = vmul.f32 %v6180, 1.442695
      %v6203 = vpow.pop %v6202
      %v6204 = vmul.f32 %v6181, 1.442695
      %v6205 = vpow.pop %v6204
      %v6206 = vmul.f32 %v6182, 1.442695
      %v6207 = vpow.pop %v6206
      %v6208 = vmul.f32 %v6183, 1.442695
      %v6209 = vpow.pop %v6208
      %v6210 = vmul.f32 %v6184, 1.442695
      %v6211 = vpow.pop %v6210
      %v6212 = vmul.f32 %v6185, 1.442695
      %v6213 = vpow.pop %v6212
      %v6214 = vmul.f32 %v6186, 1.442695
      %v6215 = vpow.pop %v6214
      %v6216 = vmul.f32 %v6187, 1.442695
      %v6217 = vpow.pop %v6216
      %v6218 = vmul.f32 %v6188, 1.442695
      %v6219 = vpow.pop %v6218
      %v6220 = vmul.f32 %v6189, 1.442695
      %v6221 = vpow.pop %v6220
      %v6222 = vsel %vm6125, %v6191, 0.0
      %6223 = vadd.xlane.f32.xlu0 %v6222
      %v6224 = vpop.xlane.xlu0 %6223
      %v6225 = vsel %vm6125, %v6193, 0.0
      %6226 = vadd.xlane.f32.xlu0 %v6225
      %v6227 = vpop.xlane.xlu0 %6226
      %v6228 = vsel %vm6125, %v6195, 0.0
      %6229 = vadd.xlane.f32.xlu0 %v6228
      %v6230 = vpop.xlane.xlu0 %6229
      %v6231 = vsel %vm6125, %v6197, 0.0
      %6232 = vadd.xlane.f32.xlu0 %v6231
      %v6233 = vpop.xlane.xlu0 %6232
      %v6234 = vsel %vm6125, %v6199, 0.0
      %6235 = vadd.xlane.f32.xlu0 %v6234
      %v6236 = vpop.xlane.xlu0 %6235
      %v6237 = vsel %vm6125, %v6201, 0.0
      %6238 = vadd.xlane.f32.xlu0 %v6237
      %v6239 = vpop.xlane.xlu0 %6238
      %v6240 = vsel %vm6125, %v6203, 0.0
      %6241 = vadd.xlane.f32.xlu0 %v6240
      %v6242 = vpop.xlane.xlu0 %6241
      %v6243 = vsel %vm6125, %v6205, 0.0
      %6244 = vadd.xlane.f32.xlu0 %v6243
      %v6245 = vpop.xlane.xlu0 %6244
      %v6246 = vsel %vm6125, %v6207, 0.0
      %6247 = vadd.xlane.f32.xlu0 %v6246
      %v6248 = vpop.xlane.xlu0 %6247
      %v6249 = vsel %vm6125, %v6209, 0.0
      %6250 = vadd.xlane.f32.xlu0 %v6249
      %v6251 = vpop.xlane.xlu0 %6250
      %v6252 = vsel %vm6125, %v6211, 0.0
      %6253 = vadd.xlane.f32.xlu0 %v6252
      %v6254 = vpop.xlane.xlu0 %6253
      %v6255 = vsel %vm6125, %v6213, 0.0
      %6256 = vadd.xlane.f32.xlu0 %v6255
      %v6257 = vpop.xlane.xlu0 %6256
      %v6258 = vsel %vm6125, %v6215, 0.0
      %6259 = vadd.xlane.f32.xlu0 %v6258
      %v6260 = vpop.xlane.xlu0 %6259
      %v6261 = vsel %vm6125, %v6217, 0.0
      %6262 = vadd.xlane.f32.xlu0 %v6261
      %v6263 = vpop.xlane.xlu0 %6262
      %v6264 = vsel %vm6125, %v6219, 0.0
      %6265 = vadd.xlane.f32.xlu0 %v6264
      %v6266 = vpop.xlane.xlu0 %6265
      %v6267 = vsel %vm6125, %v6221, 0.0
      %6268 = vadd.xlane.f32.xlu0 %v6267
      %v6269 = vpop.xlane.xlu0 %6268
      %v6270 = vmax.f32 %v6224, 1e-20
      %v6271 = vmax.f32 %v6227, 1e-20
      %v6272 = vmax.f32 %v6230, 1e-20
      %v6273 = vmax.f32 %v6233, 1e-20
      %v6274 = vmax.f32 %v6236, 1e-20
      %v6275 = vmax.f32 %v6239, 1e-20
      %v6276 = vmax.f32 %v6242, 1e-20
      %v6277 = vmax.f32 %v6245, 1e-20
      %v6278 = vmax.f32 %v6248, 1e-20
      %v6279 = vmax.f32 %v6251, 1e-20
      %v6280 = vmax.f32 %v6254, 1e-20
      %v6281 = vmax.f32 %v6257, 1e-20
      %v6282 = vmax.f32 %v6260, 1e-20
      %v6283 = vmax.f32 %v6263, 1e-20
      %v6284 = vmax.f32 %v6266, 1e-20
      %v6285 = vmax.f32 %v6269, 1e-20
      %v6286 = vrcp.pop %v6270
      %v6287 = vmul.f32 %v6270, %v6286
      %v6288 = vsub.f32 1.0, %v6287
      %v6289 = vmul.f32 %v6286, %v6288
      %v6290 = vadd.f32 %v6286, %v6289
      %vm6291 = vweird.f32 %v6270
      %vm6292 = vweird.f32 %v6286
      %vm6293 = vmor %vm6291, %vm6292
      %v6294 = vsel %vm6293, %v6286, %v6290
      %v6295 = vand.u32 2147483647, %v6270
      %vm6296 = vcmp.eq.f32.partialorder %v6295, 8.507059e+37
      %v6297 = vand.u32 %v6270, 2147483648
      %v6298 = vor.u32 1.1754944e-38, %v6297
      %v6299 = vsel %vm6296, %v6298, %v6294
      %v6300 = vmul.f32 %v6191, %v6299
      %v6301 = vrcp.pop %v6271
      %v6302 = vmul.f32 %v6271, %v6301
      %v6303 = vsub.f32 1.0, %v6302
      %v6304 = vmul.f32 %v6301, %v6303
      %v6305 = vadd.f32 %v6301, %v6304
      %vm6306 = vweird.f32 %v6271
      %vm6307 = vweird.f32 %v6301
      %vm6308 = vmor %vm6306, %vm6307
      %v6309 = vsel %vm6308, %v6301, %v6305
      %v6310 = vand.u32 2147483647, %v6271
      %vm6311 = vcmp.eq.f32.partialorder %v6310, 8.507059e+37
      %v6312 = vand.u32 %v6271, 2147483648
      %v6313 = vor.u32 1.1754944e-38, %v6312
      %v6314 = vsel %vm6311, %v6313, %v6309
      %v6315 = vmul.f32 %v6193, %v6314
      %v6316 = vrcp.pop %v6272
      %v6317 = vmul.f32 %v6272, %v6316
      %v6318 = vsub.f32 1.0, %v6317
      %v6319 = vmul.f32 %v6316, %v6318
      %v6320 = vadd.f32 %v6316, %v6319
      %vm6321 = vweird.f32 %v6272
      %vm6322 = vweird.f32 %v6316
      %vm6323 = vmor %vm6321, %vm6322
      %v6324 = vsel %vm6323, %v6316, %v6320
      %v6325 = vand.u32 2147483647, %v6272
      %vm6326 = vcmp.eq.f32.partialorder %v6325, 8.507059e+37
      %v6327 = vand.u32 %v6272, 2147483648
      %v6328 = vor.u32 1.1754944e-38, %v6327
      %v6329 = vsel %vm6326, %v6328, %v6324
      %v6330 = vmul.f32 %v6195, %v6329
      %v6331 = vrcp.pop %v6273
      %v6332 = vmul.f32 %v6273, %v6331
      %v6333 = vsub.f32 1.0, %v6332
      %v6334 = vmul.f32 %v6331, %v6333
      %v6335 = vadd.f32 %v6331, %v6334
      %vm6336 = vweird.f32 %v6273
      %vm6337 = vweird.f32 %v6331
      %vm6338 = vmor %vm6336, %vm6337
      %v6339 = vsel %vm6338, %v6331, %v6335
      %v6340 = vand.u32 2147483647, %v6273
      %vm6341 = vcmp.eq.f32.partialorder %v6340, 8.507059e+37
      %v6342 = vand.u32 %v6273, 2147483648
      %v6343 = vor.u32 1.1754944e-38, %v6342
      %v6344 = vsel %vm6341, %v6343, %v6339
      %v6345 = vmul.f32 %v6197, %v6344
      %v6346 = vrcp.pop %v6274
      %v6347 = vmul.f32 %v6274, %v6346
      %v6348 = vsub.f32 1.0, %v6347
      %v6349 = vmul.f32 %v6346, %v6348
      %v6350 = vadd.f32 %v6346, %v6349
      %vm6351 = vweird.f32 %v6274
      %vm6352 = vweird.f32 %v6346
      %vm6353 = vmor %vm6351, %vm6352
      %v6354 = vsel %vm6353, %v6346, %v6350
      %v6355 = vand.u32 2147483647, %v6274
      %vm6356 = vcmp.eq.f32.partialorder %v6355, 8.507059e+37
      %v6357 = vand.u32 %v6274, 2147483648
      %v6358 = vor.u32 1.1754944e-38, %v6357
      %v6359 = vsel %vm6356, %v6358, %v6354
      %v6360 = vmul.f32 %v6199, %v6359
      %v6361 = vrcp.pop %v6275
      %v6362 = vmul.f32 %v6275, %v6361
      %v6363 = vsub.f32 1.0, %v6362
      %v6364 = vmul.f32 %v6361, %v6363
      %v6365 = vadd.f32 %v6361, %v6364
      %vm6366 = vweird.f32 %v6275
      %vm6367 = vweird.f32 %v6361
      %vm6368 = vmor %vm6366, %vm6367
      %v6369 = vsel %vm6368, %v6361, %v6365
      %v6370 = vand.u32 2147483647, %v6275
      %vm6371 = vcmp.eq.f32.partialorder %v6370, 8.507059e+37
      %v6372 = vand.u32 %v6275, 2147483648
      %v6373 = vor.u32 1.1754944e-38, %v6372
      %v6374 = vsel %vm6371, %v6373, %v6369
      %v6375 = vmul.f32 %v6201, %v6374
      %v6376 = vrcp.pop %v6276
      %v6377 = vmul.f32 %v6276, %v6376
      %v6378 = vsub.f32 1.0, %v6377
      %v6379 = vmul.f32 %v6376, %v6378
      %v6380 = vadd.f32 %v6376, %v6379
      %vm6381 = vweird.f32 %v6276
      %vm6382 = vweird.f32 %v6376
      %vm6383 = vmor %vm6381, %vm6382
      %v6384 = vsel %vm6383, %v6376, %v6380
      %v6385 = vand.u32 2147483647, %v6276
      %vm6386 = vcmp.eq.f32.partialorder %v6385, 8.507059e+37
      %v6387 = vand.u32 %v6276, 2147483648
      %v6388 = vor.u32 1.1754944e-38, %v6387
      %v6389 = vsel %vm6386, %v6388, %v6384
      %v6390 = vmul.f32 %v6203, %v6389
      %v6391 = vrcp.pop %v6277
      %v6392 = vmul.f32 %v6277, %v6391
      %v6393 = vsub.f32 1.0, %v6392
      %v6394 = vmul.f32 %v6391, %v6393
      %v6395 = vadd.f32 %v6391, %v6394
      %vm6396 = vweird.f32 %v6277
      %vm6397 = vweird.f32 %v6391
      %vm6398 = vmor %vm6396, %vm6397
      %v6399 = vsel %vm6398, %v6391, %v6395
      %v6400 = vand.u32 2147483647, %v6277
      %vm6401 = vcmp.eq.f32.partialorder %v6400, 8.507059e+37
      %v6402 = vand.u32 %v6277, 2147483648
      %v6403 = vor.u32 1.1754944e-38, %v6402
      %v6404 = vsel %vm6401, %v6403, %v6399
      %v6405 = vmul.f32 %v6205, %v6404
      %v6406 = vrcp.pop %v6278
      %v6407 = vmul.f32 %v6278, %v6406
      %v6408 = vsub.f32 1.0, %v6407
      %v6409 = vmul.f32 %v6406, %v6408
      %v6410 = vadd.f32 %v6406, %v6409
      %vm6411 = vweird.f32 %v6278
      %vm6412 = vweird.f32 %v6406
      %vm6413 = vmor %vm6411, %vm6412
      %v6414 = vsel %vm6413, %v6406, %v6410
      %v6415 = vand.u32 2147483647, %v6278
      %vm6416 = vcmp.eq.f32.partialorder %v6415, 8.507059e+37
      %v6417 = vand.u32 %v6278, 2147483648
      %v6418 = vor.u32 1.1754944e-38, %v6417
      %v6419 = vsel %vm6416, %v6418, %v6414
      %v6420 = vmul.f32 %v6207, %v6419
      %v6421 = vrcp.pop %v6279
      %v6422 = vmul.f32 %v6279, %v6421
      %v6423 = vsub.f32 1.0, %v6422
      %v6424 = vmul.f32 %v6421, %v6423
      %v6425 = vadd.f32 %v6421, %v6424
      %vm6426 = vweird.f32 %v6279
      %vm6427 = vweird.f32 %v6421
      %vm6428 = vmor %vm6426, %vm6427
      %v6429 = vsel %vm6428, %v6421, %v6425
      %v6430 = vand.u32 2147483647, %v6279
      %vm6431 = vcmp.eq.f32.partialorder %v6430, 8.507059e+37
      %v6432 = vand.u32 %v6279, 2147483648
      %v6433 = vor.u32 1.1754944e-38, %v6432
      %v6434 = vsel %vm6431, %v6433, %v6429
      %v6435 = vmul.f32 %v6209, %v6434
      %v6436 = vrcp.pop %v6280
      %v6437 = vmul.f32 %v6280, %v6436
      %v6438 = vsub.f32 1.0, %v6437
      %v6439 = vmul.f32 %v6436, %v6438
      %v6440 = vadd.f32 %v6436, %v6439
      %vm6441 = vweird.f32 %v6280
      %vm6442 = vweird.f32 %v6436
      %vm6443 = vmor %vm6441, %vm6442
      %v6444 = vsel %vm6443, %v6436, %v6440
      %v6445 = vand.u32 2147483647, %v6280
      %vm6446 = vcmp.eq.f32.partialorder %v6445, 8.507059e+37
      %v6447 = vand.u32 %v6280, 2147483648
      %v6448 = vor.u32 1.1754944e-38, %v6447
      %v6449 = vsel %vm6446, %v6448, %v6444
      %v6450 = vmul.f32 %v6211, %v6449
      %v6451 = vrcp.pop %v6281
      %v6452 = vmul.f32 %v6281, %v6451
      %v6453 = vsub.f32 1.0, %v6452
      %v6454 = vmul.f32 %v6451, %v6453
      %v6455 = vadd.f32 %v6451, %v6454
      %vm6456 = vweird.f32 %v6281
      %vm6457 = vweird.f32 %v6451
      %vm6458 = vmor %vm6456, %vm6457
      %v6459 = vsel %vm6458, %v6451, %v6455
      %v6460 = vand.u32 2147483647, %v6281
      %vm6461 = vcmp.eq.f32.partialorder %v6460, 8.507059e+37
      %v6462 = vand.u32 %v6281, 2147483648
      %v6463 = vor.u32 1.1754944e-38, %v6462
      %v6464 = vsel %vm6461, %v6463, %v6459
      %v6465 = vmul.f32 %v6213, %v6464
      %v6466 = vrcp.pop %v6282
      %v6467 = vmul.f32 %v6282, %v6466
      %v6468 = vsub.f32 1.0, %v6467
      %v6469 = vmul.f32 %v6466, %v6468
      %v6470 = vadd.f32 %v6466, %v6469
      %vm6471 = vweird.f32 %v6282
      %vm6472 = vweird.f32 %v6466
      %vm6473 = vmor %vm6471, %vm6472
      %v6474 = vsel %vm6473, %v6466, %v6470
      %v6475 = vand.u32 2147483647, %v6282
      %vm6476 = vcmp.eq.f32.partialorder %v6475, 8.507059e+37
      %v6477 = vand.u32 %v6282, 2147483648
      %v6478 = vor.u32 1.1754944e-38, %v6477
      %v6479 = vsel %vm6476, %v6478, %v6474
      %v6480 = vmul.f32 %v6215, %v6479
      %v6481 = vrcp.pop %v6283
      %v6482 = vmul.f32 %v6283, %v6481
      %v6483 = vsub.f32 1.0, %v6482
      %v6484 = vmul.f32 %v6481, %v6483
      %v6485 = vadd.f32 %v6481, %v6484
      %vm6486 = vweird.f32 %v6283
      %vm6487 = vweird.f32 %v6481
      %vm6488 = vmor %vm6486, %vm6487
      %v6489 = vsel %vm6488, %v6481, %v6485
      %v6490 = vand.u32 2147483647, %v6283
      %vm6491 = vcmp.eq.f32.partialorder %v6490, 8.507059e+37
      %v6492 = vand.u32 %v6283, 2147483648
      %v6493 = vor.u32 1.1754944e-38, %v6492
      %v6494 = vsel %vm6491, %v6493, %v6489
      %v6495 = vmul.f32 %v6217, %v6494
      %v6496 = vrcp.pop %v6284
      %v6497 = vmul.f32 %v6284, %v6496
      %v6498 = vsub.f32 1.0, %v6497
      %v6499 = vmul.f32 %v6496, %v6498
      %v6500 = vadd.f32 %v6496, %v6499
      %vm6501 = vweird.f32 %v6284
      %vm6502 = vweird.f32 %v6496
      %vm6503 = vmor %vm6501, %vm6502
      %v6504 = vsel %vm6503, %v6496, %v6500
      %v6505 = vand.u32 2147483647, %v6284
      %vm6506 = vcmp.eq.f32.partialorder %v6505, 8.507059e+37
      %v6507 = vand.u32 %v6284, 2147483648
      %v6508 = vor.u32 1.1754944e-38, %v6507
      %v6509 = vsel %vm6506, %v6508, %v6504
      %v6510 = vmul.f32 %v6219, %v6509
      %v6511 = vrcp.pop %v6285
      %v6512 = vmul.f32 %v6285, %v6511
      %v6513 = vsub.f32 1.0, %v6512
      %v6514 = vmul.f32 %v6511, %v6513
      %v6515 = vadd.f32 %v6511, %v6514
      %vm6516 = vweird.f32 %v6285
      %vm6517 = vweird.f32 %v6511
      %vm6518 = vmor %vm6516, %vm6517
      %v6519 = vsel %vm6518, %v6511, %v6515
      %v6520 = vand.u32 2147483647, %v6285
      %vm6521 = vcmp.eq.f32.partialorder %v6520, 8.507059e+37
      %v6522 = vand.u32 %v6285, 2147483648
      %v6523 = vor.u32 1.1754944e-38, %v6522
      %v6524 = vsel %vm6521, %v6523, %v6519
      %v6525 = vmul.f32 %v6221, %v6524
      %v6526 = vld [vmem:[#allocation3] sm:$0xff]
      %v6527 = vld [vmem:[#allocation3 + $0x8] sm:$0xff]
      %v6529 = vsel %vm6125, %v6300, 0
      %v6532 = vsel %vm6125, %v6315, 0
      %v6535 = vsel %vm6125, %v6330, 0
      %v6538 = vsel %vm6125, %v6345, 0
      %v6541 = vsel %vm6125, %v6360, 0
      %v6544 = vsel %vm6125, %v6375, 0
      %v6547 = vsel %vm6125, %v6390, 0
      %v6550 = vsel %vm6125, %v6405, 0
      %v6553 = vsel %vm6125, %v6420, 0
      %v6556 = vsel %vm6125, %v6435, 0
      %v6559 = vsel %vm6125, %v6450, 0
      %v6562 = vsel %vm6125, %v6465, 0
      %v6565 = vsel %vm6125, %v6480, 0
      %v6568 = vsel %vm6125, %v6495, 0
      %v6571 = vsel %vm6125, %v6510, 0
      %v6574 = vsel %vm6125, %v6525, 0
      %6576 = vmatpush.msra.mxu0 0.0
      %6577 = vmatpush.msra.mxu0 0.0
      %6578 = vmatpush.msra.mxu0 0.0
      %6579 = vmatpush.msra.mxu0 0.0
      %6580 = vmatpush.msra.mxu0 0.0
      %6581 = vmatpush.msra.mxu0 0.0
      %6582 = vmatpush.msra.mxu0 0.0
      %6583 = vmatpush.msra.mxu0 0.0
      %6584 = vmatpush.msra.mxu0 0.0
      %6585 = vmatpush.msra.mxu0 0.0
      %6586 = vmatpush.msra.mxu0 0.0
      %6587 = vmatpush.msra.mxu0 0.0
      %6588 = vmatpush.msra.mxu0 0.0
      %6589 = vmatpush.msra.mxu0 0.0
      %6590 = vmatpush.msra.mxu0 %v6527
      %6591 = vmatpush.msra.mxu0 %v6526
      %6592 = vmatmul.f32.gmra.mxu0 %v6529
      %v6593 = vpop.f32.mrf.mxu0
      %v6594 = vadd.f32 0.0, %v6593
      %6595 = vmatmul.f32.gmra.mxu0 %v6532
      %v6596 = vpop.f32.mrf.mxu0
      %v6597 = vadd.f32 0.0, %v6596
      %6598 = vmatmul.f32.gmra.mxu0 %v6535
      %v6599 = vpop.f32.mrf.mxu0
      %v6600 = vadd.f32 0.0, %v6599
      %6601 = vmatmul.f32.gmra.mxu0 %v6538
      %v6602 = vpop.f32.mrf.mxu0
      %v6603 = vadd.f32 0.0, %v6602
      %6604 = vmatmul.f32.gmra.mxu0 %v6541
      %v6605 = vpop.f32.mrf.mxu0
      %v6606 = vadd.f32 0.0, %v6605
      %6607 = vmatmul.f32.gmra.mxu0 %v6544
      %v6608 = vpop.f32.mrf.mxu0
      %v6609 = vadd.f32 0.0, %v6608
      %6610 = vmatmul.f32.gmra.mxu0 %v6547
      %v6611 = vpop.f32.mrf.mxu0
      %v6612 = vadd.f32 0.0, %v6611
      %6613 = vmatmul.f32.gmra.mxu0 %v6550
      %v6614 = vpop.f32.mrf.mxu0
      %v6615 = vadd.f32 0.0, %v6614
      %6616 = vmatmul.f32.gmra.mxu0 %v6553
      %v6617 = vpop.f32.mrf.mxu0
      %v6618 = vadd.f32 0.0, %v6617
      %6619 = vmatmul.f32.gmra.mxu0 %v6556
      %v6620 = vpop.f32.mrf.mxu0
      %v6621 = vadd.f32 0.0, %v6620
      %6622 = vmatmul.f32.gmra.mxu0 %v6559
      %v6623 = vpop.f32.mrf.mxu0
      %v6624 = vadd.f32 0.0, %v6623
      %6625 = vmatmul.f32.gmra.mxu0 %v6562
      %v6626 = vpop.f32.mrf.mxu0
      %v6627 = vadd.f32 0.0, %v6626
      %6628 = vmatmul.f32.gmra.mxu0 %v6565
      %v6629 = vpop.f32.mrf.mxu0
      %v6630 = vadd.f32 0.0, %v6629
      %6631 = vmatmul.f32.gmra.mxu0 %v6568
      %v6632 = vpop.f32.mrf.mxu0
      %v6633 = vadd.f32 0.0, %v6632
      %6634 = vmatmul.f32.gmra.mxu0 %v6571
      %v6635 = vpop.f32.mrf.mxu0
      %v6636 = vadd.f32 0.0, %v6635
      %6637 = vmatmul.f32.gmra.mxu0 %v6574
      %v6638 = vpop.f32.mrf.mxu0
      %v6639 = vadd.f32 0.0, %v6638
      %6640 = vdwg.mxu0
      %v6641 = vld [vmem:[%s9] sm:$0x1]
      %v6642 = vperm.slane %v6641, 0
      %v6643 = vmul.f32 %v6594, %v6642
      %v6644 = vmul.f32 %v6597, %v6642
      %v6645 = vmul.f32 %v6600, %v6642
      %v6646 = vmul.f32 %v6603, %v6642
      %v6647 = vmul.f32 %v6606, %v6642
      %v6648 = vmul.f32 %v6609, %v6642
      %v6649 = vmul.f32 %v6612, %v6642
      %v6650 = vmul.f32 %v6615, %v6642
      %v6651 = vmul.f32 %v6618, %v6642
      %v6652 = vmul.f32 %v6621, %v6642
      %v6653 = vmul.f32 %v6624, %v6642
      %v6654 = vmul.f32 %v6627, %v6642
      %v6655 = vmul.f32 %v6630, %v6642
      %v6656 = vmul.f32 %v6633, %v6642
      %v6657 = vmul.f32 %v6636, %v6642
      %v6658 = vmul.f32 %v6639, %v6642
      %v6659 = vadd.f32 %v6643, 0.0
      %v6660 = vadd.f32 %v6644, 0.0
      %v6661 = vadd.f32 %v6645, 0.0
      %v6662 = vadd.f32 %v6646, 0.0
      %v6663 = vadd.f32 %v6647, 0.0
      %v6664 = vadd.f32 %v6648, 0.0
      %v6665 = vadd.f32 %v6649, 0.0
      %v6666 = vadd.f32 %v6650, 0.0
      %v6667 = vadd.f32 %v6651, 0.0
      %v6668 = vadd.f32 %v6652, 0.0
      %v6669 = vadd.f32 %v6653, 0.0
      %v6670 = vadd.f32 %v6654, 0.0
      %v6671 = vadd.f32 %v6655, 0.0
      %v6672 = vadd.f32 %v6656, 0.0
      %v6673 = vadd.f32 %v6657, 0.0
      %v6674 = vadd.f32 %v6658, 0.0
      %v6675 = vld [vmem:[%s9 + $0x1] sm:$0x1]
      %v6676 = vperm.slane %v6675, 0
      %v6677 = vmul.f32 %v6594, %v6676
      %v6678 = vmul.f32 %v6597, %v6676
      %v6679 = vmul.f32 %v6600, %v6676
      %v6680 = vmul.f32 %v6603, %v6676
      %v6681 = vmul.f32 %v6606, %v6676
      %v6682 = vmul.f32 %v6609, %v6676
      %v6683 = vmul.f32 %v6612, %v6676
      %v6684 = vmul.f32 %v6615, %v6676
      %v6685 = vmul.f32 %v6618, %v6676
      %v6686 = vmul.f32 %v6621, %v6676
      %v6687 = vmul.f32 %v6624, %v6676
      %v6688 = vmul.f32 %v6627, %v6676
      %v6689 = vmul.f32 %v6630, %v6676
      %v6690 = vmul.f32 %v6633, %v6676
      %v6691 = vmul.f32 %v6636, %v6676
      %v6692 = vmul.f32 %v6639, %v6676
      %v6709 = vrot.slane %v6677, 1
      %v6710 = vrot.slane %v6678, 1
      %v6711 = vrot.slane %v6679, 1
      %v6712 = vrot.slane %v6680, 1
      %v6713 = vrot.slane %v6681, 1
      %v6714 = vrot.slane %v6682, 1
      %v6715 = vrot.slane %v6683, 1
      %v6716 = vrot.slane %v6684, 1
      %v6717 = vrot.slane %v6685, 1
      %v6718 = vrot.slane %v6686, 1
      %v6719 = vrot.slane %v6687, 1
      %v6720 = vrot.slane %v6688, 1
      %v6721 = vrot.slane %v6689, 1
      %v6722 = vrot.slane %v6690, 1
      %v6723 = vrot.slane %v6691, 1
      %v6724 = vrot.slane %v6692, 1
      %v6741 = vadd.f32 %v6659, %v6709
      %v6742 = vadd.f32 %v6660, %v6710
      %v6743 = vadd.f32 %v6661, %v6711
      %v6744 = vadd.f32 %v6662, %v6712
      %v6745 = vadd.f32 %v6663, %v6713
      %v6746 = vadd.f32 %v6664, %v6714
      %v6747 = vadd.f32 %v6665, %v6715
      %v6748 = vadd.f32 %v6666, %v6716
      %v6749 = vadd.f32 %v6667, %v6717
      %v6750 = vadd.f32 %v6668, %v6718
      %v6751 = vadd.f32 %v6669, %v6719
      %v6752 = vadd.f32 %v6670, %v6720
      %v6753 = vadd.f32 %v6671, %v6721
      %v6754 = vadd.f32 %v6672, %v6722
      %v6755 = vadd.f32 %v6673, %v6723
      %v6756 = vadd.f32 %v6674, %v6724
      %v6757 = vld [vmem:[%s765] sm:$0x1]
      %v6759 = vperm.slane %v6757, 0
      %v6761 = vadd.f32 %v6741, %v6759
      %v6762 = vadd.f32 %v6742, %v6759
      %v6763 = vadd.f32 %v6743, %v6759
      %v6764 = vadd.f32 %v6744, %v6759
      %v6765 = vadd.f32 %v6745, %v6759
      %v6766 = vadd.f32 %v6746, %v6759
      %v6767 = vadd.f32 %v6747, %v6759
      %v6768 = vadd.f32 %v6748, %v6759
      %v6769 = vadd.f32 %v6749, %v6759
      %v6770 = vadd.f32 %v6750, %v6759
      %v6771 = vadd.f32 %v6751, %v6759
      %v6772 = vadd.f32 %v6752, %v6759
      %v6773 = vadd.f32 %v6753, %v6759
      %v6774 = vadd.f32 %v6754, %v6759
      %v6775 = vadd.f32 %v6755, %v6759
      %v6776 = vadd.f32 %v6756, %v6759
      %p6777 = scmp.gt.s32.totalorder %s33, 0
      %s6778 = scalar_select %p6777, 1.0, 0.0
      %v6779 = vstv %s6778
      %v6780 = vmul.f32 %v6779, %v889
      %v6781 = vmul.f32 %v6779, %v890
      %v6784 = vrot.slane %v6780, 1
      %v6785 = vrot.slane %v6780, 2
      %v6786 = vrot.slane %v6780, 3
      %v6787 = vrot.slane %v6780, 4
      %v6788 = vrot.slane %v6780, 5
      %v6789 = vrot.slane %v6780, 6
      %v6790 = vrot.slane %v6780, 7
      %v6791 = vrot.slane %v6781, 1
      %v6792 = vrot.slane %v6781, 2
      %v6793 = vrot.slane %v6781, 3
      %v6794 = vrot.slane %v6781, 4
      %v6795 = vrot.slane %v6781, 5
      %v6796 = vrot.slane %v6781, 6
      %v6797 = vrot.slane %v6781, 7
      %v6814 = vadd.f32 %v6761, %v6780
      %v6815 = vadd.f32 %v6762, %v6784
      %v6816 = vadd.f32 %v6763, %v6785
      %v6817 = vadd.f32 %v6764, %v6786
      %v6818 = vadd.f32 %v6765, %v6787
      %v6819 = vadd.f32 %v6766, %v6788
      %v6820 = vadd.f32 %v6767, %v6789
      %v6821 = vadd.f32 %v6768, %v6790
      %v6822 = vadd.f32 %v6769, %v6781
      %v6823 = vadd.f32 %v6770, %v6791
      %v6824 = vadd.f32 %v6771, %v6792
      %v6825 = vadd.f32 %v6772, %v6793
      %v6826 = vadd.f32 %v6773, %v6794
      %v6827 = vadd.f32 %v6774, %v6795
      %v6828 = vadd.f32 %v6775, %v6796
      %v6829 = vadd.f32 %v6776, %v6797
      %v6830 = vld [vmem:[%s777] sm:$0x1]
      %v6831 = vadd.f32 %v6830, 1e-05
      %v6832 = vrsqrt.pop %v6831
      %v6833 = vmul.f32 %v6832, %v6831
      %v6834 = vmul.f32 %v6833, %v6832
      %v6835 = vmul.f32 0.5, %v6834
      %v6836 = vsub.f32 1.5, %v6835
      %v6837 = vmul.f32 %v6832, %v6836
      %vm6838 = vweird.f32 %v6831
      %vm6839 = vweird.f32 %v6832
      %vm6840 = vmor %vm6838, %vm6839
      %v6841 = vsel %vm6840, %v6832, %v6837
      %v6842 = vld [vmem:[%s774] sm:$0x1]
      %v6844 = vperm.slane %v6842, 0
      %v6846 = vsub.f32 %v6814, %v6844
      %v6847 = vsub.f32 %v6815, %v6844
      %v6848 = vsub.f32 %v6816, %v6844
      %v6849 = vsub.f32 %v6817, %v6844
      %v6850 = vsub.f32 %v6818, %v6844
      %v6851 = vsub.f32 %v6819, %v6844
      %v6852 = vsub.f32 %v6820, %v6844
      %v6853 = vsub.f32 %v6821, %v6844
      %v6854 = vsub.f32 %v6822, %v6844
      %v6855 = vsub.f32 %v6823, %v6844
      %v6856 = vsub.f32 %v6824, %v6844
      %v6857 = vsub.f32 %v6825, %v6844
      %v6858 = vsub.f32 %v6826, %v6844
      %v6859 = vsub.f32 %v6827, %v6844
      %v6860 = vsub.f32 %v6828, %v6844
      %v6861 = vsub.f32 %v6829, %v6844
      %v6863 = vperm.slane %v6841, 0
      %v6865 = vmul.f32 %v6846, %v6863
      %v6866 = vmul.f32 %v6847, %v6863
      %v6867 = vmul.f32 %v6848, %v6863
      %v6868 = vmul.f32 %v6849, %v6863
      %v6869 = vmul.f32 %v6850, %v6863
      %v6870 = vmul.f32 %v6851, %v6863
      %v6871 = vmul.f32 %v6852, %v6863
      %v6872 = vmul.f32 %v6853, %v6863
      %v6873 = vmul.f32 %v6854, %v6863
      %v6874 = vmul.f32 %v6855, %v6863
      %v6875 = vmul.f32 %v6856, %v6863
      %v6876 = vmul.f32 %v6857, %v6863
      %v6877 = vmul.f32 %v6858, %v6863
      %v6878 = vmul.f32 %v6859, %v6863
      %v6879 = vmul.f32 %v6860, %v6863
      %v6880 = vmul.f32 %v6861, %v6863
      %v6881 = vld [vmem:[%s768] sm:$0x1]
      %v6883 = vperm.slane %v6881, 0
      %v6885 = vmul.f32 %v6865, %v6883
      %v6886 = vmul.f32 %v6866, %v6883
      %v6887 = vmul.f32 %v6867, %v6883
      %v6888 = vmul.f32 %v6868, %v6883
      %v6889 = vmul.f32 %v6869, %v6883
      %v6890 = vmul.f32 %v6870, %v6883
      %v6891 = vmul.f32 %v6871, %v6883
      %v6892 = vmul.f32 %v6872, %v6883
      %v6893 = vmul.f32 %v6873, %v6883
      %v6894 = vmul.f32 %v6874, %v6883
      %v6895 = vmul.f32 %v6875, %v6883
      %v6896 = vmul.f32 %v6876, %v6883
      %v6897 = vmul.f32 %v6877, %v6883
      %v6898 = vmul.f32 %v6878, %v6883
      %v6899 = vmul.f32 %v6879, %v6883
      %v6900 = vmul.f32 %v6880, %v6883
      %v6901 = vld [vmem:[%s771] sm:$0x1]
      %v6903 = vperm.slane %v6901, 0
      %v6905 = vadd.f32 %v6885, %v6903
      %v6906 = vadd.f32 %v6886, %v6903
      %v6907 = vadd.f32 %v6887, %v6903
      %v6908 = vadd.f32 %v6888, %v6903
      %v6909 = vadd.f32 %v6889, %v6903
      %v6910 = vadd.f32 %v6890, %v6903
      %v6911 = vadd.f32 %v6891, %v6903
      %v6912 = vadd.f32 %v6892, %v6903
      %v6913 = vadd.f32 %v6893, %v6903
      %v6914 = vadd.f32 %v6894, %v6903
      %v6915 = vadd.f32 %v6895, %v6903
      %v6916 = vadd.f32 %v6896, %v6903
      %v6917 = vadd.f32 %v6897, %v6903
      %v6918 = vadd.f32 %v6898, %v6903
      %v6919 = vadd.f32 %v6899, %v6903
      %v6920 = vadd.f32 %v6900, %v6903
      %vm6921 = vcmp.gt.f32.partialorder %v6905, 0.0
      %vm6922 = vcmp.gt.f32.partialorder %v6906, 0.0
      %vm6923 = vcmp.gt.f32.partialorder %v6907, 0.0
      %vm6924 = vcmp.gt.f32.partialorder %v6908, 0.0
      %vm6925 = vcmp.gt.f32.partialorder %v6909, 0.0
      %vm6926 = vcmp.gt.f32.partialorder %v6910, 0.0
      %vm6927 = vcmp.gt.f32.partialorder %v6911, 0.0
      %vm6928 = vcmp.gt.f32.partialorder %v6912, 0.0
      %vm6929 = vcmp.gt.f32.partialorder %v6913, 0.0
      %vm6930 = vcmp.gt.f32.partialorder %v6914, 0.0
      %vm6931 = vcmp.gt.f32.partialorder %v6915, 0.0
      %vm6932 = vcmp.gt.f32.partialorder %v6916, 0.0
      %vm6933 = vcmp.gt.f32.partialorder %v6917, 0.0
      %vm6934 = vcmp.gt.f32.partialorder %v6918, 0.0
      %vm6935 = vcmp.gt.f32.partialorder %v6919, 0.0
      %vm6936 = vcmp.gt.f32.partialorder %v6920, 0.0
      %v6937 = vmin.f32 %v6905, 0.0
      %v6938 = vmin.f32 %v6906, 0.0
      %v6939 = vmin.f32 %v6907, 0.0
      %v6940 = vmin.f32 %v6908, 0.0
      %v6941 = vmin.f32 %v6909, 0.0
      %v6942 = vmin.f32 %v6910, 0.0
      %v6943 = vmin.f32 %v6911, 0.0
      %v6944 = vmin.f32 %v6912, 0.0
      %v6945 = vmin.f32 %v6913, 0.0
      %v6946 = vmin.f32 %v6914, 0.0
      %v6947 = vmin.f32 %v6915, 0.0
      %v6948 = vmin.f32 %v6916, 0.0
      %v6949 = vmin.f32 %v6917, 0.0
      %v6950 = vmin.f32 %v6918, 0.0
      %v6951 = vmin.f32 %v6919, 0.0
      %v6952 = vmin.f32 %v6920, 0.0
      %v6953 = vmul.f32 %v6937, 1.442695
      %v6954 = vpow.pop %v6953
      %v6955 = vmul.f32 %v6938, 1.442695
      %v6956 = vpow.pop %v6955
      %v6957 = vmul.f32 %v6939, 1.442695
      %v6958 = vpow.pop %v6957
      %v6959 = vmul.f32 %v6940, 1.442695
      %v6960 = vpow.pop %v6959
      %v6961 = vmul.f32 %v6941, 1.442695
      %v6962 = vpow.pop %v6961
      %v6963 = vmul.f32 %v6942, 1.442695
      %v6964 = vpow.pop %v6963
      %v6965 = vmul.f32 %v6943, 1.442695
      %v6966 = vpow.pop %v6965
      %v6967 = vmul.f32 %v6944, 1.442695
      %v6968 = vpow.pop %v6967
      %v6969 = vmul.f32 %v6945, 1.442695
      %v6970 = vpow.pop %v6969
      %v6971 = vmul.f32 %v6946, 1.442695
      %v6972 = vpow.pop %v6971
      %v6973 = vmul.f32 %v6947, 1.442695
      %v6974 = vpow.pop %v6973
      %v6975 = vmul.f32 %v6948, 1.442695
      %v6976 = vpow.pop %v6975
      %v6977 = vmul.f32 %v6949, 1.442695
      %v6978 = vpow.pop %v6977
      %v6979 = vmul.f32 %v6950, 1.442695
      %v6980 = vpow.pop %v6979
      %v6981 = vmul.f32 %v6951, 1.442695
      %v6982 = vpow.pop %v6981
      %v6983 = vmul.f32 %v6952, 1.442695
      %v6984 = vpow.pop %v6983
      %v6985 = vsub.f32 %v6954, 1.0
      %v6986 = vsub.f32 %v6956, 1.0
      %v6987 = vsub.f32 %v6958, 1.0
      %v6988 = vsub.f32 %v6960, 1.0
      %v6989 = vsub.f32 %v6962, 1.0
      %v6990 = vsub.f32 %v6964, 1.0
      %v6991 = vsub.f32 %v6966, 1.0
      %v6992 = vsub.f32 %v6968, 1.0
      %v6993 = vsub.f32 %v6970, 1.0
      %v6994 = vsub.f32 %v6972, 1.0
      %v6995 = vsub.f32 %v6974, 1.0
      %v6996 = vsub.f32 %v6976, 1.0
      %v6997 = vsub.f32 %v6978, 1.0
      %v6998 = vsub.f32 %v6980, 1.0
      %v6999 = vsub.f32 %v6982, 1.0
      %v7000 = vsub.f32 %v6984, 1.0
      %v7001 = vsel %vm6921, %v6905, %v6985
      %v7002 = vsel %vm6922, %v6906, %v6986
      %v7003 = vsel %vm6923, %v6907, %v6987
      %v7004 = vsel %vm6924, %v6908, %v6988
      %v7005 = vsel %vm6925, %v6909, %v6989
      %v7006 = vsel %vm6926, %v6910, %v6990
      %v7007 = vsel %vm6927, %v6911, %v6991
      %v7008 = vsel %vm6928, %v6912, %v6992
      %v7009 = vsel %vm6929, %v6913, %v6993
      %v7010 = vsel %vm6930, %v6914, %v6994
      %v7011 = vsel %vm6931, %v6915, %v6995
      %v7012 = vsel %vm6932, %v6916, %v6996
      %v7013 = vsel %vm6933, %v6917, %v6997
      %v7014 = vsel %vm6934, %v6918, %v6998
      %v7015 = vsel %vm6935, %v6919, %v6999
      %v7016 = vsel %vm6936, %v6920, %v7000
      %v7033 = vrot.slane %v7002, 7
      %vm7034 = vcmask 1041409
      %v7035 = vsel %vm7034, %v7033, %v7001
      %v7036 = vrot.slane %v7003, 6
      %vm7037 = vcmask 1042434
      %v7038 = vsel %vm7037, %v7036, %v7035
      %v7039 = vrot.slane %v7004, 5
      %vm7040 = vcmask 1043459
      %v7041 = vsel %vm7040, %v7039, %v7038
      %v7042 = vrot.slane %v7005, 4
      %vm7043 = vcmask 1044484
      %v7044 = vsel %vm7043, %v7042, %v7041
      %v7045 = vrot.slane %v7006, 3
      %vm7046 = vcmask 1045509
      %v7047 = vsel %vm7046, %v7045, %v7044
      %v7048 = vrot.slane %v7007, 2
      %vm7049 = vcmask 1046534
      %v7050 = vsel %vm7049, %v7048, %v7047
      %v7051 = vrot.slane %v7008, 1
      %vm7052 = vcmask 1047559
      %v7053 = vsel %vm7052, %v7051, %v7050
      %v7054 = vrot.slane %v7010, 7
      %v7055 = vsel %vm7034, %v7054, %v7009
      %v7056 = vrot.slane %v7011, 6
      %v7057 = vsel %vm7037, %v7056, %v7055
      %v7058 = vrot.slane %v7012, 5
      %v7059 = vsel %vm7040, %v7058, %v7057
      %v7060 = vrot.slane %v7013, 4
      %v7061 = vsel %vm7043, %v7060, %v7059
      %v7062 = vrot.slane %v7014, 3
      %v7063 = vsel %vm7046, %v7062, %v7061
      %v7064 = vrot.slane %v7015, 2
      %v7065 = vsel %vm7049, %v7064, %v7063
      %v7066 = vrot.slane %v7016, 1
      %v7067 = vsel %vm7052, %v7066, %v7065
      %7070 = vst [vmem:[%s888] sm:$0xff] %v7053
      %7071 = vst [vmem:[%s888 + $0x8] sm:$0xff] %v7067
      %p7072 = scmp.eq.s32.totalorder %s33, 2
      %p7073 = pnand %p7072, %p779
      %p7074 = pneg %p7073
      // Predicated region
      $region101: #{gnn_forward.1} parent=91 // pred_check
        _
      $region102: #{gnn_forward.1} parent=91 // pred_check_branch
        %7076 = sbr.rel (%p7073) target = $region104
      $region103: #{gnn_forward.1} parent=91 // pred_region
        %v7077 = vld [vmem:[%s15] sm:$0xff]
        %v7078 = vld [vmem:[#allocation2] sm:$0xff]
        %v7079 = vld [vmem:[#allocation2 + $0x8] sm:$0xff]
        %v7081 = vsel %vm6125, %v7077, 0
        %7083 = vmatpush.msra.mxu0 0.0
        %7084 = vmatpush.msra.mxu0 0.0
        %7085 = vmatpush.msra.mxu0 0.0
        %7086 = vmatpush.msra.mxu0 0.0
        %7087 = vmatpush.msra.mxu0 0.0
        %7088 = vmatpush.msra.mxu0 0.0
        %7089 = vmatpush.msra.mxu0 0.0
        %7090 = vmatpush.msra.mxu0 0.0
        %7091 = vmatpush.msra.mxu0 0.0
        %7092 = vmatpush.msra.mxu0 0.0
        %7093 = vmatpush.msra.mxu0 0.0
        %7094 = vmatpush.msra.mxu0 0.0
        %7095 = vmatpush.msra.mxu0 0.0
        %7096 = vmatpush.msra.mxu0 0.0
        %7097 = vmatpush.msra.mxu0 %v7079
        %7098 = vmatpush.msra.mxu0 %v7078
        %7099 = vmatmul.f32.gmra.mxu0 %v7081
        %v7100 = vpop.f32.mrf.mxu0
        %v7101 = vadd.f32 0.0, %v7100
        %7102 = vdwg.mxu0
        %v7103 = vld [vmem:[%s16] sm:$0xff]
        %v7104 = vld [vmem:[%s16 + $0x8] sm:$0xff]
        %v7105 = vld [vmem:[%s16 + $0x10] sm:$0xff]
        %v7106 = vld [vmem:[%s16 + $0x18] sm:$0xff]
        %v7107 = vld [vmem:[%s16 + $0x20] sm:$0xff]
        %v7108 = vld [vmem:[%s16 + $0x28] sm:$0xff]
        %v7109 = vld [vmem:[%s16 + $0x30] sm:$0xff]
        %v7110 = vld [vmem:[%s16 + $0x38] sm:$0xff]
        %v7111 = vld [vmem:[%s16 + $0x40] sm:$0xff]
        %v7112 = vld [vmem:[%s16 + $0x48] sm:$0xff]
        %v7113 = vld [vmem:[%s16 + $0x50] sm:$0xff]
        %v7114 = vld [vmem:[%s16 + $0x58] sm:$0xff]
        %v7115 = vld [vmem:[%s16 + $0x60] sm:$0xff]
        %v7116 = vld [vmem:[%s16 + $0x68] sm:$0xff]
        %v7117 = vld [vmem:[%s16 + $0x70] sm:$0xff]
        %v7118 = vld [vmem:[%s16 + $0x78] sm:$0xff]
        %v7119 = vld [vmem:[%s17] sm:$0x1]
        %v7121 = vperm.slane %v7119, 0
        %7123 = vmatpush.msra.mxu0 %v7118
        %7124 = vmatpush.msra.mxu0 %v7117
        %7125 = vmatpush.msra.mxu0 %v7116
        %7126 = vmatpush.msra.mxu0 %v7115
        %7127 = vmatpush.msra.mxu0 %v7114
        %7128 = vmatpush.msra.mxu0 %v7113
        %7129 = vmatpush.msra.mxu0 %v7112
        %7130 = vmatpush.msra.mxu0 %v7111
        %7131 = vmatpush.msra.mxu0 %v7110
        %7132 = vmatpush.msra.mxu0 %v7109
        %7133 = vmatpush.msra.mxu0 %v7108
        %7134 = vmatpush.msra.mxu0 %v7107
        %7135 = vmatpush.msra.mxu0 %v7106
        %7136 = vmatpush.msra.mxu0 %v7105
        %7137 = vmatpush.msra.mxu0 %v7104
        %7138 = vmatpush.msra.mxu0 %v7103
        %7139 = vmatmul.f32.gmra.mxu0 %v7101
        %v7140 = vpop.f32.mrf.mxu0
        %v7141 = vadd.f32 %v7121, %v7140
        %7142 = vdwg.mxu0
        %7143 = vst [vmem:[%s18] sm:$0xff] %v7141
      $region104: #{gnn_forward.1} parent=91 // pred_fallthru
        _
      // Predicated region
      $region105: #{gnn_forward.1} parent=91 // pred_check
        %p7144 = pneg %p497
      $region106: #{gnn_forward.1} parent=91 // pred_check_branch
        %7146 = sbr.rel (%p7144) target = $region108
      $region107: #{gnn_forward.1} parent=91 // pred_region
        _
      $region108: #{gnn_forward.1} parent=91 // pred_fallthru
        _
      // Predicated region
      $region109: #{gnn_forward.1} parent=91 // pred_check
        %p7147 = pneg %p497
      $region110: #{gnn_forward.1} parent=91 // pred_check_branch
        %7149 = sbr.rel (%p7147) target = $region112
      $region111: #{gnn_forward.1} parent=91 // pred_region
        _
      $region112: #{gnn_forward.1} parent=91 // pred_fallthru
        _
    $region92: #{gnn_forward.1} parent=5 // pred_fallthru
      _
    %p7150 = scmp.le.s32.totalorder 2, %s24
    // Predicated region
    $region113: #{gnn_forward.1} parent=5 // pred_check
      %p7151 = pneg %p7150
    $region114: #{gnn_forward.1} parent=5 // pred_check_branch
      %7153 = sbr.rel (%p7151) target = $region116
    $region115: #{gnn_forward.1} parent=5 // pred_region
      %s7154 = ssub.s32 %s24, 2
    $region116: #{gnn_forward.1} parent=5 // pred_fallthru
      _
  $region6: #{gnn_forward.1} parent=0 // loop_footer
    %s28 = sadd.s32 1, %s24
  $region7: #{gnn_forward.1} parent=0 // loop_footer_branch
    %23 = sbr.rel target = $region3
  $region8: #{gnn_forward.1} parent=0 // loop_exit
    _

</llo_original>
